<compile_context>
chip_gen: v6e
topology: v6e:2x2x1
jax: 0.10.0
libtpu: 0.0.40
codegen_flags: <defaults>
</compile_context>

<pallas_src>
import functools

import jax
import jax.numpy as jnp
from jax.experimental import pallas as pl
from jax.experimental.pallas import tpu as pltpu

LN_EPS = 1e-5  # nn.LayerNorm default


# ----------------------------- tiling helpers -------------------------------
def _choose_rows_tile(m, target=512):
    """Row tile for the conv matmul: <= target, multiple of 8, >=2 grid steps."""
    tm = max(8, min(target, m))
    tm = (tm // 8) * 8
    while tm > 8 and pl.cdiv(m, tm) < 2:
        tm = max(8, ((tm // 2) // 8) * 8)
    return tm


def _choose_group(bp, n, target_rows=256):
    """Largest divisor g of bp with g*n <= ~target_rows rows and >=2 grid steps."""
    g_max = max(1, target_rows // max(n, 1))
    best = 1
    for g in range(1, bp + 1):
        if bp % g != 0 or g > g_max:
            continue
        if bp // g < 2 and bp > 1:
            continue
        best = max(best, g)
    return best


# ----------------------------- 1x1 conv kernel ------------------------------
def _conv1x1_kernel(x_ref, w_ref, b_ref, o_ref):
    x = x_ref[...].astype(jnp.bfloat16)
    acc = jnp.dot(x, w_ref[...], preferred_element_type=jnp.float32)
    o_ref[...] = (acc + b_ref[...]).astype(o_ref.dtype)


def conv1x1(x_nchw, w, b):
    """x: (B, Cin, H, W); w: (Cin, Cout) bf16; b: (Cout,) f32 -> (B, Cout, H, W)."""
    B, Cin, H, W = x_nchw.shape
    Cout = w.shape[1]
    M = B * H * W
    xm = jnp.transpose(x_nchw, (0, 2, 3, 1)).reshape(M, Cin)

    tm = _choose_rows_tile(M)
    m_pad = pl.cdiv(M, tm) * tm
    if m_pad != M:
        xm = jnp.pad(xm, ((0, m_pad - M), (0, 0)))

    flops = 2 * m_pad * Cin * Cout
    bytes_acc = m_pad * Cin * 4 + Cin * Cout * 2 + Cout * 4 + m_pad * Cout * 4

    out = pl.pallas_call(
        _conv1x1_kernel,
        out_shape=jax.ShapeDtypeStruct((m_pad, Cout), jnp.float32),
        grid=(m_pad // tm,),
        in_specs=[pl.BlockSpec((tm, Cin), lambda i: (i, 0)),
                  pl.BlockSpec((Cin, Cout), lambda i: (0, 0)),
                  pl.BlockSpec((1, Cout), lambda i: (0, 0))],
        out_specs=pl.BlockSpec((tm, Cout), lambda i: (i, 0)),
        compiler_params=pltpu.CompilerParams(
            dimension_semantics=("parallel",),
            vmem_limit_bytes=32 * 1024 * 1024),
        cost_estimate=pl.CostEstimate(flops=flops, transcendentals=0,
                                      bytes_accessed=bytes_acc),
    )(xm, w, b.reshape(1, Cout))
    out = out[:M]
    return jnp.transpose(out.reshape(B, H, W, Cout), (0, 3, 1, 2))


# ------------------------ fused transformer layer kernel --------------------
def _layernorm(x, g, b):
    mu = jnp.mean(x, axis=-1, keepdims=True)
    var = jnp.mean(jnp.square(x - mu), axis=-1, keepdims=True)
    return (x - mu) * jax.lax.rsqrt(var + LN_EPS) * g + b


def _transformer_layer_kernel(x_ref, g1_ref, be1_ref, wqkv_ref, wo_ref, bo_ref,
                              g2_ref, be2_ref, w1_ref, b1_ref, w2_ref, b2_ref,
                              o_ref, *, heads, head_dim, scale):
    G, N, dim = x_ref.shape
    inner = heads * head_dim
    GN = G * N

    # (G, N, dim) -> (G*N, dim): N % 8 == 0 so this is a free leading-dim merge.
    x = x_ref[...].astype(jnp.float32).reshape(GN, dim)

    # ---- PreNorm + multi-head self-attention + residual ----
    xl = _layernorm(x, g1_ref[...], be1_ref[...])
    qkv = jnp.dot(xl.astype(jnp.bfloat16), wqkv_ref[...],
                  preferred_element_type=jnp.float32)          # (GN, 3*inner)

    att_proj = None
    for h in range(heads):          # static loop; each head is G-batched on the MXU
        lo = h * head_dim
        hi = lo + head_dim
        qh = qkv[:, lo:hi].reshape(G, N, head_dim)
        kh = qkv[:, inner + lo:inner + hi].reshape(G, N, head_dim)
        vh = qkv[:, 2 * inner + lo:2 * inner + hi].reshape(G, N, head_dim)

        dots = jnp.einsum('gnd,gmd->gnm',
                          qh.astype(jnp.bfloat16), kh.astype(jnp.bfloat16),
                          preferred_element_type=jnp.float32) * scale
        dots = dots - jnp.max(dots, axis=-1, keepdims=True)
        e = jnp.exp(dots)
        inv = pl.reciprocal(jnp.sum(e, axis=-1, keepdims=True), approx=True)
        attn = (e * inv).astype(jnp.bfloat16)
        oh = jnp.einsum('gnm,gmd->gnd', attn, vh.astype(jnp.bfloat16),
                        preferred_element_type=jnp.float32)     # (G, N, head_dim)

        # Fold this head's slice of the output projection; sum over heads equals
        # concat(heads) @ W_o, so no cross-lane concatenate is needed.
        contrib = jnp.dot(oh.reshape(GN, head_dim).astype(jnp.bfloat16),
                          wo_ref[lo:hi, :],
                          preferred_element_type=jnp.float32)
        att_proj = contrib if att_proj is None else att_proj + contrib

    x = x + att_proj + bo_ref[...]          # dropout(p=0.0) == identity

    # ---- PreNorm + SiLU MLP + residual ----
    xl2 = _layernorm(x, g2_ref[...], be2_ref[...])
    hdn = jnp.dot(xl2.astype(jnp.bfloat16), w1_ref[...],
                  preferred_element_type=jnp.float32) + b1_ref[...]
    hdn = hdn * jax.nn.sigmoid(hdn)         # SiLU (f32)
    ff = jnp.dot(hdn.astype(jnp.bfloat16), w2_ref[...],
                 preferred_element_type=jnp.float32) + b2_ref[...]
    x = x + ff

    o_ref[...] = x.reshape(G, N, dim).astype(o_ref.dtype)


def transformer_layer(x3, lp, heads, head_dim):
    """x3: (B*P, N, dim) -> (B*P, N, dim), one fused layer (attn + ffn)."""
    BP, N, dim = x3.shape
    mlp_dim = lp['w1'].shape[1]
    inner = heads * head_dim
    scale = head_dim ** (-0.5)

    G = _choose_group(BP, N)
    grid = (BP // G,)
    kern = functools.partial(_transformer_layer_kernel,
                             heads=heads, head_dim=head_dim, scale=scale)

    def full(shape):
        return pl.BlockSpec(shape, lambda i: tuple(0 for _ in shape))

    rows = BP * N
    flops = (2 * rows * dim * 3 * inner
             + 2 * BP * heads * N * N * head_dim * 2
             + 2 * rows * inner * dim
             + 2 * rows * dim * mlp_dim * 2)
    trans = BP * heads * N * N + rows * (mlp_dim + 2)
    bytes_acc = (2 * rows * dim * 4
                 + (dim * 3 * inner + inner * dim + dim * mlp_dim + mlp_dim * dim) * 2
                 + (6 * dim + mlp_dim) * 4)

    return pl.pallas_call(
        kern,
        out_shape=jax.ShapeDtypeStruct((BP, N, dim), jnp.float32),
        grid=grid,
        in_specs=[pl.BlockSpec((G, N, dim), lambda i: (i, 0, 0)),
                  full((1, dim)), full((1, dim)),
                  full((dim, 3 * inner)),
                  full((inner, dim)), full((1, dim)),
                  full((1, dim)), full((1, dim)),
                  full((dim, mlp_dim)), full((1, mlp_dim)),
                  full((mlp_dim, dim)), full((1, dim))],
        out_specs=pl.BlockSpec((G, N, dim), lambda i: (i, 0, 0)),
        compiler_params=pltpu.CompilerParams(
            dimension_semantics=("parallel",),
            vmem_limit_bytes=32 * 1024 * 1024),
        cost_estimate=pl.CostEstimate(flops=flops, transcendentals=trans,
                                      bytes_accessed=bytes_acc),
    )(x3, lp['ln1_g'], lp['ln1_b'], lp['wqkv'], lp['wo'], lp['bo'],
      lp['ln2_g'], lp['ln2_b'], lp['w1'], lp['b1'], lp['w2'], lp['b2'])


# --------------------------- full forward pass ------------------------------
def mobilevit_attention(x, params, patch_size, heads, head_dim, depth):
    B, _, H, W = x.shape
    ph = pw = patch_size
    nh, nw = H // ph, W // pw
    dim = params['conv2_w'].shape[1]

    y = conv1x1(x, params['conv2_w'], params['conv2_b'])        # (B, dim, H, W)

    # rearrange 'bs dim (nh ph) (nw pw) -> bs (ph pw) (nh nw) dim'
    y = y.reshape(B, dim, nh, ph, nw, pw)
    y = jnp.transpose(y, (0, 3, 5, 2, 4, 1)).reshape(B, ph * pw, nh * nw, dim)

    P, N = ph * pw, nh * nw
    y = y.reshape(B * P, N, dim)
    for l in range(depth):
        y = transformer_layer(y, params['layers'][l], heads, head_dim)
    y = y.reshape(B, P, N, dim)

    # rearrange 'bs (ph pw) (nh nw) dim -> bs dim (nh ph) (nw pw)'
    y = y.reshape(B, ph, pw, nh, nw, dim)
    y = jnp.transpose(y, (0, 5, 3, 1, 4, 2)).reshape(B, dim, nh * ph, nw * pw)

    y = conv1x1(y, params['conv3_w'], params['conv3_b'])        # (B, in_ch, H, W)
    return y


# ------------------------------ parameter init -------------------------------
def init_params(key, in_channel, dim, heads, head_dim, mlp_dim, depth):
    inner = heads * head_dim
    keys = jax.random.split(key, 4 + depth)

    def nrm(k, shape, scale=0.05, dtype=jnp.float32):
        return (jax.random.normal(k, shape, jnp.float32) * scale).astype(dtype)

    bf16 = jnp.bfloat16
    params = {
        'conv2_w': nrm(keys[0], (in_channel * 2, dim), dtype=bf16),
        'conv2_b': nrm(keys[1], (dim,)),
        'conv3_w': nrm(keys[2], (dim, in_channel), dtype=bf16),
        'conv3_b': nrm(keys[3], (in_channel,)),
        'layers': [],
    }
    for l in range(depth):
        lk = jax.random.split(keys[4 + l], 6)
        params['layers'].append({
            'ln1_g': jnp.ones((1, dim), jnp.float32),
            'ln1_b': jnp.zeros((1, dim), jnp.float32),
            'wqkv': nrm(lk[0], (dim, 3 * inner), dtype=bf16),
            'wo': nrm(lk[1], (inner, dim), dtype=bf16),
            'bo': nrm(lk[2], (1, dim)),
            'ln2_g': jnp.ones((1, dim), jnp.float32),
            'ln2_b': jnp.zeros((1, dim), jnp.float32),
            'w1': nrm(lk[3], (dim, mlp_dim), dtype=bf16),
            'b1': nrm(lk[4], (1, mlp_dim)),
            'w2': nrm(lk[5], (mlp_dim, dim), dtype=bf16),
            'b2': jnp.zeros((1, dim), jnp.float32),
        })
    return params


if __name__ == "__main__":
    # Small config consistent with the module structure:
    # conv2 takes in_channel*2 channels, ViT dim=32, depth=3, 2 heads x 16.
    in_channel, dim, patch_size = 4, 32, 2
    heads, head_dim, mlp_dim, depth = 2, 16, 64, 3
    B, H, W = 2, 16, 16

    key = jax.random.PRNGKey(0)
    kx, kp = jax.random.split(key)
    x = jax.random.normal(kx, (B, in_channel * 2, H, W), jnp.float32)   # NCHW
    params = init_params(kp, in_channel, dim, heads, head_dim, mlp_dim, depth)

    fwd = jax.jit(functools.partial(mobilevit_attention, patch_size=patch_size,
                                    heads=heads, head_dim=head_dim, depth=depth))
    out = jax.block_until_ready(fwd(x, params))
    assert out.shape == (B, in_channel, H, W), out.shape
    assert bool(jnp.all(jnp.isfinite(out)))
    print("KERNEL_OK")
</pallas_src>

<mosaic_0001>
module attributes {stable_mosaic.version = 11 : i64} {
  func.func @_conv1x1_kernel(%arg0: i32, %arg1: memref<256x8xf32, #tpu.memory_space<vmem>>, %arg2: memref<8x32xbf16, #tpu.memory_space<vmem>>, %arg3: memref<1x32xf32, #tpu.memory_space<vmem>>, %arg4: memref<256x32xf32, #tpu.memory_space<vmem>>) attributes {dimension_semantics = [#tpu.dimension_semantics<parallel>], iteration_bounds = array<i64: 2>, scalar_prefetch = 0 : i64, scratch_operands = 0 : i64, tpu.core_type = #tpu.core_type<tc>, window_params = [{transform_indices = @transform_0, window_bounds = array<i64: 256, 8>}, {pipeline_mode = #tpu.pipeline_mode<synchronous>, transform_indices = @transform_1, window_bounds = array<i64: 8, 32>}, {pipeline_mode = #tpu.pipeline_mode<synchronous>, transform_indices = @transform_2, window_bounds = array<i64: 1, 32>}, {transform_indices = @transform_3, window_bounds = array<i64: 256, 32>}]} {
    %c0 = arith.constant 0 : index
    %c0_0 = arith.constant 0 : index
    %0 = vector.load %arg1[%c0, %c0_0] : memref<256x8xf32, #tpu.memory_space<vmem>>, vector<256x8xf32>
    %1 = arith.truncf %0 : vector<256x8xf32> to vector<256x8xbf16>
    %c0_1 = arith.constant 0 : index
    %c0_2 = arith.constant 0 : index
    %2 = vector.load %arg2[%c0_1, %c0_2] : memref<8x32xbf16, #tpu.memory_space<vmem>>, vector<8x32xbf16>
    %cst = arith.constant dense<0.000000e+00> : vector<256x32xf32>
    %3 = tpu.matmul %1, %2, %cst {dimension_numbers = #tpu.dot_dimension_numbers<[1], [0], [0], [1], [0, 0, 1, 1], [], []>} : vector<256x8xbf16>, vector<8x32xbf16>, vector<256x32xf32> -> vector<256x32xf32>
    %c0_3 = arith.constant 0 : index
    %c0_4 = arith.constant 0 : index
    %4 = vector.load %arg3[%c0_3, %c0_4] : memref<1x32xf32, #tpu.memory_space<vmem>>, vector<1x32xf32>
    %5 = vector.broadcast %4 : vector<1x32xf32> to vector<256x32xf32>
    %6 = arith.addf %3, %5 : vector<256x32xf32>
    %c0_5 = arith.constant 0 : index
    %c0_6 = arith.constant 0 : index
    %7 = vector.load %arg4[%c0_5, %c0_6] : memref<256x32xf32, #tpu.memory_space<vmem>>, vector<256x32xf32>
    tpu.vector_store %arg4[%c0_5, %c0_6], %6 {strides = array<i32>} : memref<256x32xf32, #tpu.memory_space<vmem>>, vector<256x32xf32>,
    return
  }
  func.func @transform_0(%arg0: i32) -> (i32, i32) {
    %c0_i32 = arith.constant 0 : i32
    %c0_i32_0 = arith.constant 0 : i32
    return %arg0, %c0_i32 : i32, i32
  }
  func.func @transform_1(%arg0: i32) -> (i32, i32) {
    %c0_i32 = arith.constant 0 : i32
    %c0_i32_0 = arith.constant 0 : i32
    %c0_i32_1 = arith.constant 0 : i32
    return %c0_i32, %c0_i32_0 : i32, i32
  }
  func.func @transform_2(%arg0: i32) -> (i32, i32) {
    %c0_i32 = arith.constant 0 : i32
    %c0_i32_0 = arith.constant 0 : i32
    %c0_i32_1 = arith.constant 0 : i32
    return %c0_i32, %c0_i32_0 : i32, i32
  }
  func.func @transform_3(%arg0: i32) -> (i32, i32) {
    %c0_i32 = arith.constant 0 : i32
    %c0_i32_0 = arith.constant 0 : i32
    return %arg0, %c0_i32 : i32, i32
  }
}

module attributes {stable_mosaic.version = 11 : i64} {
  func.func @_transformer_layer_kernel(%arg0: i32, %arg1: memref<4x64x32xf32, #tpu.memory_space<vmem>>, %arg2: memref<1x32xf32, #tpu.memory_space<vmem>>, %arg3: memref<1x32xf32, #tpu.memory_space<vmem>>, %arg4: memref<32x96xbf16, #tpu.memory_space<vmem>>, %arg5: memref<32x32xbf16, #tpu.memory_space<vmem>>, %arg6: memref<1x32xf32, #tpu.memory_space<vmem>>, %arg7: memref<1x32xf32, #tpu.memory_space<vmem>>, %arg8: memref<1x32xf32, #tpu.memory_space<vmem>>, %arg9: memref<32x64xbf16, #tpu.memory_space<vmem>>, %arg10: memref<1x64xf32, #tpu.memory_space<vmem>>, %arg11: memref<64x32xbf16, #tpu.memory_space<vmem>>, %arg12: memref<1x32xf32, #tpu.memory_space<vmem>>, %arg13: memref<4x64x32xf32, #tpu.memory_space<vmem>>) attributes {dimension_semantics = [#tpu.dimension_semantics<parallel>], iteration_bounds = array<i64: 2>, scalar_prefetch = 0 : i64, scratch_operands = 0 : i64, tpu.core_type = #tpu.core_type<tc>, window_params = [{transform_indices = @transform_0, window_bounds = array<i64: 4, 64, 32>}, {pipeline_mode = #tpu.pipeline_mode<synchronous>, transform_indices = @transform_1, window_bounds = array<i64: 1, 32>}, {pipeline_mode = #tpu.pipeline_mode<synchronous>, transform_indices = @transform_2, window_bounds = array<i64: 1, 32>}, {pipeline_mode = #tpu.pipeline_mode<synchronous>, transform_indices = @transform_3, window_bounds = array<i64: 32, 96>}, {pipeline_mode = #tpu.pipeline_mode<synchronous>, transform_indices = @transform_4, window_bounds = array<i64: 32, 32>}, {pipeline_mode = #tpu.pipeline_mode<synchronous>, transform_indices = @transform_5, window_bounds = array<i64: 1, 32>}, {pipeline_mode = #tpu.pipeline_mode<synchronous>, transform_indices = @transform_6, window_bounds = array<i64: 1, 32>}, {pipeline_mode = #tpu.pipeline_mode<synchronous>, transform_indices = @transform_7, window_bounds = array<i64: 1, 32>}, {pipeline_mode = #tpu.pipeline_mode<synchronous>, transform_indices = @transform_8, window_bounds = array<i64: 32, 64>}, {pipeline_mode = #tpu.pipeline_mode<synchronous>, transform_indices = @transform_9, window_bounds = array<i64: 1, 64>}, {pipeline_mode = #tpu.pipeline_mode<synchronous>, transform_indices = @transform_10, window_bounds = array<i64: 64, 32>}, {pipeline_mode = #tpu.pipeline_mode<synchronous>, transform_indices = @transform_11, window_bounds = array<i64: 1, 32>}, {transform_indices = @transform_12, window_bounds = array<i64: 4, 64, 32>}]} {
    %c0 = arith.constant 0 : index
    %c0_0 = arith.constant 0 : index
    %c0_1 = arith.constant 0 : index
    %0 = vector.load %arg1[%c0, %c0_0, %c0_1] : memref<4x64x32xf32, #tpu.memory_space<vmem>>, vector<4x64x32xf32>
    %1 = vector.shape_cast %0 : vector<4x64x32xf32> to vector<256x32xf32>
    %c0_2 = arith.constant 0 : index
    %c0_3 = arith.constant 0 : index
    %2 = vector.load %arg2[%c0_2, %c0_3] : memref<1x32xf32, #tpu.memory_space<vmem>>, vector<1x32xf32>
    %c0_4 = arith.constant 0 : index
    %c0_5 = arith.constant 0 : index
    %3 = vector.load %arg3[%c0_4, %c0_5] : memref<1x32xf32, #tpu.memory_space<vmem>>, vector<1x32xf32>
    %cst = arith.constant dense<0.000000e+00> : vector<256xf32>
    %4 = vector.multi_reduction <add>, %1, %cst [1] : vector<256x32xf32> to vector<256xf32>
    %5 = vector.shape_cast %4 : vector<256xf32> to vector<256x1xf32>
    %cst_6 = arith.constant 3.200000e+01 : f32
    %6 = vector.broadcast %cst_6 : f32 to vector<256x1xf32>
    %7 = arith.divf %5, %6 : vector<256x1xf32>
    %8 = vector.broadcast %7 : vector<256x1xf32> to vector<256x32xf32>
    %9 = arith.subf %1, %8 : vector<256x32xf32>
    %10 = arith.mulf %9, %9 : vector<256x32xf32>
    %cst_7 = arith.constant dense<0.000000e+00> : vector<256xf32>
    %11 = vector.multi_reduction <add>, %10, %cst_7 [1] : vector<256x32xf32> to vector<256xf32>
    %12 = vector.shape_cast %11 : vector<256xf32> to vector<256x1xf32>
    %cst_8 = arith.constant 3.200000e+01 : f32
    %13 = vector.broadcast %cst_8 : f32 to vector<256x1xf32>
    %14 = arith.divf %12, %13 : vector<256x1xf32>
    %15 = vector.broadcast %7 : vector<256x1xf32> to vector<256x32xf32>
    %16 = arith.subf %1, %15 : vector<256x32xf32>
    %cst_9 = arith.constant 9.99999974E-6 : f32
    %17 = vector.broadcast %cst_9 : f32 to vector<256x1xf32>
    %18 = arith.addf %14, %17 : vector<256x1xf32>
    %19 = math.rsqrt %18 : vector<256x1xf32>
    %20 = vector.broadcast %19 : vector<256x1xf32> to vector<256x32xf32>
    %21 = arith.mulf %16, %20 : vector<256x32xf32>
    %22 = vector.broadcast %2 : vector<1x32xf32> to vector<256x32xf32>
    %23 = arith.mulf %21, %22 : vector<256x32xf32>
    %24 = vector.broadcast %3 : vector<1x32xf32> to vector<256x32xf32>
    %25 = arith.addf %23, %24 : vector<256x32xf32>
    %26 = arith.truncf %25 : vector<256x32xf32> to vector<256x32xbf16>
    %c0_10 = arith.constant 0 : index
    %c0_11 = arith.constant 0 : index
    %27 = vector.load %arg4[%c0_10, %c0_11] : memref<32x96xbf16, #tpu.memory_space<vmem>>, vector<32x96xbf16>
    %cst_12 = arith.constant dense<0.000000e+00> : vector<256x96xf32>
    %28 = tpu.matmul %26, %27, %cst_12 {dimension_numbers = #tpu.dot_dimension_numbers<[1], [0], [0], [1], [0, 0, 1, 1], [], []>} : vector<256x32xbf16>, vector<32x96xbf16>, vector<256x96xf32> -> vector<256x96xf32>
    %29 = vector.extract_strided_slice %28 {offsets = [0, 0], sizes = [256, 16], strides = [1, 1]} : vector<256x96xf32> to vector<256x16xf32>
    %30 = vector.shape_cast %29 : vector<256x16xf32> to vector<4x64x16xf32>
    %31 = vector.extract_strided_slice %28 {offsets = [0, 32], sizes = [256, 16], strides = [1, 1]} : vector<256x96xf32> to vector<256x16xf32>
    %32 = vector.shape_cast %31 : vector<256x16xf32> to vector<4x64x16xf32>
    %33 = vector.extract_strided_slice %28 {offsets = [0, 64], sizes = [256, 16], strides = [1, 1]} : vector<256x96xf32> to vector<256x16xf32>
    %34 = vector.shape_cast %33 : vector<256x16xf32> to vector<4x64x16xf32>
    %35 = arith.truncf %30 : vector<4x64x16xf32> to vector<4x64x16xbf16>
    %36 = arith.truncf %32 : vector<4x64x16xf32> to vector<4x64x16xbf16>
    "tpu.trace_start"() <{level = 10 : i32, message = "gnd,gmd->gnm"}> : () -> ()
    %cst_13 = arith.constant dense<0.000000e+00> : vector<4x64x64xf32>
    %37 = tpu.matmul %35, %36, %cst_13 {dimension_numbers = #tpu.dot_dimension_numbers<[2], [2], [1], [1], [0, 0, 0, 1, 1, 1], [0], [0]>} : vector<4x64x16xbf16>, vector<4x64x16xbf16>, vector<4x64x64xf32> -> vector<4x64x64xf32>
    "tpu.trace_stop"() : () -> ()
    %cst_14 = arith.constant 2.500000e-01 : f32
    %38 = vector.broadcast %cst_14 : f32 to vector<4x64x64xf32>
    %39 = arith.mulf %37, %38 : vector<4x64x64xf32>
    %cst_15 = arith.constant dense<0xFF800000> : vector<4x64xf32>
    %40 = vector.multi_reduction <maximumf>, %39, %cst_15 [2] : vector<4x64x64xf32> to vector<4x64xf32>
    %41 = vector.shape_cast %40 : vector<4x64xf32> to vector<4x64x1xf32>
    %42 = vector.broadcast %41 : vector<4x64x1xf32> to vector<4x64x64xf32>
    %43 = arith.subf %39, %42 : vector<4x64x64xf32>
    %44 = math.exp %43 : vector<4x64x64xf32>
    %cst_16 = arith.constant dense<0.000000e+00> : vector<4x64xf32>
    %45 = vector.multi_reduction <add>, %44, %cst_16 [2] : vector<4x64x64xf32> to vector<4x64xf32>
    %46 = vector.shape_cast %45 : vector<4x64xf32> to vector<4x64x1xf32>
    %47 = tpu.reciprocal %46 {approx = true} : vector<4x64x1xf32> -> vector<4x64x1xf32>
    %48 = vector.broadcast %47 : vector<4x64x1xf32> to vector<4x64x64xf32>
    %49 = arith.mulf %44, %48 : vector<4x64x64xf32>
    %50 = arith.truncf %49 : vector<4x64x64xf32> to vector<4x64x64xbf16>
    %51 = arith.truncf %34 : vector<4x64x16xf32> to vector<4x64x16xbf16>
    "tpu.trace_start"() <{level = 10 : i32, message = "gnm,gmd->gnd"}> : () -> ()
    %cst_17 = arith.constant dense<0.000000e+00> : vector<4x64x16xf32>
    %52 = tpu.matmul %50, %51, %cst_17 {dimension_numbers = #tpu.dot_dimension_numbers<[2], [1], [1], [2], [0, 0, 0, 1, 1, 2], [0], [0]>} : vector<4x64x64xbf16>, vector<4x64x16xbf16>, vector<4x64x16xf32> -> vector<4x64x16xf32>
    "tpu.trace_stop"() : () -> ()
    %53 = vector.shape_cast %52 : vector<4x64x16xf32> to vector<256x16xf32>
    %54 = arith.truncf %53 : vector<256x16xf32> to vector<256x16xbf16>
    %c0_18 = arith.constant 0 : index
    %c0_19 = arith.constant 0 : index
    %55 = vector.load %arg5[%c0_18, %c0_19] : memref<32x32xbf16, #tpu.memory_space<vmem>>, vector<16x32xbf16>
    %cst_20 = arith.constant dense<0.000000e+00> : vector<256x32xf32>
    %56 = tpu.matmul %54, %55, %cst_20 {dimension_numbers = #tpu.dot_dimension_numbers<[1], [0], [0], [1], [0, 0, 1, 1], [], []>} : vector<256x16xbf16>, vector<16x32xbf16>, vector<256x32xf32> -> vector<256x32xf32>
    %57 = vector.extract_strided_slice %28 {offsets = [0, 16], sizes = [256, 16], strides = [1, 1]} : vector<256x96xf32> to vector<256x16xf32>
    %58 = vector.shape_cast %57 : vector<256x16xf32> to vector<4x64x16xf32>
    %59 = vector.extract_strided_slice %28 {offsets = [0, 48], sizes = [256, 16], strides = [1, 1]} : vector<256x96xf32> to vector<256x16xf32>
    %60 = vector.shape_cast %59 : vector<256x16xf32> to vector<4x64x16xf32>
    %61 = vector.extract_strided_slice %28 {offsets = [0, 80], sizes = [256, 16], strides = [1, 1]} : vector<256x96xf32> to vector<256x16xf32>
    %62 = vector.shape_cast %61 : vector<256x16xf32> to vector<4x64x16xf32>
    %63 = arith.truncf %58 : vector<4x64x16xf32> to vector<4x64x16xbf16>
    %64 = arith.truncf %60 : vector<4x64x16xf32> to vector<4x64x16xbf16>
    "tpu.trace_start"() <{level = 10 : i32, message = "gnd,gmd->gnm"}> : () -> ()
    %cst_21 = arith.constant dense<0.000000e+00> : vector<4x64x64xf32>
    %65 = tpu.matmul %63, %64, %cst_21 {dimension_numbers = #tpu.dot_dimension_numbers<[2], [2], [1], [1], [0, 0, 0, 1, 1, 1], [0], [0]>} : vector<4x64x16xbf16>, vector<4x64x16xbf16>, vector<4x64x64xf32> -> vector<4x64x64xf32>
    "tpu.trace_stop"() : () -> ()
    %cst_22 = arith.constant 2.500000e-01 : f32
    %66 = vector.broadcast %cst_22 : f32 to vector<4x64x64xf32>
    %67 = arith.mulf %65, %66 : vector<4x64x64xf32>
    %cst_23 = arith.constant dense<0xFF800000> : vector<4x64xf32>
    %68 = vector.multi_reduction <maximumf>, %67, %cst_23 [2] : vector<4x64x64xf32> to vector<4x64xf32>
    %69 = vector.shape_cast %68 : vector<4x64xf32> to vector<4x64x1xf32>
    %70 = vector.broadcast %69 : vector<4x64x1xf32> to vector<4x64x64xf32>
    %71 = arith.subf %67, %70 : vector<4x64x64xf32>
    %72 = math.exp %71 : vector<4x64x64xf32>
    %cst_24 = arith.constant dense<0.000000e+00> : vector<4x64xf32>
    %73 = vector.multi_reduction <add>, %72, %cst_24 [2] : vector<4x64x64xf32> to vector<4x64xf32>
    %74 = vector.shape_cast %73 : vector<4x64xf32> to vector<4x64x1xf32>
    %75 = tpu.reciprocal %74 {approx = true} : vector<4x64x1xf32> -> vector<4x64x1xf32>
    %76 = vector.broadcast %75 : vector<4x64x1xf32> to vector<4x64x64xf32>
    %77 = arith.mulf %72, %76 : vector<4x64x64xf32>
    %78 = arith.truncf %77 : vector<4x64x64xf32> to vector<4x64x64xbf16>
    %79 = arith.truncf %62 : vector<4x64x16xf32> to vector<4x64x16xbf16>
    "tpu.trace_start"() <{level = 10 : i32, message = "gnm,gmd->gnd"}> : () -> ()
    %cst_25 = arith.constant dense<0.000000e+00> : vector<4x64x16xf32>
    %80 = tpu.matmul %78, %79, %cst_25 {dimension_numbers = #tpu.dot_dimension_numbers<[2], [1], [1], [2], [0, 0, 0, 1, 1, 2], [0], [0]>} : vector<4x64x64xbf16>, vector<4x64x16xbf16>, vector<4x64x16xf32> -> vector<4x64x16xf32>
    "tpu.trace_stop"() : () -> ()
    %81 = vector.shape_cast %80 : vector<4x64x16xf32> to vector<256x16xf32>
    %82 = arith.truncf %81 : vector<256x16xf32> to vector<256x16xbf16>
    %c16 = arith.constant 16 : index
    %c0_26 = arith.constant 0 : index
    %83 = vector.load %arg5[%c16, %c0_26] : memref<32x32xbf16, #tpu.memory_space<vmem>>, vector<16x32xbf16>
    %cst_27 = arith.constant dense<0.000000e+00> : vector<256x32xf32>
    %84 = tpu.matmul %82, %83, %cst_27 {dimension_numbers = #tpu.dot_dimension_numbers<[1], [0], [0], [1], [0, 0, 1, 1], [], []>} : vector<256x16xbf16>, vector<16x32xbf16>, vector<256x32xf32> -> vector<256x32xf32>
    %85 = arith.addf %56, %84 : vector<256x32xf32>
    %86 = arith.addf %1, %85 : vector<256x32xf32>
    %c0_28 = arith.constant 0 : index
    %c0_29 = arith.constant 0 : index
    %87 = vector.load %arg6[%c0_28, %c0_29] : memref<1x32xf32, #tpu.memory_space<vmem>>, vector<1x32xf32>
    %88 = vector.broadcast %87 : vector<1x32xf32> to vector<256x32xf32>
    %89 = arith.addf %86, %88 : vector<256x32xf32>
    %c0_30 = arith.constant 0 : index
    %c0_31 = arith.constant 0 : index
    %90 = vector.load %arg7[%c0_30, %c0_31] : memref<1x32xf32, #tpu.memory_space<vmem>>, vector<1x32xf32>
    %c0_32 = arith.constant 0 : index
    %c0_33 = arith.constant 0 : index
    %91 = vector.load %arg8[%c0_32, %c0_33] : memref<1x32xf32, #tpu.memory_space<vmem>>, vector<1x32xf32>
    %cst_34 = arith.constant dense<0.000000e+00> : vector<256xf32>
    %92 = vector.multi_reduction <add>, %89, %cst_34 [1] : vector<256x32xf32> to vector<256xf32>
    %93 = vector.shape_cast %92 : vector<256xf32> to vector<256x1xf32>
    %cst_35 = arith.constant 3.200000e+01 : f32
    %94 = vector.broadcast %cst_35 : f32 to vector<256x1xf32>
    %95 = arith.divf %93, %94 : vector<256x1xf32>
    %96 = vector.broadcast %95 : vector<256x1xf32> to vector<256x32xf32>
    %97 = arith.subf %89, %96 : vector<256x32xf32>
    %98 = arith.mulf %97, %97 : vector<256x32xf32>
    %cst_36 = arith.constant dense<0.000000e+00> : vector<256xf32>
    %99 = vector.multi_reduction <add>, %98, %cst_36 [1] : vector<256x32xf32> to vector<256xf32>
    %100 = vector.shape_cast %99 : vector<256xf32> to vector<256x1xf32>
    %cst_37 = arith.constant 3.200000e+01 : f32
    %101 = vector.broadcast %cst_37 : f32 to vector<256x1xf32>
    %102 = arith.divf %100, %101 : vector<256x1xf32>
    %103 = vector.broadcast %95 : vector<256x1xf32> to vector<256x32xf32>
    %104 = arith.subf %89, %103 : vector<256x32xf32>
    %cst_38 = arith.constant 9.99999974E-6 : f32
    %105 = vector.broadcast %cst_38 : f32 to vector<256x1xf32>
    %106 = arith.addf %102, %105 : vector<256x1xf32>
    %107 = math.rsqrt %106 : vector<256x1xf32>
    %108 = vector.broadcast %107 : vector<256x1xf32> to vector<256x32xf32>
    %109 = arith.mulf %104, %108 : vector<256x32xf32>
    %110 = vector.broadcast %90 : vector<1x32xf32> to vector<256x32xf32>
    %111 = arith.mulf %109, %110 : vector<256x32xf32>
    %112 = vector.broadcast %91 : vector<1x32xf32> to vector<256x32xf32>
    %113 = arith.addf %111, %112 : vector<256x32xf32>
    %114 = arith.truncf %113 : vector<256x32xf32> to vector<256x32xbf16>
    %c0_39 = arith.constant 0 : index
    %c0_40 = arith.constant 0 : index
    %115 = vector.load %arg9[%c0_39, %c0_40] : memref<32x64xbf16, #tpu.memory_space<vmem>>, vector<32x64xbf16>
    %cst_41 = arith.constant dense<0.000000e+00> : vector<256x64xf32>
    %116 = tpu.matmul %114, %115, %cst_41 {dimension_numbers = #tpu.dot_dimension_numbers<[1], [0], [0], [1], [0, 0, 1, 1], [], []>} : vector<256x32xbf16>, vector<32x64xbf16>, vector<256x64xf32> -> vector<256x64xf32>
    %c0_42 = arith.constant 0 : index
    %c0_43 = arith.constant 0 : index
    %117 = vector.load %arg10[%c0_42, %c0_43] : memref<1x64xf32, #tpu.memory_space<vmem>>, vector<1x64xf32>
    %118 = vector.broadcast %117 : vector<1x64xf32> to vector<256x64xf32>
    %119 = arith.addf %116, %118 : vector<256x64xf32>
    %120 = arith.negf %119 : vector<256x64xf32>
    %121 = math.exp %120 : vector<256x64xf32>
    %cst_44 = arith.constant 1.000000e+00 : f32
    %122 = vector.broadcast %cst_44 : f32 to vector<256x64xf32>
    %123 = arith.addf %122, %121 : vector<256x64xf32>
    %124 = arith.divf %122, %123 : vector<256x64xf32>
    %125 = arith.mulf %119, %124 : vector<256x64xf32>
    %126 = arith.truncf %125 : vector<256x64xf32> to vector<256x64xbf16>
    %c0_45 = arith.constant 0 : index
    %c0_46 = arith.constant 0 : index
    %127 = vector.load %arg11[%c0_45, %c0_46] : memref<64x32xbf16, #tpu.memory_space<vmem>>, vector<64x32xbf16>
    %cst_47 = arith.constant dense<0.000000e+00> : vector<256x32xf32>
    %128 = tpu.matmul %126, %127, %cst_47 {dimension_numbers = #tpu.dot_dimension_numbers<[1], [0], [0], [1], [0, 0, 1, 1], [], []>} : vector<256x64xbf16>, vector<64x32xbf16>, vector<256x32xf32> -> vector<256x32xf32>
    %c0_48 = arith.constant 0 : index
    %c0_49 = arith.constant 0 : index
    %129 = vector.load %arg12[%c0_48, %c0_49] : memref<1x32xf32, #tpu.memory_space<vmem>>, vector<1x32xf32>
    %130 = vector.broadcast %129 : vector<1x32xf32> to vector<256x32xf32>
    %131 = arith.addf %128, %130 : vector<256x32xf32>
    %132 = arith.addf %89, %131 : vector<256x32xf32>
    %133 = vector.shape_cast %132 : vector<256x32xf32> to vector<4x64x32xf32>
    %c0_50 = arith.constant 0 : index
    %c0_51 = arith.constant 0 : index
    %c0_52 = arith.constant 0 : index
    %134 = vector.load %arg13[%c0_50, %c0_51, %c0_52] : memref<4x64x32xf32, #tpu.memory_space<vmem>>, vector<4x64x32xf32>
    tpu.vector_store %arg13[%c0_50, %c0_51, %c0_52], %133 {strides = array<i32>} : memref<4x64x32xf32, #tpu.memory_space<vmem>>, vector<4x64x32xf32>,
    return
  }
  func.func @transform_0(%arg0: i32) -> (i32, i32, i32) {
    %c0_i32 = arith.constant 0 : i32
    %c0_i32_0 = arith.constant 0 : i32
    %c0_i32_1 = arith.constant 0 : i32
    return %arg0, %c0_i32, %c0_i32_0 : i32, i32, i32
  }
  func.func @transform_1(%arg0: i32) -> (i32, i32) {
    %c0_i32 = arith.constant 0 : i32
    %c0_i32_0 = arith.constant 0 : i32
    %c0_i32_1 = arith.constant 0 : i32
    return %c0_i32, %c0_i32_0 : i32, i32
  }
  func.func @transform_2(%arg0: i32) -> (i32, i32) {
    %c0_i32 = arith.constant 0 : i32
    %c0_i32_0 = arith.constant 0 : i32
    %c0_i32_1 = arith.constant 0 : i32
    return %c0_i32, %c0_i32_0 : i32, i32
  }
  func.func @transform_3(%arg0: i32) -> (i32, i32) {
    %c0_i32 = arith.constant 0 : i32
    %c0_i32_0 = arith.constant 0 : i32
    %c0_i32_1 = arith.constant 0 : i32
    return %c0_i32, %c0_i32_0 : i32, i32
  }
  func.func @transform_4(%arg0: i32) -> (i32, i32) {
    %c0_i32 = arith.constant 0 : i32
    %c0_i32_0 = arith.constant 0 : i32
    %c0_i32_1 = arith.constant 0 : i32
    return %c0_i32, %c0_i32_0 : i32, i32
  }
  func.func @transform_5(%arg0: i32) -> (i32, i32) {
    %c0_i32 = arith.constant 0 : i32
    %c0_i32_0 = arith.constant 0 : i32
    %c0_i32_1 = arith.constant 0 : i32
    return %c0_i32, %c0_i32_0 : i32, i32
  }
  func.func @transform_6(%arg0: i32) -> (i32, i32) {
    %c0_i32 = arith.constant 0 : i32
    %c0_i32_0 = arith.constant 0 : i32
    %c0_i32_1 = arith.constant 0 : i32
    return %c0_i32, %c0_i32_0 : i32, i32
  }
  func.func @transform_7(%arg0: i32) -> (i32, i32) {
    %c0_i32 = arith.constant 0 : i32
    %c0_i32_0 = arith.constant 0 : i32
    %c0_i32_1 = arith.constant 0 : i32
    return %c0_i32, %c0_i32_0 : i32, i32
  }
  func.func @transform_8(%arg0: i32) -> (i32, i32) {
    %c0_i32 = arith.constant 0 : i32
    %c0_i32_0 = arith.constant 0 : i32
    %c0_i32_1 = arith.constant 0 : i32
    return %c0_i32, %c0_i32_0 : i32, i32
  }
  func.func @transform_9(%arg0: i32) -> (i32, i32) {
    %c0_i32 = arith.constant 0 : i32
    %c0_i32_0 = arith.constant 0 : i32
    %c0_i32_1 = arith.constant 0 : i32
    return %c0_i32, %c0_i32_0 : i32, i32
  }
  func.func @transform_10(%arg0: i32) -> (i32, i32) {
    %c0_i32 = arith.constant 0 : i32
    %c0_i32_0 = arith.constant 0 : i32
    %c0_i32_1 = arith.constant 0 : i32
    return %c0_i32, %c0_i32_0 : i32, i32
  }
  func.func @transform_11(%arg0: i32) -> (i32, i32) {
    %c0_i32 = arith.constant 0 : i32
    %c0_i32_0 = arith.constant 0 : i32
    %c0_i32_1 = arith.constant 0 : i32
    return %c0_i32, %c0_i32_0 : i32, i32
  }
  func.func @transform_12(%arg0: i32) -> (i32, i32, i32) {
    %c0_i32 = arith.constant 0 : i32
    %c0_i32_0 = arith.constant 0 : i32
    %c0_i32_1 = arith.constant 0 : i32
    return %arg0, %c0_i32, %c0_i32_0 : i32, i32, i32
  }
}

module attributes {stable_mosaic.version = 11 : i64} {
  func.func @_conv1x1_kernel(%arg0: i32, %arg1: memref<256x32xf32, #tpu.memory_space<vmem>>, %arg2: memref<32x4xbf16, #tpu.memory_space<vmem>>, %arg3: memref<1x4xf32, #tpu.memory_space<vmem>>, %arg4: memref<256x4xf32, #tpu.memory_space<vmem>>) attributes {dimension_semantics = [#tpu.dimension_semantics<parallel>], iteration_bounds = array<i64: 2>, scalar_prefetch = 0 : i64, scratch_operands = 0 : i64, tpu.core_type = #tpu.core_type<tc>, window_params = [{transform_indices = @transform_0, window_bounds = array<i64: 256, 32>}, {pipeline_mode = #tpu.pipeline_mode<synchronous>, transform_indices = @transform_1, window_bounds = array<i64: 32, 4>}, {pipeline_mode = #tpu.pipeline_mode<synchronous>, transform_indices = @transform_2, window_bounds = array<i64: 1, 4>}, {transform_indices = @transform_3, window_bounds = array<i64: 256, 4>}]} {
    %c0 = arith.constant 0 : index
    %c0_0 = arith.constant 0 : index
    %0 = vector.load %arg1[%c0, %c0_0] : memref<256x32xf32, #tpu.memory_space<vmem>>, vector<256x32xf32>
    %1 = arith.truncf %0 : vector<256x32xf32> to vector<256x32xbf16>
    %c0_1 = arith.constant 0 : index
    %c0_2 = arith.constant 0 : index
    %2 = vector.load %arg2[%c0_1, %c0_2] : memref<32x4xbf16, #tpu.memory_space<vmem>>, vector<32x4xbf16>
    %cst = arith.constant dense<0.000000e+00> : vector<256x4xf32>
    %3 = tpu.matmul %1, %2, %cst {dimension_numbers = #tpu.dot_dimension_numbers<[1], [0], [0], [1], [0, 0, 1, 1], [], []>} : vector<256x32xbf16>, vector<32x4xbf16>, vector<256x4xf32> -> vector<256x4xf32>
    %c0_3 = arith.constant 0 : index
    %c0_4 = arith.constant 0 : index
    %4 = vector.load %arg3[%c0_3, %c0_4] : memref<1x4xf32, #tpu.memory_space<vmem>>, vector<1x4xf32>
    %5 = vector.broadcast %4 : vector<1x4xf32> to vector<256x4xf32>
    %6 = arith.addf %3, %5 : vector<256x4xf32>
    %c0_5 = arith.constant 0 : index
    %c0_6 = arith.constant 0 : index
    %7 = vector.load %arg4[%c0_5, %c0_6] : memref<256x4xf32, #tpu.memory_space<vmem>>, vector<256x4xf32>
    tpu.vector_store %arg4[%c0_5, %c0_6], %6 {strides = array<i32>} : memref<256x4xf32, #tpu.memory_space<vmem>>, vector<256x4xf32>,
    return
  }
  func.func @transform_0(%arg0: i32) -> (i32, i32) {
    %c0_i32 = arith.constant 0 : i32
    %c0_i32_0 = arith.constant 0 : i32
    return %arg0, %c0_i32 : i32, i32
  }
  func.func @transform_1(%arg0: i32) -> (i32, i32) {
    %c0_i32 = arith.constant 0 : i32
    %c0_i32_0 = arith.constant 0 : i32
    %c0_i32_1 = arith.constant 0 : i32
    return %c0_i32, %c0_i32_0 : i32, i32
  }
  func.func @transform_2(%arg0: i32) -> (i32, i32) {
    %c0_i32 = arith.constant 0 : i32
    %c0_i32_0 = arith.constant 0 : i32
    %c0_i32_1 = arith.constant 0 : i32
    return %c0_i32, %c0_i32_0 : i32, i32
  }
  func.func @transform_3(%arg0: i32) -> (i32, i32) {
    %c0_i32 = arith.constant 0 : i32
    %c0_i32_0 = arith.constant 0 : i32
    return %arg0, %c0_i32 : i32, i32
  }
}

</mosaic_0001>

<llo_original>
// kernel: mobilevit_attention.5
$region0: #{mobilevit_attention.5}
  #allocation0 [shape = 'u32[]', space=smem, size = 0x4, offset = 0x4, fixed_abs, tag = 'smem constant byte address 0x4 - core index']
  #allocation1 [shape = 'u32[144,128]{1,0:T(1,128)}', space=vmem, size = 0x12000, scoped, tag = 'internal scratch']
  %s0 = inlined_call_operand.vmem [shape: f32[512,8], index: 0, kind: input, shape index: {}]
  %s1 = inlined_call_operand.vmem [shape: bf16[8,32], index: 1, kind: input, shape index: {}]
  %s2 = inlined_call_operand.vmem [shape: f32[1,32], index: 2, kind: input, shape index: {}]
  %s3 = inlined_call_operand.vmem [shape: f32[512,32], index: 3, kind: output, shape index: {}]
  %s4 = sld [smem:[#allocation0]]
  $region45: #{mobilevit_attention.5} parent=0
    _
  %s6 = ssub.s32 1, %s4
  %s7 = scalar_select 0, %s6, %s4
  loop: start=0, step=1, limit=4
  $region2: #{mobilevit_attention.5} parent=0 // loop_pre_header
    _
  $region3: #{mobilevit_attention.5} parent=0 // loop_header
    %s9 = sphi 0, %s13
    %p10 = scmp.ge.s32.totalorder %s9, 4
    %s19 = sphi 0, %s21
    %s22 = sphi 0, %s19
    %s23 = sphi 0, %s22
    %s39 = sphi 0, %s23
    %s43 = sphi 0, %s43
    %s45 = sphi 0, %s43
    %s46 = sphi 0, %s45
    %s60 = sphi 0, %s46
    %s64 = sphi 0, %s64
    %s66 = sphi 0, %s64
    %s67 = sphi 0, %s66
    %s81 = sphi 0, %s67
    %s87 = sphi 0, %s89
    %s90 = sphi 0, %s87
    %s91 = sphi 0, %s90
    %s107 = sphi 0, %s91
  $region4: #{mobilevit_attention.5} parent=0 // loop_header_branch
    %12 = sbr.rel (%p10) target = $region8
  $region5: #{mobilevit_attention.5} parent=0 // loop_body
    %s14 = ssub.s32 %s9, 1
    %s15 = ssub.s32 %s9, 2
    %s16 = sadd.s32 %s9, 1
    %s17 = ssub.s32 %s9, %s16
    %p18 = scmp.eq.s32.totalorder %s17, 0
    %s20 = sadd.s32 %s19, 1
    %s21 = scalar_select %p18, %s19, %s20
    %p24 = pneg %p18
    %p25 = scmp.eq.s32.totalorder %s9, 1
    %p26 = por %p24, %p25
    %p27 = scmp.ne.s32.totalorder %s19, %s22
    %p28 = scmp.eq.s32.totalorder %s9, 0
    %p29 = por %p27, %p28
    %p30 = scmp.ne.s32.totalorder %s19, %s22
    %p31 = scmp.eq.s32.totalorder %s14, 1
    %p32 = por %p30, %p31
    %p33 = scmp.ne.s32.totalorder %s22, %s23
    %p34 = scmp.eq.s32.totalorder %s14, 0
    %p35 = por %p33, %p34
    %p36 = scmp.ne.s32.totalorder %s22, %s23
    %p37 = scmp.eq.s32.totalorder %s15, 1
    %p38 = por %p36, %p37
    %p40 = scmp.ne.s32.totalorder %s23, %s39
    %p41 = scmp.eq.s32.totalorder %s15, 0
    %p42 = por %p40, %p41
    %s44 = sadd.s32 %s43, 1
    %p47 = scmp.eq.s32.totalorder %s9, 1
    %p48 = scmp.ne.s32.totalorder %s43, %s45
    %p49 = scmp.eq.s32.totalorder %s9, 0
    %p50 = por %p48, %p49
    %p51 = scmp.ne.s32.totalorder %s43, %s45
    %p52 = scmp.eq.s32.totalorder %s14, 1
    %p53 = por %p51, %p52
    %p54 = scmp.ne.s32.totalorder %s45, %s46
    %p55 = scmp.eq.s32.totalorder %s14, 0
    %p56 = por %p54, %p55
    %p57 = scmp.ne.s32.totalorder %s45, %s46
    %p58 = scmp.eq.s32.totalorder %s15, 1
    %p59 = por %p57, %p58
    %p61 = scmp.ne.s32.totalorder %s46, %s60
    %p62 = scmp.eq.s32.totalorder %s15, 0
    %p63 = por %p61, %p62
    %s65 = sadd.s32 %s64, 1
    %p68 = scmp.eq.s32.totalorder %s9, 1
    %p69 = scmp.ne.s32.totalorder %s64, %s66
    %p70 = scmp.eq.s32.totalorder %s9, 0
    %p71 = por %p69, %p70
    %p72 = scmp.ne.s32.totalorder %s64, %s66
    %p73 = scmp.eq.s32.totalorder %s14, 1
    %p74 = por %p72, %p73
    %p75 = scmp.ne.s32.totalorder %s66, %s67
    %p76 = scmp.eq.s32.totalorder %s14, 0
    %p77 = por %p75, %p76
    %p78 = scmp.ne.s32.totalorder %s66, %s67
    %p79 = scmp.eq.s32.totalorder %s15, 1
    %p80 = por %p78, %p79
    %p82 = scmp.ne.s32.totalorder %s67, %s81
    %p83 = scmp.eq.s32.totalorder %s15, 0
    %p84 = por %p82, %p83
    %s85 = ssub.s32 %s9, %s16
    %p86 = scmp.eq.s32.totalorder %s85, 0
    %s88 = sadd.s32 %s87, 1
    %s89 = scalar_select %p86, %s87, %s88
    %p92 = pneg %p86
    %p93 = scmp.eq.s32.totalorder %s9, 1
    %p94 = por %p92, %p93
    %p95 = scmp.ne.s32.totalorder %s87, %s90
    %p96 = scmp.eq.s32.totalorder %s9, 0
    %p97 = por %p95, %p96
    %p98 = scmp.ne.s32.totalorder %s87, %s90
    %p99 = scmp.eq.s32.totalorder %s14, 1
    %p100 = por %p98, %p99
    %p101 = scmp.ne.s32.totalorder %s90, %s91
    %p102 = scmp.eq.s32.totalorder %s14, 0
    %p103 = por %p101, %p102
    %p104 = scmp.ne.s32.totalorder %s90, %s91
    %p105 = scmp.eq.s32.totalorder %s15, 1
    %p106 = por %p104, %p105
    %p108 = scmp.ne.s32.totalorder %s91, %s107
    %p109 = scmp.eq.s32.totalorder %s15, 0
    %p110 = por %p108, %p109
    %p111 = scmp.le.s32.totalorder 1, %s9
    %p112 = scmp.lt.s32.totalorder %s9, 3
    %p113 = pnand %p111, %p112
    %p114 = pneg %p113
    // Predicated region
    $region9: #{mobilevit_attention.5} parent=5 // pred_check
      _
    $region10: #{mobilevit_attention.5} parent=5 // pred_check_branch
      %116 = sbr.rel (%p113) target = $region12
    $region11: #{mobilevit_attention.5} parent=5 // pred_region
      %s117 = ssub.s32 %s9, 1
      // Predicated region
      $region13: #{mobilevit_attention.5} parent=11 // pred_check
        %p118 = pneg %p56
      $region14: #{mobilevit_attention.5} parent=11 // pred_check_branch
        %120 = sbr.rel (%p118) target = $region16
      $region15: #{mobilevit_attention.5} parent=11 // pred_region
        _
      $region16: #{mobilevit_attention.5} parent=11 // pred_fallthru
        _
      // Predicated region
      $region17: #{mobilevit_attention.5} parent=11 // pred_check
        %p121 = pneg %p77
      $region18: #{mobilevit_attention.5} parent=11 // pred_check_branch
        %123 = sbr.rel (%p121) target = $region20
      $region19: #{mobilevit_attention.5} parent=11 // pred_region
        _
      $region20: #{mobilevit_attention.5} parent=11 // pred_fallthru
        _
    $region12: #{mobilevit_attention.5} parent=5 // pred_fallthru
      _
    %p124 = scmp.lt.s32.totalorder %s9, 2
    // Predicated region
    $region21: #{mobilevit_attention.5} parent=5 // pred_check
      %p125 = pneg %p124
    $region22: #{mobilevit_attention.5} parent=5 // pred_check_branch
      %127 = sbr.rel (%p125) target = $region24
    $region23: #{mobilevit_attention.5} parent=5 // pred_region
      // Predicated region
      $region25: #{mobilevit_attention.5} parent=23 // pred_check
        %p128 = pneg %p29
      $region26: #{mobilevit_attention.5} parent=23 // pred_check_branch
        %130 = sbr.rel (%p128) target = $region28
      $region27: #{mobilevit_attention.5} parent=23 // pred_region
        %s131 = smul.u32 32, %s9
        %p132 = scmp.lt.s32.totalorder %s131, 63
        %s133 = scalar_select %p132, %s131, 63
        %s134 = smul.addr %s133, 8
        %s135 = scalar_lea.vmem %s0, %s134
        %s136 = smul.u32 32, %s9
      $region28: #{mobilevit_attention.5} parent=23 // pred_fallthru
        _
    $region24: #{mobilevit_attention.5} parent=5 // pred_fallthru
      _
    %p137 = scmp.le.s32.totalorder 1, %s9
    %p138 = scmp.lt.s32.totalorder %s9, 3
    %p139 = pnand %p137, %p138
    %p140 = pneg %p139
    // Predicated region
    $region29: #{mobilevit_attention.5} parent=5 // pred_check
      _
    $region30: #{mobilevit_attention.5} parent=5 // pred_check_branch
      %142 = sbr.rel (%p139) target = $region32
    $region31: #{mobilevit_attention.5} parent=5 // pred_region
      %s143 = ssub.s32 %s9, 1
      %s144 = smul.u32 32, %s14
      %p145 = scmp.lt.s32.totalorder %s144, 63
      %s146 = scalar_select %p145, %s144, 63
      %s147 = smul.addr %s146, 8
      %s148 = scalar_lea.vmem %s0, %s147
      %p149 = pneg %p35
      %p150 = pneg %p32
      %p151 = pneg %p56
      %p152 = pneg %p53
      %p153 = pneg %p77
      %p154 = pneg %p74
      %p155 = pneg %p103
      %p156 = pneg %p100
      %s157 = smul.u32 32, %s14
      %p158 = scmp.lt.s32.totalorder %s157, 63
      %s159 = scalar_select %p158, %s157, 63
      %s160 = smul.addr %s159, 8
      %s161 = scalar_lea.vmem %s3, %s160
      %s162 = smul.u32 32, %s14
      %p163 = scmp.lt.s32.totalorder %s162, 63
      %s164 = scalar_select %p163, %s162, 63
      %s165 = smul.addr %s164, 8
      %s166 = scalar_lea.vmem %s0, %s165
      %s167 = smul.u32 32, %s14
      %s168 = smul.u32 32, %s14
      %p169 = scmp.lt.s32.totalorder %s168, 63
      %s170 = scalar_select %p169, %s168, 63
      %s171 = smul.addr %s170, 8
      %s172 = scalar_lea.vmem %s3, %s171
      %s173 = smul.u32 32, %s14
      %v175 = vld [vmem:[%s166] sm:$0xff]
      %v176 = vld [vmem:[%s166 + $0x8] sm:$0xff]
      %v177 = vld [vmem:[%s166 + $0x10] sm:$0xff]
      %v178 = vld [vmem:[%s166 + $0x18] sm:$0xff]
      %v179 = vld [vmem:[%s166 + $0x20] sm:$0xff]
      %v180 = vld [vmem:[%s166 + $0x28] sm:$0xff]
      %v181 = vld [vmem:[%s166 + $0x30] sm:$0xff]
      %v182 = vld [vmem:[%s166 + $0x38] sm:$0xff]
      %v183 = vld [vmem:[%s166 + $0x40] sm:$0xff]
      %v184 = vld [vmem:[%s166 + $0x48] sm:$0xff]
      %v185 = vld [vmem:[%s166 + $0x50] sm:$0xff]
      %v186 = vld [vmem:[%s166 + $0x58] sm:$0xff]
      %v187 = vld [vmem:[%s166 + $0x60] sm:$0xff]
      %v188 = vld [vmem:[%s166 + $0x68] sm:$0xff]
      %v189 = vld [vmem:[%s166 + $0x70] sm:$0xff]
      %v190 = vld [vmem:[%s166 + $0x78] sm:$0xff]
      %v191 = vld [vmem:[%s166 + $0x80] sm:$0xff]
      %v192 = vld [vmem:[%s166 + $0x88] sm:$0xff]
      %v193 = vld [vmem:[%s166 + $0x90] sm:$0xff]
      %v194 = vld [vmem:[%s166 + $0x98] sm:$0xff]
      %v195 = vld [vmem:[%s166 + $0xa0] sm:$0xff]
      %v196 = vld [vmem:[%s166 + $0xa8] sm:$0xff]
      %v197 = vld [vmem:[%s166 + $0xb0] sm:$0xff]
      %v198 = vld [vmem:[%s166 + $0xb8] sm:$0xff]
      %v199 = vld [vmem:[%s166 + $0xc0] sm:$0xff]
      %v200 = vld [vmem:[%s166 + $0xc8] sm:$0xff]
      %v201 = vld [vmem:[%s166 + $0xd0] sm:$0xff]
      %v202 = vld [vmem:[%s166 + $0xd8] sm:$0xff]
      %v203 = vld [vmem:[%s166 + $0xe0] sm:$0xff]
      %v204 = vld [vmem:[%s166 + $0xe8] sm:$0xff]
      %v205 = vld [vmem:[%s166 + $0xf0] sm:$0xff]
      %v206 = vld [vmem:[%s166 + $0xf8] sm:$0xff]
      %v207 = vpack.c.bf16 %v176, %v175
      %v208 = vpack.c.bf16 %v178, %v177
      %v209 = vpack.c.bf16 %v180, %v179
      %v210 = vpack.c.bf16 %v182, %v181
      %v211 = vpack.c.bf16 %v184, %v183
      %v212 = vpack.c.bf16 %v186, %v185
      %v213 = vpack.c.bf16 %v188, %v187
      %v214 = vpack.c.bf16 %v190, %v189
      %v215 = vpack.c.bf16 %v192, %v191
      %v216 = vpack.c.bf16 %v194, %v193
      %v217 = vpack.c.bf16 %v196, %v195
      %v218 = vpack.c.bf16 %v198, %v197
      %v219 = vpack.c.bf16 %v200, %v199
      %v220 = vpack.c.bf16 %v202, %v201
      %v221 = vpack.c.bf16 %v204, %v203
      %v222 = vpack.c.bf16 %v206, %v205
      %v223 = vld [vmem:[%s1] sm:$0xf]
      %v224 = vld [vmem:[%s2] sm:$0x1]
      %v226 = vlaneseq
      %v227 = vshrl.u32 %v226, 7
      %v228 = vsub.s32 0, %v227
      %v229 = vrot.slane %v224, %v228
      %vm231 = vcmask 64512
      %v233 = vsel %vm231, %v207, 0
      %v236 = vsel %vm231, %v208, 0
      %v239 = vsel %vm231, %v209, 0
      %v242 = vsel %vm231, %v210, 0
      %v245 = vsel %vm231, %v211, 0
      %v248 = vsel %vm231, %v212, 0
      %v251 = vsel %vm231, %v213, 0
      %v254 = vsel %vm231, %v214, 0
      %v257 = vsel %vm231, %v215, 0
      %v260 = vsel %vm231, %v216, 0
      %v263 = vsel %vm231, %v217, 0
      %v266 = vsel %vm231, %v218, 0
      %v269 = vsel %vm231, %v219, 0
      %v272 = vsel %vm231, %v220, 0
      %v275 = vsel %vm231, %v221, 0
      %v278 = vsel %vm231, %v222, 0
      %vm280 = vcmask 1043456
      %v282 = vsel %vm280, %v223, 0
      %284 = vmatprep.subr.bf16.mxu0 0
      %285 = vmatpush1.bf16.msra.mxu0 0
      %286 = vmatprep.subr.bf16.mxu0 0
      %287 = vmatpush1.bf16.msra.mxu0 0
      %288 = vmatprep.subr.bf16.mxu0 0
      %289 = vmatpush1.bf16.msra.mxu0 0
      %290 = vmatprep.subr.bf16.mxu0 0
      %291 = vmatpush1.bf16.msra.mxu0 0
      %292 = vmatprep.subr.bf16.mxu0 0
      %293 = vmatpush1.bf16.msra.mxu0 0
      %294 = vmatprep.subr.bf16.mxu0 0
      %295 = vmatpush1.bf16.msra.mxu0 0
      %296 = vmatprep.subr.bf16.mxu0 0
      %297 = vmatpush1.bf16.msra.mxu0 0
      %298 = vmatprep.subr.bf16.mxu0 0
      %299 = vmatpush1.bf16.msra.mxu0 %v282
      %300 = vmatprep.subr.bf16.mxu0 0
      %301 = vmatpush2.bf16.msra.mxu0 0
      %302 = vmatprep.subr.bf16.mxu0 0
      %303 = vmatpush2.bf16.msra.mxu0 0
      %304 = vmatprep.subr.bf16.mxu0 0
      %305 = vmatpush2.bf16.msra.mxu0 0
      %306 = vmatprep.subr.bf16.mxu0 0
      %307 = vmatpush2.bf16.msra.mxu0 0
      %308 = vmatprep.subr.bf16.mxu0 0
      %309 = vmatpush2.bf16.msra.mxu0 0
      %310 = vmatprep.subr.bf16.mxu0 0
      %311 = vmatpush2.bf16.msra.mxu0 0
      %312 = vmatprep.subr.bf16.mxu0 0
      %313 = vmatpush2.bf16.msra.mxu0 0
      %314 = vmatprep.subr.bf16.mxu0 0
      %315 = vmatpush2.bf16.msra.mxu0 0
      %316 = vmatprep.mubr.bf16.mxu0 0
      %317 = vmatmul.mubr.bf16.gmra.mxu0 %v233
      %v318 = vpop.f32.mrf.mxu0
      %v319 = vadd.f32 %v229, %v318
      %v320 = vpop.f32.mrf.mxu0
      %v321 = vpop.f32.mrf.mxu0
      %v322 = vadd.f32 %v229, %v321
      %v323 = vpop.f32.mrf.mxu0
      %324 = vmatprep.mubr.bf16.mxu0 0
      %325 = vmatmul.mubr.bf16.gmra.mxu0 %v236
      %v326 = vpop.f32.mrf.mxu0
      %v327 = vadd.f32 %v229, %v326
      %v328 = vpop.f32.mrf.mxu0
      %v329 = vpop.f32.mrf.mxu0
      %v330 = vadd.f32 %v229, %v329
      %v331 = vpop.f32.mrf.mxu0
      %332 = vmatprep.mubr.bf16.mxu0 0
      %333 = vmatmul.mubr.bf16.gmra.mxu0 %v239
      %v334 = vpop.f32.mrf.mxu0
      %v335 = vadd.f32 %v229, %v334
      %v336 = vpop.f32.mrf.mxu0
      %v337 = vpop.f32.mrf.mxu0
      %v338 = vadd.f32 %v229, %v337
      %v339 = vpop.f32.mrf.mxu0
      %340 = vmatprep.mubr.bf16.mxu0 0
      %341 = vmatmul.mubr.bf16.gmra.mxu0 %v242
      %v342 = vpop.f32.mrf.mxu0
      %v343 = vadd.f32 %v229, %v342
      %v344 = vpop.f32.mrf.mxu0
      %v345 = vpop.f32.mrf.mxu0
      %v346 = vadd.f32 %v229, %v345
      %v347 = vpop.f32.mrf.mxu0
      %348 = vmatprep.mubr.bf16.mxu0 0
      %349 = vmatmul.mubr.bf16.gmra.mxu0 %v245
      %v350 = vpop.f32.mrf.mxu0
      %v351 = vadd.f32 %v229, %v350
      %v352 = vpop.f32.mrf.mxu0
      %v353 = vpop.f32.mrf.mxu0
      %v354 = vadd.f32 %v229, %v353
      %v355 = vpop.f32.mrf.mxu0
      %356 = vmatprep.mubr.bf16.mxu0 0
      %357 = vmatmul.mubr.bf16.gmra.mxu0 %v248
      %v358 = vpop.f32.mrf.mxu0
      %v359 = vadd.f32 %v229, %v358
      %v360 = vpop.f32.mrf.mxu0
      %v361 = vpop.f32.mrf.mxu0
      %v362 = vadd.f32 %v229, %v361
      %v363 = vpop.f32.mrf.mxu0
      %364 = vmatprep.mubr.bf16.mxu0 0
      %365 = vmatmul.mubr.bf16.gmra.mxu0 %v251
      %v366 = vpop.f32.mrf.mxu0
      %v367 = vadd.f32 %v229, %v366
      %v368 = vpop.f32.mrf.mxu0
      %v369 = vpop.f32.mrf.mxu0
      %v370 = vadd.f32 %v229, %v369
      %v371 = vpop.f32.mrf.mxu0
      %372 = vmatprep.mubr.bf16.mxu0 0
      %373 = vmatmul.mubr.bf16.gmra.mxu0 %v254
      %v374 = vpop.f32.mrf.mxu0
      %v375 = vadd.f32 %v229, %v374
      %v376 = vpop.f32.mrf.mxu0
      %v377 = vpop.f32.mrf.mxu0
      %v378 = vadd.f32 %v229, %v377
      %v379 = vpop.f32.mrf.mxu0
      %380 = vmatprep.mubr.bf16.mxu0 0
      %381 = vmatmul.mubr.bf16.gmra.mxu0 %v257
      %v382 = vpop.f32.mrf.mxu0
      %v383 = vadd.f32 %v229, %v382
      %v384 = vpop.f32.mrf.mxu0
      %v385 = vpop.f32.mrf.mxu0
      %v386 = vadd.f32 %v229, %v385
      %v387 = vpop.f32.mrf.mxu0
      %388 = vmatprep.mubr.bf16.mxu0 0
      %389 = vmatmul.mubr.bf16.gmra.mxu0 %v260
      %v390 = vpop.f32.mrf.mxu0
      %v391 = vadd.f32 %v229, %v390
      %v392 = vpop.f32.mrf.mxu0
      %v393 = vpop.f32.mrf.mxu0
      %v394 = vadd.f32 %v229, %v393
      %v395 = vpop.f32.mrf.mxu0
      %396 = vmatprep.mubr.bf16.mxu0 0
      %397 = vmatmul.mubr.bf16.gmra.mxu0 %v263
      %v398 = vpop.f32.mrf.mxu0
      %v399 = vadd.f32 %v229, %v398
      %v400 = vpop.f32.mrf.mxu0
      %v401 = vpop.f32.mrf.mxu0
      %v402 = vadd.f32 %v229, %v401
      %v403 = vpop.f32.mrf.mxu0
      %404 = vmatprep.mubr.bf16.mxu0 0
      %405 = vmatmul.mubr.bf16.gmra.mxu0 %v266
      %v406 = vpop.f32.mrf.mxu0
      %v407 = vadd.f32 %v229, %v406
      %v408 = vpop.f32.mrf.mxu0
      %v409 = vpop.f32.mrf.mxu0
      %v410 = vadd.f32 %v229, %v409
      %v411 = vpop.f32.mrf.mxu0
      %412 = vmatprep.mubr.bf16.mxu0 0
      %413 = vmatmul.mubr.bf16.gmra.mxu0 %v269
      %v414 = vpop.f32.mrf.mxu0
      %v415 = vadd.f32 %v229, %v414
      %v416 = vpop.f32.mrf.mxu0
      %v417 = vpop.f32.mrf.mxu0
      %v418 = vadd.f32 %v229, %v417
      %v419 = vpop.f32.mrf.mxu0
      %420 = vmatprep.mubr.bf16.mxu0 0
      %421 = vmatmul.mubr.bf16.gmra.mxu0 %v272
      %v422 = vpop.f32.mrf.mxu0
      %v423 = vadd.f32 %v229, %v422
      %v424 = vpop.f32.mrf.mxu0
      %v425 = vpop.f32.mrf.mxu0
      %v426 = vadd.f32 %v229, %v425
      %v427 = vpop.f32.mrf.mxu0
      %428 = vmatprep.mubr.bf16.mxu0 0
      %429 = vmatmul.mubr.bf16.gmra.mxu0 %v275
      %v430 = vpop.f32.mrf.mxu0
      %v431 = vadd.f32 %v229, %v430
      %v432 = vpop.f32.mrf.mxu0
      %v433 = vpop.f32.mrf.mxu0
      %v434 = vadd.f32 %v229, %v433
      %v435 = vpop.f32.mrf.mxu0
      %436 = vmatprep.mubr.bf16.mxu0 0
      %437 = vmatmul.mubr.bf16.gmra.mxu0 %v278
      %v438 = vpop.f32.mrf.mxu0
      %v439 = vadd.f32 %v229, %v438
      %v440 = vpop.f32.mrf.mxu0
      %v441 = vpop.f32.mrf.mxu0
      %v442 = vadd.f32 %v229, %v441
      %v443 = vpop.f32.mrf.mxu0
      %444 = vdwg.mxu0
      %vm445 = vcmask 261120
      %446 = vst.msk [vmem:[%s172] sm:$0xff] %vm445, %v319
      %447 = vst.msk [vmem:[%s172 + $0x8] sm:$0xff] %vm445, %v322
      %448 = vst.msk [vmem:[%s172 + $0x10] sm:$0xff] %vm445, %v327
      %449 = vst.msk [vmem:[%s172 + $0x18] sm:$0xff] %vm445, %v330
      %450 = vst.msk [vmem:[%s172 + $0x20] sm:$0xff] %vm445, %v335
      %451 = vst.msk [vmem:[%s172 + $0x28] sm:$0xff] %vm445, %v338
      %452 = vst.msk [vmem:[%s172 + $0x30] sm:$0xff] %vm445, %v343
      %453 = vst.msk [vmem:[%s172 + $0x38] sm:$0xff] %vm445, %v346
      %454 = vst.msk [vmem:[%s172 + $0x40] sm:$0xff] %vm445, %v351
      %455 = vst.msk [vmem:[%s172 + $0x48] sm:$0xff] %vm445, %v354
      %456 = vst.msk [vmem:[%s172 + $0x50] sm:$0xff] %vm445, %v359
      %457 = vst.msk [vmem:[%s172 + $0x58] sm:$0xff] %vm445, %v362
      %458 = vst.msk [vmem:[%s172 + $0x60] sm:$0xff] %vm445, %v367
      %459 = vst.msk [vmem:[%s172 + $0x68] sm:$0xff] %vm445, %v370
      %460 = vst.msk [vmem:[%s172 + $0x70] sm:$0xff] %vm445, %v375
      %461 = vst.msk [vmem:[%s172 + $0x78] sm:$0xff] %vm445, %v378
      %462 = vst.msk [vmem:[%s172 + $0x80] sm:$0xff] %vm445, %v383
      %463 = vst.msk [vmem:[%s172 + $0x88] sm:$0xff] %vm445, %v386
      %464 = vst.msk [vmem:[%s172 + $0x90] sm:$0xff] %vm445, %v391
      %465 = vst.msk [vmem:[%s172 + $0x98] sm:$0xff] %vm445, %v394
      %466 = vst.msk [vmem:[%s172 + $0xa0] sm:$0xff] %vm445, %v399
      %467 = vst.msk [vmem:[%s172 + $0xa8] sm:$0xff] %vm445, %v402
      %468 = vst.msk [vmem:[%s172 + $0xb0] sm:$0xff] %vm445, %v407
      %469 = vst.msk [vmem:[%s172 + $0xb8] sm:$0xff] %vm445, %v410
      %470 = vst.msk [vmem:[%s172 + $0xc0] sm:$0xff] %vm445, %v415
      %471 = vst.msk [vmem:[%s172 + $0xc8] sm:$0xff] %vm445, %v418
      %472 = vst.msk [vmem:[%s172 + $0xd0] sm:$0xff] %vm445, %v423
      %473 = vst.msk [vmem:[%s172 + $0xd8] sm:$0xff] %vm445, %v426
      %474 = vst.msk [vmem:[%s172 + $0xe0] sm:$0xff] %vm445, %v431
      %475 = vst.msk [vmem:[%s172 + $0xe8] sm:$0xff] %vm445, %v434
      %476 = vst.msk [vmem:[%s172 + $0xf0] sm:$0xff] %vm445, %v439
      %477 = vst.msk [vmem:[%s172 + $0xf8] sm:$0xff] %vm445, %v442
      %s478 = smul.u32 32, %s14
      %p479 = scmp.lt.s32.totalorder %s478, 63
      %s480 = scalar_select %p479, %s478, 63
      %s481 = smul.addr %s480, 8
      %s482 = scalar_lea.vmem %s3, %s481
      // Predicated region
      $region33: #{mobilevit_attention.5} parent=31 // pred_check
        %p483 = pneg %p100
      $region34: #{mobilevit_attention.5} parent=31 // pred_check_branch
        %485 = sbr.rel (%p483) target = $region36
      $region35: #{mobilevit_attention.5} parent=31 // pred_region
        %s486 = smul.u32 32, %s14
      $region36: #{mobilevit_attention.5} parent=31 // pred_fallthru
        _
    $region32: #{mobilevit_attention.5} parent=5 // pred_fallthru
      _
    %p487 = scmp.le.s32.totalorder 2, %s9
    // Predicated region
    $region37: #{mobilevit_attention.5} parent=5 // pred_check
      %p488 = pneg %p487
    $region38: #{mobilevit_attention.5} parent=5 // pred_check_branch
      %490 = sbr.rel (%p488) target = $region40
    $region39: #{mobilevit_attention.5} parent=5 // pred_region
      %s491 = ssub.s32 %s9, 2
      // Predicated region
      $region41: #{mobilevit_attention.5} parent=39 // pred_check
        %p492 = pneg %p106
      $region42: #{mobilevit_attention.5} parent=39 // pred_check_branch
        %494 = sbr.rel (%p492) target = $region44
      $region43: #{mobilevit_attention.5} parent=39 // pred_region
        %s495 = smul.u32 32, %s15
        %p496 = scmp.lt.s32.totalorder %s495, 63
        %s497 = scalar_select %p496, %s495, 63
        %s498 = smul.addr %s497, 8
        %s499 = scalar_lea.vmem %s3, %s498
      $region44: #{mobilevit_attention.5} parent=39 // pred_fallthru
        _
    $region40: #{mobilevit_attention.5} parent=5 // pred_fallthru
      _
  $region6: #{mobilevit_attention.5} parent=0 // loop_footer
    %s13 = sadd.s32 1, %s9
  $region7: #{mobilevit_attention.5} parent=0 // loop_footer_branch
    %8 = sbr.rel target = $region3
  $region8: #{mobilevit_attention.5} parent=0 // loop_exit
    _

// kernel: mobilevit_attention.9
$region0: #{mobilevit_attention.9}
  #allocation0 [shape = 'u32[]', space=smem, size = 0x4, offset = 0x4, fixed_abs, tag = 'smem constant byte address 0x4 - core index']
  #allocation1 [shape = 'u32[144,128]{1,0:T(1,128)}', space=vmem, size = 0x12000, scoped, tag = 'internal scratch']
  %s0 = inlined_call_operand.vmem [shape: f32[512,32], index: 0, kind: input, shape index: {}]
  %s1 = inlined_call_operand.vmem [shape: bf16[32,4], index: 1, kind: input, shape index: {}]
  %s2 = inlined_call_operand.vmem [shape: f32[1,4], index: 2, kind: input, shape index: {}]
  %s3 = inlined_call_operand.vmem [shape: f32[512,4], index: 3, kind: output, shape index: {}]
  %s4 = sld [smem:[#allocation0]]
  $region45: #{mobilevit_attention.9} parent=0
    _
  %s6 = ssub.s32 1, %s4
  %s7 = scalar_select 0, %s6, %s4
  loop: start=0, step=1, limit=4
  $region2: #{mobilevit_attention.9} parent=0 // loop_pre_header
    _
  $region3: #{mobilevit_attention.9} parent=0 // loop_header
    %s9 = sphi 0, %s13
    %p10 = scmp.ge.s32.totalorder %s9, 4
    %s19 = sphi 0, %s21
    %s22 = sphi 0, %s19
    %s23 = sphi 0, %s22
    %s39 = sphi 0, %s23
    %s43 = sphi 0, %s43
    %s45 = sphi 0, %s43
    %s46 = sphi 0, %s45
    %s60 = sphi 0, %s46
    %s64 = sphi 0, %s64
    %s66 = sphi 0, %s64
    %s67 = sphi 0, %s66
    %s81 = sphi 0, %s67
    %s87 = sphi 0, %s89
    %s90 = sphi 0, %s87
    %s91 = sphi 0, %s90
    %s107 = sphi 0, %s91
  $region4: #{mobilevit_attention.9} parent=0 // loop_header_branch
    %12 = sbr.rel (%p10) target = $region8
  $region5: #{mobilevit_attention.9} parent=0 // loop_body
    %s14 = ssub.s32 %s9, 1
    %s15 = ssub.s32 %s9, 2
    %s16 = sadd.s32 %s9, 1
    %s17 = ssub.s32 %s9, %s16
    %p18 = scmp.eq.s32.totalorder %s17, 0
    %s20 = sadd.s32 %s19, 1
    %s21 = scalar_select %p18, %s19, %s20
    %p24 = pneg %p18
    %p25 = scmp.eq.s32.totalorder %s9, 1
    %p26 = por %p24, %p25
    %p27 = scmp.ne.s32.totalorder %s19, %s22
    %p28 = scmp.eq.s32.totalorder %s9, 0
    %p29 = por %p27, %p28
    %p30 = scmp.ne.s32.totalorder %s19, %s22
    %p31 = scmp.eq.s32.totalorder %s14, 1
    %p32 = por %p30, %p31
    %p33 = scmp.ne.s32.totalorder %s22, %s23
    %p34 = scmp.eq.s32.totalorder %s14, 0
    %p35 = por %p33, %p34
    %p36 = scmp.ne.s32.totalorder %s22, %s23
    %p37 = scmp.eq.s32.totalorder %s15, 1
    %p38 = por %p36, %p37
    %p40 = scmp.ne.s32.totalorder %s23, %s39
    %p41 = scmp.eq.s32.totalorder %s15, 0
    %p42 = por %p40, %p41
    %s44 = sadd.s32 %s43, 1
    %p47 = scmp.eq.s32.totalorder %s9, 1
    %p48 = scmp.ne.s32.totalorder %s43, %s45
    %p49 = scmp.eq.s32.totalorder %s9, 0
    %p50 = por %p48, %p49
    %p51 = scmp.ne.s32.totalorder %s43, %s45
    %p52 = scmp.eq.s32.totalorder %s14, 1
    %p53 = por %p51, %p52
    %p54 = scmp.ne.s32.totalorder %s45, %s46
    %p55 = scmp.eq.s32.totalorder %s14, 0
    %p56 = por %p54, %p55
    %p57 = scmp.ne.s32.totalorder %s45, %s46
    %p58 = scmp.eq.s32.totalorder %s15, 1
    %p59 = por %p57, %p58
    %p61 = scmp.ne.s32.totalorder %s46, %s60
    %p62 = scmp.eq.s32.totalorder %s15, 0
    %p63 = por %p61, %p62
    %s65 = sadd.s32 %s64, 1
    %p68 = scmp.eq.s32.totalorder %s9, 1
    %p69 = scmp.ne.s32.totalorder %s64, %s66
    %p70 = scmp.eq.s32.totalorder %s9, 0
    %p71 = por %p69, %p70
    %p72 = scmp.ne.s32.totalorder %s64, %s66
    %p73 = scmp.eq.s32.totalorder %s14, 1
    %p74 = por %p72, %p73
    %p75 = scmp.ne.s32.totalorder %s66, %s67
    %p76 = scmp.eq.s32.totalorder %s14, 0
    %p77 = por %p75, %p76
    %p78 = scmp.ne.s32.totalorder %s66, %s67
    %p79 = scmp.eq.s32.totalorder %s15, 1
    %p80 = por %p78, %p79
    %p82 = scmp.ne.s32.totalorder %s67, %s81
    %p83 = scmp.eq.s32.totalorder %s15, 0
    %p84 = por %p82, %p83
    %s85 = ssub.s32 %s9, %s16
    %p86 = scmp.eq.s32.totalorder %s85, 0
    %s88 = sadd.s32 %s87, 1
    %s89 = scalar_select %p86, %s87, %s88
    %p92 = pneg %p86
    %p93 = scmp.eq.s32.totalorder %s9, 1
    %p94 = por %p92, %p93
    %p95 = scmp.ne.s32.totalorder %s87, %s90
    %p96 = scmp.eq.s32.totalorder %s9, 0
    %p97 = por %p95, %p96
    %p98 = scmp.ne.s32.totalorder %s87, %s90
    %p99 = scmp.eq.s32.totalorder %s14, 1
    %p100 = por %p98, %p99
    %p101 = scmp.ne.s32.totalorder %s90, %s91
    %p102 = scmp.eq.s32.totalorder %s14, 0
    %p103 = por %p101, %p102
    %p104 = scmp.ne.s32.totalorder %s90, %s91
    %p105 = scmp.eq.s32.totalorder %s15, 1
    %p106 = por %p104, %p105
    %p108 = scmp.ne.s32.totalorder %s91, %s107
    %p109 = scmp.eq.s32.totalorder %s15, 0
    %p110 = por %p108, %p109
    %p111 = scmp.le.s32.totalorder 1, %s9
    %p112 = scmp.lt.s32.totalorder %s9, 3
    %p113 = pnand %p111, %p112
    %p114 = pneg %p113
    // Predicated region
    $region9: #{mobilevit_attention.9} parent=5 // pred_check
      _
    $region10: #{mobilevit_attention.9} parent=5 // pred_check_branch
      %116 = sbr.rel (%p113) target = $region12
    $region11: #{mobilevit_attention.9} parent=5 // pred_region
      %s117 = ssub.s32 %s9, 1
      // Predicated region
      $region13: #{mobilevit_attention.9} parent=11 // pred_check
        %p118 = pneg %p56
      $region14: #{mobilevit_attention.9} parent=11 // pred_check_branch
        %120 = sbr.rel (%p118) target = $region16
      $region15: #{mobilevit_attention.9} parent=11 // pred_region
        _
      $region16: #{mobilevit_attention.9} parent=11 // pred_fallthru
        _
      // Predicated region
      $region17: #{mobilevit_attention.9} parent=11 // pred_check
        %p121 = pneg %p77
      $region18: #{mobilevit_attention.9} parent=11 // pred_check_branch
        %123 = sbr.rel (%p121) target = $region20
      $region19: #{mobilevit_attention.9} parent=11 // pred_region
        _
      $region20: #{mobilevit_attention.9} parent=11 // pred_fallthru
        _
    $region12: #{mobilevit_attention.9} parent=5 // pred_fallthru
      _
    %p124 = scmp.lt.s32.totalorder %s9, 2
    // Predicated region
    $region21: #{mobilevit_attention.9} parent=5 // pred_check
      %p125 = pneg %p124
    $region22: #{mobilevit_attention.9} parent=5 // pred_check_branch
      %127 = sbr.rel (%p125) target = $region24
    $region23: #{mobilevit_attention.9} parent=5 // pred_region
      // Predicated region
      $region25: #{mobilevit_attention.9} parent=23 // pred_check
        %p128 = pneg %p29
      $region26: #{mobilevit_attention.9} parent=23 // pred_check_branch
        %130 = sbr.rel (%p128) target = $region28
      $region27: #{mobilevit_attention.9} parent=23 // pred_region
        %s131 = smul.u32 32, %s9
        %p132 = scmp.lt.s32.totalorder %s131, 63
        %s133 = scalar_select %p132, %s131, 63
        %s134 = smul.addr %s133, 8
        %s135 = scalar_lea.vmem %s0, %s134
        %s136 = smul.u32 32, %s9
      $region28: #{mobilevit_attention.9} parent=23 // pred_fallthru
        _
    $region24: #{mobilevit_attention.9} parent=5 // pred_fallthru
      _
    %p137 = scmp.le.s32.totalorder 1, %s9
    %p138 = scmp.lt.s32.totalorder %s9, 3
    %p139 = pnand %p137, %p138
    %p140 = pneg %p139
    // Predicated region
    $region29: #{mobilevit_attention.9} parent=5 // pred_check
      _
    $region30: #{mobilevit_attention.9} parent=5 // pred_check_branch
      %142 = sbr.rel (%p139) target = $region32
    $region31: #{mobilevit_attention.9} parent=5 // pred_region
      %s143 = ssub.s32 %s9, 1
      %s144 = smul.u32 32, %s14
      %p145 = scmp.lt.s32.totalorder %s144, 63
      %s146 = scalar_select %p145, %s144, 63
      %s147 = smul.addr %s146, 8
      %s148 = scalar_lea.vmem %s0, %s147
      %p149 = pneg %p35
      %p150 = pneg %p32
      %p151 = pneg %p56
      %p152 = pneg %p53
      %p153 = pneg %p77
      %p154 = pneg %p74
      %p155 = pneg %p103
      %p156 = pneg %p100
      %s157 = smul.u32 32, %s14
      %p158 = scmp.lt.s32.totalorder %s157, 63
      %s159 = scalar_select %p158, %s157, 63
      %s160 = smul.addr %s159, 8
      %s161 = scalar_lea.vmem %s3, %s160
      %s162 = smul.u32 32, %s14
      %p163 = scmp.lt.s32.totalorder %s162, 63
      %s164 = scalar_select %p163, %s162, 63
      %s165 = smul.addr %s164, 8
      %s166 = scalar_lea.vmem %s0, %s165
      %s167 = smul.u32 32, %s14
      %s168 = smul.u32 32, %s14
      %p169 = scmp.lt.s32.totalorder %s168, 63
      %s170 = scalar_select %p169, %s168, 63
      %s171 = smul.addr %s170, 8
      %s172 = scalar_lea.vmem %s3, %s171
      %s173 = smul.u32 32, %s14
      %v175 = vld [vmem:[%s166] sm:$0xff]
      %v176 = vld [vmem:[%s166 + $0x8] sm:$0xff]
      %v177 = vld [vmem:[%s166 + $0x10] sm:$0xff]
      %v178 = vld [vmem:[%s166 + $0x18] sm:$0xff]
      %v179 = vld [vmem:[%s166 + $0x20] sm:$0xff]
      %v180 = vld [vmem:[%s166 + $0x28] sm:$0xff]
      %v181 = vld [vmem:[%s166 + $0x30] sm:$0xff]
      %v182 = vld [vmem:[%s166 + $0x38] sm:$0xff]
      %v183 = vld [vmem:[%s166 + $0x40] sm:$0xff]
      %v184 = vld [vmem:[%s166 + $0x48] sm:$0xff]
      %v185 = vld [vmem:[%s166 + $0x50] sm:$0xff]
      %v186 = vld [vmem:[%s166 + $0x58] sm:$0xff]
      %v187 = vld [vmem:[%s166 + $0x60] sm:$0xff]
      %v188 = vld [vmem:[%s166 + $0x68] sm:$0xff]
      %v189 = vld [vmem:[%s166 + $0x70] sm:$0xff]
      %v190 = vld [vmem:[%s166 + $0x78] sm:$0xff]
      %v191 = vld [vmem:[%s166 + $0x80] sm:$0xff]
      %v192 = vld [vmem:[%s166 + $0x88] sm:$0xff]
      %v193 = vld [vmem:[%s166 + $0x90] sm:$0xff]
      %v194 = vld [vmem:[%s166 + $0x98] sm:$0xff]
      %v195 = vld [vmem:[%s166 + $0xa0] sm:$0xff]
      %v196 = vld [vmem:[%s166 + $0xa8] sm:$0xff]
      %v197 = vld [vmem:[%s166 + $0xb0] sm:$0xff]
      %v198 = vld [vmem:[%s166 + $0xb8] sm:$0xff]
      %v199 = vld [vmem:[%s166 + $0xc0] sm:$0xff]
      %v200 = vld [vmem:[%s166 + $0xc8] sm:$0xff]
      %v201 = vld [vmem:[%s166 + $0xd0] sm:$0xff]
      %v202 = vld [vmem:[%s166 + $0xd8] sm:$0xff]
      %v203 = vld [vmem:[%s166 + $0xe0] sm:$0xff]
      %v204 = vld [vmem:[%s166 + $0xe8] sm:$0xff]
      %v205 = vld [vmem:[%s166 + $0xf0] sm:$0xff]
      %v206 = vld [vmem:[%s166 + $0xf8] sm:$0xff]
      %v207 = vpack.c.bf16 %v176, %v175
      %v208 = vpack.c.bf16 %v178, %v177
      %v209 = vpack.c.bf16 %v180, %v179
      %v210 = vpack.c.bf16 %v182, %v181
      %v211 = vpack.c.bf16 %v184, %v183
      %v212 = vpack.c.bf16 %v186, %v185
      %v213 = vpack.c.bf16 %v188, %v187
      %v214 = vpack.c.bf16 %v190, %v189
      %v215 = vpack.c.bf16 %v192, %v191
      %v216 = vpack.c.bf16 %v194, %v193
      %v217 = vpack.c.bf16 %v196, %v195
      %v218 = vpack.c.bf16 %v198, %v197
      %v219 = vpack.c.bf16 %v200, %v199
      %v220 = vpack.c.bf16 %v202, %v201
      %v221 = vpack.c.bf16 %v204, %v203
      %v222 = vpack.c.bf16 %v206, %v205
      %v223 = vld [vmem:[%s1] sm:$0xf]
      %v224 = vld [vmem:[%s1 + $0x4] sm:$0xf]
      %v225 = vld [vmem:[%s1 + $0x8] sm:$0xf]
      %v226 = vld [vmem:[%s1 + $0xc] sm:$0xf]
      %v227 = vld [vmem:[%s2] sm:$0x1]
      %v229 = vlaneseq
      %v230 = vshrl.u32 %v229, 7
      %v231 = vsub.s32 0, %v230
      %v232 = vrot.slane %v227, %v231
      %v238 = vunpack.c.l.b16 %v223
      %v239 = vunpack.c.l.b16 %v224
      %v240 = vunpack.c.l.b16 %v225
      %v241 = vunpack.c.l.b16 %v226
      %v242 = vpack.c.b16 %v239, %v238
      %v243 = vpack.c.b16 %v241, %v240
      %vm246 = vcmask 261120
      %v248 = vsel %vm246, %v207, 0
      %v251 = vsel %vm246, %v208, 0
      %v254 = vsel %vm246, %v209, 0
      %v257 = vsel %vm246, %v210, 0
      %v260 = vsel %vm246, %v211, 0
      %v263 = vsel %vm246, %v212, 0
      %v266 = vsel %vm246, %v213, 0
      %v269 = vsel %vm246, %v214, 0
      %v272 = vsel %vm246, %v215, 0
      %v275 = vsel %vm246, %v216, 0
      %v278 = vsel %vm246, %v217, 0
      %v281 = vsel %vm246, %v218, 0
      %v284 = vsel %vm246, %v219, 0
      %v287 = vsel %vm246, %v220, 0
      %v290 = vsel %vm246, %v221, 0
      %v293 = vsel %vm246, %v222, 0
      %295 = vmatprep.subr.bf16.mxu0 0
      %296 = vmatpush1.bf16.msra.mxu0 0
      %297 = vmatprep.subr.bf16.mxu0 0
      %298 = vmatpush1.bf16.msra.mxu0 0
      %299 = vmatprep.subr.bf16.mxu0 0
      %300 = vmatpush1.bf16.msra.mxu0 0
      %301 = vmatprep.subr.bf16.mxu0 0
      %302 = vmatpush1.bf16.msra.mxu0 0
      %303 = vmatprep.subr.bf16.mxu0 0
      %304 = vmatpush1.bf16.msra.mxu0 0
      %305 = vmatprep.subr.bf16.mxu0 0
      %306 = vmatpush1.bf16.msra.mxu0 0
      %307 = vmatprep.subr.bf16.mxu0 0
      %308 = vmatpush1.bf16.msra.mxu0 %v243
      %309 = vmatprep.subr.bf16.mxu0 0
      %310 = vmatpush1.bf16.msra.mxu0 %v242
      %311 = vmatprep.subr.bf16.mxu0 0
      %312 = vmatpush2.bf16.msra.mxu0 0
      %313 = vmatprep.subr.bf16.mxu0 0
      %314 = vmatpush2.bf16.msra.mxu0 0
      %315 = vmatprep.subr.bf16.mxu0 0
      %316 = vmatpush2.bf16.msra.mxu0 0
      %317 = vmatprep.subr.bf16.mxu0 0
      %318 = vmatpush2.bf16.msra.mxu0 0
      %319 = vmatprep.subr.bf16.mxu0 0
      %320 = vmatpush2.bf16.msra.mxu0 0
      %321 = vmatprep.subr.bf16.mxu0 0
      %322 = vmatpush2.bf16.msra.mxu0 0
      %323 = vmatprep.subr.bf16.mxu0 0
      %324 = vmatpush2.bf16.msra.mxu0 0
      %325 = vmatprep.subr.bf16.mxu0 0
      %326 = vmatpush2.bf16.msra.mxu0 0
      %327 = vmatprep.mubr.bf16.mxu0 0
      %328 = vmatmul.mubr.bf16.gmra.mxu0 %v248
      %v329 = vpop.f32.mrf.mxu0
      %v330 = vadd.f32 %v232, %v329
      %v331 = vpop.f32.mrf.mxu0
      %v332 = vpop.f32.mrf.mxu0
      %v333 = vadd.f32 %v232, %v332
      %v334 = vpop.f32.mrf.mxu0
      %335 = vmatprep.mubr.bf16.mxu0 0
      %336 = vmatmul.mubr.bf16.gmra.mxu0 %v251
      %v337 = vpop.f32.mrf.mxu0
      %v338 = vadd.f32 %v232, %v337
      %v339 = vpop.f32.mrf.mxu0
      %v340 = vpop.f32.mrf.mxu0
      %v341 = vadd.f32 %v232, %v340
      %v342 = vpop.f32.mrf.mxu0
      %343 = vmatprep.mubr.bf16.mxu0 0
      %344 = vmatmul.mubr.bf16.gmra.mxu0 %v254
      %v345 = vpop.f32.mrf.mxu0
      %v346 = vadd.f32 %v232, %v345
      %v347 = vpop.f32.mrf.mxu0
      %v348 = vpop.f32.mrf.mxu0
      %v349 = vadd.f32 %v232, %v348
      %v350 = vpop.f32.mrf.mxu0
      %351 = vmatprep.mubr.bf16.mxu0 0
      %352 = vmatmul.mubr.bf16.gmra.mxu0 %v257
      %v353 = vpop.f32.mrf.mxu0
      %v354 = vadd.f32 %v232, %v353
      %v355 = vpop.f32.mrf.mxu0
      %v356 = vpop.f32.mrf.mxu0
      %v357 = vadd.f32 %v232, %v356
      %v358 = vpop.f32.mrf.mxu0
      %359 = vmatprep.mubr.bf16.mxu0 0
      %360 = vmatmul.mubr.bf16.gmra.mxu0 %v260
      %v361 = vpop.f32.mrf.mxu0
      %v362 = vadd.f32 %v232, %v361
      %v363 = vpop.f32.mrf.mxu0
      %v364 = vpop.f32.mrf.mxu0
      %v365 = vadd.f32 %v232, %v364
      %v366 = vpop.f32.mrf.mxu0
      %367 = vmatprep.mubr.bf16.mxu0 0
      %368 = vmatmul.mubr.bf16.gmra.mxu0 %v263
      %v369 = vpop.f32.mrf.mxu0
      %v370 = vadd.f32 %v232, %v369
      %v371 = vpop.f32.mrf.mxu0
      %v372 = vpop.f32.mrf.mxu0
      %v373 = vadd.f32 %v232, %v372
      %v374 = vpop.f32.mrf.mxu0
      %375 = vmatprep.mubr.bf16.mxu0 0
      %376 = vmatmul.mubr.bf16.gmra.mxu0 %v266
      %v377 = vpop.f32.mrf.mxu0
      %v378 = vadd.f32 %v232, %v377
      %v379 = vpop.f32.mrf.mxu0
      %v380 = vpop.f32.mrf.mxu0
      %v381 = vadd.f32 %v232, %v380
      %v382 = vpop.f32.mrf.mxu0
      %383 = vmatprep.mubr.bf16.mxu0 0
      %384 = vmatmul.mubr.bf16.gmra.mxu0 %v269
      %v385 = vpop.f32.mrf.mxu0
      %v386 = vadd.f32 %v232, %v385
      %v387 = vpop.f32.mrf.mxu0
      %v388 = vpop.f32.mrf.mxu0
      %v389 = vadd.f32 %v232, %v388
      %v390 = vpop.f32.mrf.mxu0
      %391 = vmatprep.mubr.bf16.mxu0 0
      %392 = vmatmul.mubr.bf16.gmra.mxu0 %v272
      %v393 = vpop.f32.mrf.mxu0
      %v394 = vadd.f32 %v232, %v393
      %v395 = vpop.f32.mrf.mxu0
      %v396 = vpop.f32.mrf.mxu0
      %v397 = vadd.f32 %v232, %v396
      %v398 = vpop.f32.mrf.mxu0
      %399 = vmatprep.mubr.bf16.mxu0 0
      %400 = vmatmul.mubr.bf16.gmra.mxu0 %v275
      %v401 = vpop.f32.mrf.mxu0
      %v402 = vadd.f32 %v232, %v401
      %v403 = vpop.f32.mrf.mxu0
      %v404 = vpop.f32.mrf.mxu0
      %v405 = vadd.f32 %v232, %v404
      %v406 = vpop.f32.mrf.mxu0
      %407 = vmatprep.mubr.bf16.mxu0 0
      %408 = vmatmul.mubr.bf16.gmra.mxu0 %v278
      %v409 = vpop.f32.mrf.mxu0
      %v410 = vadd.f32 %v232, %v409
      %v411 = vpop.f32.mrf.mxu0
      %v412 = vpop.f32.mrf.mxu0
      %v413 = vadd.f32 %v232, %v412
      %v414 = vpop.f32.mrf.mxu0
      %415 = vmatprep.mubr.bf16.mxu0 0
      %416 = vmatmul.mubr.bf16.gmra.mxu0 %v281
      %v417 = vpop.f32.mrf.mxu0
      %v418 = vadd.f32 %v232, %v417
      %v419 = vpop.f32.mrf.mxu0
      %v420 = vpop.f32.mrf.mxu0
      %v421 = vadd.f32 %v232, %v420
      %v422 = vpop.f32.mrf.mxu0
      %423 = vmatprep.mubr.bf16.mxu0 0
      %424 = vmatmul.mubr.bf16.gmra.mxu0 %v284
      %v425 = vpop.f32.mrf.mxu0
      %v426 = vadd.f32 %v232, %v425
      %v427 = vpop.f32.mrf.mxu0
      %v428 = vpop.f32.mrf.mxu0
      %v429 = vadd.f32 %v232, %v428
      %v430 = vpop.f32.mrf.mxu0
      %431 = vmatprep.mubr.bf16.mxu0 0
      %432 = vmatmul.mubr.bf16.gmra.mxu0 %v287
      %v433 = vpop.f32.mrf.mxu0
      %v434 = vadd.f32 %v232, %v433
      %v435 = vpop.f32.mrf.mxu0
      %v436 = vpop.f32.mrf.mxu0
      %v437 = vadd.f32 %v232, %v436
      %v438 = vpop.f32.mrf.mxu0
      %439 = vmatprep.mubr.bf16.mxu0 0
      %440 = vmatmul.mubr.bf16.gmra.mxu0 %v290
      %v441 = vpop.f32.mrf.mxu0
      %v442 = vadd.f32 %v232, %v441
      %v443 = vpop.f32.mrf.mxu0
      %v444 = vpop.f32.mrf.mxu0
      %v445 = vadd.f32 %v232, %v444
      %v446 = vpop.f32.mrf.mxu0
      %447 = vmatprep.mubr.bf16.mxu0 0
      %448 = vmatmul.mubr.bf16.gmra.mxu0 %v293
      %v449 = vpop.f32.mrf.mxu0
      %v450 = vadd.f32 %v232, %v449
      %v451 = vpop.f32.mrf.mxu0
      %v452 = vpop.f32.mrf.mxu0
      %v453 = vadd.f32 %v232, %v452
      %v454 = vpop.f32.mrf.mxu0
      %455 = vdwg.mxu0
      %vm456 = vcmask 31744
      %457 = vst.msk [vmem:[%s172] sm:$0xff] %vm456, %v330
      %458 = vst.msk [vmem:[%s172 + $0x8] sm:$0xff] %vm456, %v333
      %459 = vst.msk [vmem:[%s172 + $0x10] sm:$0xff] %vm456, %v338
      %460 = vst.msk [vmem:[%s172 + $0x18] sm:$0xff] %vm456, %v341
      %461 = vst.msk [vmem:[%s172 + $0x20] sm:$0xff] %vm456, %v346
      %462 = vst.msk [vmem:[%s172 + $0x28] sm:$0xff] %vm456, %v349
      %463 = vst.msk [vmem:[%s172 + $0x30] sm:$0xff] %vm456, %v354
      %464 = vst.msk [vmem:[%s172 + $0x38] sm:$0xff] %vm456, %v357
      %465 = vst.msk [vmem:[%s172 + $0x40] sm:$0xff] %vm456, %v362
      %466 = vst.msk [vmem:[%s172 + $0x48] sm:$0xff] %vm456, %v365
      %467 = vst.msk [vmem:[%s172 + $0x50] sm:$0xff] %vm456, %v370
      %468 = vst.msk [vmem:[%s172 + $0x58] sm:$0xff] %vm456, %v373
      %469 = vst.msk [vmem:[%s172 + $0x60] sm:$0xff] %vm456, %v378
      %470 = vst.msk [vmem:[%s172 + $0x68] sm:$0xff] %vm456, %v381
      %471 = vst.msk [vmem:[%s172 + $0x70] sm:$0xff] %vm456, %v386
      %472 = vst.msk [vmem:[%s172 + $0x78] sm:$0xff] %vm456, %v389
      %473 = vst.msk [vmem:[%s172 + $0x80] sm:$0xff] %vm456, %v394
      %474 = vst.msk [vmem:[%s172 + $0x88] sm:$0xff] %vm456, %v397
      %475 = vst.msk [vmem:[%s172 + $0x90] sm:$0xff] %vm456, %v402
      %476 = vst.msk [vmem:[%s172 + $0x98] sm:$0xff] %vm456, %v405
      %477 = vst.msk [vmem:[%s172 + $0xa0] sm:$0xff] %vm456, %v410
      %478 = vst.msk [vmem:[%s172 + $0xa8] sm:$0xff] %vm456, %v413
      %479 = vst.msk [vmem:[%s172 + $0xb0] sm:$0xff] %vm456, %v418
      %480 = vst.msk [vmem:[%s172 + $0xb8] sm:$0xff] %vm456, %v421
      %481 = vst.msk [vmem:[%s172 + $0xc0] sm:$0xff] %vm456, %v426
      %482 = vst.msk [vmem:[%s172 + $0xc8] sm:$0xff] %vm456, %v429
      %483 = vst.msk [vmem:[%s172 + $0xd0] sm:$0xff] %vm456, %v434
      %484 = vst.msk [vmem:[%s172 + $0xd8] sm:$0xff] %vm456, %v437
      %485 = vst.msk [vmem:[%s172 + $0xe0] sm:$0xff] %vm456, %v442
      %486 = vst.msk [vmem:[%s172 + $0xe8] sm:$0xff] %vm456, %v445
      %487 = vst.msk [vmem:[%s172 + $0xf0] sm:$0xff] %vm456, %v450
      %488 = vst.msk [vmem:[%s172 + $0xf8] sm:$0xff] %vm456, %v453
      %s489 = smul.u32 32, %s14
      %p490 = scmp.lt.s32.totalorder %s489, 63
      %s491 = scalar_select %p490, %s489, 63
      %s492 = smul.addr %s491, 8
      %s493 = scalar_lea.vmem %s3, %s492
      // Predicated region
      $region33: #{mobilevit_attention.9} parent=31 // pred_check
        %p494 = pneg %p100
      $region34: #{mobilevit_attention.9} parent=31 // pred_check_branch
        %496 = sbr.rel (%p494) target = $region36
      $region35: #{mobilevit_attention.9} parent=31 // pred_region
        %s497 = smul.u32 32, %s14
      $region36: #{mobilevit_attention.9} parent=31 // pred_fallthru
        _
    $region32: #{mobilevit_attention.9} parent=5 // pred_fallthru
      _
    %p498 = scmp.le.s32.totalorder 2, %s9
    // Predicated region
    $region37: #{mobilevit_attention.9} parent=5 // pred_check
      %p499 = pneg %p498
    $region38: #{mobilevit_attention.9} parent=5 // pred_check_branch
      %501 = sbr.rel (%p499) target = $region40
    $region39: #{mobilevit_attention.9} parent=5 // pred_region
      %s502 = ssub.s32 %s9, 2
      // Predicated region
      $region41: #{mobilevit_attention.9} parent=39 // pred_check
        %p503 = pneg %p106
      $region42: #{mobilevit_attention.9} parent=39 // pred_check_branch
        %505 = sbr.rel (%p503) target = $region44
      $region43: #{mobilevit_attention.9} parent=39 // pred_region
        %s506 = smul.u32 32, %s15
        %p507 = scmp.lt.s32.totalorder %s506, 63
        %s508 = scalar_select %p507, %s506, 63
        %s509 = smul.addr %s508, 8
        %s510 = scalar_lea.vmem %s3, %s509
      $region44: #{mobilevit_attention.9} parent=39 // pred_fallthru
        _
    $region40: #{mobilevit_attention.9} parent=5 // pred_fallthru
      _
  $region6: #{mobilevit_attention.9} parent=0 // loop_footer
    %s13 = sadd.s32 1, %s9
  $region7: #{mobilevit_attention.9} parent=0 // loop_footer_branch
    %8 = sbr.rel target = $region3
  $region8: #{mobilevit_attention.9} parent=0 // loop_exit
    _

// kernel: mobilevit_attention.6
$region0: #{mobilevit_attention.6}
  #allocation0 [shape = 'u32[]', space=smem, size = 0x4, offset = 0x4, fixed_abs, tag = 'smem constant byte address 0x4 - core index']
  #allocation1 [shape = 'u32[144,128]{1,0:T(1,128)}', space=vmem, size = 0x12000, scoped, tag = 'internal scratch']
  %s0 = inlined_call_operand.vmem [shape: f32[8,64,32], index: 0, kind: input, shape index: {}]
  %s1 = inlined_call_operand.vmem [shape: f32[1,32], index: 1, kind: input, shape index: {}]
  %s2 = inlined_call_operand.vmem [shape: f32[1,32], index: 2, kind: input, shape index: {}]
  %s3 = inlined_call_operand.vmem [shape: bf16[32,96], index: 3, kind: input, shape index: {}]
  %s4 = inlined_call_operand.vmem [shape: bf16[32,32], index: 4, kind: input, shape index: {}]
  %s5 = inlined_call_operand.vmem [shape: f32[1,32], index: 5, kind: input, shape index: {}]
  %s6 = inlined_call_operand.vmem [shape: f32[1,32], index: 6, kind: input, shape index: {}]
  %s7 = inlined_call_operand.vmem [shape: f32[1,32], index: 7, kind: input, shape index: {}]
  %s8 = inlined_call_operand.vmem [shape: bf16[32,64], index: 8, kind: input, shape index: {}]
  %s9 = inlined_call_operand.vmem [shape: f32[1,64], index: 9, kind: input, shape index: {}]
  %s10 = inlined_call_operand.vmem [shape: bf16[64,32], index: 10, kind: input, shape index: {}]
  %s11 = inlined_call_operand.vmem [shape: f32[1,32], index: 11, kind: input, shape index: {}]
  %s12 = inlined_call_operand.vmem [shape: f32[8,64,32], index: 12, kind: output, shape index: {}]
  %s13 = sld [smem:[#allocation0]]
  $region81: #{mobilevit_attention.6} parent=0
    _
  %s15 = ssub.s32 1, %s13
  %s16 = scalar_select 0, %s15, %s13
  loop: start=0, step=1, limit=4
  $region2: #{mobilevit_attention.6} parent=0 // loop_pre_header
    _
  $region3: #{mobilevit_attention.6} parent=0 // loop_header
    %s18 = sphi 0, %s22
    %p19 = scmp.ge.s32.totalorder %s18, 4
    %s28 = sphi 0, %s30
    %s31 = sphi 0, %s28
    %s32 = sphi 0, %s31
    %s48 = sphi 0, %s32
    %s52 = sphi 0, %s52
    %s54 = sphi 0, %s52
    %s55 = sphi 0, %s54
    %s69 = sphi 0, %s55
    %s73 = sphi 0, %s73
    %s75 = sphi 0, %s73
    %s76 = sphi 0, %s75
    %s90 = sphi 0, %s76
    %s94 = sphi 0, %s94
    %s96 = sphi 0, %s94
    %s97 = sphi 0, %s96
    %s111 = sphi 0, %s97
    %s115 = sphi 0, %s115
    %s117 = sphi 0, %s115
    %s118 = sphi 0, %s117
    %s132 = sphi 0, %s118
    %s136 = sphi 0, %s136
    %s138 = sphi 0, %s136
    %s139 = sphi 0, %s138
    %s153 = sphi 0, %s139
    %s157 = sphi 0, %s157
    %s159 = sphi 0, %s157
    %s160 = sphi 0, %s159
    %s174 = sphi 0, %s160
    %s178 = sphi 0, %s178
    %s180 = sphi 0, %s178
    %s181 = sphi 0, %s180
    %s195 = sphi 0, %s181
    %s199 = sphi 0, %s199
    %s201 = sphi 0, %s199
    %s202 = sphi 0, %s201
    %s216 = sphi 0, %s202
    %s220 = sphi 0, %s220
    %s222 = sphi 0, %s220
    %s223 = sphi 0, %s222
    %s237 = sphi 0, %s223
    %s241 = sphi 0, %s241
    %s243 = sphi 0, %s241
    %s244 = sphi 0, %s243
    %s258 = sphi 0, %s244
    %s262 = sphi 0, %s262
    %s264 = sphi 0, %s262
    %s265 = sphi 0, %s264
    %s279 = sphi 0, %s265
    %s285 = sphi 0, %s287
    %s288 = sphi 0, %s285
    %s289 = sphi 0, %s288
    %s305 = sphi 0, %s289
  $region4: #{mobilevit_attention.6} parent=0 // loop_header_branch
    %21 = sbr.rel (%p19) target = $region8
  $region5: #{mobilevit_attention.6} parent=0 // loop_body
    %s23 = ssub.s32 %s18, 1
    %s24 = ssub.s32 %s18, 2
    %s25 = sadd.s32 %s18, 1
    %s26 = ssub.s32 %s18, %s25
    %p27 = scmp.eq.s32.totalorder %s26, 0
    %s29 = sadd.s32 %s28, 1
    %s30 = scalar_select %p27, %s28, %s29
    %p33 = pneg %p27
    %p34 = scmp.eq.s32.totalorder %s18, 1
    %p35 = por %p33, %p34
    %p36 = scmp.ne.s32.totalorder %s28, %s31
    %p37 = scmp.eq.s32.totalorder %s18, 0
    %p38 = por %p36, %p37
    %p39 = scmp.ne.s32.totalorder %s28, %s31
    %p40 = scmp.eq.s32.totalorder %s23, 1
    %p41 = por %p39, %p40
    %p42 = scmp.ne.s32.totalorder %s31, %s32
    %p43 = scmp.eq.s32.totalorder %s23, 0
    %p44 = por %p42, %p43
    %p45 = scmp.ne.s32.totalorder %s31, %s32
    %p46 = scmp.eq.s32.totalorder %s24, 1
    %p47 = por %p45, %p46
    %p49 = scmp.ne.s32.totalorder %s32, %s48
    %p50 = scmp.eq.s32.totalorder %s24, 0
    %p51 = por %p49, %p50
    %s53 = sadd.s32 %s52, 1
    %p56 = scmp.eq.s32.totalorder %s18, 1
    %p57 = scmp.ne.s32.totalorder %s52, %s54
    %p58 = scmp.eq.s32.totalorder %s18, 0
    %p59 = por %p57, %p58
    %p60 = scmp.ne.s32.totalorder %s52, %s54
    %p61 = scmp.eq.s32.totalorder %s23, 1
    %p62 = por %p60, %p61
    %p63 = scmp.ne.s32.totalorder %s54, %s55
    %p64 = scmp.eq.s32.totalorder %s23, 0
    %p65 = por %p63, %p64
    %p66 = scmp.ne.s32.totalorder %s54, %s55
    %p67 = scmp.eq.s32.totalorder %s24, 1
    %p68 = por %p66, %p67
    %p70 = scmp.ne.s32.totalorder %s55, %s69
    %p71 = scmp.eq.s32.totalorder %s24, 0
    %p72 = por %p70, %p71
    %s74 = sadd.s32 %s73, 1
    %p77 = scmp.eq.s32.totalorder %s18, 1
    %p78 = scmp.ne.s32.totalorder %s73, %s75
    %p79 = scmp.eq.s32.totalorder %s18, 0
    %p80 = por %p78, %p79
    %p81 = scmp.ne.s32.totalorder %s73, %s75
    %p82 = scmp.eq.s32.totalorder %s23, 1
    %p83 = por %p81, %p82
    %p84 = scmp.ne.s32.totalorder %s75, %s76
    %p85 = scmp.eq.s32.totalorder %s23, 0
    %p86 = por %p84, %p85
    %p87 = scmp.ne.s32.totalorder %s75, %s76
    %p88 = scmp.eq.s32.totalorder %s24, 1
    %p89 = por %p87, %p88
    %p91 = scmp.ne.s32.totalorder %s76, %s90
    %p92 = scmp.eq.s32.totalorder %s24, 0
    %p93 = por %p91, %p92
    %s95 = sadd.s32 %s94, 1
    %p98 = scmp.eq.s32.totalorder %s18, 1
    %p99 = scmp.ne.s32.totalorder %s94, %s96
    %p100 = scmp.eq.s32.totalorder %s18, 0
    %p101 = por %p99, %p100
    %p102 = scmp.ne.s32.totalorder %s94, %s96
    %p103 = scmp.eq.s32.totalorder %s23, 1
    %p104 = por %p102, %p103
    %p105 = scmp.ne.s32.totalorder %s96, %s97
    %p106 = scmp.eq.s32.totalorder %s23, 0
    %p107 = por %p105, %p106
    %p108 = scmp.ne.s32.totalorder %s96, %s97
    %p109 = scmp.eq.s32.totalorder %s24, 1
    %p110 = por %p108, %p109
    %p112 = scmp.ne.s32.totalorder %s97, %s111
    %p113 = scmp.eq.s32.totalorder %s24, 0
    %p114 = por %p112, %p113
    %s116 = sadd.s32 %s115, 1
    %p119 = scmp.eq.s32.totalorder %s18, 1
    %p120 = scmp.ne.s32.totalorder %s115, %s117
    %p121 = scmp.eq.s32.totalorder %s18, 0
    %p122 = por %p120, %p121
    %p123 = scmp.ne.s32.totalorder %s115, %s117
    %p124 = scmp.eq.s32.totalorder %s23, 1
    %p125 = por %p123, %p124
    %p126 = scmp.ne.s32.totalorder %s117, %s118
    %p127 = scmp.eq.s32.totalorder %s23, 0
    %p128 = por %p126, %p127
    %p129 = scmp.ne.s32.totalorder %s117, %s118
    %p130 = scmp.eq.s32.totalorder %s24, 1
    %p131 = por %p129, %p130
    %p133 = scmp.ne.s32.totalorder %s118, %s132
    %p134 = scmp.eq.s32.totalorder %s24, 0
    %p135 = por %p133, %p134
    %s137 = sadd.s32 %s136, 1
    %p140 = scmp.eq.s32.totalorder %s18, 1
    %p141 = scmp.ne.s32.totalorder %s136, %s138
    %p142 = scmp.eq.s32.totalorder %s18, 0
    %p143 = por %p141, %p142
    %p144 = scmp.ne.s32.totalorder %s136, %s138
    %p145 = scmp.eq.s32.totalorder %s23, 1
    %p146 = por %p144, %p145
    %p147 = scmp.ne.s32.totalorder %s138, %s139
    %p148 = scmp.eq.s32.totalorder %s23, 0
    %p149 = por %p147, %p148
    %p150 = scmp.ne.s32.totalorder %s138, %s139
    %p151 = scmp.eq.s32.totalorder %s24, 1
    %p152 = por %p150, %p151
    %p154 = scmp.ne.s32.totalorder %s139, %s153
    %p155 = scmp.eq.s32.totalorder %s24, 0
    %p156 = por %p154, %p155
    %s158 = sadd.s32 %s157, 1
    %p161 = scmp.eq.s32.totalorder %s18, 1
    %p162 = scmp.ne.s32.totalorder %s157, %s159
    %p163 = scmp.eq.s32.totalorder %s18, 0
    %p164 = por %p162, %p163
    %p165 = scmp.ne.s32.totalorder %s157, %s159
    %p166 = scmp.eq.s32.totalorder %s23, 1
    %p167 = por %p165, %p166
    %p168 = scmp.ne.s32.totalorder %s159, %s160
    %p169 = scmp.eq.s32.totalorder %s23, 0
    %p170 = por %p168, %p169
    %p171 = scmp.ne.s32.totalorder %s159, %s160
    %p172 = scmp.eq.s32.totalorder %s24, 1
    %p173 = por %p171, %p172
    %p175 = scmp.ne.s32.totalorder %s160, %s174
    %p176 = scmp.eq.s32.totalorder %s24, 0
    %p177 = por %p175, %p176
    %s179 = sadd.s32 %s178, 1
    %p182 = scmp.eq.s32.totalorder %s18, 1
    %p183 = scmp.ne.s32.totalorder %s178, %s180
    %p184 = scmp.eq.s32.totalorder %s18, 0
    %p185 = por %p183, %p184
    %p186 = scmp.ne.s32.totalorder %s178, %s180
    %p187 = scmp.eq.s32.totalorder %s23, 1
    %p188 = por %p186, %p187
    %p189 = scmp.ne.s32.totalorder %s180, %s181
    %p190 = scmp.eq.s32.totalorder %s23, 0
    %p191 = por %p189, %p190
    %p192 = scmp.ne.s32.totalorder %s180, %s181
    %p193 = scmp.eq.s32.totalorder %s24, 1
    %p194 = por %p192, %p193
    %p196 = scmp.ne.s32.totalorder %s181, %s195
    %p197 = scmp.eq.s32.totalorder %s24, 0
    %p198 = por %p196, %p197
    %s200 = sadd.s32 %s199, 1
    %p203 = scmp.eq.s32.totalorder %s18, 1
    %p204 = scmp.ne.s32.totalorder %s199, %s201
    %p205 = scmp.eq.s32.totalorder %s18, 0
    %p206 = por %p204, %p205
    %p207 = scmp.ne.s32.totalorder %s199, %s201
    %p208 = scmp.eq.s32.totalorder %s23, 1
    %p209 = por %p207, %p208
    %p210 = scmp.ne.s32.totalorder %s201, %s202
    %p211 = scmp.eq.s32.totalorder %s23, 0
    %p212 = por %p210, %p211
    %p213 = scmp.ne.s32.totalorder %s201, %s202
    %p214 = scmp.eq.s32.totalorder %s24, 1
    %p215 = por %p213, %p214
    %p217 = scmp.ne.s32.totalorder %s202, %s216
    %p218 = scmp.eq.s32.totalorder %s24, 0
    %p219 = por %p217, %p218
    %s221 = sadd.s32 %s220, 1
    %p224 = scmp.eq.s32.totalorder %s18, 1
    %p225 = scmp.ne.s32.totalorder %s220, %s222
    %p226 = scmp.eq.s32.totalorder %s18, 0
    %p227 = por %p225, %p226
    %p228 = scmp.ne.s32.totalorder %s220, %s222
    %p229 = scmp.eq.s32.totalorder %s23, 1
    %p230 = por %p228, %p229
    %p231 = scmp.ne.s32.totalorder %s222, %s223
    %p232 = scmp.eq.s32.totalorder %s23, 0
    %p233 = por %p231, %p232
    %p234 = scmp.ne.s32.totalorder %s222, %s223
    %p235 = scmp.eq.s32.totalorder %s24, 1
    %p236 = por %p234, %p235
    %p238 = scmp.ne.s32.totalorder %s223, %s237
    %p239 = scmp.eq.s32.totalorder %s24, 0
    %p240 = por %p238, %p239
    %s242 = sadd.s32 %s241, 1
    %p245 = scmp.eq.s32.totalorder %s18, 1
    %p246 = scmp.ne.s32.totalorder %s241, %s243
    %p247 = scmp.eq.s32.totalorder %s18, 0
    %p248 = por %p246, %p247
    %p249 = scmp.ne.s32.totalorder %s241, %s243
    %p250 = scmp.eq.s32.totalorder %s23, 1
    %p251 = por %p249, %p250
    %p252 = scmp.ne.s32.totalorder %s243, %s244
    %p253 = scmp.eq.s32.totalorder %s23, 0
    %p254 = por %p252, %p253
    %p255 = scmp.ne.s32.totalorder %s243, %s244
    %p256 = scmp.eq.s32.totalorder %s24, 1
    %p257 = por %p255, %p256
    %p259 = scmp.ne.s32.totalorder %s244, %s258
    %p260 = scmp.eq.s32.totalorder %s24, 0
    %p261 = por %p259, %p260
    %s263 = sadd.s32 %s262, 1
    %p266 = scmp.eq.s32.totalorder %s18, 1
    %p267 = scmp.ne.s32.totalorder %s262, %s264
    %p268 = scmp.eq.s32.totalorder %s18, 0
    %p269 = por %p267, %p268
    %p270 = scmp.ne.s32.totalorder %s262, %s264
    %p271 = scmp.eq.s32.totalorder %s23, 1
    %p272 = por %p270, %p271
    %p273 = scmp.ne.s32.totalorder %s264, %s265
    %p274 = scmp.eq.s32.totalorder %s23, 0
    %p275 = por %p273, %p274
    %p276 = scmp.ne.s32.totalorder %s264, %s265
    %p277 = scmp.eq.s32.totalorder %s24, 1
    %p278 = por %p276, %p277
    %p280 = scmp.ne.s32.totalorder %s265, %s279
    %p281 = scmp.eq.s32.totalorder %s24, 0
    %p282 = por %p280, %p281
    %s283 = ssub.s32 %s18, %s25
    %p284 = scmp.eq.s32.totalorder %s283, 0
    %s286 = sadd.s32 %s285, 1
    %s287 = scalar_select %p284, %s285, %s286
    %p290 = pneg %p284
    %p291 = scmp.eq.s32.totalorder %s18, 1
    %p292 = por %p290, %p291
    %p293 = scmp.ne.s32.totalorder %s285, %s288
    %p294 = scmp.eq.s32.totalorder %s18, 0
    %p295 = por %p293, %p294
    %p296 = scmp.ne.s32.totalorder %s285, %s288
    %p297 = scmp.eq.s32.totalorder %s23, 1
    %p298 = por %p296, %p297
    %p299 = scmp.ne.s32.totalorder %s288, %s289
    %p300 = scmp.eq.s32.totalorder %s23, 0
    %p301 = por %p299, %p300
    %p302 = scmp.ne.s32.totalorder %s288, %s289
    %p303 = scmp.eq.s32.totalorder %s24, 1
    %p304 = por %p302, %p303
    %p306 = scmp.ne.s32.totalorder %s289, %s305
    %p307 = scmp.eq.s32.totalorder %s24, 0
    %p308 = por %p306, %p307
    %p309 = scmp.le.s32.totalorder 1, %s18
    %p310 = scmp.lt.s32.totalorder %s18, 3
    %p311 = pnand %p309, %p310
    %p312 = pneg %p311
    // Predicated region
    $region9: #{mobilevit_attention.6} parent=5 // pred_check
      _
    $region10: #{mobilevit_attention.6} parent=5 // pred_check_branch
      %314 = sbr.rel (%p311) target = $region12
    $region11: #{mobilevit_attention.6} parent=5 // pred_region
      %s315 = ssub.s32 %s18, 1
      // Predicated region
      $region13: #{mobilevit_attention.6} parent=11 // pred_check
        %p316 = pneg %p65
      $region14: #{mobilevit_attention.6} parent=11 // pred_check_branch
        %318 = sbr.rel (%p316) target = $region16
      $region15: #{mobilevit_attention.6} parent=11 // pred_region
        _
      $region16: #{mobilevit_attention.6} parent=11 // pred_fallthru
        _
      // Predicated region
      $region17: #{mobilevit_attention.6} parent=11 // pred_check
        %p319 = pneg %p86
      $region18: #{mobilevit_attention.6} parent=11 // pred_check_branch
        %321 = sbr.rel (%p319) target = $region20
      $region19: #{mobilevit_attention.6} parent=11 // pred_region
        _
      $region20: #{mobilevit_attention.6} parent=11 // pred_fallthru
        _
      // Predicated region
      $region21: #{mobilevit_attention.6} parent=11 // pred_check
        %p322 = pneg %p107
      $region22: #{mobilevit_attention.6} parent=11 // pred_check_branch
        %324 = sbr.rel (%p322) target = $region24
      $region23: #{mobilevit_attention.6} parent=11 // pred_region
        _
      $region24: #{mobilevit_attention.6} parent=11 // pred_fallthru
        _
      // Predicated region
      $region25: #{mobilevit_attention.6} parent=11 // pred_check
        %p325 = pneg %p128
      $region26: #{mobilevit_attention.6} parent=11 // pred_check_branch
        %327 = sbr.rel (%p325) target = $region28
      $region27: #{mobilevit_attention.6} parent=11 // pred_region
        _
      $region28: #{mobilevit_attention.6} parent=11 // pred_fallthru
        _
      // Predicated region
      $region29: #{mobilevit_attention.6} parent=11 // pred_check
        %p328 = pneg %p149
      $region30: #{mobilevit_attention.6} parent=11 // pred_check_branch
        %330 = sbr.rel (%p328) target = $region32
      $region31: #{mobilevit_attention.6} parent=11 // pred_region
        _
      $region32: #{mobilevit_attention.6} parent=11 // pred_fallthru
        _
      // Predicated region
      $region33: #{mobilevit_attention.6} parent=11 // pred_check
        %p331 = pneg %p170
      $region34: #{mobilevit_attention.6} parent=11 // pred_check_branch
        %333 = sbr.rel (%p331) target = $region36
      $region35: #{mobilevit_attention.6} parent=11 // pred_region
        _
      $region36: #{mobilevit_attention.6} parent=11 // pred_fallthru
        _
      // Predicated region
      $region37: #{mobilevit_attention.6} parent=11 // pred_check
        %p334 = pneg %p191
      $region38: #{mobilevit_attention.6} parent=11 // pred_check_branch
        %336 = sbr.rel (%p334) target = $region40
      $region39: #{mobilevit_attention.6} parent=11 // pred_region
        _
      $region40: #{mobilevit_attention.6} parent=11 // pred_fallthru
        _
      // Predicated region
      $region41: #{mobilevit_attention.6} parent=11 // pred_check
        %p337 = pneg %p212
      $region42: #{mobilevit_attention.6} parent=11 // pred_check_branch
        %339 = sbr.rel (%p337) target = $region44
      $region43: #{mobilevit_attention.6} parent=11 // pred_region
        _
      $region44: #{mobilevit_attention.6} parent=11 // pred_fallthru
        _
      // Predicated region
      $region45: #{mobilevit_attention.6} parent=11 // pred_check
        %p340 = pneg %p233
      $region46: #{mobilevit_attention.6} parent=11 // pred_check_branch
        %342 = sbr.rel (%p340) target = $region48
      $region47: #{mobilevit_attention.6} parent=11 // pred_region
        _
      $region48: #{mobilevit_attention.6} parent=11 // pred_fallthru
        _
      // Predicated region
      $region49: #{mobilevit_attention.6} parent=11 // pred_check
        %p343 = pneg %p254
      $region50: #{mobilevit_attention.6} parent=11 // pred_check_branch
        %345 = sbr.rel (%p343) target = $region52
      $region51: #{mobilevit_attention.6} parent=11 // pred_region
        _
      $region52: #{mobilevit_attention.6} parent=11 // pred_fallthru
        _
      // Predicated region
      $region53: #{mobilevit_attention.6} parent=11 // pred_check
        %p346 = pneg %p275
      $region54: #{mobilevit_attention.6} parent=11 // pred_check_branch
        %348 = sbr.rel (%p346) target = $region56
      $region55: #{mobilevit_attention.6} parent=11 // pred_region
        _
      $region56: #{mobilevit_attention.6} parent=11 // pred_fallthru
        _
    $region12: #{mobilevit_attention.6} parent=5 // pred_fallthru
      _
    %p349 = scmp.lt.s32.totalorder %s18, 2
    // Predicated region
    $region57: #{mobilevit_attention.6} parent=5 // pred_check
      %p350 = pneg %p349
    $region58: #{mobilevit_attention.6} parent=5 // pred_check_branch
      %352 = sbr.rel (%p350) target = $region60
    $region59: #{mobilevit_attention.6} parent=5 // pred_region
      // Predicated region
      $region61: #{mobilevit_attention.6} parent=59 // pred_check
        %p353 = pneg %p38
      $region62: #{mobilevit_attention.6} parent=59 // pred_check_branch
        %355 = sbr.rel (%p353) target = $region64
      $region63: #{mobilevit_attention.6} parent=59 // pred_region
        %s356 = smul.u32 4, %s18
        %p357 = scmp.lt.s32.totalorder %s356, 7
        %s358 = scalar_select %p357, %s356, 7
        %s359 = smul.addr %s358, 8
        %s360 = smul.addr %s359, 8
        %s361 = scalar_lea.vmem %s0, %s360
        %s362 = smul.u32 4, %s18
      $region64: #{mobilevit_attention.6} parent=59 // pred_fallthru
        _
    $region60: #{mobilevit_attention.6} parent=5 // pred_fallthru
      _
    %p363 = scmp.le.s32.totalorder 1, %s18
    %p364 = scmp.lt.s32.totalorder %s18, 3
    %p365 = pnand %p363, %p364
    %p366 = pneg %p365
    // Predicated region
    $region65: #{mobilevit_attention.6} parent=5 // pred_check
      _
    $region66: #{mobilevit_attention.6} parent=5 // pred_check_branch
      %368 = sbr.rel (%p365) target = $region68
    $region67: #{mobilevit_attention.6} parent=5 // pred_region
      %s369 = ssub.s32 %s18, 1
      %s370 = smul.u32 4, %s23
      %p371 = scmp.lt.s32.totalorder %s370, 7
      %s372 = scalar_select %p371, %s370, 7
      %s373 = smul.addr %s372, 8
      %s374 = smul.addr %s373, 8
      %s375 = scalar_lea.vmem %s0, %s374
      %p376 = pneg %p44
      %p377 = pneg %p41
      %p378 = pneg %p65
      %p379 = pneg %p62
      %p380 = pneg %p86
      %p381 = pneg %p83
      %p382 = pneg %p107
      %p383 = pneg %p104
      %p384 = pneg %p128
      %p385 = pneg %p125
      %p386 = pneg %p149
      %p387 = pneg %p146
      %p388 = pneg %p170
      %p389 = pneg %p167
      %p390 = pneg %p191
      %p391 = pneg %p188
      %p392 = pneg %p212
      %p393 = pneg %p209
      %p394 = pneg %p233
      %p395 = pneg %p230
      %p396 = pneg %p254
      %p397 = pneg %p251
      %p398 = pneg %p275
      %p399 = pneg %p272
      %p400 = pneg %p301
      %p401 = pneg %p298
      %s402 = smul.u32 4, %s23
      %p403 = scmp.lt.s32.totalorder %s402, 7
      %s404 = scalar_select %p403, %s402, 7
      %s405 = smul.addr %s404, 8
      %s406 = smul.addr %s405, 8
      %s407 = scalar_lea.vmem %s12, %s406
      %s408 = smul.u32 4, %s23
      %p409 = scmp.lt.s32.totalorder %s408, 7
      %s410 = scalar_select %p409, %s408, 7
      %s411 = smul.addr %s410, 8
      %s412 = smul.addr %s411, 8
      %s413 = scalar_lea.vmem %s0, %s412
      %s414 = smul.u32 4, %s23
      %s415 = smul.u32 4, %s23
      %p416 = scmp.lt.s32.totalorder %s415, 7
      %s417 = scalar_select %p416, %s415, 7
      %s418 = smul.addr %s417, 8
      %s419 = smul.addr %s418, 8
      %s420 = scalar_lea.vmem %s12, %s419
      %s421 = smul.u32 4, %s23
      %v423 = vld [vmem:[%s413] sm:$0xff]
      %v424 = vld [vmem:[%s413 + $0x8] sm:$0xff]
      %v425 = vld [vmem:[%s413 + $0x10] sm:$0xff]
      %v426 = vld [vmem:[%s413 + $0x18] sm:$0xff]
      %v427 = vld [vmem:[%s413 + $0x20] sm:$0xff]
      %v428 = vld [vmem:[%s413 + $0x28] sm:$0xff]
      %v429 = vld [vmem:[%s413 + $0x30] sm:$0xff]
      %v430 = vld [vmem:[%s413 + $0x38] sm:$0xff]
      %v431 = vld [vmem:[%s413 + $0x40] sm:$0xff]
      %v432 = vld [vmem:[%s413 + $0x48] sm:$0xff]
      %v433 = vld [vmem:[%s413 + $0x50] sm:$0xff]
      %v434 = vld [vmem:[%s413 + $0x58] sm:$0xff]
      %v435 = vld [vmem:[%s413 + $0x60] sm:$0xff]
      %v436 = vld [vmem:[%s413 + $0x68] sm:$0xff]
      %v437 = vld [vmem:[%s413 + $0x70] sm:$0xff]
      %v438 = vld [vmem:[%s413 + $0x78] sm:$0xff]
      %v439 = vld [vmem:[%s413 + $0x80] sm:$0xff]
      %v440 = vld [vmem:[%s413 + $0x88] sm:$0xff]
      %v441 = vld [vmem:[%s413 + $0x90] sm:$0xff]
      %v442 = vld [vmem:[%s413 + $0x98] sm:$0xff]
      %v443 = vld [vmem:[%s413 + $0xa0] sm:$0xff]
      %v444 = vld [vmem:[%s413 + $0xa8] sm:$0xff]
      %v445 = vld [vmem:[%s413 + $0xb0] sm:$0xff]
      %v446 = vld [vmem:[%s413 + $0xb8] sm:$0xff]
      %v447 = vld [vmem:[%s413 + $0xc0] sm:$0xff]
      %v448 = vld [vmem:[%s413 + $0xc8] sm:$0xff]
      %v449 = vld [vmem:[%s413 + $0xd0] sm:$0xff]
      %v450 = vld [vmem:[%s413 + $0xd8] sm:$0xff]
      %v451 = vld [vmem:[%s413 + $0xe0] sm:$0xff]
      %v452 = vld [vmem:[%s413 + $0xe8] sm:$0xff]
      %v453 = vld [vmem:[%s413 + $0xf0] sm:$0xff]
      %v454 = vld [vmem:[%s413 + $0xf8] sm:$0xff]
      %v455 = vld [vmem:[%s1] sm:$0x1]
      %v456 = vld [vmem:[%s2] sm:$0x1]
      %vm457 = vcmask 261120
      %v458 = vsel %vm457, %v423, 0.0
      %459 = vadd.xlane.f32.xlu0 %v458
      %v460 = vpop.xlane.xlu0 %459
      %v461 = vsel %vm457, %v424, 0.0
      %462 = vadd.xlane.f32.xlu0 %v461
      %v463 = vpop.xlane.xlu0 %462
      %v464 = vsel %vm457, %v425, 0.0
      %465 = vadd.xlane.f32.xlu0 %v464
      %v466 = vpop.xlane.xlu0 %465
      %v467 = vsel %vm457, %v426, 0.0
      %468 = vadd.xlane.f32.xlu0 %v467
      %v469 = vpop.xlane.xlu0 %468
      %v470 = vsel %vm457, %v427, 0.0
      %471 = vadd.xlane.f32.xlu0 %v470
      %v472 = vpop.xlane.xlu0 %471
      %v473 = vsel %vm457, %v428, 0.0
      %474 = vadd.xlane.f32.xlu0 %v473
      %v475 = vpop.xlane.xlu0 %474
      %v476 = vsel %vm457, %v429, 0.0
      %477 = vadd.xlane.f32.xlu0 %v476
      %v478 = vpop.xlane.xlu0 %477
      %v479 = vsel %vm457, %v430, 0.0
      %480 = vadd.xlane.f32.xlu0 %v479
      %v481 = vpop.xlane.xlu0 %480
      %v482 = vsel %vm457, %v431, 0.0
      %483 = vadd.xlane.f32.xlu0 %v482
      %v484 = vpop.xlane.xlu0 %483
      %v485 = vsel %vm457, %v432, 0.0
      %486 = vadd.xlane.f32.xlu0 %v485
      %v487 = vpop.xlane.xlu0 %486
      %v488 = vsel %vm457, %v433, 0.0
      %489 = vadd.xlane.f32.xlu0 %v488
      %v490 = vpop.xlane.xlu0 %489
      %v491 = vsel %vm457, %v434, 0.0
      %492 = vadd.xlane.f32.xlu0 %v491
      %v493 = vpop.xlane.xlu0 %492
      %v494 = vsel %vm457, %v435, 0.0
      %495 = vadd.xlane.f32.xlu0 %v494
      %v496 = vpop.xlane.xlu0 %495
      %v497 = vsel %vm457, %v436, 0.0
      %498 = vadd.xlane.f32.xlu0 %v497
      %v499 = vpop.xlane.xlu0 %498
      %v500 = vsel %vm457, %v437, 0.0
      %501 = vadd.xlane.f32.xlu0 %v500
      %v502 = vpop.xlane.xlu0 %501
      %v503 = vsel %vm457, %v438, 0.0
      %504 = vadd.xlane.f32.xlu0 %v503
      %v505 = vpop.xlane.xlu0 %504
      %v506 = vsel %vm457, %v439, 0.0
      %507 = vadd.xlane.f32.xlu0 %v506
      %v508 = vpop.xlane.xlu0 %507
      %v509 = vsel %vm457, %v440, 0.0
      %510 = vadd.xlane.f32.xlu0 %v509
      %v511 = vpop.xlane.xlu0 %510
      %v512 = vsel %vm457, %v441, 0.0
      %513 = vadd.xlane.f32.xlu0 %v512
      %v514 = vpop.xlane.xlu0 %513
      %v515 = vsel %vm457, %v442, 0.0
      %516 = vadd.xlane.f32.xlu0 %v515
      %v517 = vpop.xlane.xlu0 %516
      %v518 = vsel %vm457, %v443, 0.0
      %519 = vadd.xlane.f32.xlu0 %v518
      %v520 = vpop.xlane.xlu0 %519
      %v521 = vsel %vm457, %v444, 0.0
      %522 = vadd.xlane.f32.xlu0 %v521
      %v523 = vpop.xlane.xlu0 %522
      %v524 = vsel %vm457, %v445, 0.0
      %525 = vadd.xlane.f32.xlu0 %v524
      %v526 = vpop.xlane.xlu0 %525
      %v527 = vsel %vm457, %v446, 0.0
      %528 = vadd.xlane.f32.xlu0 %v527
      %v529 = vpop.xlane.xlu0 %528
      %v530 = vsel %vm457, %v447, 0.0
      %531 = vadd.xlane.f32.xlu0 %v530
      %v532 = vpop.xlane.xlu0 %531
      %v533 = vsel %vm457, %v448, 0.0
      %534 = vadd.xlane.f32.xlu0 %v533
      %v535 = vpop.xlane.xlu0 %534
      %v536 = vsel %vm457, %v449, 0.0
      %537 = vadd.xlane.f32.xlu0 %v536
      %v538 = vpop.xlane.xlu0 %537
      %v539 = vsel %vm457, %v450, 0.0
      %540 = vadd.xlane.f32.xlu0 %v539
      %v541 = vpop.xlane.xlu0 %540
      %v542 = vsel %vm457, %v451, 0.0
      %543 = vadd.xlane.f32.xlu0 %v542
      %v544 = vpop.xlane.xlu0 %543
      %v545 = vsel %vm457, %v452, 0.0
      %546 = vadd.xlane.f32.xlu0 %v545
      %v547 = vpop.xlane.xlu0 %546
      %v548 = vsel %vm457, %v453, 0.0
      %549 = vadd.xlane.f32.xlu0 %v548
      %v550 = vpop.xlane.xlu0 %549
      %v551 = vsel %vm457, %v454, 0.0
      %552 = vadd.xlane.f32.xlu0 %v551
      %v553 = vpop.xlane.xlu0 %552
      %v554 = vrcp.pop 32.0
      %v555 = vmul.f32 %v460, %v554
      %v556 = vmul.f32 %v463, %v554
      %v557 = vmul.f32 %v466, %v554
      %v558 = vmul.f32 %v469, %v554
      %v559 = vmul.f32 %v472, %v554
      %v560 = vmul.f32 %v475, %v554
      %v561 = vmul.f32 %v478, %v554
      %v562 = vmul.f32 %v481, %v554
      %v563 = vmul.f32 %v484, %v554
      %v564 = vmul.f32 %v487, %v554
      %v565 = vmul.f32 %v490, %v554
      %v566 = vmul.f32 %v493, %v554
      %v567 = vmul.f32 %v496, %v554
      %v568 = vmul.f32 %v499, %v554
      %v569 = vmul.f32 %v502, %v554
      %v570 = vmul.f32 %v505, %v554
      %v571 = vmul.f32 %v508, %v554
      %v572 = vmul.f32 %v511, %v554
      %v573 = vmul.f32 %v514, %v554
      %v574 = vmul.f32 %v517, %v554
      %v575 = vmul.f32 %v520, %v554
      %v576 = vmul.f32 %v523, %v554
      %v577 = vmul.f32 %v526, %v554
      %v578 = vmul.f32 %v529, %v554
      %v579 = vmul.f32 %v532, %v554
      %v580 = vmul.f32 %v535, %v554
      %v581 = vmul.f32 %v538, %v554
      %v582 = vmul.f32 %v541, %v554
      %v583 = vmul.f32 %v544, %v554
      %v584 = vmul.f32 %v547, %v554
      %v585 = vmul.f32 %v550, %v554
      %v586 = vmul.f32 %v553, %v554
      %v587 = vsub.f32 %v423, %v555
      %v588 = vsub.f32 %v424, %v556
      %v589 = vsub.f32 %v425, %v557
      %v590 = vsub.f32 %v426, %v558
      %v591 = vsub.f32 %v427, %v559
      %v592 = vsub.f32 %v428, %v560
      %v593 = vsub.f32 %v429, %v561
      %v594 = vsub.f32 %v430, %v562
      %v595 = vsub.f32 %v431, %v563
      %v596 = vsub.f32 %v432, %v564
      %v597 = vsub.f32 %v433, %v565
      %v598 = vsub.f32 %v434, %v566
      %v599 = vsub.f32 %v435, %v567
      %v600 = vsub.f32 %v436, %v568
      %v601 = vsub.f32 %v437, %v569
      %v602 = vsub.f32 %v438, %v570
      %v603 = vsub.f32 %v439, %v571
      %v604 = vsub.f32 %v440, %v572
      %v605 = vsub.f32 %v441, %v573
      %v606 = vsub.f32 %v442, %v574
      %v607 = vsub.f32 %v443, %v575
      %v608 = vsub.f32 %v444, %v576
      %v609 = vsub.f32 %v445, %v577
      %v610 = vsub.f32 %v446, %v578
      %v611 = vsub.f32 %v447, %v579
      %v612 = vsub.f32 %v448, %v580
      %v613 = vsub.f32 %v449, %v581
      %v614 = vsub.f32 %v450, %v582
      %v615 = vsub.f32 %v451, %v583
      %v616 = vsub.f32 %v452, %v584
      %v617 = vsub.f32 %v453, %v585
      %v618 = vsub.f32 %v454, %v586
      %v619 = vmul.f32 %v587, %v587
      %v620 = vmul.f32 %v588, %v588
      %v621 = vmul.f32 %v589, %v589
      %v622 = vmul.f32 %v590, %v590
      %v623 = vmul.f32 %v591, %v591
      %v624 = vmul.f32 %v592, %v592
      %v625 = vmul.f32 %v593, %v593
      %v626 = vmul.f32 %v594, %v594
      %v627 = vmul.f32 %v595, %v595
      %v628 = vmul.f32 %v596, %v596
      %v629 = vmul.f32 %v597, %v597
      %v630 = vmul.f32 %v598, %v598
      %v631 = vmul.f32 %v599, %v599
      %v632 = vmul.f32 %v600, %v600
      %v633 = vmul.f32 %v601, %v601
      %v634 = vmul.f32 %v602, %v602
      %v635 = vmul.f32 %v603, %v603
      %v636 = vmul.f32 %v604, %v604
      %v637 = vmul.f32 %v605, %v605
      %v638 = vmul.f32 %v606, %v606
      %v639 = vmul.f32 %v607, %v607
      %v640 = vmul.f32 %v608, %v608
      %v641 = vmul.f32 %v609, %v609
      %v642 = vmul.f32 %v610, %v610
      %v643 = vmul.f32 %v611, %v611
      %v644 = vmul.f32 %v612, %v612
      %v645 = vmul.f32 %v613, %v613
      %v646 = vmul.f32 %v614, %v614
      %v647 = vmul.f32 %v615, %v615
      %v648 = vmul.f32 %v616, %v616
      %v649 = vmul.f32 %v617, %v617
      %v650 = vmul.f32 %v618, %v618
      %v651 = vsel %vm457, %v619, 0.0
      %652 = vadd.xlane.f32.xlu0 %v651
      %v653 = vpop.xlane.xlu0 %652
      %v654 = vsel %vm457, %v620, 0.0
      %655 = vadd.xlane.f32.xlu0 %v654
      %v656 = vpop.xlane.xlu0 %655
      %v657 = vsel %vm457, %v621, 0.0
      %658 = vadd.xlane.f32.xlu0 %v657
      %v659 = vpop.xlane.xlu0 %658
      %v660 = vsel %vm457, %v622, 0.0
      %661 = vadd.xlane.f32.xlu0 %v660
      %v662 = vpop.xlane.xlu0 %661
      %v663 = vsel %vm457, %v623, 0.0
      %664 = vadd.xlane.f32.xlu0 %v663
      %v665 = vpop.xlane.xlu0 %664
      %v666 = vsel %vm457, %v624, 0.0
      %667 = vadd.xlane.f32.xlu0 %v666
      %v668 = vpop.xlane.xlu0 %667
      %v669 = vsel %vm457, %v625, 0.0
      %670 = vadd.xlane.f32.xlu0 %v669
      %v671 = vpop.xlane.xlu0 %670
      %v672 = vsel %vm457, %v626, 0.0
      %673 = vadd.xlane.f32.xlu0 %v672
      %v674 = vpop.xlane.xlu0 %673
      %v675 = vsel %vm457, %v627, 0.0
      %676 = vadd.xlane.f32.xlu0 %v675
      %v677 = vpop.xlane.xlu0 %676
      %v678 = vsel %vm457, %v628, 0.0
      %679 = vadd.xlane.f32.xlu0 %v678
      %v680 = vpop.xlane.xlu0 %679
      %v681 = vsel %vm457, %v629, 0.0
      %682 = vadd.xlane.f32.xlu0 %v681
      %v683 = vpop.xlane.xlu0 %682
      %v684 = vsel %vm457, %v630, 0.0
      %685 = vadd.xlane.f32.xlu0 %v684
      %v686 = vpop.xlane.xlu0 %685
      %v687 = vsel %vm457, %v631, 0.0
      %688 = vadd.xlane.f32.xlu0 %v687
      %v689 = vpop.xlane.xlu0 %688
      %v690 = vsel %vm457, %v632, 0.0
      %691 = vadd.xlane.f32.xlu0 %v690
      %v692 = vpop.xlane.xlu0 %691
      %v693 = vsel %vm457, %v633, 0.0
      %694 = vadd.xlane.f32.xlu0 %v693
      %v695 = vpop.xlane.xlu0 %694
      %v696 = vsel %vm457, %v634, 0.0
      %697 = vadd.xlane.f32.xlu0 %v696
      %v698 = vpop.xlane.xlu0 %697
      %v699 = vsel %vm457, %v635, 0.0
      %700 = vadd.xlane.f32.xlu0 %v699
      %v701 = vpop.xlane.xlu0 %700
      %v702 = vsel %vm457, %v636, 0.0
      %703 = vadd.xlane.f32.xlu0 %v702
      %v704 = vpop.xlane.xlu0 %703
      %v705 = vsel %vm457, %v637, 0.0
      %706 = vadd.xlane.f32.xlu0 %v705
      %v707 = vpop.xlane.xlu0 %706
      %v708 = vsel %vm457, %v638, 0.0
      %709 = vadd.xlane.f32.xlu0 %v708
      %v710 = vpop.xlane.xlu0 %709
      %v711 = vsel %vm457, %v639, 0.0
      %712 = vadd.xlane.f32.xlu0 %v711
      %v713 = vpop.xlane.xlu0 %712
      %v714 = vsel %vm457, %v640, 0.0
      %715 = vadd.xlane.f32.xlu0 %v714
      %v716 = vpop.xlane.xlu0 %715
      %v717 = vsel %vm457, %v641, 0.0
      %718 = vadd.xlane.f32.xlu0 %v717
      %v719 = vpop.xlane.xlu0 %718
      %v720 = vsel %vm457, %v642, 0.0
      %721 = vadd.xlane.f32.xlu0 %v720
      %v722 = vpop.xlane.xlu0 %721
      %v723 = vsel %vm457, %v643, 0.0
      %724 = vadd.xlane.f32.xlu0 %v723
      %v725 = vpop.xlane.xlu0 %724
      %v726 = vsel %vm457, %v644, 0.0
      %727 = vadd.xlane.f32.xlu0 %v726
      %v728 = vpop.xlane.xlu0 %727
      %v729 = vsel %vm457, %v645, 0.0
      %730 = vadd.xlane.f32.xlu0 %v729
      %v731 = vpop.xlane.xlu0 %730
      %v732 = vsel %vm457, %v646, 0.0
      %733 = vadd.xlane.f32.xlu0 %v732
      %v734 = vpop.xlane.xlu0 %733
      %v735 = vsel %vm457, %v647, 0.0
      %736 = vadd.xlane.f32.xlu0 %v735
      %v737 = vpop.xlane.xlu0 %736
      %v738 = vsel %vm457, %v648, 0.0
      %739 = vadd.xlane.f32.xlu0 %v738
      %v740 = vpop.xlane.xlu0 %739
      %v741 = vsel %vm457, %v649, 0.0
      %742 = vadd.xlane.f32.xlu0 %v741
      %v743 = vpop.xlane.xlu0 %742
      %v744 = vsel %vm457, %v650, 0.0
      %745 = vadd.xlane.f32.xlu0 %v744
      %v746 = vpop.xlane.xlu0 %745
      %v747 = vmul.f32 %v653, %v554
      %v748 = vmul.f32 %v656, %v554
      %v749 = vmul.f32 %v659, %v554
      %v750 = vmul.f32 %v662, %v554
      %v751 = vmul.f32 %v665, %v554
      %v752 = vmul.f32 %v668, %v554
      %v753 = vmul.f32 %v671, %v554
      %v754 = vmul.f32 %v674, %v554
      %v755 = vmul.f32 %v677, %v554
      %v756 = vmul.f32 %v680, %v554
      %v757 = vmul.f32 %v683, %v554
      %v758 = vmul.f32 %v686, %v554
      %v759 = vmul.f32 %v689, %v554
      %v760 = vmul.f32 %v692, %v554
      %v761 = vmul.f32 %v695, %v554
      %v762 = vmul.f32 %v698, %v554
      %v763 = vmul.f32 %v701, %v554
      %v764 = vmul.f32 %v704, %v554
      %v765 = vmul.f32 %v707, %v554
      %v766 = vmul.f32 %v710, %v554
      %v767 = vmul.f32 %v713, %v554
      %v768 = vmul.f32 %v716, %v554
      %v769 = vmul.f32 %v719, %v554
      %v770 = vmul.f32 %v722, %v554
      %v771 = vmul.f32 %v725, %v554
      %v772 = vmul.f32 %v728, %v554
      %v773 = vmul.f32 %v731, %v554
      %v774 = vmul.f32 %v734, %v554
      %v775 = vmul.f32 %v737, %v554
      %v776 = vmul.f32 %v740, %v554
      %v777 = vmul.f32 %v743, %v554
      %v778 = vmul.f32 %v746, %v554
      %v779 = vadd.f32 %v747, 1e-05
      %v780 = vadd.f32 %v748, 1e-05
      %v781 = vadd.f32 %v749, 1e-05
      %v782 = vadd.f32 %v750, 1e-05
      %v783 = vadd.f32 %v751, 1e-05
      %v784 = vadd.f32 %v752, 1e-05
      %v785 = vadd.f32 %v753, 1e-05
      %v786 = vadd.f32 %v754, 1e-05
      %v787 = vadd.f32 %v755, 1e-05
      %v788 = vadd.f32 %v756, 1e-05
      %v789 = vadd.f32 %v757, 1e-05
      %v790 = vadd.f32 %v758, 1e-05
      %v791 = vadd.f32 %v759, 1e-05
      %v792 = vadd.f32 %v760, 1e-05
      %v793 = vadd.f32 %v761, 1e-05
      %v794 = vadd.f32 %v762, 1e-05
      %v795 = vadd.f32 %v763, 1e-05
      %v796 = vadd.f32 %v764, 1e-05
      %v797 = vadd.f32 %v765, 1e-05
      %v798 = vadd.f32 %v766, 1e-05
      %v799 = vadd.f32 %v767, 1e-05
      %v800 = vadd.f32 %v768, 1e-05
      %v801 = vadd.f32 %v769, 1e-05
      %v802 = vadd.f32 %v770, 1e-05
      %v803 = vadd.f32 %v771, 1e-05
      %v804 = vadd.f32 %v772, 1e-05
      %v805 = vadd.f32 %v773, 1e-05
      %v806 = vadd.f32 %v774, 1e-05
      %v807 = vadd.f32 %v775, 1e-05
      %v808 = vadd.f32 %v776, 1e-05
      %v809 = vadd.f32 %v777, 1e-05
      %v810 = vadd.f32 %v778, 1e-05
      %v811 = vrsqrt.pop %v779
      %v812 = vrsqrt.pop %v780
      %v813 = vrsqrt.pop %v781
      %v814 = vrsqrt.pop %v782
      %v815 = vrsqrt.pop %v783
      %v816 = vrsqrt.pop %v784
      %v817 = vrsqrt.pop %v785
      %v818 = vrsqrt.pop %v786
      %v819 = vrsqrt.pop %v787
      %v820 = vrsqrt.pop %v788
      %v821 = vrsqrt.pop %v789
      %v822 = vrsqrt.pop %v790
      %v823 = vrsqrt.pop %v791
      %v824 = vrsqrt.pop %v792
      %v825 = vrsqrt.pop %v793
      %v826 = vrsqrt.pop %v794
      %v827 = vrsqrt.pop %v795
      %v828 = vrsqrt.pop %v796
      %v829 = vrsqrt.pop %v797
      %v830 = vrsqrt.pop %v798
      %v831 = vrsqrt.pop %v799
      %v832 = vrsqrt.pop %v800
      %v833 = vrsqrt.pop %v801
      %v834 = vrsqrt.pop %v802
      %v835 = vrsqrt.pop %v803
      %v836 = vrsqrt.pop %v804
      %v837 = vrsqrt.pop %v805
      %v838 = vrsqrt.pop %v806
      %v839 = vrsqrt.pop %v807
      %v840 = vrsqrt.pop %v808
      %v841 = vrsqrt.pop %v809
      %v842 = vrsqrt.pop %v810
      %v843 = vmul.f32 %v587, %v811
      %v844 = vmul.f32 %v588, %v812
      %v845 = vmul.f32 %v589, %v813
      %v846 = vmul.f32 %v590, %v814
      %v847 = vmul.f32 %v591, %v815
      %v848 = vmul.f32 %v592, %v816
      %v849 = vmul.f32 %v593, %v817
      %v850 = vmul.f32 %v594, %v818
      %v851 = vmul.f32 %v595, %v819
      %v852 = vmul.f32 %v596, %v820
      %v853 = vmul.f32 %v597, %v821
      %v854 = vmul.f32 %v598, %v822
      %v855 = vmul.f32 %v599, %v823
      %v856 = vmul.f32 %v600, %v824
      %v857 = vmul.f32 %v601, %v825
      %v858 = vmul.f32 %v602, %v826
      %v859 = vmul.f32 %v603, %v827
      %v860 = vmul.f32 %v604, %v828
      %v861 = vmul.f32 %v605, %v829
      %v862 = vmul.f32 %v606, %v830
      %v863 = vmul.f32 %v607, %v831
      %v864 = vmul.f32 %v608, %v832
      %v865 = vmul.f32 %v609, %v833
      %v866 = vmul.f32 %v610, %v834
      %v867 = vmul.f32 %v611, %v835
      %v868 = vmul.f32 %v612, %v836
      %v869 = vmul.f32 %v613, %v837
      %v870 = vmul.f32 %v614, %v838
      %v871 = vmul.f32 %v615, %v839
      %v872 = vmul.f32 %v616, %v840
      %v873 = vmul.f32 %v617, %v841
      %v874 = vmul.f32 %v618, %v842
      %v876 = vlaneseq
      %v877 = vshrl.u32 %v876, 7
      %v878 = vsub.s32 0, %v877
      %v879 = vrot.slane %v455, %v878
      %v881 = vmul.f32 %v843, %v879
      %v882 = vmul.f32 %v844, %v879
      %v883 = vmul.f32 %v845, %v879
      %v884 = vmul.f32 %v846, %v879
      %v885 = vmul.f32 %v847, %v879
      %v886 = vmul.f32 %v848, %v879
      %v887 = vmul.f32 %v849, %v879
      %v888 = vmul.f32 %v850, %v879
      %v889 = vmul.f32 %v851, %v879
      %v890 = vmul.f32 %v852, %v879
      %v891 = vmul.f32 %v853, %v879
      %v892 = vmul.f32 %v854, %v879
      %v893 = vmul.f32 %v855, %v879
      %v894 = vmul.f32 %v856, %v879
      %v895 = vmul.f32 %v857, %v879
      %v896 = vmul.f32 %v858, %v879
      %v897 = vmul.f32 %v859, %v879
      %v898 = vmul.f32 %v860, %v879
      %v899 = vmul.f32 %v861, %v879
      %v900 = vmul.f32 %v862, %v879
      %v901 = vmul.f32 %v863, %v879
      %v902 = vmul.f32 %v864, %v879
      %v903 = vmul.f32 %v865, %v879
      %v904 = vmul.f32 %v866, %v879
      %v905 = vmul.f32 %v867, %v879
      %v906 = vmul.f32 %v868, %v879
      %v907 = vmul.f32 %v869, %v879
      %v908 = vmul.f32 %v870, %v879
      %v909 = vmul.f32 %v871, %v879
      %v910 = vmul.f32 %v872, %v879
      %v911 = vmul.f32 %v873, %v879
      %v912 = vmul.f32 %v874, %v879
      %v914 = vlaneseq
      %v915 = vshrl.u32 %v914, 7
      %v916 = vsub.s32 0, %v915
      %v917 = vrot.slane %v456, %v916
      %v919 = vadd.f32 %v881, %v917
      %v920 = vadd.f32 %v882, %v917
      %v921 = vadd.f32 %v883, %v917
      %v922 = vadd.f32 %v884, %v917
      %v923 = vadd.f32 %v885, %v917
      %v924 = vadd.f32 %v886, %v917
      %v925 = vadd.f32 %v887, %v917
      %v926 = vadd.f32 %v888, %v917
      %v927 = vadd.f32 %v889, %v917
      %v928 = vadd.f32 %v890, %v917
      %v929 = vadd.f32 %v891, %v917
      %v930 = vadd.f32 %v892, %v917
      %v931 = vadd.f32 %v893, %v917
      %v932 = vadd.f32 %v894, %v917
      %v933 = vadd.f32 %v895, %v917
      %v934 = vadd.f32 %v896, %v917
      %v935 = vadd.f32 %v897, %v917
      %v936 = vadd.f32 %v898, %v917
      %v937 = vadd.f32 %v899, %v917
      %v938 = vadd.f32 %v900, %v917
      %v939 = vadd.f32 %v901, %v917
      %v940 = vadd.f32 %v902, %v917
      %v941 = vadd.f32 %v903, %v917
      %v942 = vadd.f32 %v904, %v917
      %v943 = vadd.f32 %v905, %v917
      %v944 = vadd.f32 %v906, %v917
      %v945 = vadd.f32 %v907, %v917
      %v946 = vadd.f32 %v908, %v917
      %v947 = vadd.f32 %v909, %v917
      %v948 = vadd.f32 %v910, %v917
      %v949 = vadd.f32 %v911, %v917
      %v950 = vadd.f32 %v912, %v917
      %v951 = vpack.c.bf16 %v920, %v919
      %v952 = vpack.c.bf16 %v922, %v921
      %v953 = vpack.c.bf16 %v924, %v923
      %v954 = vpack.c.bf16 %v926, %v925
      %v955 = vpack.c.bf16 %v928, %v927
      %v956 = vpack.c.bf16 %v930, %v929
      %v957 = vpack.c.bf16 %v932, %v931
      %v958 = vpack.c.bf16 %v934, %v933
      %v959 = vpack.c.bf16 %v936, %v935
      %v960 = vpack.c.bf16 %v938, %v937
      %v961 = vpack.c.bf16 %v940, %v939
      %v962 = vpack.c.bf16 %v942, %v941
      %v963 = vpack.c.bf16 %v944, %v943
      %v964 = vpack.c.bf16 %v946, %v945
      %v965 = vpack.c.bf16 %v948, %v947
      %v966 = vpack.c.bf16 %v950, %v949
      %v967 = vld [vmem:[%s3] sm:$0xf]
      %v968 = vld [vmem:[%s3 + $0x4] sm:$0xf]
      %v969 = vld [vmem:[%s3 + $0x8] sm:$0xf]
      %v970 = vld [vmem:[%s3 + $0xc] sm:$0xf]
      %v975 = vunpack.c.l.b16 %v967
      %v976 = vunpack.c.l.b16 %v968
      %v977 = vunpack.c.l.b16 %v969
      %v978 = vunpack.c.l.b16 %v970
      %v979 = vpack.c.b16 %v976, %v975
      %v980 = vpack.c.b16 %v978, %v977
      %v984 = vsel %vm457, %v951, 0
      %v987 = vsel %vm457, %v952, 0
      %v990 = vsel %vm457, %v953, 0
      %v993 = vsel %vm457, %v954, 0
      %v996 = vsel %vm457, %v955, 0
      %v999 = vsel %vm457, %v956, 0
      %v1002 = vsel %vm457, %v957, 0
      %v1005 = vsel %vm457, %v958, 0
      %v1008 = vsel %vm457, %v959, 0
      %v1011 = vsel %vm457, %v960, 0
      %v1014 = vsel %vm457, %v961, 0
      %v1017 = vsel %vm457, %v962, 0
      %v1020 = vsel %vm457, %v963, 0
      %v1023 = vsel %vm457, %v964, 0
      %v1026 = vsel %vm457, %v965, 0
      %v1029 = vsel %vm457, %v966, 0
      %1031 = vmatprep.subr.bf16.mxu0 0
      %1032 = vmatpush1.bf16.msra.mxu0 0
      %1033 = vmatprep.subr.bf16.mxu0 0
      %1034 = vmatpush1.bf16.msra.mxu0 0
      %1035 = vmatprep.subr.bf16.mxu0 0
      %1036 = vmatpush1.bf16.msra.mxu0 0
      %1037 = vmatprep.subr.bf16.mxu0 0
      %1038 = vmatpush1.bf16.msra.mxu0 0
      %1039 = vmatprep.subr.bf16.mxu0 0
      %1040 = vmatpush1.bf16.msra.mxu0 0
      %1041 = vmatprep.subr.bf16.mxu0 0
      %1042 = vmatpush1.bf16.msra.mxu0 0
      %1043 = vmatprep.subr.bf16.mxu0 0
      %1044 = vmatpush1.bf16.msra.mxu0 %v980
      %1045 = vmatprep.subr.bf16.mxu0 0
      %1046 = vmatpush1.bf16.msra.mxu0 %v979
      %1047 = vmatprep.subr.bf16.mxu0 0
      %1048 = vmatpush2.bf16.msra.mxu0 0
      %1049 = vmatprep.subr.bf16.mxu0 0
      %1050 = vmatpush2.bf16.msra.mxu0 0
      %1051 = vmatprep.subr.bf16.mxu0 0
      %1052 = vmatpush2.bf16.msra.mxu0 0
      %1053 = vmatprep.subr.bf16.mxu0 0
      %1054 = vmatpush2.bf16.msra.mxu0 0
      %1055 = vmatprep.subr.bf16.mxu0 0
      %1056 = vmatpush2.bf16.msra.mxu0 0
      %1057 = vmatprep.subr.bf16.mxu0 0
      %1058 = vmatpush2.bf16.msra.mxu0 0
      %1059 = vmatprep.subr.bf16.mxu0 0
      %1060 = vmatpush2.bf16.msra.mxu0 0
      %1061 = vmatprep.subr.bf16.mxu0 0
      %1062 = vmatpush2.bf16.msra.mxu0 0
      %1063 = vmatprep.mubr.bf16.mxu0 0
      %1064 = vmatmul.mubr.bf16.gmra.mxu0 %v984
      %v1065 = vpop.f32.mrf.mxu0
      %v1066 = vadd.f32 0.0, %v1065
      %v1067 = vpop.f32.mrf.mxu0
      %v1068 = vpop.f32.mrf.mxu0
      %v1069 = vadd.f32 0.0, %v1068
      %v1070 = vpop.f32.mrf.mxu0
      %1071 = vmatprep.mubr.bf16.mxu0 0
      %1072 = vmatmul.mubr.bf16.gmra.mxu0 %v987
      %v1073 = vpop.f32.mrf.mxu0
      %v1074 = vadd.f32 0.0, %v1073
      %v1075 = vpop.f32.mrf.mxu0
      %v1076 = vpop.f32.mrf.mxu0
      %v1077 = vadd.f32 0.0, %v1076
      %v1078 = vpop.f32.mrf.mxu0
      %1079 = vmatprep.mubr.bf16.mxu0 0
      %1080 = vmatmul.mubr.bf16.gmra.mxu0 %v990
      %v1081 = vpop.f32.mrf.mxu0
      %v1082 = vadd.f32 0.0, %v1081
      %v1083 = vpop.f32.mrf.mxu0
      %v1084 = vpop.f32.mrf.mxu0
      %v1085 = vadd.f32 0.0, %v1084
      %v1086 = vpop.f32.mrf.mxu0
      %1087 = vmatprep.mubr.bf16.mxu0 0
      %1088 = vmatmul.mubr.bf16.gmra.mxu0 %v993
      %v1089 = vpop.f32.mrf.mxu0
      %v1090 = vadd.f32 0.0, %v1089
      %v1091 = vpop.f32.mrf.mxu0
      %v1092 = vpop.f32.mrf.mxu0
      %v1093 = vadd.f32 0.0, %v1092
      %v1094 = vpop.f32.mrf.mxu0
      %1095 = vmatprep.mubr.bf16.mxu0 0
      %1096 = vmatmul.mubr.bf16.gmra.mxu0 %v996
      %v1097 = vpop.f32.mrf.mxu0
      %v1098 = vadd.f32 0.0, %v1097
      %v1099 = vpop.f32.mrf.mxu0
      %v1100 = vpop.f32.mrf.mxu0
      %v1101 = vadd.f32 0.0, %v1100
      %v1102 = vpop.f32.mrf.mxu0
      %1103 = vmatprep.mubr.bf16.mxu0 0
      %1104 = vmatmul.mubr.bf16.gmra.mxu0 %v999
      %v1105 = vpop.f32.mrf.mxu0
      %v1106 = vadd.f32 0.0, %v1105
      %v1107 = vpop.f32.mrf.mxu0
      %v1108 = vpop.f32.mrf.mxu0
      %v1109 = vadd.f32 0.0, %v1108
      %v1110 = vpop.f32.mrf.mxu0
      %1111 = vmatprep.mubr.bf16.mxu0 0
      %1112 = vmatmul.mubr.bf16.gmra.mxu0 %v1002
      %v1113 = vpop.f32.mrf.mxu0
      %v1114 = vadd.f32 0.0, %v1113
      %v1115 = vpop.f32.mrf.mxu0
      %v1116 = vpop.f32.mrf.mxu0
      %v1117 = vadd.f32 0.0, %v1116
      %v1118 = vpop.f32.mrf.mxu0
      %1119 = vmatprep.mubr.bf16.mxu0 0
      %1120 = vmatmul.mubr.bf16.gmra.mxu0 %v1005
      %v1121 = vpop.f32.mrf.mxu0
      %v1122 = vadd.f32 0.0, %v1121
      %v1123 = vpop.f32.mrf.mxu0
      %v1124 = vpop.f32.mrf.mxu0
      %v1125 = vadd.f32 0.0, %v1124
      %v1126 = vpop.f32.mrf.mxu0
      %1127 = vmatprep.mubr.bf16.mxu0 0
      %1128 = vmatmul.mubr.bf16.gmra.mxu0 %v1008
      %v1129 = vpop.f32.mrf.mxu0
      %v1130 = vadd.f32 0.0, %v1129
      %v1131 = vpop.f32.mrf.mxu0
      %v1132 = vpop.f32.mrf.mxu0
      %v1133 = vadd.f32 0.0, %v1132
      %v1134 = vpop.f32.mrf.mxu0
      %1135 = vmatprep.mubr.bf16.mxu0 0
      %1136 = vmatmul.mubr.bf16.gmra.mxu0 %v1011
      %v1137 = vpop.f32.mrf.mxu0
      %v1138 = vadd.f32 0.0, %v1137
      %v1139 = vpop.f32.mrf.mxu0
      %v1140 = vpop.f32.mrf.mxu0
      %v1141 = vadd.f32 0.0, %v1140
      %v1142 = vpop.f32.mrf.mxu0
      %1143 = vmatprep.mubr.bf16.mxu0 0
      %1144 = vmatmul.mubr.bf16.gmra.mxu0 %v1014
      %v1145 = vpop.f32.mrf.mxu0
      %v1146 = vadd.f32 0.0, %v1145
      %v1147 = vpop.f32.mrf.mxu0
      %v1148 = vpop.f32.mrf.mxu0
      %v1149 = vadd.f32 0.0, %v1148
      %v1150 = vpop.f32.mrf.mxu0
      %1151 = vmatprep.mubr.bf16.mxu0 0
      %1152 = vmatmul.mubr.bf16.gmra.mxu0 %v1017
      %v1153 = vpop.f32.mrf.mxu0
      %v1154 = vadd.f32 0.0, %v1153
      %v1155 = vpop.f32.mrf.mxu0
      %v1156 = vpop.f32.mrf.mxu0
      %v1157 = vadd.f32 0.0, %v1156
      %v1158 = vpop.f32.mrf.mxu0
      %1159 = vmatprep.mubr.bf16.mxu0 0
      %1160 = vmatmul.mubr.bf16.gmra.mxu0 %v1020
      %v1161 = vpop.f32.mrf.mxu0
      %v1162 = vadd.f32 0.0, %v1161
      %v1163 = vpop.f32.mrf.mxu0
      %v1164 = vpop.f32.mrf.mxu0
      %v1165 = vadd.f32 0.0, %v1164
      %v1166 = vpop.f32.mrf.mxu0
      %1167 = vmatprep.mubr.bf16.mxu0 0
      %1168 = vmatmul.mubr.bf16.gmra.mxu0 %v1023
      %v1169 = vpop.f32.mrf.mxu0
      %v1170 = vadd.f32 0.0, %v1169
      %v1171 = vpop.f32.mrf.mxu0
      %v1172 = vpop.f32.mrf.mxu0
      %v1173 = vadd.f32 0.0, %v1172
      %v1174 = vpop.f32.mrf.mxu0
      %1175 = vmatprep.mubr.bf16.mxu0 0
      %1176 = vmatmul.mubr.bf16.gmra.mxu0 %v1026
      %v1177 = vpop.f32.mrf.mxu0
      %v1178 = vadd.f32 0.0, %v1177
      %v1179 = vpop.f32.mrf.mxu0
      %v1180 = vpop.f32.mrf.mxu0
      %v1181 = vadd.f32 0.0, %v1180
      %v1182 = vpop.f32.mrf.mxu0
      %1183 = vmatprep.mubr.bf16.mxu0 0
      %1184 = vmatmul.mubr.bf16.gmra.mxu0 %v1029
      %v1185 = vpop.f32.mrf.mxu0
      %v1186 = vadd.f32 0.0, %v1185
      %v1187 = vpop.f32.mrf.mxu0
      %v1188 = vpop.f32.mrf.mxu0
      %v1189 = vadd.f32 0.0, %v1188
      %v1190 = vpop.f32.mrf.mxu0
      %1191 = vdwg.mxu0
      %v1192 = vpack.c.bf16 %v1069, %v1066
      %v1193 = vpack.c.bf16 %v1077, %v1074
      %v1194 = vpack.c.bf16 %v1085, %v1082
      %v1195 = vpack.c.bf16 %v1093, %v1090
      %v1196 = vpack.c.bf16 %v1101, %v1098
      %v1197 = vpack.c.bf16 %v1109, %v1106
      %v1198 = vpack.c.bf16 %v1117, %v1114
      %v1199 = vpack.c.bf16 %v1125, %v1122
      %v1200 = vpack.c.bf16 %v1133, %v1130
      %v1201 = vpack.c.bf16 %v1141, %v1138
      %v1202 = vpack.c.bf16 %v1149, %v1146
      %v1203 = vpack.c.bf16 %v1157, %v1154
      %v1204 = vpack.c.bf16 %v1165, %v1162
      %v1205 = vpack.c.bf16 %v1173, %v1170
      %v1206 = vpack.c.bf16 %v1181, %v1178
      %v1207 = vpack.c.bf16 %v1189, %v1186
      %1212 = vrot.lane.b32.xlu0 %v1192, 96
      %v1213 = vpop.permute.xlu0 %1212
      %1214 = vrot.lane.b32.xlu0 %v1193, 96
      %v1215 = vpop.permute.xlu0 %1214
      %1216 = vrot.lane.b32.xlu0 %v1194, 96
      %v1217 = vpop.permute.xlu0 %1216
      %1218 = vrot.lane.b32.xlu0 %v1195, 96
      %v1219 = vpop.permute.xlu0 %1218
      %vm1220 = vcmask 130048
      %v1222 = vsel %vm1220, %v1192, 0
      %v1225 = vsel %vm1220, %v1193, 0
      %v1228 = vsel %vm1220, %v1194, 0
      %v1231 = vsel %vm1220, %v1195, 0
      %v1234 = vsel %vm1220, %v1213, 0
      %v1237 = vsel %vm1220, %v1215, 0
      %v1240 = vsel %vm1220, %v1217, 0
      %v1243 = vsel %vm1220, %v1219, 0
      %1245 = vmatprep.subr.bf16.mxu0 0
      %1246 = vmatpush1.bf16.xpose.msra.mxu0 0
      %1247 = vmatprep.subr.bf16.mxu0 0
      %1248 = vmatpush1.bf16.xpose.msra.mxu0 0
      %1249 = vmatprep.subr.bf16.mxu0 0
      %1250 = vmatpush1.bf16.xpose.msra.mxu0 0
      %1251 = vmatprep.subr.bf16.mxu0 0
      %1252 = vmatpush1.bf16.xpose.msra.mxu0 0
      %1253 = vmatprep.subr.bf16.mxu0 0
      %1254 = vmatpush1.bf16.xpose.msra.mxu0 %v1243
      %1255 = vmatprep.subr.bf16.mxu0 0
      %1256 = vmatpush1.bf16.xpose.msra.mxu0 %v1240
      %1257 = vmatprep.subr.bf16.mxu0 0
      %1258 = vmatpush1.bf16.xpose.msra.mxu0 %v1237
      %1259 = vmatprep.subr.bf16.mxu0 0
      %1260 = vmatpush1.bf16.xpose.msra.mxu0 %v1234
      %1261 = vmatprep.subr.bf16.mxu0 0
      %1262 = vmatpush2.bf16.xpose.msra.mxu0 0
      %1263 = vmatprep.subr.bf16.mxu0 0
      %1264 = vmatpush2.bf16.xpose.msra.mxu0 0
      %1265 = vmatprep.subr.bf16.mxu0 0
      %1266 = vmatpush2.bf16.xpose.msra.mxu0 0
      %1267 = vmatprep.subr.bf16.mxu0 0
      %1268 = vmatpush2.bf16.xpose.msra.mxu0 0
      %1269 = vmatprep.subr.bf16.mxu0 0
      %1270 = vmatpush2.bf16.xpose.msra.mxu0 0
      %1271 = vmatprep.subr.bf16.mxu0 0
      %1272 = vmatpush2.bf16.xpose.msra.mxu0 0
      %1273 = vmatprep.subr.bf16.mxu0 0
      %1274 = vmatpush2.bf16.xpose.msra.mxu0 0
      %1275 = vmatprep.subr.bf16.mxu0 0
      %1276 = vmatpush2.bf16.xpose.msra.mxu0 0
      %1277 = vmatprep.mubr.bf16.mxu0 0
      %1278 = vmatmul.mubr.bf16.gmra.mxu0 %v1222
      %v1279 = vpop.f32.mrf.mxu0
      %v1280 = vadd.f32 0.0, %v1279
      %v1281 = vpop.f32.mrf.mxu0
      %v1282 = vpop.f32.mrf.mxu0
      %v1283 = vadd.f32 0.0, %v1282
      %v1284 = vpop.f32.mrf.mxu0
      %1285 = vmatprep.mubr.bf16.mxu0 0
      %1286 = vmatmul.mubr.bf16.gmra.mxu0 %v1225
      %v1287 = vpop.f32.mrf.mxu0
      %v1288 = vadd.f32 0.0, %v1287
      %v1289 = vpop.f32.mrf.mxu0
      %v1290 = vpop.f32.mrf.mxu0
      %v1291 = vadd.f32 0.0, %v1290
      %v1292 = vpop.f32.mrf.mxu0
      %1293 = vmatprep.mubr.bf16.mxu0 0
      %1294 = vmatmul.mubr.bf16.gmra.mxu0 %v1228
      %v1295 = vpop.f32.mrf.mxu0
      %v1296 = vadd.f32 0.0, %v1295
      %v1297 = vpop.f32.mrf.mxu0
      %v1298 = vpop.f32.mrf.mxu0
      %v1299 = vadd.f32 0.0, %v1298
      %v1300 = vpop.f32.mrf.mxu0
      %1301 = vmatprep.mubr.bf16.mxu0 0
      %1302 = vmatmul.mubr.bf16.gmra.mxu0 %v1231
      %v1303 = vpop.f32.mrf.mxu0
      %v1304 = vadd.f32 0.0, %v1303
      %v1305 = vpop.f32.mrf.mxu0
      %v1306 = vpop.f32.mrf.mxu0
      %v1307 = vadd.f32 0.0, %v1306
      %v1308 = vpop.f32.mrf.mxu0
      %1309 = vdwg.mxu0
      %1314 = vrot.lane.b32.xlu0 %v1196, 96
      %v1315 = vpop.permute.xlu0 %1314
      %1316 = vrot.lane.b32.xlu0 %v1197, 96
      %v1317 = vpop.permute.xlu0 %1316
      %1318 = vrot.lane.b32.xlu0 %v1198, 96
      %v1319 = vpop.permute.xlu0 %1318
      %1320 = vrot.lane.b32.xlu0 %v1199, 96
      %v1321 = vpop.permute.xlu0 %1320
      %v1323 = vsel %vm1220, %v1196, 0
      %v1326 = vsel %vm1220, %v1197, 0
      %v1329 = vsel %vm1220, %v1198, 0
      %v1332 = vsel %vm1220, %v1199, 0
      %v1335 = vsel %vm1220, %v1315, 0
      %v1338 = vsel %vm1220, %v1317, 0
      %v1341 = vsel %vm1220, %v1319, 0
      %v1344 = vsel %vm1220, %v1321, 0
      %1346 = vmatprep.subr.bf16.mxu0 0
      %1347 = vmatpush1.bf16.xpose.msra.mxu0 0
      %1348 = vmatprep.subr.bf16.mxu0 0
      %1349 = vmatpush1.bf16.xpose.msra.mxu0 0
      %1350 = vmatprep.subr.bf16.mxu0 0
      %1351 = vmatpush1.bf16.xpose.msra.mxu0 0
      %1352 = vmatprep.subr.bf16.mxu0 0
      %1353 = vmatpush1.bf16.xpose.msra.mxu0 0
      %1354 = vmatprep.subr.bf16.mxu0 0
      %1355 = vmatpush1.bf16.xpose.msra.mxu0 %v1344
      %1356 = vmatprep.subr.bf16.mxu0 0
      %1357 = vmatpush1.bf16.xpose.msra.mxu0 %v1341
      %1358 = vmatprep.subr.bf16.mxu0 0
      %1359 = vmatpush1.bf16.xpose.msra.mxu0 %v1338
      %1360 = vmatprep.subr.bf16.mxu0 0
      %1361 = vmatpush1.bf16.xpose.msra.mxu0 %v1335
      %1362 = vmatprep.subr.bf16.mxu0 0
      %1363 = vmatpush2.bf16.xpose.msra.mxu0 0
      %1364 = vmatprep.subr.bf16.mxu0 0
      %1365 = vmatpush2.bf16.xpose.msra.mxu0 0
      %1366 = vmatprep.subr.bf16.mxu0 0
      %1367 = vmatpush2.bf16.xpose.msra.mxu0 0
      %1368 = vmatprep.subr.bf16.mxu0 0
      %1369 = vmatpush2.bf16.xpose.msra.mxu0 0
      %1370 = vmatprep.subr.bf16.mxu0 0
      %1371 = vmatpush2.bf16.xpose.msra.mxu0 0
      %1372 = vmatprep.subr.bf16.mxu0 0
      %1373 = vmatpush2.bf16.xpose.msra.mxu0 0
      %1374 = vmatprep.subr.bf16.mxu0 0
      %1375 = vmatpush2.bf16.xpose.msra.mxu0 0
      %1376 = vmatprep.subr.bf16.mxu0 0
      %1377 = vmatpush2.bf16.xpose.msra.mxu0 0
      %1378 = vmatprep.mubr.bf16.mxu0 0
      %1379 = vmatmul.mubr.bf16.gmra.mxu0 %v1323
      %v1380 = vpop.f32.mrf.mxu0
      %v1381 = vadd.f32 0.0, %v1380
      %v1382 = vpop.f32.mrf.mxu0
      %v1383 = vpop.f32.mrf.mxu0
      %v1384 = vadd.f32 0.0, %v1383
      %v1385 = vpop.f32.mrf.mxu0
      %1386 = vmatprep.mubr.bf16.mxu0 0
      %1387 = vmatmul.mubr.bf16.gmra.mxu0 %v1326
      %v1388 = vpop.f32.mrf.mxu0
      %v1389 = vadd.f32 0.0, %v1388
      %v1390 = vpop.f32.mrf.mxu0
      %v1391 = vpop.f32.mrf.mxu0
      %v1392 = vadd.f32 0.0, %v1391
      %v1393 = vpop.f32.mrf.mxu0
      %1394 = vmatprep.mubr.bf16.mxu0 0
      %1395 = vmatmul.mubr.bf16.gmra.mxu0 %v1329
      %v1396 = vpop.f32.mrf.mxu0
      %v1397 = vadd.f32 0.0, %v1396
      %v1398 = vpop.f32.mrf.mxu0
      %v1399 = vpop.f32.mrf.mxu0
      %v1400 = vadd.f32 0.0, %v1399
      %v1401 = vpop.f32.mrf.mxu0
      %1402 = vmatprep.mubr.bf16.mxu0 0
      %1403 = vmatmul.mubr.bf16.gmra.mxu0 %v1332
      %v1404 = vpop.f32.mrf.mxu0
      %v1405 = vadd.f32 0.0, %v1404
      %v1406 = vpop.f32.mrf.mxu0
      %v1407 = vpop.f32.mrf.mxu0
      %v1408 = vadd.f32 0.0, %v1407
      %v1409 = vpop.f32.mrf.mxu0
      %1410 = vdwg.mxu0
      %1415 = vrot.lane.b32.xlu0 %v1200, 96
      %v1416 = vpop.permute.xlu0 %1415
      %1417 = vrot.lane.b32.xlu0 %v1201, 96
      %v1418 = vpop.permute.xlu0 %1417
      %1419 = vrot.lane.b32.xlu0 %v1202, 96
      %v1420 = vpop.permute.xlu0 %1419
      %1421 = vrot.lane.b32.xlu0 %v1203, 96
      %v1422 = vpop.permute.xlu0 %1421
      %v1424 = vsel %vm1220, %v1200, 0
      %v1427 = vsel %vm1220, %v1201, 0
      %v1430 = vsel %vm1220, %v1202, 0
      %v1433 = vsel %vm1220, %v1203, 0
      %v1436 = vsel %vm1220, %v1416, 0
      %v1439 = vsel %vm1220, %v1418, 0
      %v1442 = vsel %vm1220, %v1420, 0
      %v1445 = vsel %vm1220, %v1422, 0
      %1447 = vmatprep.subr.bf16.mxu0 0
      %1448 = vmatpush1.bf16.xpose.msra.mxu0 0
      %1449 = vmatprep.subr.bf16.mxu0 0
      %1450 = vmatpush1.bf16.xpose.msra.mxu0 0
      %1451 = vmatprep.subr.bf16.mxu0 0
      %1452 = vmatpush1.bf16.xpose.msra.mxu0 0
      %1453 = vmatprep.subr.bf16.mxu0 0
      %1454 = vmatpush1.bf16.xpose.msra.mxu0 0
      %1455 = vmatprep.subr.bf16.mxu0 0
      %1456 = vmatpush1.bf16.xpose.msra.mxu0 %v1445
      %1457 = vmatprep.subr.bf16.mxu0 0
      %1458 = vmatpush1.bf16.xpose.msra.mxu0 %v1442
      %1459 = vmatprep.subr.bf16.mxu0 0
      %1460 = vmatpush1.bf16.xpose.msra.mxu0 %v1439
      %1461 = vmatprep.subr.bf16.mxu0 0
      %1462 = vmatpush1.bf16.xpose.msra.mxu0 %v1436
      %1463 = vmatprep.subr.bf16.mxu0 0
      %1464 = vmatpush2.bf16.xpose.msra.mxu0 0
      %1465 = vmatprep.subr.bf16.mxu0 0
      %1466 = vmatpush2.bf16.xpose.msra.mxu0 0
      %1467 = vmatprep.subr.bf16.mxu0 0
      %1468 = vmatpush2.bf16.xpose.msra.mxu0 0
      %1469 = vmatprep.subr.bf16.mxu0 0
      %1470 = vmatpush2.bf16.xpose.msra.mxu0 0
      %1471 = vmatprep.subr.bf16.mxu0 0
      %1472 = vmatpush2.bf16.xpose.msra.mxu0 0
      %1473 = vmatprep.subr.bf16.mxu0 0
      %1474 = vmatpush2.bf16.xpose.msra.mxu0 0
      %1475 = vmatprep.subr.bf16.mxu0 0
      %1476 = vmatpush2.bf16.xpose.msra.mxu0 0
      %1477 = vmatprep.subr.bf16.mxu0 0
      %1478 = vmatpush2.bf16.xpose.msra.mxu0 0
      %1479 = vmatprep.mubr.bf16.mxu0 0
      %1480 = vmatmul.mubr.bf16.gmra.mxu0 %v1424
      %v1481 = vpop.f32.mrf.mxu0
      %v1482 = vadd.f32 0.0, %v1481
      %v1483 = vpop.f32.mrf.mxu0
      %v1484 = vpop.f32.mrf.mxu0
      %v1485 = vadd.f32 0.0, %v1484
      %v1486 = vpop.f32.mrf.mxu0
      %1487 = vmatprep.mubr.bf16.mxu0 0
      %1488 = vmatmul.mubr.bf16.gmra.mxu0 %v1427
      %v1489 = vpop.f32.mrf.mxu0
      %v1490 = vadd.f32 0.0, %v1489
      %v1491 = vpop.f32.mrf.mxu0
      %v1492 = vpop.f32.mrf.mxu0
      %v1493 = vadd.f32 0.0, %v1492
      %v1494 = vpop.f32.mrf.mxu0
      %1495 = vmatprep.mubr.bf16.mxu0 0
      %1496 = vmatmul.mubr.bf16.gmra.mxu0 %v1430
      %v1497 = vpop.f32.mrf.mxu0
      %v1498 = vadd.f32 0.0, %v1497
      %v1499 = vpop.f32.mrf.mxu0
      %v1500 = vpop.f32.mrf.mxu0
      %v1501 = vadd.f32 0.0, %v1500
      %v1502 = vpop.f32.mrf.mxu0
      %1503 = vmatprep.mubr.bf16.mxu0 0
      %1504 = vmatmul.mubr.bf16.gmra.mxu0 %v1433
      %v1505 = vpop.f32.mrf.mxu0
      %v1506 = vadd.f32 0.0, %v1505
      %v1507 = vpop.f32.mrf.mxu0
      %v1508 = vpop.f32.mrf.mxu0
      %v1509 = vadd.f32 0.0, %v1508
      %v1510 = vpop.f32.mrf.mxu0
      %1511 = vdwg.mxu0
      %1516 = vrot.lane.b32.xlu0 %v1204, 96
      %v1517 = vpop.permute.xlu0 %1516
      %1518 = vrot.lane.b32.xlu0 %v1205, 96
      %v1519 = vpop.permute.xlu0 %1518
      %1520 = vrot.lane.b32.xlu0 %v1206, 96
      %v1521 = vpop.permute.xlu0 %1520
      %1522 = vrot.lane.b32.xlu0 %v1207, 96
      %v1523 = vpop.permute.xlu0 %1522
      %v1525 = vsel %vm1220, %v1204, 0
      %v1528 = vsel %vm1220, %v1205, 0
      %v1531 = vsel %vm1220, %v1206, 0
      %v1534 = vsel %vm1220, %v1207, 0
      %v1537 = vsel %vm1220, %v1517, 0
      %v1540 = vsel %vm1220, %v1519, 0
      %v1543 = vsel %vm1220, %v1521, 0
      %v1546 = vsel %vm1220, %v1523, 0
      %1548 = vmatprep.subr.bf16.mxu0 0
      %1549 = vmatpush1.bf16.xpose.msra.mxu0 0
      %1550 = vmatprep.subr.bf16.mxu0 0
      %1551 = vmatpush1.bf16.xpose.msra.mxu0 0
      %1552 = vmatprep.subr.bf16.mxu0 0
      %1553 = vmatpush1.bf16.xpose.msra.mxu0 0
      %1554 = vmatprep.subr.bf16.mxu0 0
      %1555 = vmatpush1.bf16.xpose.msra.mxu0 0
      %1556 = vmatprep.subr.bf16.mxu0 0
      %1557 = vmatpush1.bf16.xpose.msra.mxu0 %v1546
      %1558 = vmatprep.subr.bf16.mxu0 0
      %1559 = vmatpush1.bf16.xpose.msra.mxu0 %v1543
      %1560 = vmatprep.subr.bf16.mxu0 0
      %1561 = vmatpush1.bf16.xpose.msra.mxu0 %v1540
      %1562 = vmatprep.subr.bf16.mxu0 0
      %1563 = vmatpush1.bf16.xpose.msra.mxu0 %v1537
      %1564 = vmatprep.subr.bf16.mxu0 0
      %1565 = vmatpush2.bf16.xpose.msra.mxu0 0
      %1566 = vmatprep.subr.bf16.mxu0 0
      %1567 = vmatpush2.bf16.xpose.msra.mxu0 0
      %1568 = vmatprep.subr.bf16.mxu0 0
      %1569 = vmatpush2.bf16.xpose.msra.mxu0 0
      %1570 = vmatprep.subr.bf16.mxu0 0
      %1571 = vmatpush2.bf16.xpose.msra.mxu0 0
      %1572 = vmatprep.subr.bf16.mxu0 0
      %1573 = vmatpush2.bf16.xpose.msra.mxu0 0
      %1574 = vmatprep.subr.bf16.mxu0 0
      %1575 = vmatpush2.bf16.xpose.msra.mxu0 0
      %1576 = vmatprep.subr.bf16.mxu0 0
      %1577 = vmatpush2.bf16.xpose.msra.mxu0 0
      %1578 = vmatprep.subr.bf16.mxu0 0
      %1579 = vmatpush2.bf16.xpose.msra.mxu0 0
      %1580 = vmatprep.mubr.bf16.mxu0 0
      %1581 = vmatmul.mubr.bf16.gmra.mxu0 %v1525
      %v1582 = vpop.f32.mrf.mxu0
      %v1583 = vadd.f32 0.0, %v1582
      %v1584 = vpop.f32.mrf.mxu0
      %v1585 = vpop.f32.mrf.mxu0
      %v1586 = vadd.f32 0.0, %v1585
      %v1587 = vpop.f32.mrf.mxu0
      %1588 = vmatprep.mubr.bf16.mxu0 0
      %1589 = vmatmul.mubr.bf16.gmra.mxu0 %v1528
      %v1590 = vpop.f32.mrf.mxu0
      %v1591 = vadd.f32 0.0, %v1590
      %v1592 = vpop.f32.mrf.mxu0
      %v1593 = vpop.f32.mrf.mxu0
      %v1594 = vadd.f32 0.0, %v1593
      %v1595 = vpop.f32.mrf.mxu0
      %1596 = vmatprep.mubr.bf16.mxu0 0
      %1597 = vmatmul.mubr.bf16.gmra.mxu0 %v1531
      %v1598 = vpop.f32.mrf.mxu0
      %v1599 = vadd.f32 0.0, %v1598
      %v1600 = vpop.f32.mrf.mxu0
      %v1601 = vpop.f32.mrf.mxu0
      %v1602 = vadd.f32 0.0, %v1601
      %v1603 = vpop.f32.mrf.mxu0
      %1604 = vmatprep.mubr.bf16.mxu0 0
      %1605 = vmatmul.mubr.bf16.gmra.mxu0 %v1534
      %v1606 = vpop.f32.mrf.mxu0
      %v1607 = vadd.f32 0.0, %v1606
      %v1608 = vpop.f32.mrf.mxu0
      %v1609 = vpop.f32.mrf.mxu0
      %v1610 = vadd.f32 0.0, %v1609
      %v1611 = vpop.f32.mrf.mxu0
      %1612 = vdwg.mxu0
      %v1613 = vmul.f32 %v1280, 0.25
      %v1614 = vmul.f32 %v1283, 0.25
      %v1615 = vmul.f32 %v1288, 0.25
      %v1616 = vmul.f32 %v1291, 0.25
      %v1617 = vmul.f32 %v1296, 0.25
      %v1618 = vmul.f32 %v1299, 0.25
      %v1619 = vmul.f32 %v1304, 0.25
      %v1620 = vmul.f32 %v1307, 0.25
      %v1621 = vmul.f32 %v1381, 0.25
      %v1622 = vmul.f32 %v1384, 0.25
      %v1623 = vmul.f32 %v1389, 0.25
      %v1624 = vmul.f32 %v1392, 0.25
      %v1625 = vmul.f32 %v1397, 0.25
      %v1626 = vmul.f32 %v1400, 0.25
      %v1627 = vmul.f32 %v1405, 0.25
      %v1628 = vmul.f32 %v1408, 0.25
      %v1629 = vmul.f32 %v1482, 0.25
      %v1630 = vmul.f32 %v1485, 0.25
      %v1631 = vmul.f32 %v1490, 0.25
      %v1632 = vmul.f32 %v1493, 0.25
      %v1633 = vmul.f32 %v1498, 0.25
      %v1634 = vmul.f32 %v1501, 0.25
      %v1635 = vmul.f32 %v1506, 0.25
      %v1636 = vmul.f32 %v1509, 0.25
      %v1637 = vmul.f32 %v1583, 0.25
      %v1638 = vmul.f32 %v1586, 0.25
      %v1639 = vmul.f32 %v1591, 0.25
      %v1640 = vmul.f32 %v1594, 0.25
      %v1641 = vmul.f32 %v1599, 0.25
      %v1642 = vmul.f32 %v1602, 0.25
      %v1643 = vmul.f32 %v1607, 0.25
      %v1644 = vmul.f32 %v1610, 0.25
      %vm1645 = vcmask 523264
      %v1646 = vsel %vm1645, %v1613, -inf
      %1647 = vmax.xlane.f32.xlu0 %v1646
      %v1648 = vpop.xlane.xlu0 %1647
      %v1649 = vsel %vm1645, %v1614, -inf
      %1650 = vmax.xlane.f32.xlu0 %v1649
      %v1651 = vpop.xlane.xlu0 %1650
      %v1652 = vsel %vm1645, %v1615, -inf
      %1653 = vmax.xlane.f32.xlu0 %v1652
      %v1654 = vpop.xlane.xlu0 %1653
      %v1655 = vsel %vm1645, %v1616, -inf
      %1656 = vmax.xlane.f32.xlu0 %v1655
      %v1657 = vpop.xlane.xlu0 %1656
      %v1658 = vsel %vm1645, %v1617, -inf
      %1659 = vmax.xlane.f32.xlu0 %v1658
      %v1660 = vpop.xlane.xlu0 %1659
      %v1661 = vsel %vm1645, %v1618, -inf
      %1662 = vmax.xlane.f32.xlu0 %v1661
      %v1663 = vpop.xlane.xlu0 %1662
      %v1664 = vsel %vm1645, %v1619, -inf
      %1665 = vmax.xlane.f32.xlu0 %v1664
      %v1666 = vpop.xlane.xlu0 %1665
      %v1667 = vsel %vm1645, %v1620, -inf
      %1668 = vmax.xlane.f32.xlu0 %v1667
      %v1669 = vpop.xlane.xlu0 %1668
      %v1670 = vsel %vm1645, %v1621, -inf
      %1671 = vmax.xlane.f32.xlu0 %v1670
      %v1672 = vpop.xlane.xlu0 %1671
      %v1673 = vsel %vm1645, %v1622, -inf
      %1674 = vmax.xlane.f32.xlu0 %v1673
      %v1675 = vpop.xlane.xlu0 %1674
      %v1676 = vsel %vm1645, %v1623, -inf
      %1677 = vmax.xlane.f32.xlu0 %v1676
      %v1678 = vpop.xlane.xlu0 %1677
      %v1679 = vsel %vm1645, %v1624, -inf
      %1680 = vmax.xlane.f32.xlu0 %v1679
      %v1681 = vpop.xlane.xlu0 %1680
      %v1682 = vsel %vm1645, %v1625, -inf
      %1683 = vmax.xlane.f32.xlu0 %v1682
      %v1684 = vpop.xlane.xlu0 %1683
      %v1685 = vsel %vm1645, %v1626, -inf
      %1686 = vmax.xlane.f32.xlu0 %v1685
      %v1687 = vpop.xlane.xlu0 %1686
      %v1688 = vsel %vm1645, %v1627, -inf
      %1689 = vmax.xlane.f32.xlu0 %v1688
      %v1690 = vpop.xlane.xlu0 %1689
      %v1691 = vsel %vm1645, %v1628, -inf
      %1692 = vmax.xlane.f32.xlu0 %v1691
      %v1693 = vpop.xlane.xlu0 %1692
      %v1694 = vsel %vm1645, %v1629, -inf
      %1695 = vmax.xlane.f32.xlu0 %v1694
      %v1696 = vpop.xlane.xlu0 %1695
      %v1697 = vsel %vm1645, %v1630, -inf
      %1698 = vmax.xlane.f32.xlu0 %v1697
      %v1699 = vpop.xlane.xlu0 %1698
      %v1700 = vsel %vm1645, %v1631, -inf
      %1701 = vmax.xlane.f32.xlu0 %v1700
      %v1702 = vpop.xlane.xlu0 %1701
      %v1703 = vsel %vm1645, %v1632, -inf
      %1704 = vmax.xlane.f32.xlu0 %v1703
      %v1705 = vpop.xlane.xlu0 %1704
      %v1706 = vsel %vm1645, %v1633, -inf
      %1707 = vmax.xlane.f32.xlu0 %v1706
      %v1708 = vpop.xlane.xlu0 %1707
      %v1709 = vsel %vm1645, %v1634, -inf
      %1710 = vmax.xlane.f32.xlu0 %v1709
      %v1711 = vpop.xlane.xlu0 %1710
      %v1712 = vsel %vm1645, %v1635, -inf
      %1713 = vmax.xlane.f32.xlu0 %v1712
      %v1714 = vpop.xlane.xlu0 %1713
      %v1715 = vsel %vm1645, %v1636, -inf
      %1716 = vmax.xlane.f32.xlu0 %v1715
      %v1717 = vpop.xlane.xlu0 %1716
      %v1718 = vsel %vm1645, %v1637, -inf
      %1719 = vmax.xlane.f32.xlu0 %v1718
      %v1720 = vpop.xlane.xlu0 %1719
      %v1721 = vsel %vm1645, %v1638, -inf
      %1722 = vmax.xlane.f32.xlu0 %v1721
      %v1723 = vpop.xlane.xlu0 %1722
      %v1724 = vsel %vm1645, %v1639, -inf
      %1725 = vmax.xlane.f32.xlu0 %v1724
      %v1726 = vpop.xlane.xlu0 %1725
      %v1727 = vsel %vm1645, %v1640, -inf
      %1728 = vmax.xlane.f32.xlu0 %v1727
      %v1729 = vpop.xlane.xlu0 %1728
      %v1730 = vsel %vm1645, %v1641, -inf
      %1731 = vmax.xlane.f32.xlu0 %v1730
      %v1732 = vpop.xlane.xlu0 %1731
      %v1733 = vsel %vm1645, %v1642, -inf
      %1734 = vmax.xlane.f32.xlu0 %v1733
      %v1735 = vpop.xlane.xlu0 %1734
      %v1736 = vsel %vm1645, %v1643, -inf
      %1737 = vmax.xlane.f32.xlu0 %v1736
      %v1738 = vpop.xlane.xlu0 %1737
      %v1739 = vsel %vm1645, %v1644, -inf
      %1740 = vmax.xlane.f32.xlu0 %v1739
      %v1741 = vpop.xlane.xlu0 %1740
      %v1742 = vsub.f32 %v1613, %v1648
      %v1743 = vsub.f32 %v1614, %v1651
      %v1744 = vsub.f32 %v1615, %v1654
      %v1745 = vsub.f32 %v1616, %v1657
      %v1746 = vsub.f32 %v1617, %v1660
      %v1747 = vsub.f32 %v1618, %v1663
      %v1748 = vsub.f32 %v1619, %v1666
      %v1749 = vsub.f32 %v1620, %v1669
      %v1750 = vsub.f32 %v1621, %v1672
      %v1751 = vsub.f32 %v1622, %v1675
      %v1752 = vsub.f32 %v1623, %v1678
      %v1753 = vsub.f32 %v1624, %v1681
      %v1754 = vsub.f32 %v1625, %v1684
      %v1755 = vsub.f32 %v1626, %v1687
      %v1756 = vsub.f32 %v1627, %v1690
      %v1757 = vsub.f32 %v1628, %v1693
      %v1758 = vsub.f32 %v1629, %v1696
      %v1759 = vsub.f32 %v1630, %v1699
      %v1760 = vsub.f32 %v1631, %v1702
      %v1761 = vsub.f32 %v1632, %v1705
      %v1762 = vsub.f32 %v1633, %v1708
      %v1763 = vsub.f32 %v1634, %v1711
      %v1764 = vsub.f32 %v1635, %v1714
      %v1765 = vsub.f32 %v1636, %v1717
      %v1766 = vsub.f32 %v1637, %v1720
      %v1767 = vsub.f32 %v1638, %v1723
      %v1768 = vsub.f32 %v1639, %v1726
      %v1769 = vsub.f32 %v1640, %v1729
      %v1770 = vsub.f32 %v1641, %v1732
      %v1771 = vsub.f32 %v1642, %v1735
      %v1772 = vsub.f32 %v1643, %v1738
      %v1773 = vsub.f32 %v1644, %v1741
      %v1774 = vmul.f32 %v1742, 1.442695
      %v1775 = vpow.pop %v1774
      %v1776 = vmul.f32 %v1743, 1.442695
      %v1777 = vpow.pop %v1776
      %v1778 = vmul.f32 %v1744, 1.442695
      %v1779 = vpow.pop %v1778
      %v1780 = vmul.f32 %v1745, 1.442695
      %v1781 = vpow.pop %v1780
      %v1782 = vmul.f32 %v1746, 1.442695
      %v1783 = vpow.pop %v1782
      %v1784 = vmul.f32 %v1747, 1.442695
      %v1785 = vpow.pop %v1784
      %v1786 = vmul.f32 %v1748, 1.442695
      %v1787 = vpow.pop %v1786
      %v1788 = vmul.f32 %v1749, 1.442695
      %v1789 = vpow.pop %v1788
      %v1790 = vmul.f32 %v1750, 1.442695
      %v1791 = vpow.pop %v1790
      %v1792 = vmul.f32 %v1751, 1.442695
      %v1793 = vpow.pop %v1792
      %v1794 = vmul.f32 %v1752, 1.442695
      %v1795 = vpow.pop %v1794
      %v1796 = vmul.f32 %v1753, 1.442695
      %v1797 = vpow.pop %v1796
      %v1798 = vmul.f32 %v1754, 1.442695
      %v1799 = vpow.pop %v1798
      %v1800 = vmul.f32 %v1755, 1.442695
      %v1801 = vpow.pop %v1800
      %v1802 = vmul.f32 %v1756, 1.442695
      %v1803 = vpow.pop %v1802
      %v1804 = vmul.f32 %v1757, 1.442695
      %v1805 = vpow.pop %v1804
      %v1806 = vmul.f32 %v1758, 1.442695
      %v1807 = vpow.pop %v1806
      %v1808 = vmul.f32 %v1759, 1.442695
      %v1809 = vpow.pop %v1808
      %v1810 = vmul.f32 %v1760, 1.442695
      %v1811 = vpow.pop %v1810
      %v1812 = vmul.f32 %v1761, 1.442695
      %v1813 = vpow.pop %v1812
      %v1814 = vmul.f32 %v1762, 1.442695
      %v1815 = vpow.pop %v1814
      %v1816 = vmul.f32 %v1763, 1.442695
      %v1817 = vpow.pop %v1816
      %v1818 = vmul.f32 %v1764, 1.442695
      %v1819 = vpow.pop %v1818
      %v1820 = vmul.f32 %v1765, 1.442695
      %v1821 = vpow.pop %v1820
      %v1822 = vmul.f32 %v1766, 1.442695
      %v1823 = vpow.pop %v1822
      %v1824 = vmul.f32 %v1767, 1.442695
      %v1825 = vpow.pop %v1824
      %v1826 = vmul.f32 %v1768, 1.442695
      %v1827 = vpow.pop %v1826
      %v1828 = vmul.f32 %v1769, 1.442695
      %v1829 = vpow.pop %v1828
      %v1830 = vmul.f32 %v1770, 1.442695
      %v1831 = vpow.pop %v1830
      %v1832 = vmul.f32 %v1771, 1.442695
      %v1833 = vpow.pop %v1832
      %v1834 = vmul.f32 %v1772, 1.442695
      %v1835 = vpow.pop %v1834
      %v1836 = vmul.f32 %v1773, 1.442695
      %v1837 = vpow.pop %v1836
      %v1838 = vsel %vm1645, %v1775, 0.0
      %1839 = vadd.xlane.f32.xlu0 %v1838
      %v1840 = vpop.xlane.xlu0 %1839
      %v1841 = vsel %vm1645, %v1777, 0.0
      %1842 = vadd.xlane.f32.xlu0 %v1841
      %v1843 = vpop.xlane.xlu0 %1842
      %v1844 = vsel %vm1645, %v1779, 0.0
      %1845 = vadd.xlane.f32.xlu0 %v1844
      %v1846 = vpop.xlane.xlu0 %1845
      %v1847 = vsel %vm1645, %v1781, 0.0
      %1848 = vadd.xlane.f32.xlu0 %v1847
      %v1849 = vpop.xlane.xlu0 %1848
      %v1850 = vsel %vm1645, %v1783, 0.0
      %1851 = vadd.xlane.f32.xlu0 %v1850
      %v1852 = vpop.xlane.xlu0 %1851
      %v1853 = vsel %vm1645, %v1785, 0.0
      %1854 = vadd.xlane.f32.xlu0 %v1853
      %v1855 = vpop.xlane.xlu0 %1854
      %v1856 = vsel %vm1645, %v1787, 0.0
      %1857 = vadd.xlane.f32.xlu0 %v1856
      %v1858 = vpop.xlane.xlu0 %1857
      %v1859 = vsel %vm1645, %v1789, 0.0
      %1860 = vadd.xlane.f32.xlu0 %v1859
      %v1861 = vpop.xlane.xlu0 %1860
      %v1862 = vsel %vm1645, %v1791, 0.0
      %1863 = vadd.xlane.f32.xlu0 %v1862
      %v1864 = vpop.xlane.xlu0 %1863
      %v1865 = vsel %vm1645, %v1793, 0.0
      %1866 = vadd.xlane.f32.xlu0 %v1865
      %v1867 = vpop.xlane.xlu0 %1866
      %v1868 = vsel %vm1645, %v1795, 0.0
      %1869 = vadd.xlane.f32.xlu0 %v1868
      %v1870 = vpop.xlane.xlu0 %1869
      %v1871 = vsel %vm1645, %v1797, 0.0
      %1872 = vadd.xlane.f32.xlu0 %v1871
      %v1873 = vpop.xlane.xlu0 %1872
      %v1874 = vsel %vm1645, %v1799, 0.0
      %1875 = vadd.xlane.f32.xlu0 %v1874
      %v1876 = vpop.xlane.xlu0 %1875
      %v1877 = vsel %vm1645, %v1801, 0.0
      %1878 = vadd.xlane.f32.xlu0 %v1877
      %v1879 = vpop.xlane.xlu0 %1878
      %v1880 = vsel %vm1645, %v1803, 0.0
      %1881 = vadd.xlane.f32.xlu0 %v1880
      %v1882 = vpop.xlane.xlu0 %1881
      %v1883 = vsel %vm1645, %v1805, 0.0
      %1884 = vadd.xlane.f32.xlu0 %v1883
      %v1885 = vpop.xlane.xlu0 %1884
      %v1886 = vsel %vm1645, %v1807, 0.0
      %1887 = vadd.xlane.f32.xlu0 %v1886
      %v1888 = vpop.xlane.xlu0 %1887
      %v1889 = vsel %vm1645, %v1809, 0.0
      %1890 = vadd.xlane.f32.xlu0 %v1889
      %v1891 = vpop.xlane.xlu0 %1890
      %v1892 = vsel %vm1645, %v1811, 0.0
      %1893 = vadd.xlane.f32.xlu0 %v1892
      %v1894 = vpop.xlane.xlu0 %1893
      %v1895 = vsel %vm1645, %v1813, 0.0
      %1896 = vadd.xlane.f32.xlu0 %v1895
      %v1897 = vpop.xlane.xlu0 %1896
      %v1898 = vsel %vm1645, %v1815, 0.0
      %1899 = vadd.xlane.f32.xlu0 %v1898
      %v1900 = vpop.xlane.xlu0 %1899
      %v1901 = vsel %vm1645, %v1817, 0.0
      %1902 = vadd.xlane.f32.xlu0 %v1901
      %v1903 = vpop.xlane.xlu0 %1902
      %v1904 = vsel %vm1645, %v1819, 0.0
      %1905 = vadd.xlane.f32.xlu0 %v1904
      %v1906 = vpop.xlane.xlu0 %1905
      %v1907 = vsel %vm1645, %v1821, 0.0
      %1908 = vadd.xlane.f32.xlu0 %v1907
      %v1909 = vpop.xlane.xlu0 %1908
      %v1910 = vsel %vm1645, %v1823, 0.0
      %1911 = vadd.xlane.f32.xlu0 %v1910
      %v1912 = vpop.xlane.xlu0 %1911
      %v1913 = vsel %vm1645, %v1825, 0.0
      %1914 = vadd.xlane.f32.xlu0 %v1913
      %v1915 = vpop.xlane.xlu0 %1914
      %v1916 = vsel %vm1645, %v1827, 0.0
      %1917 = vadd.xlane.f32.xlu0 %v1916
      %v1918 = vpop.xlane.xlu0 %1917
      %v1919 = vsel %vm1645, %v1829, 0.0
      %1920 = vadd.xlane.f32.xlu0 %v1919
      %v1921 = vpop.xlane.xlu0 %1920
      %v1922 = vsel %vm1645, %v1831, 0.0
      %1923 = vadd.xlane.f32.xlu0 %v1922
      %v1924 = vpop.xlane.xlu0 %1923
      %v1925 = vsel %vm1645, %v1833, 0.0
      %1926 = vadd.xlane.f32.xlu0 %v1925
      %v1927 = vpop.xlane.xlu0 %1926
      %v1928 = vsel %vm1645, %v1835, 0.0
      %1929 = vadd.xlane.f32.xlu0 %v1928
      %v1930 = vpop.xlane.xlu0 %1929
      %v1931 = vsel %vm1645, %v1837, 0.0
      %1932 = vadd.xlane.f32.xlu0 %v1931
      %v1933 = vpop.xlane.xlu0 %1932
      %v1934 = vrcp.pop %v1840
      %v1935 = vrcp.pop %v1843
      %v1936 = vrcp.pop %v1846
      %v1937 = vrcp.pop %v1849
      %v1938 = vrcp.pop %v1852
      %v1939 = vrcp.pop %v1855
      %v1940 = vrcp.pop %v1858
      %v1941 = vrcp.pop %v1861
      %v1942 = vrcp.pop %v1864
      %v1943 = vrcp.pop %v1867
      %v1944 = vrcp.pop %v1870
      %v1945 = vrcp.pop %v1873
      %v1946 = vrcp.pop %v1876
      %v1947 = vrcp.pop %v1879
      %v1948 = vrcp.pop %v1882
      %v1949 = vrcp.pop %v1885
      %v1950 = vrcp.pop %v1888
      %v1951 = vrcp.pop %v1891
      %v1952 = vrcp.pop %v1894
      %v1953 = vrcp.pop %v1897
      %v1954 = vrcp.pop %v1900
      %v1955 = vrcp.pop %v1903
      %v1956 = vrcp.pop %v1906
      %v1957 = vrcp.pop %v1909
      %v1958 = vrcp.pop %v1912
      %v1959 = vrcp.pop %v1915
      %v1960 = vrcp.pop %v1918
      %v1961 = vrcp.pop %v1921
      %v1962 = vrcp.pop %v1924
      %v1963 = vrcp.pop %v1927
      %v1964 = vrcp.pop %v1930
      %v1965 = vrcp.pop %v1933
      %v1966 = vmul.f32 %v1775, %v1934
      %v1967 = vmul.f32 %v1777, %v1935
      %v1968 = vmul.f32 %v1779, %v1936
      %v1969 = vmul.f32 %v1781, %v1937
      %v1970 = vmul.f32 %v1783, %v1938
      %v1971 = vmul.f32 %v1785, %v1939
      %v1972 = vmul.f32 %v1787, %v1940
      %v1973 = vmul.f32 %v1789, %v1941
      %v1974 = vmul.f32 %v1791, %v1942
      %v1975 = vmul.f32 %v1793, %v1943
      %v1976 = vmul.f32 %v1795, %v1944
      %v1977 = vmul.f32 %v1797, %v1945
      %v1978 = vmul.f32 %v1799, %v1946
      %v1979 = vmul.f32 %v1801, %v1947
      %v1980 = vmul.f32 %v1803, %v1948
      %v1981 = vmul.f32 %v1805, %v1949
      %v1982 = vmul.f32 %v1807, %v1950
      %v1983 = vmul.f32 %v1809, %v1951
      %v1984 = vmul.f32 %v1811, %v1952
      %v1985 = vmul.f32 %v1813, %v1953
      %v1986 = vmul.f32 %v1815, %v1954
      %v1987 = vmul.f32 %v1817, %v1955
      %v1988 = vmul.f32 %v1819, %v1956
      %v1989 = vmul.f32 %v1821, %v1957
      %v1990 = vmul.f32 %v1823, %v1958
      %v1991 = vmul.f32 %v1825, %v1959
      %v1992 = vmul.f32 %v1827, %v1960
      %v1993 = vmul.f32 %v1829, %v1961
      %v1994 = vmul.f32 %v1831, %v1962
      %v1995 = vmul.f32 %v1833, %v1963
      %v1996 = vmul.f32 %v1835, %v1964
      %v1997 = vmul.f32 %v1837, %v1965
      %v1998 = vpack.c.bf16 %v1967, %v1966
      %v1999 = vpack.c.bf16 %v1969, %v1968
      %v2000 = vpack.c.bf16 %v1971, %v1970
      %v2001 = vpack.c.bf16 %v1973, %v1972
      %v2002 = vpack.c.bf16 %v1975, %v1974
      %v2003 = vpack.c.bf16 %v1977, %v1976
      %v2004 = vpack.c.bf16 %v1979, %v1978
      %v2005 = vpack.c.bf16 %v1981, %v1980
      %v2006 = vpack.c.bf16 %v1983, %v1982
      %v2007 = vpack.c.bf16 %v1985, %v1984
      %v2008 = vpack.c.bf16 %v1987, %v1986
      %v2009 = vpack.c.bf16 %v1989, %v1988
      %v2010 = vpack.c.bf16 %v1991, %v1990
      %v2011 = vpack.c.bf16 %v1993, %v1992
      %v2012 = vpack.c.bf16 %v1995, %v1994
      %v2013 = vpack.c.bf16 %v1997, %v1996
      %2014 = vrot.lane.b32.xlu0 %v1192, 64
      %v2015 = vpop.permute.xlu0 %2014
      %2016 = vrot.lane.b32.xlu0 %v1193, 64
      %v2017 = vpop.permute.xlu0 %2016
      %2018 = vrot.lane.b32.xlu0 %v1194, 64
      %v2019 = vpop.permute.xlu0 %2018
      %2020 = vrot.lane.b32.xlu0 %v1195, 64
      %v2021 = vpop.permute.xlu0 %2020
      %v2027 = vsel %vm1645, %v1998, 0
      %v2030 = vsel %vm1645, %v1999, 0
      %v2033 = vsel %vm1645, %v2000, 0
      %v2036 = vsel %vm1645, %v2001, 0
      %2038 = vmatprep.subr.bf16.mxu0 0
      %2039 = vmatpush1.bf16.msra.mxu0 0
      %2040 = vmatprep.subr.bf16.mxu0 0
      %2041 = vmatpush1.bf16.msra.mxu0 0
      %2042 = vmatprep.subr.bf16.mxu0 0
      %2043 = vmatpush1.bf16.msra.mxu0 0
      %2044 = vmatprep.subr.bf16.mxu0 0
      %2045 = vmatpush1.bf16.msra.mxu0 0
      %2046 = vmatprep.subr.bf16.mxu0 0
      %2047 = vmatpush1.bf16.msra.mxu0 %v2021
      %2048 = vmatprep.subr.bf16.mxu0 0
      %2049 = vmatpush1.bf16.msra.mxu0 %v2019
      %2050 = vmatprep.subr.bf16.mxu0 0
      %2051 = vmatpush1.bf16.msra.mxu0 %v2017
      %2052 = vmatprep.subr.bf16.mxu0 0
      %2053 = vmatpush1.bf16.msra.mxu0 %v2015
      %2054 = vmatprep.subr.bf16.mxu0 0
      %2055 = vmatpush2.bf16.msra.mxu0 0
      %2056 = vmatprep.subr.bf16.mxu0 0
      %2057 = vmatpush2.bf16.msra.mxu0 0
      %2058 = vmatprep.subr.bf16.mxu0 0
      %2059 = vmatpush2.bf16.msra.mxu0 0
      %2060 = vmatprep.subr.bf16.mxu0 0
      %2061 = vmatpush2.bf16.msra.mxu0 0
      %2062 = vmatprep.subr.bf16.mxu0 0
      %2063 = vmatpush2.bf16.msra.mxu0 0
      %2064 = vmatprep.subr.bf16.mxu0 0
      %2065 = vmatpush2.bf16.msra.mxu0 0
      %2066 = vmatprep.subr.bf16.mxu0 0
      %2067 = vmatpush2.bf16.msra.mxu0 0
      %2068 = vmatprep.subr.bf16.mxu0 0
      %2069 = vmatpush2.bf16.msra.mxu0 0
      %2070 = vmatprep.mubr.bf16.mxu0 0
      %2071 = vmatmul.mubr.bf16.gmra.mxu0 %v2027
      %v2072 = vpop.f32.mrf.mxu0
      %v2073 = vadd.f32 0.0, %v2072
      %v2074 = vpop.f32.mrf.mxu0
      %v2075 = vpop.f32.mrf.mxu0
      %v2076 = vadd.f32 0.0, %v2075
      %v2077 = vpop.f32.mrf.mxu0
      %2078 = vmatprep.mubr.bf16.mxu0 0
      %2079 = vmatmul.mubr.bf16.gmra.mxu0 %v2030
      %v2080 = vpop.f32.mrf.mxu0
      %v2081 = vadd.f32 0.0, %v2080
      %v2082 = vpop.f32.mrf.mxu0
      %v2083 = vpop.f32.mrf.mxu0
      %v2084 = vadd.f32 0.0, %v2083
      %v2085 = vpop.f32.mrf.mxu0
      %2086 = vmatprep.mubr.bf16.mxu0 0
      %2087 = vmatmul.mubr.bf16.gmra.mxu0 %v2033
      %v2088 = vpop.f32.mrf.mxu0
      %v2089 = vadd.f32 0.0, %v2088
      %v2090 = vpop.f32.mrf.mxu0
      %v2091 = vpop.f32.mrf.mxu0
      %v2092 = vadd.f32 0.0, %v2091
      %v2093 = vpop.f32.mrf.mxu0
      %2094 = vmatprep.mubr.bf16.mxu0 0
      %2095 = vmatmul.mubr.bf16.gmra.mxu0 %v2036
      %v2096 = vpop.f32.mrf.mxu0
      %v2097 = vadd.f32 0.0, %v2096
      %v2098 = vpop.f32.mrf.mxu0
      %v2099 = vpop.f32.mrf.mxu0
      %v2100 = vadd.f32 0.0, %v2099
      %v2101 = vpop.f32.mrf.mxu0
      %2102 = vdwg.mxu0
      %2103 = vrot.lane.b32.xlu0 %v1196, 64
      %v2104 = vpop.permute.xlu0 %2103
      %2105 = vrot.lane.b32.xlu0 %v1197, 64
      %v2106 = vpop.permute.xlu0 %2105
      %2107 = vrot.lane.b32.xlu0 %v1198, 64
      %v2108 = vpop.permute.xlu0 %2107
      %2109 = vrot.lane.b32.xlu0 %v1199, 64
      %v2110 = vpop.permute.xlu0 %2109
      %v2116 = vsel %vm1645, %v2002, 0
      %v2119 = vsel %vm1645, %v2003, 0
      %v2122 = vsel %vm1645, %v2004, 0
      %v2125 = vsel %vm1645, %v2005, 0
      %2127 = vmatprep.subr.bf16.mxu0 0
      %2128 = vmatpush1.bf16.msra.mxu0 0
      %2129 = vmatprep.subr.bf16.mxu0 0
      %2130 = vmatpush1.bf16.msra.mxu0 0
      %2131 = vmatprep.subr.bf16.mxu0 0
      %2132 = vmatpush1.bf16.msra.mxu0 0
      %2133 = vmatprep.subr.bf16.mxu0 0
      %2134 = vmatpush1.bf16.msra.mxu0 0
      %2135 = vmatprep.subr.bf16.mxu0 0
      %2136 = vmatpush1.bf16.msra.mxu0 %v2110
      %2137 = vmatprep.subr.bf16.mxu0 0
      %2138 = vmatpush1.bf16.msra.mxu0 %v2108
      %2139 = vmatprep.subr.bf16.mxu0 0
      %2140 = vmatpush1.bf16.msra.mxu0 %v2106
      %2141 = vmatprep.subr.bf16.mxu0 0
      %2142 = vmatpush1.bf16.msra.mxu0 %v2104
      %2143 = vmatprep.subr.bf16.mxu0 0
      %2144 = vmatpush2.bf16.msra.mxu0 0
      %2145 = vmatprep.subr.bf16.mxu0 0
      %2146 = vmatpush2.bf16.msra.mxu0 0
      %2147 = vmatprep.subr.bf16.mxu0 0
      %2148 = vmatpush2.bf16.msra.mxu0 0
      %2149 = vmatprep.subr.bf16.mxu0 0
      %2150 = vmatpush2.bf16.msra.mxu0 0
      %2151 = vmatprep.subr.bf16.mxu0 0
      %2152 = vmatpush2.bf16.msra.mxu0 0
      %2153 = vmatprep.subr.bf16.mxu0 0
      %2154 = vmatpush2.bf16.msra.mxu0 0
      %2155 = vmatprep.subr.bf16.mxu0 0
      %2156 = vmatpush2.bf16.msra.mxu0 0
      %2157 = vmatprep.subr.bf16.mxu0 0
      %2158 = vmatpush2.bf16.msra.mxu0 0
      %2159 = vmatprep.mubr.bf16.mxu0 0
      %2160 = vmatmul.mubr.bf16.gmra.mxu0 %v2116
      %v2161 = vpop.f32.mrf.mxu0
      %v2162 = vadd.f32 0.0, %v2161
      %v2163 = vpop.f32.mrf.mxu0
      %v2164 = vpop.f32.mrf.mxu0
      %v2165 = vadd.f32 0.0, %v2164
      %v2166 = vpop.f32.mrf.mxu0
      %2167 = vmatprep.mubr.bf16.mxu0 0
      %2168 = vmatmul.mubr.bf16.gmra.mxu0 %v2119
      %v2169 = vpop.f32.mrf.mxu0
      %v2170 = vadd.f32 0.0, %v2169
      %v2171 = vpop.f32.mrf.mxu0
      %v2172 = vpop.f32.mrf.mxu0
      %v2173 = vadd.f32 0.0, %v2172
      %v2174 = vpop.f32.mrf.mxu0
      %2175 = vmatprep.mubr.bf16.mxu0 0
      %2176 = vmatmul.mubr.bf16.gmra.mxu0 %v2122
      %v2177 = vpop.f32.mrf.mxu0
      %v2178 = vadd.f32 0.0, %v2177
      %v2179 = vpop.f32.mrf.mxu0
      %v2180 = vpop.f32.mrf.mxu0
      %v2181 = vadd.f32 0.0, %v2180
      %v2182 = vpop.f32.mrf.mxu0
      %2183 = vmatprep.mubr.bf16.mxu0 0
      %2184 = vmatmul.mubr.bf16.gmra.mxu0 %v2125
      %v2185 = vpop.f32.mrf.mxu0
      %v2186 = vadd.f32 0.0, %v2185
      %v2187 = vpop.f32.mrf.mxu0
      %v2188 = vpop.f32.mrf.mxu0
      %v2189 = vadd.f32 0.0, %v2188
      %v2190 = vpop.f32.mrf.mxu0
      %2191 = vdwg.mxu0
      %2192 = vrot.lane.b32.xlu0 %v1200, 64
      %v2193 = vpop.permute.xlu0 %2192
      %2194 = vrot.lane.b32.xlu0 %v1201, 64
      %v2195 = vpop.permute.xlu0 %2194
      %2196 = vrot.lane.b32.xlu0 %v1202, 64
      %v2197 = vpop.permute.xlu0 %2196
      %2198 = vrot.lane.b32.xlu0 %v1203, 64
      %v2199 = vpop.permute.xlu0 %2198
      %v2205 = vsel %vm1645, %v2006, 0
      %v2208 = vsel %vm1645, %v2007, 0
      %v2211 = vsel %vm1645, %v2008, 0
      %v2214 = vsel %vm1645, %v2009, 0
      %2216 = vmatprep.subr.bf16.mxu0 0
      %2217 = vmatpush1.bf16.msra.mxu0 0
      %2218 = vmatprep.subr.bf16.mxu0 0
      %2219 = vmatpush1.bf16.msra.mxu0 0
      %2220 = vmatprep.subr.bf16.mxu0 0
      %2221 = vmatpush1.bf16.msra.mxu0 0
      %2222 = vmatprep.subr.bf16.mxu0 0
      %2223 = vmatpush1.bf16.msra.mxu0 0
      %2224 = vmatprep.subr.bf16.mxu0 0
      %2225 = vmatpush1.bf16.msra.mxu0 %v2199
      %2226 = vmatprep.subr.bf16.mxu0 0
      %2227 = vmatpush1.bf16.msra.mxu0 %v2197
      %2228 = vmatprep.subr.bf16.mxu0 0
      %2229 = vmatpush1.bf16.msra.mxu0 %v2195
      %2230 = vmatprep.subr.bf16.mxu0 0
      %2231 = vmatpush1.bf16.msra.mxu0 %v2193
      %2232 = vmatprep.subr.bf16.mxu0 0
      %2233 = vmatpush2.bf16.msra.mxu0 0
      %2234 = vmatprep.subr.bf16.mxu0 0
      %2235 = vmatpush2.bf16.msra.mxu0 0
      %2236 = vmatprep.subr.bf16.mxu0 0
      %2237 = vmatpush2.bf16.msra.mxu0 0
      %2238 = vmatprep.subr.bf16.mxu0 0
      %2239 = vmatpush2.bf16.msra.mxu0 0
      %2240 = vmatprep.subr.bf16.mxu0 0
      %2241 = vmatpush2.bf16.msra.mxu0 0
      %2242 = vmatprep.subr.bf16.mxu0 0
      %2243 = vmatpush2.bf16.msra.mxu0 0
      %2244 = vmatprep.subr.bf16.mxu0 0
      %2245 = vmatpush2.bf16.msra.mxu0 0
      %2246 = vmatprep.subr.bf16.mxu0 0
      %2247 = vmatpush2.bf16.msra.mxu0 0
      %2248 = vmatprep.mubr.bf16.mxu0 0
      %2249 = vmatmul.mubr.bf16.gmra.mxu0 %v2205
      %v2250 = vpop.f32.mrf.mxu0
      %v2251 = vadd.f32 0.0, %v2250
      %v2252 = vpop.f32.mrf.mxu0
      %v2253 = vpop.f32.mrf.mxu0
      %v2254 = vadd.f32 0.0, %v2253
      %v2255 = vpop.f32.mrf.mxu0
      %2256 = vmatprep.mubr.bf16.mxu0 0
      %2257 = vmatmul.mubr.bf16.gmra.mxu0 %v2208
      %v2258 = vpop.f32.mrf.mxu0
      %v2259 = vadd.f32 0.0, %v2258
      %v2260 = vpop.f32.mrf.mxu0
      %v2261 = vpop.f32.mrf.mxu0
      %v2262 = vadd.f32 0.0, %v2261
      %v2263 = vpop.f32.mrf.mxu0
      %2264 = vmatprep.mubr.bf16.mxu0 0
      %2265 = vmatmul.mubr.bf16.gmra.mxu0 %v2211
      %v2266 = vpop.f32.mrf.mxu0
      %v2267 = vadd.f32 0.0, %v2266
      %v2268 = vpop.f32.mrf.mxu0
      %v2269 = vpop.f32.mrf.mxu0
      %v2270 = vadd.f32 0.0, %v2269
      %v2271 = vpop.f32.mrf.mxu0
      %2272 = vmatprep.mubr.bf16.mxu0 0
      %2273 = vmatmul.mubr.bf16.gmra.mxu0 %v2214
      %v2274 = vpop.f32.mrf.mxu0
      %v2275 = vadd.f32 0.0, %v2274
      %v2276 = vpop.f32.mrf.mxu0
      %v2277 = vpop.f32.mrf.mxu0
      %v2278 = vadd.f32 0.0, %v2277
      %v2279 = vpop.f32.mrf.mxu0
      %2280 = vdwg.mxu0
      %2281 = vrot.lane.b32.xlu0 %v1204, 64
      %v2282 = vpop.permute.xlu0 %2281
      %2283 = vrot.lane.b32.xlu0 %v1205, 64
      %v2284 = vpop.permute.xlu0 %2283
      %2285 = vrot.lane.b32.xlu0 %v1206, 64
      %v2286 = vpop.permute.xlu0 %2285
      %2287 = vrot.lane.b32.xlu0 %v1207, 64
      %v2288 = vpop.permute.xlu0 %2287
      %v2294 = vsel %vm1645, %v2010, 0
      %v2297 = vsel %vm1645, %v2011, 0
      %v2300 = vsel %vm1645, %v2012, 0
      %v2303 = vsel %vm1645, %v2013, 0
      %2305 = vmatprep.subr.bf16.mxu0 0
      %2306 = vmatpush1.bf16.msra.mxu0 0
      %2307 = vmatprep.subr.bf16.mxu0 0
      %2308 = vmatpush1.bf16.msra.mxu0 0
      %2309 = vmatprep.subr.bf16.mxu0 0
      %2310 = vmatpush1.bf16.msra.mxu0 0
      %2311 = vmatprep.subr.bf16.mxu0 0
      %2312 = vmatpush1.bf16.msra.mxu0 0
      %2313 = vmatprep.subr.bf16.mxu0 0
      %2314 = vmatpush1.bf16.msra.mxu0 %v2288
      %2315 = vmatprep.subr.bf16.mxu0 0
      %2316 = vmatpush1.bf16.msra.mxu0 %v2286
      %2317 = vmatprep.subr.bf16.mxu0 0
      %2318 = vmatpush1.bf16.msra.mxu0 %v2284
      %2319 = vmatprep.subr.bf16.mxu0 0
      %2320 = vmatpush1.bf16.msra.mxu0 %v2282
      %2321 = vmatprep.subr.bf16.mxu0 0
      %2322 = vmatpush2.bf16.msra.mxu0 0
      %2323 = vmatprep.subr.bf16.mxu0 0
      %2324 = vmatpush2.bf16.msra.mxu0 0
      %2325 = vmatprep.subr.bf16.mxu0 0
      %2326 = vmatpush2.bf16.msra.mxu0 0
      %2327 = vmatprep.subr.bf16.mxu0 0
      %2328 = vmatpush2.bf16.msra.mxu0 0
      %2329 = vmatprep.subr.bf16.mxu0 0
      %2330 = vmatpush2.bf16.msra.mxu0 0
      %2331 = vmatprep.subr.bf16.mxu0 0
      %2332 = vmatpush2.bf16.msra.mxu0 0
      %2333 = vmatprep.subr.bf16.mxu0 0
      %2334 = vmatpush2.bf16.msra.mxu0 0
      %2335 = vmatprep.subr.bf16.mxu0 0
      %2336 = vmatpush2.bf16.msra.mxu0 0
      %2337 = vmatprep.mubr.bf16.mxu0 0
      %2338 = vmatmul.mubr.bf16.gmra.mxu0 %v2294
      %v2339 = vpop.f32.mrf.mxu0
      %v2340 = vadd.f32 0.0, %v2339
      %v2341 = vpop.f32.mrf.mxu0
      %v2342 = vpop.f32.mrf.mxu0
      %v2343 = vadd.f32 0.0, %v2342
      %v2344 = vpop.f32.mrf.mxu0
      %2345 = vmatprep.mubr.bf16.mxu0 0
      %2346 = vmatmul.mubr.bf16.gmra.mxu0 %v2297
      %v2347 = vpop.f32.mrf.mxu0
      %v2348 = vadd.f32 0.0, %v2347
      %v2349 = vpop.f32.mrf.mxu0
      %v2350 = vpop.f32.mrf.mxu0
      %v2351 = vadd.f32 0.0, %v2350
      %v2352 = vpop.f32.mrf.mxu0
      %2353 = vmatprep.mubr.bf16.mxu0 0
      %2354 = vmatmul.mubr.bf16.gmra.mxu0 %v2300
      %v2355 = vpop.f32.mrf.mxu0
      %v2356 = vadd.f32 0.0, %v2355
      %v2357 = vpop.f32.mrf.mxu0
      %v2358 = vpop.f32.mrf.mxu0
      %v2359 = vadd.f32 0.0, %v2358
      %v2360 = vpop.f32.mrf.mxu0
      %2361 = vmatprep.mubr.bf16.mxu0 0
      %2362 = vmatmul.mubr.bf16.gmra.mxu0 %v2303
      %v2363 = vpop.f32.mrf.mxu0
      %v2364 = vadd.f32 0.0, %v2363
      %v2365 = vpop.f32.mrf.mxu0
      %v2366 = vpop.f32.mrf.mxu0
      %v2367 = vadd.f32 0.0, %v2366
      %v2368 = vpop.f32.mrf.mxu0
      %2369 = vdwg.mxu0
      %v2370 = vpack.c.bf16 %v2076, %v2073
      %v2371 = vpack.c.bf16 %v2084, %v2081
      %v2372 = vpack.c.bf16 %v2092, %v2089
      %v2373 = vpack.c.bf16 %v2100, %v2097
      %v2374 = vpack.c.bf16 %v2165, %v2162
      %v2375 = vpack.c.bf16 %v2173, %v2170
      %v2376 = vpack.c.bf16 %v2181, %v2178
      %v2377 = vpack.c.bf16 %v2189, %v2186
      %v2378 = vpack.c.bf16 %v2254, %v2251
      %v2379 = vpack.c.bf16 %v2262, %v2259
      %v2380 = vpack.c.bf16 %v2270, %v2267
      %v2381 = vpack.c.bf16 %v2278, %v2275
      %v2382 = vpack.c.bf16 %v2343, %v2340
      %v2383 = vpack.c.bf16 %v2351, %v2348
      %v2384 = vpack.c.bf16 %v2359, %v2356
      %v2385 = vpack.c.bf16 %v2367, %v2364
      %v2386 = vld [vmem:[%s4] sm:$0xf]
      %v2387 = vld [vmem:[%s4 + $0x4] sm:$0xf]
      %2388 = vrot.lane.b32.xlu0 %v1192, 112
      %v2389 = vpop.permute.xlu0 %2388
      %2390 = vrot.lane.b32.xlu0 %v1193, 112
      %v2391 = vpop.permute.xlu0 %2390
      %2392 = vrot.lane.b32.xlu0 %v1194, 112
      %v2393 = vpop.permute.xlu0 %2392
      %2394 = vrot.lane.b32.xlu0 %v1195, 112
      %v2395 = vpop.permute.xlu0 %2394
      %2396 = vrot.lane.b32.xlu0 %v1192, 80
      %v2397 = vpop.permute.xlu0 %2396
      %2398 = vrot.lane.b32.xlu0 %v1193, 80
      %v2399 = vpop.permute.xlu0 %2398
      %2400 = vrot.lane.b32.xlu0 %v1194, 80
      %v2401 = vpop.permute.xlu0 %2400
      %2402 = vrot.lane.b32.xlu0 %v1195, 80
      %v2403 = vpop.permute.xlu0 %2402
      %v2405 = vsel %vm1220, %v2389, 0
      %v2408 = vsel %vm1220, %v2391, 0
      %v2411 = vsel %vm1220, %v2393, 0
      %v2414 = vsel %vm1220, %v2395, 0
      %v2417 = vsel %vm1220, %v2397, 0
      %v2420 = vsel %vm1220, %v2399, 0
      %v2423 = vsel %vm1220, %v2401, 0
      %v2426 = vsel %vm1220, %v2403, 0
      %2428 = vmatprep.subr.bf16.mxu0 0
      %2429 = vmatpush1.bf16.xpose.msra.mxu0 0
      %2430 = vmatprep.subr.bf16.mxu0 0
      %2431 = vmatpush1.bf16.xpose.msra.mxu0 0
      %2432 = vmatprep.subr.bf16.mxu0 0
      %2433 = vmatpush1.bf16.xpose.msra.mxu0 0
      %2434 = vmatprep.subr.bf16.mxu0 0
      %2435 = vmatpush1.bf16.xpose.msra.mxu0 0
      %2436 = vmatprep.subr.bf16.mxu0 0
      %2437 = vmatpush1.bf16.xpose.msra.mxu0 %v2426
      %2438 = vmatprep.subr.bf16.mxu0 0
      %2439 = vmatpush1.bf16.xpose.msra.mxu0 %v2423
      %2440 = vmatprep.subr.bf16.mxu0 0
      %2441 = vmatpush1.bf16.xpose.msra.mxu0 %v2420
      %2442 = vmatprep.subr.bf16.mxu0 0
      %2443 = vmatpush1.bf16.xpose.msra.mxu0 %v2417
      %2444 = vmatprep.subr.bf16.mxu0 0
      %2445 = vmatpush2.bf16.xpose.msra.mxu0 0
      %2446 = vmatprep.subr.bf16.mxu0 0
      %2447 = vmatpush2.bf16.xpose.msra.mxu0 0
      %2448 = vmatprep.subr.bf16.mxu0 0
      %2449 = vmatpush2.bf16.xpose.msra.mxu0 0
      %2450 = vmatprep.subr.bf16.mxu0 0
      %2451 = vmatpush2.bf16.xpose.msra.mxu0 0
      %2452 = vmatprep.subr.bf16.mxu0 0
      %2453 = vmatpush2.bf16.xpose.msra.mxu0 0
      %2454 = vmatprep.subr.bf16.mxu0 0
      %2455 = vmatpush2.bf16.xpose.msra.mxu0 0
      %2456 = vmatprep.subr.bf16.mxu0 0
      %2457 = vmatpush2.bf16.xpose.msra.mxu0 0
      %2458 = vmatprep.subr.bf16.mxu0 0
      %2459 = vmatpush2.bf16.xpose.msra.mxu0 0
      %2460 = vmatprep.mubr.bf16.mxu0 0
      %2461 = vmatmul.mubr.bf16.gmra.mxu0 %v2405
      %v2462 = vpop.f32.mrf.mxu0
      %v2463 = vadd.f32 0.0, %v2462
      %v2464 = vpop.f32.mrf.mxu0
      %v2465 = vpop.f32.mrf.mxu0
      %v2466 = vadd.f32 0.0, %v2465
      %v2467 = vpop.f32.mrf.mxu0
      %2468 = vmatprep.mubr.bf16.mxu0 0
      %2469 = vmatmul.mubr.bf16.gmra.mxu0 %v2408
      %v2470 = vpop.f32.mrf.mxu0
      %v2471 = vadd.f32 0.0, %v2470
      %v2472 = vpop.f32.mrf.mxu0
      %v2473 = vpop.f32.mrf.mxu0
      %v2474 = vadd.f32 0.0, %v2473
      %v2475 = vpop.f32.mrf.mxu0
      %2476 = vmatprep.mubr.bf16.mxu0 0
      %2477 = vmatmul.mubr.bf16.gmra.mxu0 %v2411
      %v2478 = vpop.f32.mrf.mxu0
      %v2479 = vadd.f32 0.0, %v2478
      %v2480 = vpop.f32.mrf.mxu0
      %v2481 = vpop.f32.mrf.mxu0
      %v2482 = vadd.f32 0.0, %v2481
      %v2483 = vpop.f32.mrf.mxu0
      %2484 = vmatprep.mubr.bf16.mxu0 0
      %2485 = vmatmul.mubr.bf16.gmra.mxu0 %v2414
      %v2486 = vpop.f32.mrf.mxu0
      %v2487 = vadd.f32 0.0, %v2486
      %v2488 = vpop.f32.mrf.mxu0
      %v2489 = vpop.f32.mrf.mxu0
      %v2490 = vadd.f32 0.0, %v2489
      %v2491 = vpop.f32.mrf.mxu0
      %2492 = vdwg.mxu0
      %2493 = vrot.lane.b32.xlu0 %v1196, 112
      %v2494 = vpop.permute.xlu0 %2493
      %2495 = vrot.lane.b32.xlu0 %v1197, 112
      %v2496 = vpop.permute.xlu0 %2495
      %2497 = vrot.lane.b32.xlu0 %v1198, 112
      %v2498 = vpop.permute.xlu0 %2497
      %2499 = vrot.lane.b32.xlu0 %v1199, 112
      %v2500 = vpop.permute.xlu0 %2499
      %2501 = vrot.lane.b32.xlu0 %v1196, 80
      %v2502 = vpop.permute.xlu0 %2501
      %2503 = vrot.lane.b32.xlu0 %v1197, 80
      %v2504 = vpop.permute.xlu0 %2503
      %2505 = vrot.lane.b32.xlu0 %v1198, 80
      %v2506 = vpop.permute.xlu0 %2505
      %2507 = vrot.lane.b32.xlu0 %v1199, 80
      %v2508 = vpop.permute.xlu0 %2507
      %v2510 = vsel %vm1220, %v2494, 0
      %v2513 = vsel %vm1220, %v2496, 0
      %v2516 = vsel %vm1220, %v2498, 0
      %v2519 = vsel %vm1220, %v2500, 0
      %v2522 = vsel %vm1220, %v2502, 0
      %v2525 = vsel %vm1220, %v2504, 0
      %v2528 = vsel %vm1220, %v2506, 0
      %v2531 = vsel %vm1220, %v2508, 0
      %2533 = vmatprep.subr.bf16.mxu0 0
      %2534 = vmatpush1.bf16.xpose.msra.mxu0 0
      %2535 = vmatprep.subr.bf16.mxu0 0
      %2536 = vmatpush1.bf16.xpose.msra.mxu0 0
      %2537 = vmatprep.subr.bf16.mxu0 0
      %2538 = vmatpush1.bf16.xpose.msra.mxu0 0
      %2539 = vmatprep.subr.bf16.mxu0 0
      %2540 = vmatpush1.bf16.xpose.msra.mxu0 0
      %2541 = vmatprep.subr.bf16.mxu0 0
      %2542 = vmatpush1.bf16.xpose.msra.mxu0 %v2531
      %2543 = vmatprep.subr.bf16.mxu0 0
      %2544 = vmatpush1.bf16.xpose.msra.mxu0 %v2528
      %2545 = vmatprep.subr.bf16.mxu0 0
      %2546 = vmatpush1.bf16.xpose.msra.mxu0 %v2525
      %2547 = vmatprep.subr.bf16.mxu0 0
      %2548 = vmatpush1.bf16.xpose.msra.mxu0 %v2522
      %2549 = vmatprep.subr.bf16.mxu0 0
      %2550 = vmatpush2.bf16.xpose.msra.mxu0 0
      %2551 = vmatprep.subr.bf16.mxu0 0
      %2552 = vmatpush2.bf16.xpose.msra.mxu0 0
      %2553 = vmatprep.subr.bf16.mxu0 0
      %2554 = vmatpush2.bf16.xpose.msra.mxu0 0
      %2555 = vmatprep.subr.bf16.mxu0 0
      %2556 = vmatpush2.bf16.xpose.msra.mxu0 0
      %2557 = vmatprep.subr.bf16.mxu0 0
      %2558 = vmatpush2.bf16.xpose.msra.mxu0 0
      %2559 = vmatprep.subr.bf16.mxu0 0
      %2560 = vmatpush2.bf16.xpose.msra.mxu0 0
      %2561 = vmatprep.subr.bf16.mxu0 0
      %2562 = vmatpush2.bf16.xpose.msra.mxu0 0
      %2563 = vmatprep.subr.bf16.mxu0 0
      %2564 = vmatpush2.bf16.xpose.msra.mxu0 0
      %2565 = vmatprep.mubr.bf16.mxu0 0
      %2566 = vmatmul.mubr.bf16.gmra.mxu0 %v2510
      %v2567 = vpop.f32.mrf.mxu0
      %v2568 = vadd.f32 0.0, %v2567
      %v2569 = vpop.f32.mrf.mxu0
      %v2570 = vpop.f32.mrf.mxu0
      %v2571 = vadd.f32 0.0, %v2570
      %v2572 = vpop.f32.mrf.mxu0
      %2573 = vmatprep.mubr.bf16.mxu0 0
      %2574 = vmatmul.mubr.bf16.gmra.mxu0 %v2513
      %v2575 = vpop.f32.mrf.mxu0
      %v2576 = vadd.f32 0.0, %v2575
      %v2577 = vpop.f32.mrf.mxu0
      %v2578 = vpop.f32.mrf.mxu0
      %v2579 = vadd.f32 0.0, %v2578
      %v2580 = vpop.f32.mrf.mxu0
      %2581 = vmatprep.mubr.bf16.mxu0 0
      %2582 = vmatmul.mubr.bf16.gmra.mxu0 %v2516
      %v2583 = vpop.f32.mrf.mxu0
      %v2584 = vadd.f32 0.0, %v2583
      %v2585 = vpop.f32.mrf.mxu0
      %v2586 = vpop.f32.mrf.mxu0
      %v2587 = vadd.f32 0.0, %v2586
      %v2588 = vpop.f32.mrf.mxu0
      %2589 = vmatprep.mubr.bf16.mxu0 0
      %2590 = vmatmul.mubr.bf16.gmra.mxu0 %v2519
      %v2591 = vpop.f32.mrf.mxu0
      %v2592 = vadd.f32 0.0, %v2591
      %v2593 = vpop.f32.mrf.mxu0
      %v2594 = vpop.f32.mrf.mxu0
      %v2595 = vadd.f32 0.0, %v2594
      %v2596 = vpop.f32.mrf.mxu0
      %2597 = vdwg.mxu0
      %2598 = vrot.lane.b32.xlu0 %v1200, 112
      %v2599 = vpop.permute.xlu0 %2598
      %2600 = vrot.lane.b32.xlu0 %v1201, 112
      %v2601 = vpop.permute.xlu0 %2600
      %2602 = vrot.lane.b32.xlu0 %v1202, 112
      %v2603 = vpop.permute.xlu0 %2602
      %2604 = vrot.lane.b32.xlu0 %v1203, 112
      %v2605 = vpop.permute.xlu0 %2604
      %2606 = vrot.lane.b32.xlu0 %v1200, 80
      %v2607 = vpop.permute.xlu0 %2606
      %2608 = vrot.lane.b32.xlu0 %v1201, 80
      %v2609 = vpop.permute.xlu0 %2608
      %2610 = vrot.lane.b32.xlu0 %v1202, 80
      %v2611 = vpop.permute.xlu0 %2610
      %2612 = vrot.lane.b32.xlu0 %v1203, 80
      %v2613 = vpop.permute.xlu0 %2612
      %v2615 = vsel %vm1220, %v2599, 0
      %v2618 = vsel %vm1220, %v2601, 0
      %v2621 = vsel %vm1220, %v2603, 0
      %v2624 = vsel %vm1220, %v2605, 0
      %v2627 = vsel %vm1220, %v2607, 0
      %v2630 = vsel %vm1220, %v2609, 0
      %v2633 = vsel %vm1220, %v2611, 0
      %v2636 = vsel %vm1220, %v2613, 0
      %2638 = vmatprep.subr.bf16.mxu0 0
      %2639 = vmatpush1.bf16.xpose.msra.mxu0 0
      %2640 = vmatprep.subr.bf16.mxu0 0
      %2641 = vmatpush1.bf16.xpose.msra.mxu0 0
      %2642 = vmatprep.subr.bf16.mxu0 0
      %2643 = vmatpush1.bf16.xpose.msra.mxu0 0
      %2644 = vmatprep.subr.bf16.mxu0 0
      %2645 = vmatpush1.bf16.xpose.msra.mxu0 0
      %2646 = vmatprep.subr.bf16.mxu0 0
      %2647 = vmatpush1.bf16.xpose.msra.mxu0 %v2636
      %2648 = vmatprep.subr.bf16.mxu0 0
      %2649 = vmatpush1.bf16.xpose.msra.mxu0 %v2633
      %2650 = vmatprep.subr.bf16.mxu0 0
      %2651 = vmatpush1.bf16.xpose.msra.mxu0 %v2630
      %2652 = vmatprep.subr.bf16.mxu0 0
      %2653 = vmatpush1.bf16.xpose.msra.mxu0 %v2627
      %2654 = vmatprep.subr.bf16.mxu0 0
      %2655 = vmatpush2.bf16.xpose.msra.mxu0 0
      %2656 = vmatprep.subr.bf16.mxu0 0
      %2657 = vmatpush2.bf16.xpose.msra.mxu0 0
      %2658 = vmatprep.subr.bf16.mxu0 0
      %2659 = vmatpush2.bf16.xpose.msra.mxu0 0
      %2660 = vmatprep.subr.bf16.mxu0 0
      %2661 = vmatpush2.bf16.xpose.msra.mxu0 0
      %2662 = vmatprep.subr.bf16.mxu0 0
      %2663 = vmatpush2.bf16.xpose.msra.mxu0 0
      %2664 = vmatprep.subr.bf16.mxu0 0
      %2665 = vmatpush2.bf16.xpose.msra.mxu0 0
      %2666 = vmatprep.subr.bf16.mxu0 0
      %2667 = vmatpush2.bf16.xpose.msra.mxu0 0
      %2668 = vmatprep.subr.bf16.mxu0 0
      %2669 = vmatpush2.bf16.xpose.msra.mxu0 0
      %2670 = vmatprep.mubr.bf16.mxu0 0
      %2671 = vmatmul.mubr.bf16.gmra.mxu0 %v2615
      %v2672 = vpop.f32.mrf.mxu0
      %v2673 = vadd.f32 0.0, %v2672
      %v2674 = vpop.f32.mrf.mxu0
      %v2675 = vpop.f32.mrf.mxu0
      %v2676 = vadd.f32 0.0, %v2675
      %v2677 = vpop.f32.mrf.mxu0
      %2678 = vmatprep.mubr.bf16.mxu0 0
      %2679 = vmatmul.mubr.bf16.gmra.mxu0 %v2618
      %v2680 = vpop.f32.mrf.mxu0
      %v2681 = vadd.f32 0.0, %v2680
      %v2682 = vpop.f32.mrf.mxu0
      %v2683 = vpop.f32.mrf.mxu0
      %v2684 = vadd.f32 0.0, %v2683
      %v2685 = vpop.f32.mrf.mxu0
      %2686 = vmatprep.mubr.bf16.mxu0 0
      %2687 = vmatmul.mubr.bf16.gmra.mxu0 %v2621
      %v2688 = vpop.f32.mrf.mxu0
      %v2689 = vadd.f32 0.0, %v2688
      %v2690 = vpop.f32.mrf.mxu0
      %v2691 = vpop.f32.mrf.mxu0
      %v2692 = vadd.f32 0.0, %v2691
      %v2693 = vpop.f32.mrf.mxu0
      %2694 = vmatprep.mubr.bf16.mxu0 0
      %2695 = vmatmul.mubr.bf16.gmra.mxu0 %v2624
      %v2696 = vpop.f32.mrf.mxu0
      %v2697 = vadd.f32 0.0, %v2696
      %v2698 = vpop.f32.mrf.mxu0
      %v2699 = vpop.f32.mrf.mxu0
      %v2700 = vadd.f32 0.0, %v2699
      %v2701 = vpop.f32.mrf.mxu0
      %2702 = vdwg.mxu0
      %2703 = vrot.lane.b32.xlu0 %v1204, 112
      %v2704 = vpop.permute.xlu0 %2703
      %2705 = vrot.lane.b32.xlu0 %v1205, 112
      %v2706 = vpop.permute.xlu0 %2705
      %2707 = vrot.lane.b32.xlu0 %v1206, 112
      %v2708 = vpop.permute.xlu0 %2707
      %2709 = vrot.lane.b32.xlu0 %v1207, 112
      %v2710 = vpop.permute.xlu0 %2709
      %2711 = vrot.lane.b32.xlu0 %v1204, 80
      %v2712 = vpop.permute.xlu0 %2711
      %2713 = vrot.lane.b32.xlu0 %v1205, 80
      %v2714 = vpop.permute.xlu0 %2713
      %2715 = vrot.lane.b32.xlu0 %v1206, 80
      %v2716 = vpop.permute.xlu0 %2715
      %2717 = vrot.lane.b32.xlu0 %v1207, 80
      %v2718 = vpop.permute.xlu0 %2717
      %v2720 = vsel %vm1220, %v2704, 0
      %v2723 = vsel %vm1220, %v2706, 0
      %v2726 = vsel %vm1220, %v2708, 0
      %v2729 = vsel %vm1220, %v2710, 0
      %v2732 = vsel %vm1220, %v2712, 0
      %v2735 = vsel %vm1220, %v2714, 0
      %v2738 = vsel %vm1220, %v2716, 0
      %v2741 = vsel %vm1220, %v2718, 0
      %2743 = vmatprep.subr.bf16.mxu0 0
      %2744 = vmatpush1.bf16.xpose.msra.mxu0 0
      %2745 = vmatprep.subr.bf16.mxu0 0
      %2746 = vmatpush1.bf16.xpose.msra.mxu0 0
      %2747 = vmatprep.subr.bf16.mxu0 0
      %2748 = vmatpush1.bf16.xpose.msra.mxu0 0
      %2749 = vmatprep.subr.bf16.mxu0 0
      %2750 = vmatpush1.bf16.xpose.msra.mxu0 0
      %2751 = vmatprep.subr.bf16.mxu0 0
      %2752 = vmatpush1.bf16.xpose.msra.mxu0 %v2741
      %2753 = vmatprep.subr.bf16.mxu0 0
      %2754 = vmatpush1.bf16.xpose.msra.mxu0 %v2738
      %2755 = vmatprep.subr.bf16.mxu0 0
      %2756 = vmatpush1.bf16.xpose.msra.mxu0 %v2735
      %2757 = vmatprep.subr.bf16.mxu0 0
      %2758 = vmatpush1.bf16.xpose.msra.mxu0 %v2732
      %2759 = vmatprep.subr.bf16.mxu0 0
      %2760 = vmatpush2.bf16.xpose.msra.mxu0 0
      %2761 = vmatprep.subr.bf16.mxu0 0
      %2762 = vmatpush2.bf16.xpose.msra.mxu0 0
      %2763 = vmatprep.subr.bf16.mxu0 0
      %2764 = vmatpush2.bf16.xpose.msra.mxu0 0
      %2765 = vmatprep.subr.bf16.mxu0 0
      %2766 = vmatpush2.bf16.xpose.msra.mxu0 0
      %2767 = vmatprep.subr.bf16.mxu0 0
      %2768 = vmatpush2.bf16.xpose.msra.mxu0 0
      %2769 = vmatprep.subr.bf16.mxu0 0
      %2770 = vmatpush2.bf16.xpose.msra.mxu0 0
      %2771 = vmatprep.subr.bf16.mxu0 0
      %2772 = vmatpush2.bf16.xpose.msra.mxu0 0
      %2773 = vmatprep.subr.bf16.mxu0 0
      %2774 = vmatpush2.bf16.xpose.msra.mxu0 0
      %2775 = vmatprep.mubr.bf16.mxu0 0
      %2776 = vmatmul.mubr.bf16.gmra.mxu0 %v2720
      %v2777 = vpop.f32.mrf.mxu0
      %v2778 = vadd.f32 0.0, %v2777
      %v2779 = vpop.f32.mrf.mxu0
      %v2780 = vpop.f32.mrf.mxu0
      %v2781 = vadd.f32 0.0, %v2780
      %v2782 = vpop.f32.mrf.mxu0
      %2783 = vmatprep.mubr.bf16.mxu0 0
      %2784 = vmatmul.mubr.bf16.gmra.mxu0 %v2723
      %v2785 = vpop.f32.mrf.mxu0
      %v2786 = vadd.f32 0.0, %v2785
      %v2787 = vpop.f32.mrf.mxu0
      %v2788 = vpop.f32.mrf.mxu0
      %v2789 = vadd.f32 0.0, %v2788
      %v2790 = vpop.f32.mrf.mxu0
      %2791 = vmatprep.mubr.bf16.mxu0 0
      %2792 = vmatmul.mubr.bf16.gmra.mxu0 %v2726
      %v2793 = vpop.f32.mrf.mxu0
      %v2794 = vadd.f32 0.0, %v2793
      %v2795 = vpop.f32.mrf.mxu0
      %v2796 = vpop.f32.mrf.mxu0
      %v2797 = vadd.f32 0.0, %v2796
      %v2798 = vpop.f32.mrf.mxu0
      %2799 = vmatprep.mubr.bf16.mxu0 0
      %2800 = vmatmul.mubr.bf16.gmra.mxu0 %v2729
      %v2801 = vpop.f32.mrf.mxu0
      %v2802 = vadd.f32 0.0, %v2801
      %v2803 = vpop.f32.mrf.mxu0
      %v2804 = vpop.f32.mrf.mxu0
      %v2805 = vadd.f32 0.0, %v2804
      %v2806 = vpop.f32.mrf.mxu0
      %2807 = vdwg.mxu0
      %v2808 = vmul.f32 %v2463, 0.25
      %v2809 = vmul.f32 %v2466, 0.25
      %v2810 = vmul.f32 %v2471, 0.25
      %v2811 = vmul.f32 %v2474, 0.25
      %v2812 = vmul.f32 %v2479, 0.25
      %v2813 = vmul.f32 %v2482, 0.25
      %v2814 = vmul.f32 %v2487, 0.25
      %v2815 = vmul.f32 %v2490, 0.25
      %v2816 = vmul.f32 %v2568, 0.25
      %v2817 = vmul.f32 %v2571, 0.25
      %v2818 = vmul.f32 %v2576, 0.25
      %v2819 = vmul.f32 %v2579, 0.25
      %v2820 = vmul.f32 %v2584, 0.25
      %v2821 = vmul.f32 %v2587, 0.25
      %v2822 = vmul.f32 %v2592, 0.25
      %v2823 = vmul.f32 %v2595, 0.25
      %v2824 = vmul.f32 %v2673, 0.25
      %v2825 = vmul.f32 %v2676, 0.25
      %v2826 = vmul.f32 %v2681, 0.25
      %v2827 = vmul.f32 %v2684, 0.25
      %v2828 = vmul.f32 %v2689, 0.25
      %v2829 = vmul.f32 %v2692, 0.25
      %v2830 = vmul.f32 %v2697, 0.25
      %v2831 = vmul.f32 %v2700, 0.25
      %v2832 = vmul.f32 %v2778, 0.25
      %v2833 = vmul.f32 %v2781, 0.25
      %v2834 = vmul.f32 %v2786, 0.25
      %v2835 = vmul.f32 %v2789, 0.25
      %v2836 = vmul.f32 %v2794, 0.25
      %v2837 = vmul.f32 %v2797, 0.25
      %v2838 = vmul.f32 %v2802, 0.25
      %v2839 = vmul.f32 %v2805, 0.25
      %v2840 = vsel %vm1645, %v2808, -inf
      %2841 = vmax.xlane.f32.xlu0 %v2840
      %v2842 = vpop.xlane.xlu0 %2841
      %v2843 = vsel %vm1645, %v2809, -inf
      %2844 = vmax.xlane.f32.xlu0 %v2843
      %v2845 = vpop.xlane.xlu0 %2844
      %v2846 = vsel %vm1645, %v2810, -inf
      %2847 = vmax.xlane.f32.xlu0 %v2846
      %v2848 = vpop.xlane.xlu0 %2847
      %v2849 = vsel %vm1645, %v2811, -inf
      %2850 = vmax.xlane.f32.xlu0 %v2849
      %v2851 = vpop.xlane.xlu0 %2850
      %v2852 = vsel %vm1645, %v2812, -inf
      %2853 = vmax.xlane.f32.xlu0 %v2852
      %v2854 = vpop.xlane.xlu0 %2853
      %v2855 = vsel %vm1645, %v2813, -inf
      %2856 = vmax.xlane.f32.xlu0 %v2855
      %v2857 = vpop.xlane.xlu0 %2856
      %v2858 = vsel %vm1645, %v2814, -inf
      %2859 = vmax.xlane.f32.xlu0 %v2858
      %v2860 = vpop.xlane.xlu0 %2859
      %v2861 = vsel %vm1645, %v2815, -inf
      %2862 = vmax.xlane.f32.xlu0 %v2861
      %v2863 = vpop.xlane.xlu0 %2862
      %v2864 = vsel %vm1645, %v2816, -inf
      %2865 = vmax.xlane.f32.xlu0 %v2864
      %v2866 = vpop.xlane.xlu0 %2865
      %v2867 = vsel %vm1645, %v2817, -inf
      %2868 = vmax.xlane.f32.xlu0 %v2867
      %v2869 = vpop.xlane.xlu0 %2868
      %v2870 = vsel %vm1645, %v2818, -inf
      %2871 = vmax.xlane.f32.xlu0 %v2870
      %v2872 = vpop.xlane.xlu0 %2871
      %v2873 = vsel %vm1645, %v2819, -inf
      %2874 = vmax.xlane.f32.xlu0 %v2873
      %v2875 = vpop.xlane.xlu0 %2874
      %v2876 = vsel %vm1645, %v2820, -inf
      %2877 = vmax.xlane.f32.xlu0 %v2876
      %v2878 = vpop.xlane.xlu0 %2877
      %v2879 = vsel %vm1645, %v2821, -inf
      %2880 = vmax.xlane.f32.xlu0 %v2879
      %v2881 = vpop.xlane.xlu0 %2880
      %v2882 = vsel %vm1645, %v2822, -inf
      %2883 = vmax.xlane.f32.xlu0 %v2882
      %v2884 = vpop.xlane.xlu0 %2883
      %v2885 = vsel %vm1645, %v2823, -inf
      %2886 = vmax.xlane.f32.xlu0 %v2885
      %v2887 = vpop.xlane.xlu0 %2886
      %v2888 = vsel %vm1645, %v2824, -inf
      %2889 = vmax.xlane.f32.xlu0 %v2888
      %v2890 = vpop.xlane.xlu0 %2889
      %v2891 = vsel %vm1645, %v2825, -inf
      %2892 = vmax.xlane.f32.xlu0 %v2891
      %v2893 = vpop.xlane.xlu0 %2892
      %v2894 = vsel %vm1645, %v2826, -inf
      %2895 = vmax.xlane.f32.xlu0 %v2894
      %v2896 = vpop.xlane.xlu0 %2895
      %v2897 = vsel %vm1645, %v2827, -inf
      %2898 = vmax.xlane.f32.xlu0 %v2897
      %v2899 = vpop.xlane.xlu0 %2898
      %v2900 = vsel %vm1645, %v2828, -inf
      %2901 = vmax.xlane.f32.xlu0 %v2900
      %v2902 = vpop.xlane.xlu0 %2901
      %v2903 = vsel %vm1645, %v2829, -inf
      %2904 = vmax.xlane.f32.xlu0 %v2903
      %v2905 = vpop.xlane.xlu0 %2904
      %v2906 = vsel %vm1645, %v2830, -inf
      %2907 = vmax.xlane.f32.xlu0 %v2906
      %v2908 = vpop.xlane.xlu0 %2907
      %v2909 = vsel %vm1645, %v2831, -inf
      %2910 = vmax.xlane.f32.xlu0 %v2909
      %v2911 = vpop.xlane.xlu0 %2910
      %v2912 = vsel %vm1645, %v2832, -inf
      %2913 = vmax.xlane.f32.xlu0 %v2912
      %v2914 = vpop.xlane.xlu0 %2913
      %v2915 = vsel %vm1645, %v2833, -inf
      %2916 = vmax.xlane.f32.xlu0 %v2915
      %v2917 = vpop.xlane.xlu0 %2916
      %v2918 = vsel %vm1645, %v2834, -inf
      %2919 = vmax.xlane.f32.xlu0 %v2918
      %v2920 = vpop.xlane.xlu0 %2919
      %v2921 = vsel %vm1645, %v2835, -inf
      %2922 = vmax.xlane.f32.xlu0 %v2921
      %v2923 = vpop.xlane.xlu0 %2922
      %v2924 = vsel %vm1645, %v2836, -inf
      %2925 = vmax.xlane.f32.xlu0 %v2924
      %v2926 = vpop.xlane.xlu0 %2925
      %v2927 = vsel %vm1645, %v2837, -inf
      %2928 = vmax.xlane.f32.xlu0 %v2927
      %v2929 = vpop.xlane.xlu0 %2928
      %v2930 = vsel %vm1645, %v2838, -inf
      %2931 = vmax.xlane.f32.xlu0 %v2930
      %v2932 = vpop.xlane.xlu0 %2931
      %v2933 = vsel %vm1645, %v2839, -inf
      %2934 = vmax.xlane.f32.xlu0 %v2933
      %v2935 = vpop.xlane.xlu0 %2934
      %v2936 = vsub.f32 %v2808, %v2842
      %v2937 = vsub.f32 %v2809, %v2845
      %v2938 = vsub.f32 %v2810, %v2848
      %v2939 = vsub.f32 %v2811, %v2851
      %v2940 = vsub.f32 %v2812, %v2854
      %v2941 = vsub.f32 %v2813, %v2857
      %v2942 = vsub.f32 %v2814, %v2860
      %v2943 = vsub.f32 %v2815, %v2863
      %v2944 = vsub.f32 %v2816, %v2866
      %v2945 = vsub.f32 %v2817, %v2869
      %v2946 = vsub.f32 %v2818, %v2872
      %v2947 = vsub.f32 %v2819, %v2875
      %v2948 = vsub.f32 %v2820, %v2878
      %v2949 = vsub.f32 %v2821, %v2881
      %v2950 = vsub.f32 %v2822, %v2884
      %v2951 = vsub.f32 %v2823, %v2887
      %v2952 = vsub.f32 %v2824, %v2890
      %v2953 = vsub.f32 %v2825, %v2893
      %v2954 = vsub.f32 %v2826, %v2896
      %v2955 = vsub.f32 %v2827, %v2899
      %v2956 = vsub.f32 %v2828, %v2902
      %v2957 = vsub.f32 %v2829, %v2905
      %v2958 = vsub.f32 %v2830, %v2908
      %v2959 = vsub.f32 %v2831, %v2911
      %v2960 = vsub.f32 %v2832, %v2914
      %v2961 = vsub.f32 %v2833, %v2917
      %v2962 = vsub.f32 %v2834, %v2920
      %v2963 = vsub.f32 %v2835, %v2923
      %v2964 = vsub.f32 %v2836, %v2926
      %v2965 = vsub.f32 %v2837, %v2929
      %v2966 = vsub.f32 %v2838, %v2932
      %v2967 = vsub.f32 %v2839, %v2935
      %v2968 = vmul.f32 %v2936, 1.442695
      %v2969 = vpow.pop %v2968
      %v2970 = vmul.f32 %v2937, 1.442695
      %v2971 = vpow.pop %v2970
      %v2972 = vmul.f32 %v2938, 1.442695
      %v2973 = vpow.pop %v2972
      %v2974 = vmul.f32 %v2939, 1.442695
      %v2975 = vpow.pop %v2974
      %v2976 = vmul.f32 %v2940, 1.442695
      %v2977 = vpow.pop %v2976
      %v2978 = vmul.f32 %v2941, 1.442695
      %v2979 = vpow.pop %v2978
      %v2980 = vmul.f32 %v2942, 1.442695
      %v2981 = vpow.pop %v2980
      %v2982 = vmul.f32 %v2943, 1.442695
      %v2983 = vpow.pop %v2982
      %v2984 = vmul.f32 %v2944, 1.442695
      %v2985 = vpow.pop %v2984
      %v2986 = vmul.f32 %v2945, 1.442695
      %v2987 = vpow.pop %v2986
      %v2988 = vmul.f32 %v2946, 1.442695
      %v2989 = vpow.pop %v2988
      %v2990 = vmul.f32 %v2947, 1.442695
      %v2991 = vpow.pop %v2990
      %v2992 = vmul.f32 %v2948, 1.442695
      %v2993 = vpow.pop %v2992
      %v2994 = vmul.f32 %v2949, 1.442695
      %v2995 = vpow.pop %v2994
      %v2996 = vmul.f32 %v2950, 1.442695
      %v2997 = vpow.pop %v2996
      %v2998 = vmul.f32 %v2951, 1.442695
      %v2999 = vpow.pop %v2998
      %v3000 = vmul.f32 %v2952, 1.442695
      %v3001 = vpow.pop %v3000
      %v3002 = vmul.f32 %v2953, 1.442695
      %v3003 = vpow.pop %v3002
      %v3004 = vmul.f32 %v2954, 1.442695
      %v3005 = vpow.pop %v3004
      %v3006 = vmul.f32 %v2955, 1.442695
      %v3007 = vpow.pop %v3006
      %v3008 = vmul.f32 %v2956, 1.442695
      %v3009 = vpow.pop %v3008
      %v3010 = vmul.f32 %v2957, 1.442695
      %v3011 = vpow.pop %v3010
      %v3012 = vmul.f32 %v2958, 1.442695
      %v3013 = vpow.pop %v3012
      %v3014 = vmul.f32 %v2959, 1.442695
      %v3015 = vpow.pop %v3014
      %v3016 = vmul.f32 %v2960, 1.442695
      %v3017 = vpow.pop %v3016
      %v3018 = vmul.f32 %v2961, 1.442695
      %v3019 = vpow.pop %v3018
      %v3020 = vmul.f32 %v2962, 1.442695
      %v3021 = vpow.pop %v3020
      %v3022 = vmul.f32 %v2963, 1.442695
      %v3023 = vpow.pop %v3022
      %v3024 = vmul.f32 %v2964, 1.442695
      %v3025 = vpow.pop %v3024
      %v3026 = vmul.f32 %v2965, 1.442695
      %v3027 = vpow.pop %v3026
      %v3028 = vmul.f32 %v2966, 1.442695
      %v3029 = vpow.pop %v3028
      %v3030 = vmul.f32 %v2967, 1.442695
      %v3031 = vpow.pop %v3030
      %v3032 = vsel %vm1645, %v2969, 0.0
      %3033 = vadd.xlane.f32.xlu0 %v3032
      %v3034 = vpop.xlane.xlu0 %3033
      %v3035 = vsel %vm1645, %v2971, 0.0
      %3036 = vadd.xlane.f32.xlu0 %v3035
      %v3037 = vpop.xlane.xlu0 %3036
      %v3038 = vsel %vm1645, %v2973, 0.0
      %3039 = vadd.xlane.f32.xlu0 %v3038
      %v3040 = vpop.xlane.xlu0 %3039
      %v3041 = vsel %vm1645, %v2975, 0.0
      %3042 = vadd.xlane.f32.xlu0 %v3041
      %v3043 = vpop.xlane.xlu0 %3042
      %v3044 = vsel %vm1645, %v2977, 0.0
      %3045 = vadd.xlane.f32.xlu0 %v3044
      %v3046 = vpop.xlane.xlu0 %3045
      %v3047 = vsel %vm1645, %v2979, 0.0
      %3048 = vadd.xlane.f32.xlu0 %v3047
      %v3049 = vpop.xlane.xlu0 %3048
      %v3050 = vsel %vm1645, %v2981, 0.0
      %3051 = vadd.xlane.f32.xlu0 %v3050
      %v3052 = vpop.xlane.xlu0 %3051
      %v3053 = vsel %vm1645, %v2983, 0.0
      %3054 = vadd.xlane.f32.xlu0 %v3053
      %v3055 = vpop.xlane.xlu0 %3054
      %v3056 = vsel %vm1645, %v2985, 0.0
      %3057 = vadd.xlane.f32.xlu0 %v3056
      %v3058 = vpop.xlane.xlu0 %3057
      %v3059 = vsel %vm1645, %v2987, 0.0
      %3060 = vadd.xlane.f32.xlu0 %v3059
      %v3061 = vpop.xlane.xlu0 %3060
      %v3062 = vsel %vm1645, %v2989, 0.0
      %3063 = vadd.xlane.f32.xlu0 %v3062
      %v3064 = vpop.xlane.xlu0 %3063
      %v3065 = vsel %vm1645, %v2991, 0.0
      %3066 = vadd.xlane.f32.xlu0 %v3065
      %v3067 = vpop.xlane.xlu0 %3066
      %v3068 = vsel %vm1645, %v2993, 0.0
      %3069 = vadd.xlane.f32.xlu0 %v3068
      %v3070 = vpop.xlane.xlu0 %3069
      %v3071 = vsel %vm1645, %v2995, 0.0
      %3072 = vadd.xlane.f32.xlu0 %v3071
      %v3073 = vpop.xlane.xlu0 %3072
      %v3074 = vsel %vm1645, %v2997, 0.0
      %3075 = vadd.xlane.f32.xlu0 %v3074
      %v3076 = vpop.xlane.xlu0 %3075
      %v3077 = vsel %vm1645, %v2999, 0.0
      %3078 = vadd.xlane.f32.xlu0 %v3077
      %v3079 = vpop.xlane.xlu0 %3078
      %v3080 = vsel %vm1645, %v3001, 0.0
      %3081 = vadd.xlane.f32.xlu0 %v3080
      %v3082 = vpop.xlane.xlu0 %3081
      %v3083 = vsel %vm1645, %v3003, 0.0
      %3084 = vadd.xlane.f32.xlu0 %v3083
      %v3085 = vpop.xlane.xlu0 %3084
      %v3086 = vsel %vm1645, %v3005, 0.0
      %3087 = vadd.xlane.f32.xlu0 %v3086
      %v3088 = vpop.xlane.xlu0 %3087
      %v3089 = vsel %vm1645, %v3007, 0.0
      %3090 = vadd.xlane.f32.xlu0 %v3089
      %v3091 = vpop.xlane.xlu0 %3090
      %v3092 = vsel %vm1645, %v3009, 0.0
      %3093 = vadd.xlane.f32.xlu0 %v3092
      %v3094 = vpop.xlane.xlu0 %3093
      %v3095 = vsel %vm1645, %v3011, 0.0
      %3096 = vadd.xlane.f32.xlu0 %v3095
      %v3097 = vpop.xlane.xlu0 %3096
      %v3098 = vsel %vm1645, %v3013, 0.0
      %3099 = vadd.xlane.f32.xlu0 %v3098
      %v3100 = vpop.xlane.xlu0 %3099
      %v3101 = vsel %vm1645, %v3015, 0.0
      %3102 = vadd.xlane.f32.xlu0 %v3101
      %v3103 = vpop.xlane.xlu0 %3102
      %v3104 = vsel %vm1645, %v3017, 0.0
      %3105 = vadd.xlane.f32.xlu0 %v3104
      %v3106 = vpop.xlane.xlu0 %3105
      %v3107 = vsel %vm1645, %v3019, 0.0
      %3108 = vadd.xlane.f32.xlu0 %v3107
      %v3109 = vpop.xlane.xlu0 %3108
      %v3110 = vsel %vm1645, %v3021, 0.0
      %3111 = vadd.xlane.f32.xlu0 %v3110
      %v3112 = vpop.xlane.xlu0 %3111
      %v3113 = vsel %vm1645, %v3023, 0.0
      %3114 = vadd.xlane.f32.xlu0 %v3113
      %v3115 = vpop.xlane.xlu0 %3114
      %v3116 = vsel %vm1645, %v3025, 0.0
      %3117 = vadd.xlane.f32.xlu0 %v3116
      %v3118 = vpop.xlane.xlu0 %3117
      %v3119 = vsel %vm1645, %v3027, 0.0
      %3120 = vadd.xlane.f32.xlu0 %v3119
      %v3121 = vpop.xlane.xlu0 %3120
      %v3122 = vsel %vm1645, %v3029, 0.0
      %3123 = vadd.xlane.f32.xlu0 %v3122
      %v3124 = vpop.xlane.xlu0 %3123
      %v3125 = vsel %vm1645, %v3031, 0.0
      %3126 = vadd.xlane.f32.xlu0 %v3125
      %v3127 = vpop.xlane.xlu0 %3126
      %v3128 = vrcp.pop %v3034
      %v3129 = vrcp.pop %v3037
      %v3130 = vrcp.pop %v3040
      %v3131 = vrcp.pop %v3043
      %v3132 = vrcp.pop %v3046
      %v3133 = vrcp.pop %v3049
      %v3134 = vrcp.pop %v3052
      %v3135 = vrcp.pop %v3055
      %v3136 = vrcp.pop %v3058
      %v3137 = vrcp.pop %v3061
      %v3138 = vrcp.pop %v3064
      %v3139 = vrcp.pop %v3067
      %v3140 = vrcp.pop %v3070
      %v3141 = vrcp.pop %v3073
      %v3142 = vrcp.pop %v3076
      %v3143 = vrcp.pop %v3079
      %v3144 = vrcp.pop %v3082
      %v3145 = vrcp.pop %v3085
      %v3146 = vrcp.pop %v3088
      %v3147 = vrcp.pop %v3091
      %v3148 = vrcp.pop %v3094
      %v3149 = vrcp.pop %v3097
      %v3150 = vrcp.pop %v3100
      %v3151 = vrcp.pop %v3103
      %v3152 = vrcp.pop %v3106
      %v3153 = vrcp.pop %v3109
      %v3154 = vrcp.pop %v3112
      %v3155 = vrcp.pop %v3115
      %v3156 = vrcp.pop %v3118
      %v3157 = vrcp.pop %v3121
      %v3158 = vrcp.pop %v3124
      %v3159 = vrcp.pop %v3127
      %v3160 = vmul.f32 %v2969, %v3128
      %v3161 = vmul.f32 %v2971, %v3129
      %v3162 = vmul.f32 %v2973, %v3130
      %v3163 = vmul.f32 %v2975, %v3131
      %v3164 = vmul.f32 %v2977, %v3132
      %v3165 = vmul.f32 %v2979, %v3133
      %v3166 = vmul.f32 %v2981, %v3134
      %v3167 = vmul.f32 %v2983, %v3135
      %v3168 = vmul.f32 %v2985, %v3136
      %v3169 = vmul.f32 %v2987, %v3137
      %v3170 = vmul.f32 %v2989, %v3138
      %v3171 = vmul.f32 %v2991, %v3139
      %v3172 = vmul.f32 %v2993, %v3140
      %v3173 = vmul.f32 %v2995, %v3141
      %v3174 = vmul.f32 %v2997, %v3142
      %v3175 = vmul.f32 %v2999, %v3143
      %v3176 = vmul.f32 %v3001, %v3144
      %v3177 = vmul.f32 %v3003, %v3145
      %v3178 = vmul.f32 %v3005, %v3146
      %v3179 = vmul.f32 %v3007, %v3147
      %v3180 = vmul.f32 %v3009, %v3148
      %v3181 = vmul.f32 %v3011, %v3149
      %v3182 = vmul.f32 %v3013, %v3150
      %v3183 = vmul.f32 %v3015, %v3151
      %v3184 = vmul.f32 %v3017, %v3152
      %v3185 = vmul.f32 %v3019, %v3153
      %v3186 = vmul.f32 %v3021, %v3154
      %v3187 = vmul.f32 %v3023, %v3155
      %v3188 = vmul.f32 %v3025, %v3156
      %v3189 = vmul.f32 %v3027, %v3157
      %v3190 = vmul.f32 %v3029, %v3158
      %v3191 = vmul.f32 %v3031, %v3159
      %v3192 = vpack.c.bf16 %v3161, %v3160
      %v3193 = vpack.c.bf16 %v3163, %v3162
      %v3194 = vpack.c.bf16 %v3165, %v3164
      %v3195 = vpack.c.bf16 %v3167, %v3166
      %v3196 = vpack.c.bf16 %v3169, %v3168
      %v3197 = vpack.c.bf16 %v3171, %v3170
      %v3198 = vpack.c.bf16 %v3173, %v3172
      %v3199 = vpack.c.bf16 %v3175, %v3174
      %v3200 = vpack.c.bf16 %v3177, %v3176
      %v3201 = vpack.c.bf16 %v3179, %v3178
      %v3202 = vpack.c.bf16 %v3181, %v3180
      %v3203 = vpack.c.bf16 %v3183, %v3182
      %v3204 = vpack.c.bf16 %v3185, %v3184
      %v3205 = vpack.c.bf16 %v3187, %v3186
      %v3206 = vpack.c.bf16 %v3189, %v3188
      %v3207 = vpack.c.bf16 %v3191, %v3190
      %3208 = vrot.lane.b32.xlu0 %v1192, 48
      %v3209 = vpop.permute.xlu0 %3208
      %3210 = vrot.lane.b32.xlu0 %v1193, 48
      %v3211 = vpop.permute.xlu0 %3210
      %3212 = vrot.lane.b32.xlu0 %v1194, 48
      %v3213 = vpop.permute.xlu0 %3212
      %3214 = vrot.lane.b32.xlu0 %v1195, 48
      %v3215 = vpop.permute.xlu0 %3214
      %v3221 = vsel %vm1645, %v3192, 0
      %v3224 = vsel %vm1645, %v3193, 0
      %v3227 = vsel %vm1645, %v3194, 0
      %v3230 = vsel %vm1645, %v3195, 0
      %3232 = vmatprep.subr.bf16.mxu0 0
      %3233 = vmatpush1.bf16.msra.mxu0 0
      %3234 = vmatprep.subr.bf16.mxu0 0
      %3235 = vmatpush1.bf16.msra.mxu0 0
      %3236 = vmatprep.subr.bf16.mxu0 0
      %3237 = vmatpush1.bf16.msra.mxu0 0
      %3238 = vmatprep.subr.bf16.mxu0 0
      %3239 = vmatpush1.bf16.msra.mxu0 0
      %3240 = vmatprep.subr.bf16.mxu0 0
      %3241 = vmatpush1.bf16.msra.mxu0 %v3215
      %3242 = vmatprep.subr.bf16.mxu0 0
      %3243 = vmatpush1.bf16.msra.mxu0 %v3213
      %3244 = vmatprep.subr.bf16.mxu0 0
      %3245 = vmatpush1.bf16.msra.mxu0 %v3211
      %3246 = vmatprep.subr.bf16.mxu0 0
      %3247 = vmatpush1.bf16.msra.mxu0 %v3209
      %3248 = vmatprep.subr.bf16.mxu0 0
      %3249 = vmatpush2.bf16.msra.mxu0 0
      %3250 = vmatprep.subr.bf16.mxu0 0
      %3251 = vmatpush2.bf16.msra.mxu0 0
      %3252 = vmatprep.subr.bf16.mxu0 0
      %3253 = vmatpush2.bf16.msra.mxu0 0
      %3254 = vmatprep.subr.bf16.mxu0 0
      %3255 = vmatpush2.bf16.msra.mxu0 0
      %3256 = vmatprep.subr.bf16.mxu0 0
      %3257 = vmatpush2.bf16.msra.mxu0 0
      %3258 = vmatprep.subr.bf16.mxu0 0
      %3259 = vmatpush2.bf16.msra.mxu0 0
      %3260 = vmatprep.subr.bf16.mxu0 0
      %3261 = vmatpush2.bf16.msra.mxu0 0
      %3262 = vmatprep.subr.bf16.mxu0 0
      %3263 = vmatpush2.bf16.msra.mxu0 0
      %3264 = vmatprep.mubr.bf16.mxu0 0
      %3265 = vmatmul.mubr.bf16.gmra.mxu0 %v3221
      %v3266 = vpop.f32.mrf.mxu0
      %v3267 = vadd.f32 0.0, %v3266
      %v3268 = vpop.f32.mrf.mxu0
      %v3269 = vpop.f32.mrf.mxu0
      %v3270 = vadd.f32 0.0, %v3269
      %v3271 = vpop.f32.mrf.mxu0
      %3272 = vmatprep.mubr.bf16.mxu0 0
      %3273 = vmatmul.mubr.bf16.gmra.mxu0 %v3224
      %v3274 = vpop.f32.mrf.mxu0
      %v3275 = vadd.f32 0.0, %v3274
      %v3276 = vpop.f32.mrf.mxu0
      %v3277 = vpop.f32.mrf.mxu0
      %v3278 = vadd.f32 0.0, %v3277
      %v3279 = vpop.f32.mrf.mxu0
      %3280 = vmatprep.mubr.bf16.mxu0 0
      %3281 = vmatmul.mubr.bf16.gmra.mxu0 %v3227
      %v3282 = vpop.f32.mrf.mxu0
      %v3283 = vadd.f32 0.0, %v3282
      %v3284 = vpop.f32.mrf.mxu0
      %v3285 = vpop.f32.mrf.mxu0
      %v3286 = vadd.f32 0.0, %v3285
      %v3287 = vpop.f32.mrf.mxu0
      %3288 = vmatprep.mubr.bf16.mxu0 0
      %3289 = vmatmul.mubr.bf16.gmra.mxu0 %v3230
      %v3290 = vpop.f32.mrf.mxu0
      %v3291 = vadd.f32 0.0, %v3290
      %v3292 = vpop.f32.mrf.mxu0
      %v3293 = vpop.f32.mrf.mxu0
      %v3294 = vadd.f32 0.0, %v3293
      %v3295 = vpop.f32.mrf.mxu0
      %3296 = vdwg.mxu0
      %3297 = vrot.lane.b32.xlu0 %v1196, 48
      %v3298 = vpop.permute.xlu0 %3297
      %3299 = vrot.lane.b32.xlu0 %v1197, 48
      %v3300 = vpop.permute.xlu0 %3299
      %3301 = vrot.lane.b32.xlu0 %v1198, 48
      %v3302 = vpop.permute.xlu0 %3301
      %3303 = vrot.lane.b32.xlu0 %v1199, 48
      %v3304 = vpop.permute.xlu0 %3303
      %v3310 = vsel %vm1645, %v3196, 0
      %v3313 = vsel %vm1645, %v3197, 0
      %v3316 = vsel %vm1645, %v3198, 0
      %v3319 = vsel %vm1645, %v3199, 0
      %3321 = vmatprep.subr.bf16.mxu0 0
      %3322 = vmatpush1.bf16.msra.mxu0 0
      %3323 = vmatprep.subr.bf16.mxu0 0
      %3324 = vmatpush1.bf16.msra.mxu0 0
      %3325 = vmatprep.subr.bf16.mxu0 0
      %3326 = vmatpush1.bf16.msra.mxu0 0
      %3327 = vmatprep.subr.bf16.mxu0 0
      %3328 = vmatpush1.bf16.msra.mxu0 0
      %3329 = vmatprep.subr.bf16.mxu0 0
      %3330 = vmatpush1.bf16.msra.mxu0 %v3304
      %3331 = vmatprep.subr.bf16.mxu0 0
      %3332 = vmatpush1.bf16.msra.mxu0 %v3302
      %3333 = vmatprep.subr.bf16.mxu0 0
      %3334 = vmatpush1.bf16.msra.mxu0 %v3300
      %3335 = vmatprep.subr.bf16.mxu0 0
      %3336 = vmatpush1.bf16.msra.mxu0 %v3298
      %3337 = vmatprep.subr.bf16.mxu0 0
      %3338 = vmatpush2.bf16.msra.mxu0 0
      %3339 = vmatprep.subr.bf16.mxu0 0
      %3340 = vmatpush2.bf16.msra.mxu0 0
      %3341 = vmatprep.subr.bf16.mxu0 0
      %3342 = vmatpush2.bf16.msra.mxu0 0
      %3343 = vmatprep.subr.bf16.mxu0 0
      %3344 = vmatpush2.bf16.msra.mxu0 0
      %3345 = vmatprep.subr.bf16.mxu0 0
      %3346 = vmatpush2.bf16.msra.mxu0 0
      %3347 = vmatprep.subr.bf16.mxu0 0
      %3348 = vmatpush2.bf16.msra.mxu0 0
      %3349 = vmatprep.subr.bf16.mxu0 0
      %3350 = vmatpush2.bf16.msra.mxu0 0
      %3351 = vmatprep.subr.bf16.mxu0 0
      %3352 = vmatpush2.bf16.msra.mxu0 0
      %3353 = vmatprep.mubr.bf16.mxu0 0
      %3354 = vmatmul.mubr.bf16.gmra.mxu0 %v3310
      %v3355 = vpop.f32.mrf.mxu0
      %v3356 = vadd.f32 0.0, %v3355
      %v3357 = vpop.f32.mrf.mxu0
      %v3358 = vpop.f32.mrf.mxu0
      %v3359 = vadd.f32 0.0, %v3358
      %v3360 = vpop.f32.mrf.mxu0
      %3361 = vmatprep.mubr.bf16.mxu0 0
      %3362 = vmatmul.mubr.bf16.gmra.mxu0 %v3313
      %v3363 = vpop.f32.mrf.mxu0
      %v3364 = vadd.f32 0.0, %v3363
      %v3365 = vpop.f32.mrf.mxu0
      %v3366 = vpop.f32.mrf.mxu0
      %v3367 = vadd.f32 0.0, %v3366
      %v3368 = vpop.f32.mrf.mxu0
      %3369 = vmatprep.mubr.bf16.mxu0 0
      %3370 = vmatmul.mubr.bf16.gmra.mxu0 %v3316
      %v3371 = vpop.f32.mrf.mxu0
      %v3372 = vadd.f32 0.0, %v3371
      %v3373 = vpop.f32.mrf.mxu0
      %v3374 = vpop.f32.mrf.mxu0
      %v3375 = vadd.f32 0.0, %v3374
      %v3376 = vpop.f32.mrf.mxu0
      %3377 = vmatprep.mubr.bf16.mxu0 0
      %3378 = vmatmul.mubr.bf16.gmra.mxu0 %v3319
      %v3379 = vpop.f32.mrf.mxu0
      %v3380 = vadd.f32 0.0, %v3379
      %v3381 = vpop.f32.mrf.mxu0
      %v3382 = vpop.f32.mrf.mxu0
      %v3383 = vadd.f32 0.0, %v3382
      %v3384 = vpop.f32.mrf.mxu0
      %3385 = vdwg.mxu0
      %3386 = vrot.lane.b32.xlu0 %v1200, 48
      %v3387 = vpop.permute.xlu0 %3386
      %3388 = vrot.lane.b32.xlu0 %v1201, 48
      %v3389 = vpop.permute.xlu0 %3388
      %3390 = vrot.lane.b32.xlu0 %v1202, 48
      %v3391 = vpop.permute.xlu0 %3390
      %3392 = vrot.lane.b32.xlu0 %v1203, 48
      %v3393 = vpop.permute.xlu0 %3392
      %v3399 = vsel %vm1645, %v3200, 0
      %v3402 = vsel %vm1645, %v3201, 0
      %v3405 = vsel %vm1645, %v3202, 0
      %v3408 = vsel %vm1645, %v3203, 0
      %3410 = vmatprep.subr.bf16.mxu0 0
      %3411 = vmatpush1.bf16.msra.mxu0 0
      %3412 = vmatprep.subr.bf16.mxu0 0
      %3413 = vmatpush1.bf16.msra.mxu0 0
      %3414 = vmatprep.subr.bf16.mxu0 0
      %3415 = vmatpush1.bf16.msra.mxu0 0
      %3416 = vmatprep.subr.bf16.mxu0 0
      %3417 = vmatpush1.bf16.msra.mxu0 0
      %3418 = vmatprep.subr.bf16.mxu0 0
      %3419 = vmatpush1.bf16.msra.mxu0 %v3393
      %3420 = vmatprep.subr.bf16.mxu0 0
      %3421 = vmatpush1.bf16.msra.mxu0 %v3391
      %3422 = vmatprep.subr.bf16.mxu0 0
      %3423 = vmatpush1.bf16.msra.mxu0 %v3389
      %3424 = vmatprep.subr.bf16.mxu0 0
      %3425 = vmatpush1.bf16.msra.mxu0 %v3387
      %3426 = vmatprep.subr.bf16.mxu0 0
      %3427 = vmatpush2.bf16.msra.mxu0 0
      %3428 = vmatprep.subr.bf16.mxu0 0
      %3429 = vmatpush2.bf16.msra.mxu0 0
      %3430 = vmatprep.subr.bf16.mxu0 0
      %3431 = vmatpush2.bf16.msra.mxu0 0
      %3432 = vmatprep.subr.bf16.mxu0 0
      %3433 = vmatpush2.bf16.msra.mxu0 0
      %3434 = vmatprep.subr.bf16.mxu0 0
      %3435 = vmatpush2.bf16.msra.mxu0 0
      %3436 = vmatprep.subr.bf16.mxu0 0
      %3437 = vmatpush2.bf16.msra.mxu0 0
      %3438 = vmatprep.subr.bf16.mxu0 0
      %3439 = vmatpush2.bf16.msra.mxu0 0
      %3440 = vmatprep.subr.bf16.mxu0 0
      %3441 = vmatpush2.bf16.msra.mxu0 0
      %3442 = vmatprep.mubr.bf16.mxu0 0
      %3443 = vmatmul.mubr.bf16.gmra.mxu0 %v3399
      %v3444 = vpop.f32.mrf.mxu0
      %v3445 = vadd.f32 0.0, %v3444
      %v3446 = vpop.f32.mrf.mxu0
      %v3447 = vpop.f32.mrf.mxu0
      %v3448 = vadd.f32 0.0, %v3447
      %v3449 = vpop.f32.mrf.mxu0
      %3450 = vmatprep.mubr.bf16.mxu0 0
      %3451 = vmatmul.mubr.bf16.gmra.mxu0 %v3402
      %v3452 = vpop.f32.mrf.mxu0
      %v3453 = vadd.f32 0.0, %v3452
      %v3454 = vpop.f32.mrf.mxu0
      %v3455 = vpop.f32.mrf.mxu0
      %v3456 = vadd.f32 0.0, %v3455
      %v3457 = vpop.f32.mrf.mxu0
      %3458 = vmatprep.mubr.bf16.mxu0 0
      %3459 = vmatmul.mubr.bf16.gmra.mxu0 %v3405
      %v3460 = vpop.f32.mrf.mxu0
      %v3461 = vadd.f32 0.0, %v3460
      %v3462 = vpop.f32.mrf.mxu0
      %v3463 = vpop.f32.mrf.mxu0
      %v3464 = vadd.f32 0.0, %v3463
      %v3465 = vpop.f32.mrf.mxu0
      %3466 = vmatprep.mubr.bf16.mxu0 0
      %3467 = vmatmul.mubr.bf16.gmra.mxu0 %v3408
      %v3468 = vpop.f32.mrf.mxu0
      %v3469 = vadd.f32 0.0, %v3468
      %v3470 = vpop.f32.mrf.mxu0
      %v3471 = vpop.f32.mrf.mxu0
      %v3472 = vadd.f32 0.0, %v3471
      %v3473 = vpop.f32.mrf.mxu0
      %3474 = vdwg.mxu0
      %3475 = vrot.lane.b32.xlu0 %v1204, 48
      %v3476 = vpop.permute.xlu0 %3475
      %3477 = vrot.lane.b32.xlu0 %v1205, 48
      %v3478 = vpop.permute.xlu0 %3477
      %3479 = vrot.lane.b32.xlu0 %v1206, 48
      %v3480 = vpop.permute.xlu0 %3479
      %3481 = vrot.lane.b32.xlu0 %v1207, 48
      %v3482 = vpop.permute.xlu0 %3481
      %v3488 = vsel %vm1645, %v3204, 0
      %v3491 = vsel %vm1645, %v3205, 0
      %v3494 = vsel %vm1645, %v3206, 0
      %v3497 = vsel %vm1645, %v3207, 0
      %3499 = vmatprep.subr.bf16.mxu0 0
      %3500 = vmatpush1.bf16.msra.mxu0 0
      %3501 = vmatprep.subr.bf16.mxu0 0
      %3502 = vmatpush1.bf16.msra.mxu0 0
      %3503 = vmatprep.subr.bf16.mxu0 0
      %3504 = vmatpush1.bf16.msra.mxu0 0
      %3505 = vmatprep.subr.bf16.mxu0 0
      %3506 = vmatpush1.bf16.msra.mxu0 0
      %3507 = vmatprep.subr.bf16.mxu0 0
      %3508 = vmatpush1.bf16.msra.mxu0 %v3482
      %3509 = vmatprep.subr.bf16.mxu0 0
      %3510 = vmatpush1.bf16.msra.mxu0 %v3480
      %3511 = vmatprep.subr.bf16.mxu0 0
      %3512 = vmatpush1.bf16.msra.mxu0 %v3478
      %3513 = vmatprep.subr.bf16.mxu0 0
      %3514 = vmatpush1.bf16.msra.mxu0 %v3476
      %3515 = vmatprep.subr.bf16.mxu0 0
      %3516 = vmatpush2.bf16.msra.mxu0 0
      %3517 = vmatprep.subr.bf16.mxu0 0
      %3518 = vmatpush2.bf16.msra.mxu0 0
      %3519 = vmatprep.subr.bf16.mxu0 0
      %3520 = vmatpush2.bf16.msra.mxu0 0
      %3521 = vmatprep.subr.bf16.mxu0 0
      %3522 = vmatpush2.bf16.msra.mxu0 0
      %3523 = vmatprep.subr.bf16.mxu0 0
      %3524 = vmatpush2.bf16.msra.mxu0 0
      %3525 = vmatprep.subr.bf16.mxu0 0
      %3526 = vmatpush2.bf16.msra.mxu0 0
      %3527 = vmatprep.subr.bf16.mxu0 0
      %3528 = vmatpush2.bf16.msra.mxu0 0
      %3529 = vmatprep.subr.bf16.mxu0 0
      %3530 = vmatpush2.bf16.msra.mxu0 0
      %3531 = vmatprep.mubr.bf16.mxu0 0
      %3532 = vmatmul.mubr.bf16.gmra.mxu0 %v3488
      %v3533 = vpop.f32.mrf.mxu0
      %v3534 = vadd.f32 0.0, %v3533
      %v3535 = vpop.f32.mrf.mxu0
      %v3536 = vpop.f32.mrf.mxu0
      %v3537 = vadd.f32 0.0, %v3536
      %v3538 = vpop.f32.mrf.mxu0
      %3539 = vmatprep.mubr.bf16.mxu0 0
      %3540 = vmatmul.mubr.bf16.gmra.mxu0 %v3491
      %v3541 = vpop.f32.mrf.mxu0
      %v3542 = vadd.f32 0.0, %v3541
      %v3543 = vpop.f32.mrf.mxu0
      %v3544 = vpop.f32.mrf.mxu0
      %v3545 = vadd.f32 0.0, %v3544
      %v3546 = vpop.f32.mrf.mxu0
      %3547 = vmatprep.mubr.bf16.mxu0 0
      %3548 = vmatmul.mubr.bf16.gmra.mxu0 %v3494
      %v3549 = vpop.f32.mrf.mxu0
      %v3550 = vadd.f32 0.0, %v3549
      %v3551 = vpop.f32.mrf.mxu0
      %v3552 = vpop.f32.mrf.mxu0
      %v3553 = vadd.f32 0.0, %v3552
      %v3554 = vpop.f32.mrf.mxu0
      %3555 = vmatprep.mubr.bf16.mxu0 0
      %3556 = vmatmul.mubr.bf16.gmra.mxu0 %v3497
      %v3557 = vpop.f32.mrf.mxu0
      %v3558 = vadd.f32 0.0, %v3557
      %v3559 = vpop.f32.mrf.mxu0
      %v3560 = vpop.f32.mrf.mxu0
      %v3561 = vadd.f32 0.0, %v3560
      %v3562 = vpop.f32.mrf.mxu0
      %3563 = vdwg.mxu0
      %v3564 = vpack.c.bf16 %v3270, %v3267
      %v3565 = vpack.c.bf16 %v3278, %v3275
      %v3566 = vpack.c.bf16 %v3286, %v3283
      %v3567 = vpack.c.bf16 %v3294, %v3291
      %v3568 = vpack.c.bf16 %v3359, %v3356
      %v3569 = vpack.c.bf16 %v3367, %v3364
      %v3570 = vpack.c.bf16 %v3375, %v3372
      %v3571 = vpack.c.bf16 %v3383, %v3380
      %v3572 = vpack.c.bf16 %v3448, %v3445
      %v3573 = vpack.c.bf16 %v3456, %v3453
      %v3574 = vpack.c.bf16 %v3464, %v3461
      %v3575 = vpack.c.bf16 %v3472, %v3469
      %v3576 = vpack.c.bf16 %v3537, %v3534
      %v3577 = vpack.c.bf16 %v3545, %v3542
      %v3578 = vpack.c.bf16 %v3553, %v3550
      %v3579 = vpack.c.bf16 %v3561, %v3558
      %v3580 = vld [vmem:[%s4 + $0x8] sm:$0xf]
      %v3581 = vld [vmem:[%s4 + $0xc] sm:$0xf]
      %v3584 = vunpack.c.l.b16 %v3580
      %v3585 = vunpack.c.l.b16 %v3581
      %v3586 = vpack.c.b16 %v3585, %v3584
      %v3589 = vsel %vm1220, %v3564, 0
      %v3592 = vsel %vm1220, %v3565, 0
      %v3595 = vsel %vm1220, %v3566, 0
      %v3598 = vsel %vm1220, %v3567, 0
      %v3601 = vsel %vm1220, %v3568, 0
      %v3604 = vsel %vm1220, %v3569, 0
      %v3607 = vsel %vm1220, %v3570, 0
      %v3610 = vsel %vm1220, %v3571, 0
      %v3613 = vsel %vm1220, %v3572, 0
      %v3616 = vsel %vm1220, %v3573, 0
      %v3619 = vsel %vm1220, %v3574, 0
      %v3622 = vsel %vm1220, %v3575, 0
      %v3625 = vsel %vm1220, %v3576, 0
      %v3628 = vsel %vm1220, %v3577, 0
      %v3631 = vsel %vm1220, %v3578, 0
      %v3634 = vsel %vm1220, %v3579, 0
      %3636 = vmatprep.subr.bf16.mxu0 0
      %3637 = vmatpush1.bf16.msra.mxu0 0
      %3638 = vmatprep.subr.bf16.mxu0 0
      %3639 = vmatpush1.bf16.msra.mxu0 0
      %3640 = vmatprep.subr.bf16.mxu0 0
      %3641 = vmatpush1.bf16.msra.mxu0 0
      %3642 = vmatprep.subr.bf16.mxu0 0
      %3643 = vmatpush1.bf16.msra.mxu0 0
      %3644 = vmatprep.subr.bf16.mxu0 0
      %3645 = vmatpush1.bf16.msra.mxu0 0
      %3646 = vmatprep.subr.bf16.mxu0 0
      %3647 = vmatpush1.bf16.msra.mxu0 0
      %3648 = vmatprep.subr.bf16.mxu0 0
      %3649 = vmatpush1.bf16.msra.mxu0 0
      %3650 = vmatprep.subr.bf16.mxu0 0
      %3651 = vmatpush1.bf16.msra.mxu0 %v3586
      %3652 = vmatprep.subr.bf16.mxu0 0
      %3653 = vmatpush2.bf16.msra.mxu0 0
      %3654 = vmatprep.subr.bf16.mxu0 0
      %3655 = vmatpush2.bf16.msra.mxu0 0
      %3656 = vmatprep.subr.bf16.mxu0 0
      %3657 = vmatpush2.bf16.msra.mxu0 0
      %3658 = vmatprep.subr.bf16.mxu0 0
      %3659 = vmatpush2.bf16.msra.mxu0 0
      %3660 = vmatprep.subr.bf16.mxu0 0
      %3661 = vmatpush2.bf16.msra.mxu0 0
      %3662 = vmatprep.subr.bf16.mxu0 0
      %3663 = vmatpush2.bf16.msra.mxu0 0
      %3664 = vmatprep.subr.bf16.mxu0 0
      %3665 = vmatpush2.bf16.msra.mxu0 0
      %3666 = vmatprep.subr.bf16.mxu0 0
      %3667 = vmatpush2.bf16.msra.mxu0 0
      %3668 = vmatprep.mubr.bf16.mxu0 0
      %3669 = vmatmul.mubr.bf16.gmra.mxu0 %v3589
      %v3670 = vpop.f32.mrf.mxu0
      %v3671 = vadd.f32 0.0, %v3670
      %v3672 = vpop.f32.mrf.mxu0
      %v3673 = vpop.f32.mrf.mxu0
      %v3674 = vadd.f32 0.0, %v3673
      %v3675 = vpop.f32.mrf.mxu0
      %3676 = vmatprep.mubr.bf16.mxu0 0
      %3677 = vmatmul.mubr.bf16.gmra.mxu0 %v3592
      %v3678 = vpop.f32.mrf.mxu0
      %v3679 = vadd.f32 0.0, %v3678
      %v3680 = vpop.f32.mrf.mxu0
      %v3681 = vpop.f32.mrf.mxu0
      %v3682 = vadd.f32 0.0, %v3681
      %v3683 = vpop.f32.mrf.mxu0
      %3684 = vmatprep.mubr.bf16.mxu0 0
      %3685 = vmatmul.mubr.bf16.gmra.mxu0 %v3595
      %v3686 = vpop.f32.mrf.mxu0
      %v3687 = vadd.f32 0.0, %v3686
      %v3688 = vpop.f32.mrf.mxu0
      %v3689 = vpop.f32.mrf.mxu0
      %v3690 = vadd.f32 0.0, %v3689
      %v3691 = vpop.f32.mrf.mxu0
      %3692 = vmatprep.mubr.bf16.mxu0 0
      %3693 = vmatmul.mubr.bf16.gmra.mxu0 %v3598
      %v3694 = vpop.f32.mrf.mxu0
      %v3695 = vadd.f32 0.0, %v3694
      %v3696 = vpop.f32.mrf.mxu0
      %v3697 = vpop.f32.mrf.mxu0
      %v3698 = vadd.f32 0.0, %v3697
      %v3699 = vpop.f32.mrf.mxu0
      %3700 = vmatprep.mubr.bf16.mxu0 0
      %3701 = vmatmul.mubr.bf16.gmra.mxu0 %v3601
      %v3702 = vpop.f32.mrf.mxu0
      %v3703 = vadd.f32 0.0, %v3702
      %v3704 = vpop.f32.mrf.mxu0
      %v3705 = vpop.f32.mrf.mxu0
      %v3706 = vadd.f32 0.0, %v3705
      %v3707 = vpop.f32.mrf.mxu0
      %3708 = vmatprep.mubr.bf16.mxu0 0
      %3709 = vmatmul.mubr.bf16.gmra.mxu0 %v3604
      %v3710 = vpop.f32.mrf.mxu0
      %v3711 = vadd.f32 0.0, %v3710
      %v3712 = vpop.f32.mrf.mxu0
      %v3713 = vpop.f32.mrf.mxu0
      %v3714 = vadd.f32 0.0, %v3713
      %v3715 = vpop.f32.mrf.mxu0
      %3716 = vmatprep.mubr.bf16.mxu0 0
      %3717 = vmatmul.mubr.bf16.gmra.mxu0 %v3607
      %v3718 = vpop.f32.mrf.mxu0
      %v3719 = vadd.f32 0.0, %v3718
      %v3720 = vpop.f32.mrf.mxu0
      %v3721 = vpop.f32.mrf.mxu0
      %v3722 = vadd.f32 0.0, %v3721
      %v3723 = vpop.f32.mrf.mxu0
      %3724 = vmatprep.mubr.bf16.mxu0 0
      %3725 = vmatmul.mubr.bf16.gmra.mxu0 %v3610
      %v3726 = vpop.f32.mrf.mxu0
      %v3727 = vadd.f32 0.0, %v3726
      %v3728 = vpop.f32.mrf.mxu0
      %v3729 = vpop.f32.mrf.mxu0
      %v3730 = vadd.f32 0.0, %v3729
      %v3731 = vpop.f32.mrf.mxu0
      %3732 = vmatprep.mubr.bf16.mxu0 0
      %3733 = vmatmul.mubr.bf16.gmra.mxu0 %v3613
      %v3734 = vpop.f32.mrf.mxu0
      %v3735 = vadd.f32 0.0, %v3734
      %v3736 = vpop.f32.mrf.mxu0
      %v3737 = vpop.f32.mrf.mxu0
      %v3738 = vadd.f32 0.0, %v3737
      %v3739 = vpop.f32.mrf.mxu0
      %3740 = vmatprep.mubr.bf16.mxu0 0
      %3741 = vmatmul.mubr.bf16.gmra.mxu0 %v3616
      %v3742 = vpop.f32.mrf.mxu0
      %v3743 = vadd.f32 0.0, %v3742
      %v3744 = vpop.f32.mrf.mxu0
      %v3745 = vpop.f32.mrf.mxu0
      %v3746 = vadd.f32 0.0, %v3745
      %v3747 = vpop.f32.mrf.mxu0
      %3748 = vmatprep.mubr.bf16.mxu0 0
      %3749 = vmatmul.mubr.bf16.gmra.mxu0 %v3619
      %v3750 = vpop.f32.mrf.mxu0
      %v3751 = vadd.f32 0.0, %v3750
      %v3752 = vpop.f32.mrf.mxu0
      %v3753 = vpop.f32.mrf.mxu0
      %v3754 = vadd.f32 0.0, %v3753
      %v3755 = vpop.f32.mrf.mxu0
      %3756 = vmatprep.mubr.bf16.mxu0 0
      %3757 = vmatmul.mubr.bf16.gmra.mxu0 %v3622
      %v3758 = vpop.f32.mrf.mxu0
      %v3759 = vadd.f32 0.0, %v3758
      %v3760 = vpop.f32.mrf.mxu0
      %v3761 = vpop.f32.mrf.mxu0
      %v3762 = vadd.f32 0.0, %v3761
      %v3763 = vpop.f32.mrf.mxu0
      %3764 = vmatprep.mubr.bf16.mxu0 0
      %3765 = vmatmul.mubr.bf16.gmra.mxu0 %v3625
      %v3766 = vpop.f32.mrf.mxu0
      %v3767 = vadd.f32 0.0, %v3766
      %v3768 = vpop.f32.mrf.mxu0
      %v3769 = vpop.f32.mrf.mxu0
      %v3770 = vadd.f32 0.0, %v3769
      %v3771 = vpop.f32.mrf.mxu0
      %3772 = vmatprep.mubr.bf16.mxu0 0
      %3773 = vmatmul.mubr.bf16.gmra.mxu0 %v3628
      %v3774 = vpop.f32.mrf.mxu0
      %v3775 = vadd.f32 0.0, %v3774
      %v3776 = vpop.f32.mrf.mxu0
      %v3777 = vpop.f32.mrf.mxu0
      %v3778 = vadd.f32 0.0, %v3777
      %v3779 = vpop.f32.mrf.mxu0
      %3780 = vmatprep.mubr.bf16.mxu0 0
      %3781 = vmatmul.mubr.bf16.gmra.mxu0 %v3631
      %v3782 = vpop.f32.mrf.mxu0
      %v3783 = vadd.f32 0.0, %v3782
      %v3784 = vpop.f32.mrf.mxu0
      %v3785 = vpop.f32.mrf.mxu0
      %v3786 = vadd.f32 0.0, %v3785
      %v3787 = vpop.f32.mrf.mxu0
      %3788 = vmatprep.mubr.bf16.mxu0 0
      %3789 = vmatmul.mubr.bf16.gmra.mxu0 %v3634
      %v3790 = vpop.f32.mrf.mxu0
      %v3791 = vadd.f32 0.0, %v3790
      %v3792 = vpop.f32.mrf.mxu0
      %v3793 = vpop.f32.mrf.mxu0
      %v3794 = vadd.f32 0.0, %v3793
      %v3795 = vpop.f32.mrf.mxu0
      %3796 = vdwg.mxu0
      %v3799 = vunpack.c.l.b16 %v2386
      %v3800 = vunpack.c.l.b16 %v2387
      %v3801 = vpack.c.b16 %v3800, %v3799
      %v3804 = vsel %vm1220, %v2370, 0
      %v3807 = vsel %vm1220, %v2371, 0
      %v3810 = vsel %vm1220, %v2372, 0
      %v3813 = vsel %vm1220, %v2373, 0
      %v3816 = vsel %vm1220, %v2374, 0
      %v3819 = vsel %vm1220, %v2375, 0
      %v3822 = vsel %vm1220, %v2376, 0
      %v3825 = vsel %vm1220, %v2377, 0
      %v3828 = vsel %vm1220, %v2378, 0
      %v3831 = vsel %vm1220, %v2379, 0
      %v3834 = vsel %vm1220, %v2380, 0
      %v3837 = vsel %vm1220, %v2381, 0
      %v3840 = vsel %vm1220, %v2382, 0
      %v3843 = vsel %vm1220, %v2383, 0
      %v3846 = vsel %vm1220, %v2384, 0
      %v3849 = vsel %vm1220, %v2385, 0
      %3851 = vmatprep.subr.bf16.mxu0 0
      %3852 = vmatpush1.bf16.msra.mxu0 0
      %3853 = vmatprep.subr.bf16.mxu0 0
      %3854 = vmatpush1.bf16.msra.mxu0 0
      %3855 = vmatprep.subr.bf16.mxu0 0
      %3856 = vmatpush1.bf16.msra.mxu0 0
      %3857 = vmatprep.subr.bf16.mxu0 0
      %3858 = vmatpush1.bf16.msra.mxu0 0
      %3859 = vmatprep.subr.bf16.mxu0 0
      %3860 = vmatpush1.bf16.msra.mxu0 0
      %3861 = vmatprep.subr.bf16.mxu0 0
      %3862 = vmatpush1.bf16.msra.mxu0 0
      %3863 = vmatprep.subr.bf16.mxu0 0
      %3864 = vmatpush1.bf16.msra.mxu0 0
      %3865 = vmatprep.subr.bf16.mxu0 0
      %3866 = vmatpush1.bf16.msra.mxu0 %v3801
      %3867 = vmatprep.subr.bf16.mxu0 0
      %3868 = vmatpush2.bf16.msra.mxu0 0
      %3869 = vmatprep.subr.bf16.mxu0 0
      %3870 = vmatpush2.bf16.msra.mxu0 0
      %3871 = vmatprep.subr.bf16.mxu0 0
      %3872 = vmatpush2.bf16.msra.mxu0 0
      %3873 = vmatprep.subr.bf16.mxu0 0
      %3874 = vmatpush2.bf16.msra.mxu0 0
      %3875 = vmatprep.subr.bf16.mxu0 0
      %3876 = vmatpush2.bf16.msra.mxu0 0
      %3877 = vmatprep.subr.bf16.mxu0 0
      %3878 = vmatpush2.bf16.msra.mxu0 0
      %3879 = vmatprep.subr.bf16.mxu0 0
      %3880 = vmatpush2.bf16.msra.mxu0 0
      %3881 = vmatprep.subr.bf16.mxu0 0
      %3882 = vmatpush2.bf16.msra.mxu0 0
      %3883 = vmatprep.mubr.bf16.mxu0 0
      %3884 = vmatmul.mubr.bf16.gmra.mxu0 %v3804
      %v3885 = vpop.f32.mrf.mxu0
      %v3886 = vadd.f32 %v3671, %v3885
      %v3887 = vpop.f32.mrf.mxu0
      %v3888 = vpop.f32.mrf.mxu0
      %v3889 = vadd.f32 %v3674, %v3888
      %v3890 = vpop.f32.mrf.mxu0
      %3891 = vmatprep.mubr.bf16.mxu0 0
      %3892 = vmatmul.mubr.bf16.gmra.mxu0 %v3807
      %v3893 = vpop.f32.mrf.mxu0
      %v3894 = vadd.f32 %v3679, %v3893
      %v3895 = vpop.f32.mrf.mxu0
      %v3896 = vpop.f32.mrf.mxu0
      %v3897 = vadd.f32 %v3682, %v3896
      %v3898 = vpop.f32.mrf.mxu0
      %3899 = vmatprep.mubr.bf16.mxu0 0
      %3900 = vmatmul.mubr.bf16.gmra.mxu0 %v3810
      %v3901 = vpop.f32.mrf.mxu0
      %v3902 = vadd.f32 %v3687, %v3901
      %v3903 = vpop.f32.mrf.mxu0
      %v3904 = vpop.f32.mrf.mxu0
      %v3905 = vadd.f32 %v3690, %v3904
      %v3906 = vpop.f32.mrf.mxu0
      %3907 = vmatprep.mubr.bf16.mxu0 0
      %3908 = vmatmul.mubr.bf16.gmra.mxu0 %v3813
      %v3909 = vpop.f32.mrf.mxu0
      %v3910 = vadd.f32 %v3695, %v3909
      %v3911 = vpop.f32.mrf.mxu0
      %v3912 = vpop.f32.mrf.mxu0
      %v3913 = vadd.f32 %v3698, %v3912
      %v3914 = vpop.f32.mrf.mxu0
      %3915 = vmatprep.mubr.bf16.mxu0 0
      %3916 = vmatmul.mubr.bf16.gmra.mxu0 %v3816
      %v3917 = vpop.f32.mrf.mxu0
      %v3918 = vadd.f32 %v3703, %v3917
      %v3919 = vpop.f32.mrf.mxu0
      %v3920 = vpop.f32.mrf.mxu0
      %v3921 = vadd.f32 %v3706, %v3920
      %v3922 = vpop.f32.mrf.mxu0
      %3923 = vmatprep.mubr.bf16.mxu0 0
      %3924 = vmatmul.mubr.bf16.gmra.mxu0 %v3819
      %v3925 = vpop.f32.mrf.mxu0
      %v3926 = vadd.f32 %v3711, %v3925
      %v3927 = vpop.f32.mrf.mxu0
      %v3928 = vpop.f32.mrf.mxu0
      %v3929 = vadd.f32 %v3714, %v3928
      %v3930 = vpop.f32.mrf.mxu0
      %3931 = vmatprep.mubr.bf16.mxu0 0
      %3932 = vmatmul.mubr.bf16.gmra.mxu0 %v3822
      %v3933 = vpop.f32.mrf.mxu0
      %v3934 = vadd.f32 %v3719, %v3933
      %v3935 = vpop.f32.mrf.mxu0
      %v3936 = vpop.f32.mrf.mxu0
      %v3937 = vadd.f32 %v3722, %v3936
      %v3938 = vpop.f32.mrf.mxu0
      %3939 = vmatprep.mubr.bf16.mxu0 0
      %3940 = vmatmul.mubr.bf16.gmra.mxu0 %v3825
      %v3941 = vpop.f32.mrf.mxu0
      %v3942 = vadd.f32 %v3727, %v3941
      %v3943 = vpop.f32.mrf.mxu0
      %v3944 = vpop.f32.mrf.mxu0
      %v3945 = vadd.f32 %v3730, %v3944
      %v3946 = vpop.f32.mrf.mxu0
      %3947 = vmatprep.mubr.bf16.mxu0 0
      %3948 = vmatmul.mubr.bf16.gmra.mxu0 %v3828
      %v3949 = vpop.f32.mrf.mxu0
      %v3950 = vadd.f32 %v3735, %v3949
      %v3951 = vpop.f32.mrf.mxu0
      %v3952 = vpop.f32.mrf.mxu0
      %v3953 = vadd.f32 %v3738, %v3952
      %v3954 = vpop.f32.mrf.mxu0
      %3955 = vmatprep.mubr.bf16.mxu0 0
      %3956 = vmatmul.mubr.bf16.gmra.mxu0 %v3831
      %v3957 = vpop.f32.mrf.mxu0
      %v3958 = vadd.f32 %v3743, %v3957
      %v3959 = vpop.f32.mrf.mxu0
      %v3960 = vpop.f32.mrf.mxu0
      %v3961 = vadd.f32 %v3746, %v3960
      %v3962 = vpop.f32.mrf.mxu0
      %3963 = vmatprep.mubr.bf16.mxu0 0
      %3964 = vmatmul.mubr.bf16.gmra.mxu0 %v3834
      %v3965 = vpop.f32.mrf.mxu0
      %v3966 = vadd.f32 %v3751, %v3965
      %v3967 = vpop.f32.mrf.mxu0
      %v3968 = vpop.f32.mrf.mxu0
      %v3969 = vadd.f32 %v3754, %v3968
      %v3970 = vpop.f32.mrf.mxu0
      %3971 = vmatprep.mubr.bf16.mxu0 0
      %3972 = vmatmul.mubr.bf16.gmra.mxu0 %v3837
      %v3973 = vpop.f32.mrf.mxu0
      %v3974 = vadd.f32 %v3759, %v3973
      %v3975 = vpop.f32.mrf.mxu0
      %v3976 = vpop.f32.mrf.mxu0
      %v3977 = vadd.f32 %v3762, %v3976
      %v3978 = vpop.f32.mrf.mxu0
      %3979 = vmatprep.mubr.bf16.mxu0 0
      %3980 = vmatmul.mubr.bf16.gmra.mxu0 %v3840
      %v3981 = vpop.f32.mrf.mxu0
      %v3982 = vadd.f32 %v3767, %v3981
      %v3983 = vpop.f32.mrf.mxu0
      %v3984 = vpop.f32.mrf.mxu0
      %v3985 = vadd.f32 %v3770, %v3984
      %v3986 = vpop.f32.mrf.mxu0
      %3987 = vmatprep.mubr.bf16.mxu0 0
      %3988 = vmatmul.mubr.bf16.gmra.mxu0 %v3843
      %v3989 = vpop.f32.mrf.mxu0
      %v3990 = vadd.f32 %v3775, %v3989
      %v3991 = vpop.f32.mrf.mxu0
      %v3992 = vpop.f32.mrf.mxu0
      %v3993 = vadd.f32 %v3778, %v3992
      %v3994 = vpop.f32.mrf.mxu0
      %3995 = vmatprep.mubr.bf16.mxu0 0
      %3996 = vmatmul.mubr.bf16.gmra.mxu0 %v3846
      %v3997 = vpop.f32.mrf.mxu0
      %v3998 = vadd.f32 %v3783, %v3997
      %v3999 = vpop.f32.mrf.mxu0
      %v4000 = vpop.f32.mrf.mxu0
      %v4001 = vadd.f32 %v3786, %v4000
      %v4002 = vpop.f32.mrf.mxu0
      %4003 = vmatprep.mubr.bf16.mxu0 0
      %4004 = vmatmul.mubr.bf16.gmra.mxu0 %v3849
      %v4005 = vpop.f32.mrf.mxu0
      %v4006 = vadd.f32 %v3791, %v4005
      %v4007 = vpop.f32.mrf.mxu0
      %v4008 = vpop.f32.mrf.mxu0
      %v4009 = vadd.f32 %v3794, %v4008
      %v4010 = vpop.f32.mrf.mxu0
      %4011 = vdwg.mxu0
      %v4012 = vadd.f32 %v423, %v3886
      %v4013 = vadd.f32 %v424, %v3889
      %v4014 = vadd.f32 %v425, %v3894
      %v4015 = vadd.f32 %v426, %v3897
      %v4016 = vadd.f32 %v427, %v3902
      %v4017 = vadd.f32 %v428, %v3905
      %v4018 = vadd.f32 %v429, %v3910
      %v4019 = vadd.f32 %v430, %v3913
      %v4020 = vadd.f32 %v431, %v3918
      %v4021 = vadd.f32 %v432, %v3921
      %v4022 = vadd.f32 %v433, %v3926
      %v4023 = vadd.f32 %v434, %v3929
      %v4024 = vadd.f32 %v435, %v3934
      %v4025 = vadd.f32 %v436, %v3937
      %v4026 = vadd.f32 %v437, %v3942
      %v4027 = vadd.f32 %v438, %v3945
      %v4028 = vadd.f32 %v439, %v3950
      %v4029 = vadd.f32 %v440, %v3953
      %v4030 = vadd.f32 %v441, %v3958
      %v4031 = vadd.f32 %v442, %v3961
      %v4032 = vadd.f32 %v443, %v3966
      %v4033 = vadd.f32 %v444, %v3969
      %v4034 = vadd.f32 %v445, %v3974
      %v4035 = vadd.f32 %v446, %v3977
      %v4036 = vadd.f32 %v447, %v3982
      %v4037 = vadd.f32 %v448, %v3985
      %v4038 = vadd.f32 %v449, %v3990
      %v4039 = vadd.f32 %v450, %v3993
      %v4040 = vadd.f32 %v451, %v3998
      %v4041 = vadd.f32 %v452, %v4001
      %v4042 = vadd.f32 %v453, %v4006
      %v4043 = vadd.f32 %v454, %v4009
      %v4044 = vld [vmem:[%s5] sm:$0x1]
      %v4046 = vlaneseq
      %v4047 = vshrl.u32 %v4046, 7
      %v4048 = vsub.s32 0, %v4047
      %v4049 = vrot.slane %v4044, %v4048
      %v4051 = vadd.f32 %v4012, %v4049
      %v4052 = vadd.f32 %v4013, %v4049
      %v4053 = vadd.f32 %v4014, %v4049
      %v4054 = vadd.f32 %v4015, %v4049
      %v4055 = vadd.f32 %v4016, %v4049
      %v4056 = vadd.f32 %v4017, %v4049
      %v4057 = vadd.f32 %v4018, %v4049
      %v4058 = vadd.f32 %v4019, %v4049
      %v4059 = vadd.f32 %v4020, %v4049
      %v4060 = vadd.f32 %v4021, %v4049
      %v4061 = vadd.f32 %v4022, %v4049
      %v4062 = vadd.f32 %v4023, %v4049
      %v4063 = vadd.f32 %v4024, %v4049
      %v4064 = vadd.f32 %v4025, %v4049
      %v4065 = vadd.f32 %v4026, %v4049
      %v4066 = vadd.f32 %v4027, %v4049
      %v4067 = vadd.f32 %v4028, %v4049
      %v4068 = vadd.f32 %v4029, %v4049
      %v4069 = vadd.f32 %v4030, %v4049
      %v4070 = vadd.f32 %v4031, %v4049
      %v4071 = vadd.f32 %v4032, %v4049
      %v4072 = vadd.f32 %v4033, %v4049
      %v4073 = vadd.f32 %v4034, %v4049
      %v4074 = vadd.f32 %v4035, %v4049
      %v4075 = vadd.f32 %v4036, %v4049
      %v4076 = vadd.f32 %v4037, %v4049
      %v4077 = vadd.f32 %v4038, %v4049
      %v4078 = vadd.f32 %v4039, %v4049
      %v4079 = vadd.f32 %v4040, %v4049
      %v4080 = vadd.f32 %v4041, %v4049
      %v4081 = vadd.f32 %v4042, %v4049
      %v4082 = vadd.f32 %v4043, %v4049
      %v4083 = vld [vmem:[%s6] sm:$0x1]
      %v4084 = vld [vmem:[%s7] sm:$0x1]
      %v4085 = vsel %vm457, %v4051, 0.0
      %4086 = vadd.xlane.f32.xlu0 %v4085
      %v4087 = vpop.xlane.xlu0 %4086
      %v4088 = vsel %vm457, %v4052, 0.0
      %4089 = vadd.xlane.f32.xlu0 %v4088
      %v4090 = vpop.xlane.xlu0 %4089
      %v4091 = vsel %vm457, %v4053, 0.0
      %4092 = vadd.xlane.f32.xlu0 %v4091
      %v4093 = vpop.xlane.xlu0 %4092
      %v4094 = vsel %vm457, %v4054, 0.0
      %4095 = vadd.xlane.f32.xlu0 %v4094
      %v4096 = vpop.xlane.xlu0 %4095
      %v4097 = vsel %vm457, %v4055, 0.0
      %4098 = vadd.xlane.f32.xlu0 %v4097
      %v4099 = vpop.xlane.xlu0 %4098
      %v4100 = vsel %vm457, %v4056, 0.0
      %4101 = vadd.xlane.f32.xlu0 %v4100
      %v4102 = vpop.xlane.xlu0 %4101
      %v4103 = vsel %vm457, %v4057, 0.0
      %4104 = vadd.xlane.f32.xlu0 %v4103
      %v4105 = vpop.xlane.xlu0 %4104
      %v4106 = vsel %vm457, %v4058, 0.0
      %4107 = vadd.xlane.f32.xlu0 %v4106
      %v4108 = vpop.xlane.xlu0 %4107
      %v4109 = vsel %vm457, %v4059, 0.0
      %4110 = vadd.xlane.f32.xlu0 %v4109
      %v4111 = vpop.xlane.xlu0 %4110
      %v4112 = vsel %vm457, %v4060, 0.0
      %4113 = vadd.xlane.f32.xlu0 %v4112
      %v4114 = vpop.xlane.xlu0 %4113
      %v4115 = vsel %vm457, %v4061, 0.0
      %4116 = vadd.xlane.f32.xlu0 %v4115
      %v4117 = vpop.xlane.xlu0 %4116
      %v4118 = vsel %vm457, %v4062, 0.0
      %4119 = vadd.xlane.f32.xlu0 %v4118
      %v4120 = vpop.xlane.xlu0 %4119
      %v4121 = vsel %vm457, %v4063, 0.0
      %4122 = vadd.xlane.f32.xlu0 %v4121
      %v4123 = vpop.xlane.xlu0 %4122
      %v4124 = vsel %vm457, %v4064, 0.0
      %4125 = vadd.xlane.f32.xlu0 %v4124
      %v4126 = vpop.xlane.xlu0 %4125
      %v4127 = vsel %vm457, %v4065, 0.0
      %4128 = vadd.xlane.f32.xlu0 %v4127
      %v4129 = vpop.xlane.xlu0 %4128
      %v4130 = vsel %vm457, %v4066, 0.0
      %4131 = vadd.xlane.f32.xlu0 %v4130
      %v4132 = vpop.xlane.xlu0 %4131
      %v4133 = vsel %vm457, %v4067, 0.0
      %4134 = vadd.xlane.f32.xlu0 %v4133
      %v4135 = vpop.xlane.xlu0 %4134
      %v4136 = vsel %vm457, %v4068, 0.0
      %4137 = vadd.xlane.f32.xlu0 %v4136
      %v4138 = vpop.xlane.xlu0 %4137
      %v4139 = vsel %vm457, %v4069, 0.0
      %4140 = vadd.xlane.f32.xlu0 %v4139
      %v4141 = vpop.xlane.xlu0 %4140
      %v4142 = vsel %vm457, %v4070, 0.0
      %4143 = vadd.xlane.f32.xlu0 %v4142
      %v4144 = vpop.xlane.xlu0 %4143
      %v4145 = vsel %vm457, %v4071, 0.0
      %4146 = vadd.xlane.f32.xlu0 %v4145
      %v4147 = vpop.xlane.xlu0 %4146
      %v4148 = vsel %vm457, %v4072, 0.0
      %4149 = vadd.xlane.f32.xlu0 %v4148
      %v4150 = vpop.xlane.xlu0 %4149
      %v4151 = vsel %vm457, %v4073, 0.0
      %4152 = vadd.xlane.f32.xlu0 %v4151
      %v4153 = vpop.xlane.xlu0 %4152
      %v4154 = vsel %vm457, %v4074, 0.0
      %4155 = vadd.xlane.f32.xlu0 %v4154
      %v4156 = vpop.xlane.xlu0 %4155
      %v4157 = vsel %vm457, %v4075, 0.0
      %4158 = vadd.xlane.f32.xlu0 %v4157
      %v4159 = vpop.xlane.xlu0 %4158
      %v4160 = vsel %vm457, %v4076, 0.0
      %4161 = vadd.xlane.f32.xlu0 %v4160
      %v4162 = vpop.xlane.xlu0 %4161
      %v4163 = vsel %vm457, %v4077, 0.0
      %4164 = vadd.xlane.f32.xlu0 %v4163
      %v4165 = vpop.xlane.xlu0 %4164
      %v4166 = vsel %vm457, %v4078, 0.0
      %4167 = vadd.xlane.f32.xlu0 %v4166
      %v4168 = vpop.xlane.xlu0 %4167
      %v4169 = vsel %vm457, %v4079, 0.0
      %4170 = vadd.xlane.f32.xlu0 %v4169
      %v4171 = vpop.xlane.xlu0 %4170
      %v4172 = vsel %vm457, %v4080, 0.0
      %4173 = vadd.xlane.f32.xlu0 %v4172
      %v4174 = vpop.xlane.xlu0 %4173
      %v4175 = vsel %vm457, %v4081, 0.0
      %4176 = vadd.xlane.f32.xlu0 %v4175
      %v4177 = vpop.xlane.xlu0 %4176
      %v4178 = vsel %vm457, %v4082, 0.0
      %4179 = vadd.xlane.f32.xlu0 %v4178
      %v4180 = vpop.xlane.xlu0 %4179
      %v4181 = vmul.f32 %v4087, %v554
      %v4182 = vmul.f32 %v4090, %v554
      %v4183 = vmul.f32 %v4093, %v554
      %v4184 = vmul.f32 %v4096, %v554
      %v4185 = vmul.f32 %v4099, %v554
      %v4186 = vmul.f32 %v4102, %v554
      %v4187 = vmul.f32 %v4105, %v554
      %v4188 = vmul.f32 %v4108, %v554
      %v4189 = vmul.f32 %v4111, %v554
      %v4190 = vmul.f32 %v4114, %v554
      %v4191 = vmul.f32 %v4117, %v554
      %v4192 = vmul.f32 %v4120, %v554
      %v4193 = vmul.f32 %v4123, %v554
      %v4194 = vmul.f32 %v4126, %v554
      %v4195 = vmul.f32 %v4129, %v554
      %v4196 = vmul.f32 %v4132, %v554
      %v4197 = vmul.f32 %v4135, %v554
      %v4198 = vmul.f32 %v4138, %v554
      %v4199 = vmul.f32 %v4141, %v554
      %v4200 = vmul.f32 %v4144, %v554
      %v4201 = vmul.f32 %v4147, %v554
      %v4202 = vmul.f32 %v4150, %v554
      %v4203 = vmul.f32 %v4153, %v554
      %v4204 = vmul.f32 %v4156, %v554
      %v4205 = vmul.f32 %v4159, %v554
      %v4206 = vmul.f32 %v4162, %v554
      %v4207 = vmul.f32 %v4165, %v554
      %v4208 = vmul.f32 %v4168, %v554
      %v4209 = vmul.f32 %v4171, %v554
      %v4210 = vmul.f32 %v4174, %v554
      %v4211 = vmul.f32 %v4177, %v554
      %v4212 = vmul.f32 %v4180, %v554
      %v4213 = vsub.f32 %v4051, %v4181
      %v4214 = vsub.f32 %v4052, %v4182
      %v4215 = vsub.f32 %v4053, %v4183
      %v4216 = vsub.f32 %v4054, %v4184
      %v4217 = vsub.f32 %v4055, %v4185
      %v4218 = vsub.f32 %v4056, %v4186
      %v4219 = vsub.f32 %v4057, %v4187
      %v4220 = vsub.f32 %v4058, %v4188
      %v4221 = vsub.f32 %v4059, %v4189
      %v4222 = vsub.f32 %v4060, %v4190
      %v4223 = vsub.f32 %v4061, %v4191
      %v4224 = vsub.f32 %v4062, %v4192
      %v4225 = vsub.f32 %v4063, %v4193
      %v4226 = vsub.f32 %v4064, %v4194
      %v4227 = vsub.f32 %v4065, %v4195
      %v4228 = vsub.f32 %v4066, %v4196
      %v4229 = vsub.f32 %v4067, %v4197
      %v4230 = vsub.f32 %v4068, %v4198
      %v4231 = vsub.f32 %v4069, %v4199
      %v4232 = vsub.f32 %v4070, %v4200
      %v4233 = vsub.f32 %v4071, %v4201
      %v4234 = vsub.f32 %v4072, %v4202
      %v4235 = vsub.f32 %v4073, %v4203
      %v4236 = vsub.f32 %v4074, %v4204
      %v4237 = vsub.f32 %v4075, %v4205
      %v4238 = vsub.f32 %v4076, %v4206
      %v4239 = vsub.f32 %v4077, %v4207
      %v4240 = vsub.f32 %v4078, %v4208
      %v4241 = vsub.f32 %v4079, %v4209
      %v4242 = vsub.f32 %v4080, %v4210
      %v4243 = vsub.f32 %v4081, %v4211
      %v4244 = vsub.f32 %v4082, %v4212
      %v4245 = vmul.f32 %v4213, %v4213
      %v4246 = vmul.f32 %v4214, %v4214
      %v4247 = vmul.f32 %v4215, %v4215
      %v4248 = vmul.f32 %v4216, %v4216
      %v4249 = vmul.f32 %v4217, %v4217
      %v4250 = vmul.f32 %v4218, %v4218
      %v4251 = vmul.f32 %v4219, %v4219
      %v4252 = vmul.f32 %v4220, %v4220
      %v4253 = vmul.f32 %v4221, %v4221
      %v4254 = vmul.f32 %v4222, %v4222
      %v4255 = vmul.f32 %v4223, %v4223
      %v4256 = vmul.f32 %v4224, %v4224
      %v4257 = vmul.f32 %v4225, %v4225
      %v4258 = vmul.f32 %v4226, %v4226
      %v4259 = vmul.f32 %v4227, %v4227
      %v4260 = vmul.f32 %v4228, %v4228
      %v4261 = vmul.f32 %v4229, %v4229
      %v4262 = vmul.f32 %v4230, %v4230
      %v4263 = vmul.f32 %v4231, %v4231
      %v4264 = vmul.f32 %v4232, %v4232
      %v4265 = vmul.f32 %v4233, %v4233
      %v4266 = vmul.f32 %v4234, %v4234
      %v4267 = vmul.f32 %v4235, %v4235
      %v4268 = vmul.f32 %v4236, %v4236
      %v4269 = vmul.f32 %v4237, %v4237
      %v4270 = vmul.f32 %v4238, %v4238
      %v4271 = vmul.f32 %v4239, %v4239
      %v4272 = vmul.f32 %v4240, %v4240
      %v4273 = vmul.f32 %v4241, %v4241
      %v4274 = vmul.f32 %v4242, %v4242
      %v4275 = vmul.f32 %v4243, %v4243
      %v4276 = vmul.f32 %v4244, %v4244
      %v4277 = vsel %vm457, %v4245, 0.0
      %4278 = vadd.xlane.f32.xlu0 %v4277
      %v4279 = vpop.xlane.xlu0 %4278
      %v4280 = vsel %vm457, %v4246, 0.0
      %4281 = vadd.xlane.f32.xlu0 %v4280
      %v4282 = vpop.xlane.xlu0 %4281
      %v4283 = vsel %vm457, %v4247, 0.0
      %4284 = vadd.xlane.f32.xlu0 %v4283
      %v4285 = vpop.xlane.xlu0 %4284
      %v4286 = vsel %vm457, %v4248, 0.0
      %4287 = vadd.xlane.f32.xlu0 %v4286
      %v4288 = vpop.xlane.xlu0 %4287
      %v4289 = vsel %vm457, %v4249, 0.0
      %4290 = vadd.xlane.f32.xlu0 %v4289
      %v4291 = vpop.xlane.xlu0 %4290
      %v4292 = vsel %vm457, %v4250, 0.0
      %4293 = vadd.xlane.f32.xlu0 %v4292
      %v4294 = vpop.xlane.xlu0 %4293
      %v4295 = vsel %vm457, %v4251, 0.0
      %4296 = vadd.xlane.f32.xlu0 %v4295
      %v4297 = vpop.xlane.xlu0 %4296
      %v4298 = vsel %vm457, %v4252, 0.0
      %4299 = vadd.xlane.f32.xlu0 %v4298
      %v4300 = vpop.xlane.xlu0 %4299
      %v4301 = vsel %vm457, %v4253, 0.0
      %4302 = vadd.xlane.f32.xlu0 %v4301
      %v4303 = vpop.xlane.xlu0 %4302
      %v4304 = vsel %vm457, %v4254, 0.0
      %4305 = vadd.xlane.f32.xlu0 %v4304
      %v4306 = vpop.xlane.xlu0 %4305
      %v4307 = vsel %vm457, %v4255, 0.0
      %4308 = vadd.xlane.f32.xlu0 %v4307
      %v4309 = vpop.xlane.xlu0 %4308
      %v4310 = vsel %vm457, %v4256, 0.0
      %4311 = vadd.xlane.f32.xlu0 %v4310
      %v4312 = vpop.xlane.xlu0 %4311
      %v4313 = vsel %vm457, %v4257, 0.0
      %4314 = vadd.xlane.f32.xlu0 %v4313
      %v4315 = vpop.xlane.xlu0 %4314
      %v4316 = vsel %vm457, %v4258, 0.0
      %4317 = vadd.xlane.f32.xlu0 %v4316
      %v4318 = vpop.xlane.xlu0 %4317
      %v4319 = vsel %vm457, %v4259, 0.0
      %4320 = vadd.xlane.f32.xlu0 %v4319
      %v4321 = vpop.xlane.xlu0 %4320
      %v4322 = vsel %vm457, %v4260, 0.0
      %4323 = vadd.xlane.f32.xlu0 %v4322
      %v4324 = vpop.xlane.xlu0 %4323
      %v4325 = vsel %vm457, %v4261, 0.0
      %4326 = vadd.xlane.f32.xlu0 %v4325
      %v4327 = vpop.xlane.xlu0 %4326
      %v4328 = vsel %vm457, %v4262, 0.0
      %4329 = vadd.xlane.f32.xlu0 %v4328
      %v4330 = vpop.xlane.xlu0 %4329
      %v4331 = vsel %vm457, %v4263, 0.0
      %4332 = vadd.xlane.f32.xlu0 %v4331
      %v4333 = vpop.xlane.xlu0 %4332
      %v4334 = vsel %vm457, %v4264, 0.0
      %4335 = vadd.xlane.f32.xlu0 %v4334
      %v4336 = vpop.xlane.xlu0 %4335
      %v4337 = vsel %vm457, %v4265, 0.0
      %4338 = vadd.xlane.f32.xlu0 %v4337
      %v4339 = vpop.xlane.xlu0 %4338
      %v4340 = vsel %vm457, %v4266, 0.0
      %4341 = vadd.xlane.f32.xlu0 %v4340
      %v4342 = vpop.xlane.xlu0 %4341
      %v4343 = vsel %vm457, %v4267, 0.0
      %4344 = vadd.xlane.f32.xlu0 %v4343
      %v4345 = vpop.xlane.xlu0 %4344
      %v4346 = vsel %vm457, %v4268, 0.0
      %4347 = vadd.xlane.f32.xlu0 %v4346
      %v4348 = vpop.xlane.xlu0 %4347
      %v4349 = vsel %vm457, %v4269, 0.0
      %4350 = vadd.xlane.f32.xlu0 %v4349
      %v4351 = vpop.xlane.xlu0 %4350
      %v4352 = vsel %vm457, %v4270, 0.0
      %4353 = vadd.xlane.f32.xlu0 %v4352
      %v4354 = vpop.xlane.xlu0 %4353
      %v4355 = vsel %vm457, %v4271, 0.0
      %4356 = vadd.xlane.f32.xlu0 %v4355
      %v4357 = vpop.xlane.xlu0 %4356
      %v4358 = vsel %vm457, %v4272, 0.0
      %4359 = vadd.xlane.f32.xlu0 %v4358
      %v4360 = vpop.xlane.xlu0 %4359
      %v4361 = vsel %vm457, %v4273, 0.0
      %4362 = vadd.xlane.f32.xlu0 %v4361
      %v4363 = vpop.xlane.xlu0 %4362
      %v4364 = vsel %vm457, %v4274, 0.0
      %4365 = vadd.xlane.f32.xlu0 %v4364
      %v4366 = vpop.xlane.xlu0 %4365
      %v4367 = vsel %vm457, %v4275, 0.0
      %4368 = vadd.xlane.f32.xlu0 %v4367
      %v4369 = vpop.xlane.xlu0 %4368
      %v4370 = vsel %vm457, %v4276, 0.0
      %4371 = vadd.xlane.f32.xlu0 %v4370
      %v4372 = vpop.xlane.xlu0 %4371
      %v4373 = vmul.f32 %v4279, %v554
      %v4374 = vmul.f32 %v4282, %v554
      %v4375 = vmul.f32 %v4285, %v554
      %v4376 = vmul.f32 %v4288, %v554
      %v4377 = vmul.f32 %v4291, %v554
      %v4378 = vmul.f32 %v4294, %v554
      %v4379 = vmul.f32 %v4297, %v554
      %v4380 = vmul.f32 %v4300, %v554
      %v4381 = vmul.f32 %v4303, %v554
      %v4382 = vmul.f32 %v4306, %v554
      %v4383 = vmul.f32 %v4309, %v554
      %v4384 = vmul.f32 %v4312, %v554
      %v4385 = vmul.f32 %v4315, %v554
      %v4386 = vmul.f32 %v4318, %v554
      %v4387 = vmul.f32 %v4321, %v554
      %v4388 = vmul.f32 %v4324, %v554
      %v4389 = vmul.f32 %v4327, %v554
      %v4390 = vmul.f32 %v4330, %v554
      %v4391 = vmul.f32 %v4333, %v554
      %v4392 = vmul.f32 %v4336, %v554
      %v4393 = vmul.f32 %v4339, %v554
      %v4394 = vmul.f32 %v4342, %v554
      %v4395 = vmul.f32 %v4345, %v554
      %v4396 = vmul.f32 %v4348, %v554
      %v4397 = vmul.f32 %v4351, %v554
      %v4398 = vmul.f32 %v4354, %v554
      %v4399 = vmul.f32 %v4357, %v554
      %v4400 = vmul.f32 %v4360, %v554
      %v4401 = vmul.f32 %v4363, %v554
      %v4402 = vmul.f32 %v4366, %v554
      %v4403 = vmul.f32 %v4369, %v554
      %v4404 = vmul.f32 %v4372, %v554
      %v4405 = vadd.f32 %v4373, 1e-05
      %v4406 = vadd.f32 %v4374, 1e-05
      %v4407 = vadd.f32 %v4375, 1e-05
      %v4408 = vadd.f32 %v4376, 1e-05
      %v4409 = vadd.f32 %v4377, 1e-05
      %v4410 = vadd.f32 %v4378, 1e-05
      %v4411 = vadd.f32 %v4379, 1e-05
      %v4412 = vadd.f32 %v4380, 1e-05
      %v4413 = vadd.f32 %v4381, 1e-05
      %v4414 = vadd.f32 %v4382, 1e-05
      %v4415 = vadd.f32 %v4383, 1e-05
      %v4416 = vadd.f32 %v4384, 1e-05
      %v4417 = vadd.f32 %v4385, 1e-05
      %v4418 = vadd.f32 %v4386, 1e-05
      %v4419 = vadd.f32 %v4387, 1e-05
      %v4420 = vadd.f32 %v4388, 1e-05
      %v4421 = vadd.f32 %v4389, 1e-05
      %v4422 = vadd.f32 %v4390, 1e-05
      %v4423 = vadd.f32 %v4391, 1e-05
      %v4424 = vadd.f32 %v4392, 1e-05
      %v4425 = vadd.f32 %v4393, 1e-05
      %v4426 = vadd.f32 %v4394, 1e-05
      %v4427 = vadd.f32 %v4395, 1e-05
      %v4428 = vadd.f32 %v4396, 1e-05
      %v4429 = vadd.f32 %v4397, 1e-05
      %v4430 = vadd.f32 %v4398, 1e-05
      %v4431 = vadd.f32 %v4399, 1e-05
      %v4432 = vadd.f32 %v4400, 1e-05
      %v4433 = vadd.f32 %v4401, 1e-05
      %v4434 = vadd.f32 %v4402, 1e-05
      %v4435 = vadd.f32 %v4403, 1e-05
      %v4436 = vadd.f32 %v4404, 1e-05
      %v4437 = vrsqrt.pop %v4405
      %v4438 = vrsqrt.pop %v4406
      %v4439 = vrsqrt.pop %v4407
      %v4440 = vrsqrt.pop %v4408
      %v4441 = vrsqrt.pop %v4409
      %v4442 = vrsqrt.pop %v4410
      %v4443 = vrsqrt.pop %v4411
      %v4444 = vrsqrt.pop %v4412
      %v4445 = vrsqrt.pop %v4413
      %v4446 = vrsqrt.pop %v4414
      %v4447 = vrsqrt.pop %v4415
      %v4448 = vrsqrt.pop %v4416
      %v4449 = vrsqrt.pop %v4417
      %v4450 = vrsqrt.pop %v4418
      %v4451 = vrsqrt.pop %v4419
      %v4452 = vrsqrt.pop %v4420
      %v4453 = vrsqrt.pop %v4421
      %v4454 = vrsqrt.pop %v4422
      %v4455 = vrsqrt.pop %v4423
      %v4456 = vrsqrt.pop %v4424
      %v4457 = vrsqrt.pop %v4425
      %v4458 = vrsqrt.pop %v4426
      %v4459 = vrsqrt.pop %v4427
      %v4460 = vrsqrt.pop %v4428
      %v4461 = vrsqrt.pop %v4429
      %v4462 = vrsqrt.pop %v4430
      %v4463 = vrsqrt.pop %v4431
      %v4464 = vrsqrt.pop %v4432
      %v4465 = vrsqrt.pop %v4433
      %v4466 = vrsqrt.pop %v4434
      %v4467 = vrsqrt.pop %v4435
      %v4468 = vrsqrt.pop %v4436
      %v4469 = vmul.f32 %v4213, %v4437
      %v4470 = vmul.f32 %v4214, %v4438
      %v4471 = vmul.f32 %v4215, %v4439
      %v4472 = vmul.f32 %v4216, %v4440
      %v4473 = vmul.f32 %v4217, %v4441
      %v4474 = vmul.f32 %v4218, %v4442
      %v4475 = vmul.f32 %v4219, %v4443
      %v4476 = vmul.f32 %v4220, %v4444
      %v4477 = vmul.f32 %v4221, %v4445
      %v4478 = vmul.f32 %v4222, %v4446
      %v4479 = vmul.f32 %v4223, %v4447
      %v4480 = vmul.f32 %v4224, %v4448
      %v4481 = vmul.f32 %v4225, %v4449
      %v4482 = vmul.f32 %v4226, %v4450
      %v4483 = vmul.f32 %v4227, %v4451
      %v4484 = vmul.f32 %v4228, %v4452
      %v4485 = vmul.f32 %v4229, %v4453
      %v4486 = vmul.f32 %v4230, %v4454
      %v4487 = vmul.f32 %v4231, %v4455
      %v4488 = vmul.f32 %v4232, %v4456
      %v4489 = vmul.f32 %v4233, %v4457
      %v4490 = vmul.f32 %v4234, %v4458
      %v4491 = vmul.f32 %v4235, %v4459
      %v4492 = vmul.f32 %v4236, %v4460
      %v4493 = vmul.f32 %v4237, %v4461
      %v4494 = vmul.f32 %v4238, %v4462
      %v4495 = vmul.f32 %v4239, %v4463
      %v4496 = vmul.f32 %v4240, %v4464
      %v4497 = vmul.f32 %v4241, %v4465
      %v4498 = vmul.f32 %v4242, %v4466
      %v4499 = vmul.f32 %v4243, %v4467
      %v4500 = vmul.f32 %v4244, %v4468
      %v4502 = vlaneseq
      %v4503 = vshrl.u32 %v4502, 7
      %v4504 = vsub.s32 0, %v4503
      %v4505 = vrot.slane %v4083, %v4504
      %v4507 = vmul.f32 %v4469, %v4505
      %v4508 = vmul.f32 %v4470, %v4505
      %v4509 = vmul.f32 %v4471, %v4505
      %v4510 = vmul.f32 %v4472, %v4505
      %v4511 = vmul.f32 %v4473, %v4505
      %v4512 = vmul.f32 %v4474, %v4505
      %v4513 = vmul.f32 %v4475, %v4505
      %v4514 = vmul.f32 %v4476, %v4505
      %v4515 = vmul.f32 %v4477, %v4505
      %v4516 = vmul.f32 %v4478, %v4505
      %v4517 = vmul.f32 %v4479, %v4505
      %v4518 = vmul.f32 %v4480, %v4505
      %v4519 = vmul.f32 %v4481, %v4505
      %v4520 = vmul.f32 %v4482, %v4505
      %v4521 = vmul.f32 %v4483, %v4505
      %v4522 = vmul.f32 %v4484, %v4505
      %v4523 = vmul.f32 %v4485, %v4505
      %v4524 = vmul.f32 %v4486, %v4505
      %v4525 = vmul.f32 %v4487, %v4505
      %v4526 = vmul.f32 %v4488, %v4505
      %v4527 = vmul.f32 %v4489, %v4505
      %v4528 = vmul.f32 %v4490, %v4505
      %v4529 = vmul.f32 %v4491, %v4505
      %v4530 = vmul.f32 %v4492, %v4505
      %v4531 = vmul.f32 %v4493, %v4505
      %v4532 = vmul.f32 %v4494, %v4505
      %v4533 = vmul.f32 %v4495, %v4505
      %v4534 = vmul.f32 %v4496, %v4505
      %v4535 = vmul.f32 %v4497, %v4505
      %v4536 = vmul.f32 %v4498, %v4505
      %v4537 = vmul.f32 %v4499, %v4505
      %v4538 = vmul.f32 %v4500, %v4505
      %v4540 = vlaneseq
      %v4541 = vshrl.u32 %v4540, 7
      %v4542 = vsub.s32 0, %v4541
      %v4543 = vrot.slane %v4084, %v4542
      %v4545 = vadd.f32 %v4507, %v4543
      %v4546 = vadd.f32 %v4508, %v4543
      %v4547 = vadd.f32 %v4509, %v4543
      %v4548 = vadd.f32 %v4510, %v4543
      %v4549 = vadd.f32 %v4511, %v4543
      %v4550 = vadd.f32 %v4512, %v4543
      %v4551 = vadd.f32 %v4513, %v4543
      %v4552 = vadd.f32 %v4514, %v4543
      %v4553 = vadd.f32 %v4515, %v4543
      %v4554 = vadd.f32 %v4516, %v4543
      %v4555 = vadd.f32 %v4517, %v4543
      %v4556 = vadd.f32 %v4518, %v4543
      %v4557 = vadd.f32 %v4519, %v4543
      %v4558 = vadd.f32 %v4520, %v4543
      %v4559 = vadd.f32 %v4521, %v4543
      %v4560 = vadd.f32 %v4522, %v4543
      %v4561 = vadd.f32 %v4523, %v4543
      %v4562 = vadd.f32 %v4524, %v4543
      %v4563 = vadd.f32 %v4525, %v4543
      %v4564 = vadd.f32 %v4526, %v4543
      %v4565 = vadd.f32 %v4527, %v4543
      %v4566 = vadd.f32 %v4528, %v4543
      %v4567 = vadd.f32 %v4529, %v4543
      %v4568 = vadd.f32 %v4530, %v4543
      %v4569 = vadd.f32 %v4531, %v4543
      %v4570 = vadd.f32 %v4532, %v4543
      %v4571 = vadd.f32 %v4533, %v4543
      %v4572 = vadd.f32 %v4534, %v4543
      %v4573 = vadd.f32 %v4535, %v4543
      %v4574 = vadd.f32 %v4536, %v4543
      %v4575 = vadd.f32 %v4537, %v4543
      %v4576 = vadd.f32 %v4538, %v4543
      %v4577 = vpack.c.bf16 %v4546, %v4545
      %v4578 = vpack.c.bf16 %v4548, %v4547
      %v4579 = vpack.c.bf16 %v4550, %v4549
      %v4580 = vpack.c.bf16 %v4552, %v4551
      %v4581 = vpack.c.bf16 %v4554, %v4553
      %v4582 = vpack.c.bf16 %v4556, %v4555
      %v4583 = vpack.c.bf16 %v4558, %v4557
      %v4584 = vpack.c.bf16 %v4560, %v4559
      %v4585 = vpack.c.bf16 %v4562, %v4561
      %v4586 = vpack.c.bf16 %v4564, %v4563
      %v4587 = vpack.c.bf16 %v4566, %v4565
      %v4588 = vpack.c.bf16 %v4568, %v4567
      %v4589 = vpack.c.bf16 %v4570, %v4569
      %v4590 = vpack.c.bf16 %v4572, %v4571
      %v4591 = vpack.c.bf16 %v4574, %v4573
      %v4592 = vpack.c.bf16 %v4576, %v4575
      %v4593 = vld [vmem:[%s8] sm:$0xf]
      %v4594 = vld [vmem:[%s8 + $0x4] sm:$0xf]
      %v4595 = vld [vmem:[%s8 + $0x8] sm:$0xf]
      %v4596 = vld [vmem:[%s8 + $0xc] sm:$0xf]
      %v4597 = vld [vmem:[%s9] sm:$0x1]
      %v4599 = vlaneseq
      %v4600 = vshrl.u32 %v4599, 7
      %v4601 = vsub.s32 0, %v4600
      %v4602 = vrot.slane %v4597, %v4601
      %v4608 = vunpack.c.l.b16 %v4593
      %v4609 = vunpack.c.l.b16 %v4594
      %v4610 = vunpack.c.l.b16 %v4595
      %v4611 = vunpack.c.l.b16 %v4596
      %v4612 = vpack.c.b16 %v4609, %v4608
      %v4613 = vpack.c.b16 %v4611, %v4610
      %v4617 = vsel %vm457, %v4577, 0
      %v4620 = vsel %vm457, %v4578, 0
      %v4623 = vsel %vm457, %v4579, 0
      %v4626 = vsel %vm457, %v4580, 0
      %v4629 = vsel %vm457, %v4581, 0
      %v4632 = vsel %vm457, %v4582, 0
      %v4635 = vsel %vm457, %v4583, 0
      %v4638 = vsel %vm457, %v4584, 0
      %v4641 = vsel %vm457, %v4585, 0
      %v4644 = vsel %vm457, %v4586, 0
      %v4647 = vsel %vm457, %v4587, 0
      %v4650 = vsel %vm457, %v4588, 0
      %v4653 = vsel %vm457, %v4589, 0
      %v4656 = vsel %vm457, %v4590, 0
      %v4659 = vsel %vm457, %v4591, 0
      %v4662 = vsel %vm457, %v4592, 0
      %4664 = vmatprep.subr.bf16.mxu0 0
      %4665 = vmatpush1.bf16.msra.mxu0 0
      %4666 = vmatprep.subr.bf16.mxu0 0
      %4667 = vmatpush1.bf16.msra.mxu0 0
      %4668 = vmatprep.subr.bf16.mxu0 0
      %4669 = vmatpush1.bf16.msra.mxu0 0
      %4670 = vmatprep.subr.bf16.mxu0 0
      %4671 = vmatpush1.bf16.msra.mxu0 0
      %4672 = vmatprep.subr.bf16.mxu0 0
      %4673 = vmatpush1.bf16.msra.mxu0 0
      %4674 = vmatprep.subr.bf16.mxu0 0
      %4675 = vmatpush1.bf16.msra.mxu0 0
      %4676 = vmatprep.subr.bf16.mxu0 0
      %4677 = vmatpush1.bf16.msra.mxu0 %v4613
      %4678 = vmatprep.subr.bf16.mxu0 0
      %4679 = vmatpush1.bf16.msra.mxu0 %v4612
      %4680 = vmatprep.subr.bf16.mxu0 0
      %4681 = vmatpush2.bf16.msra.mxu0 0
      %4682 = vmatprep.subr.bf16.mxu0 0
      %4683 = vmatpush2.bf16.msra.mxu0 0
      %4684 = vmatprep.subr.bf16.mxu0 0
      %4685 = vmatpush2.bf16.msra.mxu0 0
      %4686 = vmatprep.subr.bf16.mxu0 0
      %4687 = vmatpush2.bf16.msra.mxu0 0
      %4688 = vmatprep.subr.bf16.mxu0 0
      %4689 = vmatpush2.bf16.msra.mxu0 0
      %4690 = vmatprep.subr.bf16.mxu0 0
      %4691 = vmatpush2.bf16.msra.mxu0 0
      %4692 = vmatprep.subr.bf16.mxu0 0
      %4693 = vmatpush2.bf16.msra.mxu0 0
      %4694 = vmatprep.subr.bf16.mxu0 0
      %4695 = vmatpush2.bf16.msra.mxu0 0
      %4696 = vmatprep.mubr.bf16.mxu0 0
      %4697 = vmatmul.mubr.bf16.gmra.mxu0 %v4617
      %v4698 = vpop.f32.mrf.mxu0
      %v4699 = vadd.f32 %v4602, %v4698
      %v4700 = vpop.f32.mrf.mxu0
      %v4701 = vpop.f32.mrf.mxu0
      %v4702 = vadd.f32 %v4602, %v4701
      %v4703 = vpop.f32.mrf.mxu0
      %4704 = vmatprep.mubr.bf16.mxu0 0
      %4705 = vmatmul.mubr.bf16.gmra.mxu0 %v4620
      %v4706 = vpop.f32.mrf.mxu0
      %v4707 = vadd.f32 %v4602, %v4706
      %v4708 = vpop.f32.mrf.mxu0
      %v4709 = vpop.f32.mrf.mxu0
      %v4710 = vadd.f32 %v4602, %v4709
      %v4711 = vpop.f32.mrf.mxu0
      %4712 = vmatprep.mubr.bf16.mxu0 0
      %4713 = vmatmul.mubr.bf16.gmra.mxu0 %v4623
      %v4714 = vpop.f32.mrf.mxu0
      %v4715 = vadd.f32 %v4602, %v4714
      %v4716 = vpop.f32.mrf.mxu0
      %v4717 = vpop.f32.mrf.mxu0
      %v4718 = vadd.f32 %v4602, %v4717
      %v4719 = vpop.f32.mrf.mxu0
      %4720 = vmatprep.mubr.bf16.mxu0 0
      %4721 = vmatmul.mubr.bf16.gmra.mxu0 %v4626
      %v4722 = vpop.f32.mrf.mxu0
      %v4723 = vadd.f32 %v4602, %v4722
      %v4724 = vpop.f32.mrf.mxu0
      %v4725 = vpop.f32.mrf.mxu0
      %v4726 = vadd.f32 %v4602, %v4725
      %v4727 = vpop.f32.mrf.mxu0
      %4728 = vmatprep.mubr.bf16.mxu0 0
      %4729 = vmatmul.mubr.bf16.gmra.mxu0 %v4629
      %v4730 = vpop.f32.mrf.mxu0
      %v4731 = vadd.f32 %v4602, %v4730
      %v4732 = vpop.f32.mrf.mxu0
      %v4733 = vpop.f32.mrf.mxu0
      %v4734 = vadd.f32 %v4602, %v4733
      %v4735 = vpop.f32.mrf.mxu0
      %4736 = vmatprep.mubr.bf16.mxu0 0
      %4737 = vmatmul.mubr.bf16.gmra.mxu0 %v4632
      %v4738 = vpop.f32.mrf.mxu0
      %v4739 = vadd.f32 %v4602, %v4738
      %v4740 = vpop.f32.mrf.mxu0
      %v4741 = vpop.f32.mrf.mxu0
      %v4742 = vadd.f32 %v4602, %v4741
      %v4743 = vpop.f32.mrf.mxu0
      %4744 = vmatprep.mubr.bf16.mxu0 0
      %4745 = vmatmul.mubr.bf16.gmra.mxu0 %v4635
      %v4746 = vpop.f32.mrf.mxu0
      %v4747 = vadd.f32 %v4602, %v4746
      %v4748 = vpop.f32.mrf.mxu0
      %v4749 = vpop.f32.mrf.mxu0
      %v4750 = vadd.f32 %v4602, %v4749
      %v4751 = vpop.f32.mrf.mxu0
      %4752 = vmatprep.mubr.bf16.mxu0 0
      %4753 = vmatmul.mubr.bf16.gmra.mxu0 %v4638
      %v4754 = vpop.f32.mrf.mxu0
      %v4755 = vadd.f32 %v4602, %v4754
      %v4756 = vpop.f32.mrf.mxu0
      %v4757 = vpop.f32.mrf.mxu0
      %v4758 = vadd.f32 %v4602, %v4757
      %v4759 = vpop.f32.mrf.mxu0
      %4760 = vmatprep.mubr.bf16.mxu0 0
      %4761 = vmatmul.mubr.bf16.gmra.mxu0 %v4641
      %v4762 = vpop.f32.mrf.mxu0
      %v4763 = vadd.f32 %v4602, %v4762
      %v4764 = vpop.f32.mrf.mxu0
      %v4765 = vpop.f32.mrf.mxu0
      %v4766 = vadd.f32 %v4602, %v4765
      %v4767 = vpop.f32.mrf.mxu0
      %4768 = vmatprep.mubr.bf16.mxu0 0
      %4769 = vmatmul.mubr.bf16.gmra.mxu0 %v4644
      %v4770 = vpop.f32.mrf.mxu0
      %v4771 = vadd.f32 %v4602, %v4770
      %v4772 = vpop.f32.mrf.mxu0
      %v4773 = vpop.f32.mrf.mxu0
      %v4774 = vadd.f32 %v4602, %v4773
      %v4775 = vpop.f32.mrf.mxu0
      %4776 = vmatprep.mubr.bf16.mxu0 0
      %4777 = vmatmul.mubr.bf16.gmra.mxu0 %v4647
      %v4778 = vpop.f32.mrf.mxu0
      %v4779 = vadd.f32 %v4602, %v4778
      %v4780 = vpop.f32.mrf.mxu0
      %v4781 = vpop.f32.mrf.mxu0
      %v4782 = vadd.f32 %v4602, %v4781
      %v4783 = vpop.f32.mrf.mxu0
      %4784 = vmatprep.mubr.bf16.mxu0 0
      %4785 = vmatmul.mubr.bf16.gmra.mxu0 %v4650
      %v4786 = vpop.f32.mrf.mxu0
      %v4787 = vadd.f32 %v4602, %v4786
      %v4788 = vpop.f32.mrf.mxu0
      %v4789 = vpop.f32.mrf.mxu0
      %v4790 = vadd.f32 %v4602, %v4789
      %v4791 = vpop.f32.mrf.mxu0
      %4792 = vmatprep.mubr.bf16.mxu0 0
      %4793 = vmatmul.mubr.bf16.gmra.mxu0 %v4653
      %v4794 = vpop.f32.mrf.mxu0
      %v4795 = vadd.f32 %v4602, %v4794
      %v4796 = vpop.f32.mrf.mxu0
      %v4797 = vpop.f32.mrf.mxu0
      %v4798 = vadd.f32 %v4602, %v4797
      %v4799 = vpop.f32.mrf.mxu0
      %4800 = vmatprep.mubr.bf16.mxu0 0
      %4801 = vmatmul.mubr.bf16.gmra.mxu0 %v4656
      %v4802 = vpop.f32.mrf.mxu0
      %v4803 = vadd.f32 %v4602, %v4802
      %v4804 = vpop.f32.mrf.mxu0
      %v4805 = vpop.f32.mrf.mxu0
      %v4806 = vadd.f32 %v4602, %v4805
      %v4807 = vpop.f32.mrf.mxu0
      %4808 = vmatprep.mubr.bf16.mxu0 0
      %4809 = vmatmul.mubr.bf16.gmra.mxu0 %v4659
      %v4810 = vpop.f32.mrf.mxu0
      %v4811 = vadd.f32 %v4602, %v4810
      %v4812 = vpop.f32.mrf.mxu0
      %v4813 = vpop.f32.mrf.mxu0
      %v4814 = vadd.f32 %v4602, %v4813
      %v4815 = vpop.f32.mrf.mxu0
      %4816 = vmatprep.mubr.bf16.mxu0 0
      %4817 = vmatmul.mubr.bf16.gmra.mxu0 %v4662
      %v4818 = vpop.f32.mrf.mxu0
      %v4819 = vadd.f32 %v4602, %v4818
      %v4820 = vpop.f32.mrf.mxu0
      %v4821 = vpop.f32.mrf.mxu0
      %v4822 = vadd.f32 %v4602, %v4821
      %v4823 = vpop.f32.mrf.mxu0
      %4824 = vdwg.mxu0
      %v4825 = vxor.u32 %v4699, 2147483648
      %v4826 = vxor.u32 %v4702, 2147483648
      %v4827 = vxor.u32 %v4707, 2147483648
      %v4828 = vxor.u32 %v4710, 2147483648
      %v4829 = vxor.u32 %v4715, 2147483648
      %v4830 = vxor.u32 %v4718, 2147483648
      %v4831 = vxor.u32 %v4723, 2147483648
      %v4832 = vxor.u32 %v4726, 2147483648
      %v4833 = vxor.u32 %v4731, 2147483648
      %v4834 = vxor.u32 %v4734, 2147483648
      %v4835 = vxor.u32 %v4739, 2147483648
      %v4836 = vxor.u32 %v4742, 2147483648
      %v4837 = vxor.u32 %v4747, 2147483648
      %v4838 = vxor.u32 %v4750, 2147483648
      %v4839 = vxor.u32 %v4755, 2147483648
      %v4840 = vxor.u32 %v4758, 2147483648
      %v4841 = vxor.u32 %v4763, 2147483648
      %v4842 = vxor.u32 %v4766, 2147483648
      %v4843 = vxor.u32 %v4771, 2147483648
      %v4844 = vxor.u32 %v4774, 2147483648
      %v4845 = vxor.u32 %v4779, 2147483648
      %v4846 = vxor.u32 %v4782, 2147483648
      %v4847 = vxor.u32 %v4787, 2147483648
      %v4848 = vxor.u32 %v4790, 2147483648
      %v4849 = vxor.u32 %v4795, 2147483648
      %v4850 = vxor.u32 %v4798, 2147483648
      %v4851 = vxor.u32 %v4803, 2147483648
      %v4852 = vxor.u32 %v4806, 2147483648
      %v4853 = vxor.u32 %v4811, 2147483648
      %v4854 = vxor.u32 %v4814, 2147483648
      %v4855 = vxor.u32 %v4819, 2147483648
      %v4856 = vxor.u32 %v4822, 2147483648
      %v4857 = vmul.f32 %v4825, 1.442695
      %v4858 = vpow.pop %v4857
      %v4859 = vmul.f32 %v4826, 1.442695
      %v4860 = vpow.pop %v4859
      %v4861 = vmul.f32 %v4827, 1.442695
      %v4862 = vpow.pop %v4861
      %v4863 = vmul.f32 %v4828, 1.442695
      %v4864 = vpow.pop %v4863
      %v4865 = vmul.f32 %v4829, 1.442695
      %v4866 = vpow.pop %v4865
      %v4867 = vmul.f32 %v4830, 1.442695
      %v4868 = vpow.pop %v4867
      %v4869 = vmul.f32 %v4831, 1.442695
      %v4870 = vpow.pop %v4869
      %v4871 = vmul.f32 %v4832, 1.442695
      %v4872 = vpow.pop %v4871
      %v4873 = vmul.f32 %v4833, 1.442695
      %v4874 = vpow.pop %v4873
      %v4875 = vmul.f32 %v4834, 1.442695
      %v4876 = vpow.pop %v4875
      %v4877 = vmul.f32 %v4835, 1.442695
      %v4878 = vpow.pop %v4877
      %v4879 = vmul.f32 %v4836, 1.442695
      %v4880 = vpow.pop %v4879
      %v4881 = vmul.f32 %v4837, 1.442695
      %v4882 = vpow.pop %v4881
      %v4883 = vmul.f32 %v4838, 1.442695
      %v4884 = vpow.pop %v4883
      %v4885 = vmul.f32 %v4839, 1.442695
      %v4886 = vpow.pop %v4885
      %v4887 = vmul.f32 %v4840, 1.442695
      %v4888 = vpow.pop %v4887
      %v4889 = vmul.f32 %v4841, 1.442695
      %v4890 = vpow.pop %v4889
      %v4891 = vmul.f32 %v4842, 1.442695
      %v4892 = vpow.pop %v4891
      %v4893 = vmul.f32 %v4843, 1.442695
      %v4894 = vpow.pop %v4893
      %v4895 = vmul.f32 %v4844, 1.442695
      %v4896 = vpow.pop %v4895
      %v4897 = vmul.f32 %v4845, 1.442695
      %v4898 = vpow.pop %v4897
      %v4899 = vmul.f32 %v4846, 1.442695
      %v4900 = vpow.pop %v4899
      %v4901 = vmul.f32 %v4847, 1.442695
      %v4902 = vpow.pop %v4901
      %v4903 = vmul.f32 %v4848, 1.442695
      %v4904 = vpow.pop %v4903
      %v4905 = vmul.f32 %v4849, 1.442695
      %v4906 = vpow.pop %v4905
      %v4907 = vmul.f32 %v4850, 1.442695
      %v4908 = vpow.pop %v4907
      %v4909 = vmul.f32 %v4851, 1.442695
      %v4910 = vpow.pop %v4909
      %v4911 = vmul.f32 %v4852, 1.442695
      %v4912 = vpow.pop %v4911
      %v4913 = vmul.f32 %v4853, 1.442695
      %v4914 = vpow.pop %v4913
      %v4915 = vmul.f32 %v4854, 1.442695
      %v4916 = vpow.pop %v4915
      %v4917 = vmul.f32 %v4855, 1.442695
      %v4918 = vpow.pop %v4917
      %v4919 = vmul.f32 %v4856, 1.442695
      %v4920 = vpow.pop %v4919
      %v4921 = vadd.f32 %v4858, 1.0
      %v4922 = vadd.f32 %v4860, 1.0
      %v4923 = vadd.f32 %v4862, 1.0
      %v4924 = vadd.f32 %v4864, 1.0
      %v4925 = vadd.f32 %v4866, 1.0
      %v4926 = vadd.f32 %v4868, 1.0
      %v4927 = vadd.f32 %v4870, 1.0
      %v4928 = vadd.f32 %v4872, 1.0
      %v4929 = vadd.f32 %v4874, 1.0
      %v4930 = vadd.f32 %v4876, 1.0
      %v4931 = vadd.f32 %v4878, 1.0
      %v4932 = vadd.f32 %v4880, 1.0
      %v4933 = vadd.f32 %v4882, 1.0
      %v4934 = vadd.f32 %v4884, 1.0
      %v4935 = vadd.f32 %v4886, 1.0
      %v4936 = vadd.f32 %v4888, 1.0
      %v4937 = vadd.f32 %v4890, 1.0
      %v4938 = vadd.f32 %v4892, 1.0
      %v4939 = vadd.f32 %v4894, 1.0
      %v4940 = vadd.f32 %v4896, 1.0
      %v4941 = vadd.f32 %v4898, 1.0
      %v4942 = vadd.f32 %v4900, 1.0
      %v4943 = vadd.f32 %v4902, 1.0
      %v4944 = vadd.f32 %v4904, 1.0
      %v4945 = vadd.f32 %v4906, 1.0
      %v4946 = vadd.f32 %v4908, 1.0
      %v4947 = vadd.f32 %v4910, 1.0
      %v4948 = vadd.f32 %v4912, 1.0
      %v4949 = vadd.f32 %v4914, 1.0
      %v4950 = vadd.f32 %v4916, 1.0
      %v4951 = vadd.f32 %v4918, 1.0
      %v4952 = vadd.f32 %v4920, 1.0
      %v4953 = vrcp.pop %v4921
      %v4954 = vmul.f32 1.0, %v4953
      %v4955 = vrcp.pop %v4922
      %v4956 = vmul.f32 1.0, %v4955
      %v4957 = vrcp.pop %v4923
      %v4958 = vmul.f32 1.0, %v4957
      %v4959 = vrcp.pop %v4924
      %v4960 = vmul.f32 1.0, %v4959
      %v4961 = vrcp.pop %v4925
      %v4962 = vmul.f32 1.0, %v4961
      %v4963 = vrcp.pop %v4926
      %v4964 = vmul.f32 1.0, %v4963
      %v4965 = vrcp.pop %v4927
      %v4966 = vmul.f32 1.0, %v4965
      %v4967 = vrcp.pop %v4928
      %v4968 = vmul.f32 1.0, %v4967
      %v4969 = vrcp.pop %v4929
      %v4970 = vmul.f32 1.0, %v4969
      %v4971 = vrcp.pop %v4930
      %v4972 = vmul.f32 1.0, %v4971
      %v4973 = vrcp.pop %v4931
      %v4974 = vmul.f32 1.0, %v4973
      %v4975 = vrcp.pop %v4932
      %v4976 = vmul.f32 1.0, %v4975
      %v4977 = vrcp.pop %v4933
      %v4978 = vmul.f32 1.0, %v4977
      %v4979 = vrcp.pop %v4934
      %v4980 = vmul.f32 1.0, %v4979
      %v4981 = vrcp.pop %v4935
      %v4982 = vmul.f32 1.0, %v4981
      %v4983 = vrcp.pop %v4936
      %v4984 = vmul.f32 1.0, %v4983
      %v4985 = vrcp.pop %v4937
      %v4986 = vmul.f32 1.0, %v4985
      %v4987 = vrcp.pop %v4938
      %v4988 = vmul.f32 1.0, %v4987
      %v4989 = vrcp.pop %v4939
      %v4990 = vmul.f32 1.0, %v4989
      %v4991 = vrcp.pop %v4940
      %v4992 = vmul.f32 1.0, %v4991
      %v4993 = vrcp.pop %v4941
      %v4994 = vmul.f32 1.0, %v4993
      %v4995 = vrcp.pop %v4942
      %v4996 = vmul.f32 1.0, %v4995
      %v4997 = vrcp.pop %v4943
      %v4998 = vmul.f32 1.0, %v4997
      %v4999 = vrcp.pop %v4944
      %v5000 = vmul.f32 1.0, %v4999
      %v5001 = vrcp.pop %v4945
      %v5002 = vmul.f32 1.0, %v5001
      %v5003 = vrcp.pop %v4946
      %v5004 = vmul.f32 1.0, %v5003
      %v5005 = vrcp.pop %v4947
      %v5006 = vmul.f32 1.0, %v5005
      %v5007 = vrcp.pop %v4948
      %v5008 = vmul.f32 1.0, %v5007
      %v5009 = vrcp.pop %v4949
      %v5010 = vmul.f32 1.0, %v5009
      %v5011 = vrcp.pop %v4950
      %v5012 = vmul.f32 1.0, %v5011
      %v5013 = vrcp.pop %v4951
      %v5014 = vmul.f32 1.0, %v5013
      %v5015 = vrcp.pop %v4952
      %v5016 = vmul.f32 1.0, %v5015
      %v5017 = vmul.f32 %v4699, %v4954
      %v5018 = vmul.f32 %v4702, %v4956
      %v5019 = vmul.f32 %v4707, %v4958
      %v5020 = vmul.f32 %v4710, %v4960
      %v5021 = vmul.f32 %v4715, %v4962
      %v5022 = vmul.f32 %v4718, %v4964
      %v5023 = vmul.f32 %v4723, %v4966
      %v5024 = vmul.f32 %v4726, %v4968
      %v5025 = vmul.f32 %v4731, %v4970
      %v5026 = vmul.f32 %v4734, %v4972
      %v5027 = vmul.f32 %v4739, %v4974
      %v5028 = vmul.f32 %v4742, %v4976
      %v5029 = vmul.f32 %v4747, %v4978
      %v5030 = vmul.f32 %v4750, %v4980
      %v5031 = vmul.f32 %v4755, %v4982
      %v5032 = vmul.f32 %v4758, %v4984
      %v5033 = vmul.f32 %v4763, %v4986
      %v5034 = vmul.f32 %v4766, %v4988
      %v5035 = vmul.f32 %v4771, %v4990
      %v5036 = vmul.f32 %v4774, %v4992
      %v5037 = vmul.f32 %v4779, %v4994
      %v5038 = vmul.f32 %v4782, %v4996
      %v5039 = vmul.f32 %v4787, %v4998
      %v5040 = vmul.f32 %v4790, %v5000
      %v5041 = vmul.f32 %v4795, %v5002
      %v5042 = vmul.f32 %v4798, %v5004
      %v5043 = vmul.f32 %v4803, %v5006
      %v5044 = vmul.f32 %v4806, %v5008
      %v5045 = vmul.f32 %v4811, %v5010
      %v5046 = vmul.f32 %v4814, %v5012
      %v5047 = vmul.f32 %v4819, %v5014
      %v5048 = vmul.f32 %v4822, %v5016
      %v5049 = vpack.c.bf16 %v5018, %v5017
      %v5050 = vpack.c.bf16 %v5020, %v5019
      %v5051 = vpack.c.bf16 %v5022, %v5021
      %v5052 = vpack.c.bf16 %v5024, %v5023
      %v5053 = vpack.c.bf16 %v5026, %v5025
      %v5054 = vpack.c.bf16 %v5028, %v5027
      %v5055 = vpack.c.bf16 %v5030, %v5029
      %v5056 = vpack.c.bf16 %v5032, %v5031
      %v5057 = vpack.c.bf16 %v5034, %v5033
      %v5058 = vpack.c.bf16 %v5036, %v5035
      %v5059 = vpack.c.bf16 %v5038, %v5037
      %v5060 = vpack.c.bf16 %v5040, %v5039
      %v5061 = vpack.c.bf16 %v5042, %v5041
      %v5062 = vpack.c.bf16 %v5044, %v5043
      %v5063 = vpack.c.bf16 %v5046, %v5045
      %v5064 = vpack.c.bf16 %v5048, %v5047
      %v5065 = vld [vmem:[%s10] sm:$0xf]
      %v5066 = vld [vmem:[%s10 + $0x4] sm:$0xf]
      %v5067 = vld [vmem:[%s10 + $0x8] sm:$0xf]
      %v5068 = vld [vmem:[%s10 + $0xc] sm:$0xf]
      %v5069 = vld [vmem:[%s10 + $0x10] sm:$0xf]
      %v5070 = vld [vmem:[%s10 + $0x14] sm:$0xf]
      %v5071 = vld [vmem:[%s10 + $0x18] sm:$0xf]
      %v5072 = vld [vmem:[%s10 + $0x1c] sm:$0xf]
      %v5073 = vld [vmem:[%s11] sm:$0x1]
      %v5075 = vlaneseq
      %v5076 = vshrl.u32 %v5075, 7
      %v5077 = vsub.s32 0, %v5076
      %v5078 = vrot.slane %v5073, %v5077
      %v5088 = vunpack.c.l.b16 %v5065
      %v5089 = vunpack.c.l.b16 %v5066
      %v5090 = vunpack.c.l.b16 %v5067
      %v5091 = vunpack.c.l.b16 %v5068
      %v5092 = vunpack.c.l.b16 %v5069
      %v5093 = vunpack.c.l.b16 %v5070
      %v5094 = vunpack.c.l.b16 %v5071
      %v5095 = vunpack.c.l.b16 %v5072
      %v5096 = vpack.c.b16 %v5089, %v5088
      %v5097 = vpack.c.b16 %v5091, %v5090
      %v5098 = vpack.c.b16 %v5093, %v5092
      %v5099 = vpack.c.b16 %v5095, %v5094
      %v5105 = vsel %vm1645, %v5049, 0
      %v5108 = vsel %vm1645, %v5050, 0
      %v5111 = vsel %vm1645, %v5051, 0
      %v5114 = vsel %vm1645, %v5052, 0
      %v5117 = vsel %vm1645, %v5053, 0
      %v5120 = vsel %vm1645, %v5054, 0
      %v5123 = vsel %vm1645, %v5055, 0
      %v5126 = vsel %vm1645, %v5056, 0
      %v5129 = vsel %vm1645, %v5057, 0
      %v5132 = vsel %vm1645, %v5058, 0
      %v5135 = vsel %vm1645, %v5059, 0
      %v5138 = vsel %vm1645, %v5060, 0
      %v5141 = vsel %vm1645, %v5061, 0
      %v5144 = vsel %vm1645, %v5062, 0
      %v5147 = vsel %vm1645, %v5063, 0
      %v5150 = vsel %vm1645, %v5064, 0
      %5152 = vmatprep.subr.bf16.mxu0 0
      %5153 = vmatpush1.bf16.msra.mxu0 0
      %5154 = vmatprep.subr.bf16.mxu0 0
      %5155 = vmatpush1.bf16.msra.mxu0 0
      %5156 = vmatprep.subr.bf16.mxu0 0
      %5157 = vmatpush1.bf16.msra.mxu0 0
      %5158 = vmatprep.subr.bf16.mxu0 0
      %5159 = vmatpush1.bf16.msra.mxu0 0
      %5160 = vmatprep.subr.bf16.mxu0 0
      %5161 = vmatpush1.bf16.msra.mxu0 %v5099
      %5162 = vmatprep.subr.bf16.mxu0 0
      %5163 = vmatpush1.bf16.msra.mxu0 %v5098
      %5164 = vmatprep.subr.bf16.mxu0 0
      %5165 = vmatpush1.bf16.msra.mxu0 %v5097
      %5166 = vmatprep.subr.bf16.mxu0 0
      %5167 = vmatpush1.bf16.msra.mxu0 %v5096
      %5168 = vmatprep.subr.bf16.mxu0 0
      %5169 = vmatpush2.bf16.msra.mxu0 0
      %5170 = vmatprep.subr.bf16.mxu0 0
      %5171 = vmatpush2.bf16.msra.mxu0 0
      %5172 = vmatprep.subr.bf16.mxu0 0
      %5173 = vmatpush2.bf16.msra.mxu0 0
      %5174 = vmatprep.subr.bf16.mxu0 0
      %5175 = vmatpush2.bf16.msra.mxu0 0
      %5176 = vmatprep.subr.bf16.mxu0 0
      %5177 = vmatpush2.bf16.msra.mxu0 0
      %5178 = vmatprep.subr.bf16.mxu0 0
      %5179 = vmatpush2.bf16.msra.mxu0 0
      %5180 = vmatprep.subr.bf16.mxu0 0
      %5181 = vmatpush2.bf16.msra.mxu0 0
      %5182 = vmatprep.subr.bf16.mxu0 0
      %5183 = vmatpush2.bf16.msra.mxu0 0
      %5184 = vmatprep.mubr.bf16.mxu0 0
      %5185 = vmatmul.mubr.bf16.gmra.mxu0 %v5105
      %v5186 = vpop.f32.mrf.mxu0
      %v5187 = vadd.f32 %v5078, %v5186
      %v5188 = vpop.f32.mrf.mxu0
      %v5189 = vpop.f32.mrf.mxu0
      %v5190 = vadd.f32 %v5078, %v5189
      %v5191 = vpop.f32.mrf.mxu0
      %5192 = vmatprep.mubr.bf16.mxu0 0
      %5193 = vmatmul.mubr.bf16.gmra.mxu0 %v5108
      %v5194 = vpop.f32.mrf.mxu0
      %v5195 = vadd.f32 %v5078, %v5194
      %v5196 = vpop.f32.mrf.mxu0
      %v5197 = vpop.f32.mrf.mxu0
      %v5198 = vadd.f32 %v5078, %v5197
      %v5199 = vpop.f32.mrf.mxu0
      %5200 = vmatprep.mubr.bf16.mxu0 0
      %5201 = vmatmul.mubr.bf16.gmra.mxu0 %v5111
      %v5202 = vpop.f32.mrf.mxu0
      %v5203 = vadd.f32 %v5078, %v5202
      %v5204 = vpop.f32.mrf.mxu0
      %v5205 = vpop.f32.mrf.mxu0
      %v5206 = vadd.f32 %v5078, %v5205
      %v5207 = vpop.f32.mrf.mxu0
      %5208 = vmatprep.mubr.bf16.mxu0 0
      %5209 = vmatmul.mubr.bf16.gmra.mxu0 %v5114
      %v5210 = vpop.f32.mrf.mxu0
      %v5211 = vadd.f32 %v5078, %v5210
      %v5212 = vpop.f32.mrf.mxu0
      %v5213 = vpop.f32.mrf.mxu0
      %v5214 = vadd.f32 %v5078, %v5213
      %v5215 = vpop.f32.mrf.mxu0
      %5216 = vmatprep.mubr.bf16.mxu0 0
      %5217 = vmatmul.mubr.bf16.gmra.mxu0 %v5117
      %v5218 = vpop.f32.mrf.mxu0
      %v5219 = vadd.f32 %v5078, %v5218
      %v5220 = vpop.f32.mrf.mxu0
      %v5221 = vpop.f32.mrf.mxu0
      %v5222 = vadd.f32 %v5078, %v5221
      %v5223 = vpop.f32.mrf.mxu0
      %5224 = vmatprep.mubr.bf16.mxu0 0
      %5225 = vmatmul.mubr.bf16.gmra.mxu0 %v5120
      %v5226 = vpop.f32.mrf.mxu0
      %v5227 = vadd.f32 %v5078, %v5226
      %v5228 = vpop.f32.mrf.mxu0
      %v5229 = vpop.f32.mrf.mxu0
      %v5230 = vadd.f32 %v5078, %v5229
      %v5231 = vpop.f32.mrf.mxu0
      %5232 = vmatprep.mubr.bf16.mxu0 0
      %5233 = vmatmul.mubr.bf16.gmra.mxu0 %v5123
      %v5234 = vpop.f32.mrf.mxu0
      %v5235 = vadd.f32 %v5078, %v5234
      %v5236 = vpop.f32.mrf.mxu0
      %v5237 = vpop.f32.mrf.mxu0
      %v5238 = vadd.f32 %v5078, %v5237
      %v5239 = vpop.f32.mrf.mxu0
      %5240 = vmatprep.mubr.bf16.mxu0 0
      %5241 = vmatmul.mubr.bf16.gmra.mxu0 %v5126
      %v5242 = vpop.f32.mrf.mxu0
      %v5243 = vadd.f32 %v5078, %v5242
      %v5244 = vpop.f32.mrf.mxu0
      %v5245 = vpop.f32.mrf.mxu0
      %v5246 = vadd.f32 %v5078, %v5245
      %v5247 = vpop.f32.mrf.mxu0
      %5248 = vmatprep.mubr.bf16.mxu0 0
      %5249 = vmatmul.mubr.bf16.gmra.mxu0 %v5129
      %v5250 = vpop.f32.mrf.mxu0
      %v5251 = vadd.f32 %v5078, %v5250
      %v5252 = vpop.f32.mrf.mxu0
      %v5253 = vpop.f32.mrf.mxu0
      %v5254 = vadd.f32 %v5078, %v5253
      %v5255 = vpop.f32.mrf.mxu0
      %5256 = vmatprep.mubr.bf16.mxu0 0
      %5257 = vmatmul.mubr.bf16.gmra.mxu0 %v5132
      %v5258 = vpop.f32.mrf.mxu0
      %v5259 = vadd.f32 %v5078, %v5258
      %v5260 = vpop.f32.mrf.mxu0
      %v5261 = vpop.f32.mrf.mxu0
      %v5262 = vadd.f32 %v5078, %v5261
      %v5263 = vpop.f32.mrf.mxu0
      %5264 = vmatprep.mubr.bf16.mxu0 0
      %5265 = vmatmul.mubr.bf16.gmra.mxu0 %v5135
      %v5266 = vpop.f32.mrf.mxu0
      %v5267 = vadd.f32 %v5078, %v5266
      %v5268 = vpop.f32.mrf.mxu0
      %v5269 = vpop.f32.mrf.mxu0
      %v5270 = vadd.f32 %v5078, %v5269
      %v5271 = vpop.f32.mrf.mxu0
      %5272 = vmatprep.mubr.bf16.mxu0 0
      %5273 = vmatmul.mubr.bf16.gmra.mxu0 %v5138
      %v5274 = vpop.f32.mrf.mxu0
      %v5275 = vadd.f32 %v5078, %v5274
      %v5276 = vpop.f32.mrf.mxu0
      %v5277 = vpop.f32.mrf.mxu0
      %v5278 = vadd.f32 %v5078, %v5277
      %v5279 = vpop.f32.mrf.mxu0
      %5280 = vmatprep.mubr.bf16.mxu0 0
      %5281 = vmatmul.mubr.bf16.gmra.mxu0 %v5141
      %v5282 = vpop.f32.mrf.mxu0
      %v5283 = vadd.f32 %v5078, %v5282
      %v5284 = vpop.f32.mrf.mxu0
      %v5285 = vpop.f32.mrf.mxu0
      %v5286 = vadd.f32 %v5078, %v5285
      %v5287 = vpop.f32.mrf.mxu0
      %5288 = vmatprep.mubr.bf16.mxu0 0
      %5289 = vmatmul.mubr.bf16.gmra.mxu0 %v5144
      %v5290 = vpop.f32.mrf.mxu0
      %v5291 = vadd.f32 %v5078, %v5290
      %v5292 = vpop.f32.mrf.mxu0
      %v5293 = vpop.f32.mrf.mxu0
      %v5294 = vadd.f32 %v5078, %v5293
      %v5295 = vpop.f32.mrf.mxu0
      %5296 = vmatprep.mubr.bf16.mxu0 0
      %5297 = vmatmul.mubr.bf16.gmra.mxu0 %v5147
      %v5298 = vpop.f32.mrf.mxu0
      %v5299 = vadd.f32 %v5078, %v5298
      %v5300 = vpop.f32.mrf.mxu0
      %v5301 = vpop.f32.mrf.mxu0
      %v5302 = vadd.f32 %v5078, %v5301
      %v5303 = vpop.f32.mrf.mxu0
      %5304 = vmatprep.mubr.bf16.mxu0 0
      %5305 = vmatmul.mubr.bf16.gmra.mxu0 %v5150
      %v5306 = vpop.f32.mrf.mxu0
      %v5307 = vadd.f32 %v5078, %v5306
      %v5308 = vpop.f32.mrf.mxu0
      %v5309 = vpop.f32.mrf.mxu0
      %v5310 = vadd.f32 %v5078, %v5309
      %v5311 = vpop.f32.mrf.mxu0
      %5312 = vdwg.mxu0
      %v5313 = vadd.f32 %v4051, %v5187
      %v5314 = vadd.f32 %v4052, %v5190
      %v5315 = vadd.f32 %v4053, %v5195
      %v5316 = vadd.f32 %v4054, %v5198
      %v5317 = vadd.f32 %v4055, %v5203
      %v5318 = vadd.f32 %v4056, %v5206
      %v5319 = vadd.f32 %v4057, %v5211
      %v5320 = vadd.f32 %v4058, %v5214
      %v5321 = vadd.f32 %v4059, %v5219
      %v5322 = vadd.f32 %v4060, %v5222
      %v5323 = vadd.f32 %v4061, %v5227
      %v5324 = vadd.f32 %v4062, %v5230
      %v5325 = vadd.f32 %v4063, %v5235
      %v5326 = vadd.f32 %v4064, %v5238
      %v5327 = vadd.f32 %v4065, %v5243
      %v5328 = vadd.f32 %v4066, %v5246
      %v5329 = vadd.f32 %v4067, %v5251
      %v5330 = vadd.f32 %v4068, %v5254
      %v5331 = vadd.f32 %v4069, %v5259
      %v5332 = vadd.f32 %v4070, %v5262
      %v5333 = vadd.f32 %v4071, %v5267
      %v5334 = vadd.f32 %v4072, %v5270
      %v5335 = vadd.f32 %v4073, %v5275
      %v5336 = vadd.f32 %v4074, %v5278
      %v5337 = vadd.f32 %v4075, %v5283
      %v5338 = vadd.f32 %v4076, %v5286
      %v5339 = vadd.f32 %v4077, %v5291
      %v5340 = vadd.f32 %v4078, %v5294
      %v5341 = vadd.f32 %v4079, %v5299
      %v5342 = vadd.f32 %v4080, %v5302
      %v5343 = vadd.f32 %v4081, %v5307
      %v5344 = vadd.f32 %v4082, %v5310
      %5345 = vst.msk [vmem:[%s420] sm:$0xff] %vm457, %v5313
      %5346 = vst.msk [vmem:[%s420 + $0x8] sm:$0xff] %vm457, %v5314
      %5347 = vst.msk [vmem:[%s420 + $0x10] sm:$0xff] %vm457, %v5315
      %5348 = vst.msk [vmem:[%s420 + $0x18] sm:$0xff] %vm457, %v5316
      %5349 = vst.msk [vmem:[%s420 + $0x20] sm:$0xff] %vm457, %v5317
      %5350 = vst.msk [vmem:[%s420 + $0x28] sm:$0xff] %vm457, %v5318
      %5351 = vst.msk [vmem:[%s420 + $0x30] sm:$0xff] %vm457, %v5319
      %5352 = vst.msk [vmem:[%s420 + $0x38] sm:$0xff] %vm457, %v5320
      %5353 = vst.msk [vmem:[%s420 + $0x40] sm:$0xff] %vm457, %v5321
      %5354 = vst.msk [vmem:[%s420 + $0x48] sm:$0xff] %vm457, %v5322
      %5355 = vst.msk [vmem:[%s420 + $0x50] sm:$0xff] %vm457, %v5323
      %5356 = vst.msk [vmem:[%s420 + $0x58] sm:$0xff] %vm457, %v5324
      %5357 = vst.msk [vmem:[%s420 + $0x60] sm:$0xff] %vm457, %v5325
      %5358 = vst.msk [vmem:[%s420 + $0x68] sm:$0xff] %vm457, %v5326
      %5359 = vst.msk [vmem:[%s420 + $0x70] sm:$0xff] %vm457, %v5327
      %5360 = vst.msk [vmem:[%s420 + $0x78] sm:$0xff] %vm457, %v5328
      %5361 = vst.msk [vmem:[%s420 + $0x80] sm:$0xff] %vm457, %v5329
      %5362 = vst.msk [vmem:[%s420 + $0x88] sm:$0xff] %vm457, %v5330
      %5363 = vst.msk [vmem:[%s420 + $0x90] sm:$0xff] %vm457, %v5331
      %5364 = vst.msk [vmem:[%s420 + $0x98] sm:$0xff] %vm457, %v5332
      %5365 = vst.msk [vmem:[%s420 + $0xa0] sm:$0xff] %vm457, %v5333
      %5366 = vst.msk [vmem:[%s420 + $0xa8] sm:$0xff] %vm457, %v5334
      %5367 = vst.msk [vmem:[%s420 + $0xb0] sm:$0xff] %vm457, %v5335
      %5368 = vst.msk [vmem:[%s420 + $0xb8] sm:$0xff] %vm457, %v5336
      %5369 = vst.msk [vmem:[%s420 + $0xc0] sm:$0xff] %vm457, %v5337
      %5370 = vst.msk [vmem:[%s420 + $0xc8] sm:$0xff] %vm457, %v5338
      %5371 = vst.msk [vmem:[%s420 + $0xd0] sm:$0xff] %vm457, %v5339
      %5372 = vst.msk [vmem:[%s420 + $0xd8] sm:$0xff] %vm457, %v5340
      %5373 = vst.msk [vmem:[%s420 + $0xe0] sm:$0xff] %vm457, %v5341
      %5374 = vst.msk [vmem:[%s420 + $0xe8] sm:$0xff] %vm457, %v5342
      %5375 = vst.msk [vmem:[%s420 + $0xf0] sm:$0xff] %vm457, %v5343
      %5376 = vst.msk [vmem:[%s420 + $0xf8] sm:$0xff] %vm457, %v5344
      %s5377 = smul.u32 4, %s23
      %p5378 = scmp.lt.s32.totalorder %s5377, 7
      %s5379 = scalar_select %p5378, %s5377, 7
      %s5380 = smul.addr %s5379, 8
      %s5381 = smul.addr %s5380, 8
      %s5382 = scalar_lea.vmem %s12, %s5381
      // Predicated region
      $region69: #{mobilevit_attention.6} parent=67 // pred_check
        %p5383 = pneg %p298
      $region70: #{mobilevit_attention.6} parent=67 // pred_check_branch
        %5385 = sbr.rel (%p5383) target = $region72
      $region71: #{mobilevit_attention.6} parent=67 // pred_region
        %s5386 = smul.u32 4, %s23
      $region72: #{mobilevit_attention.6} parent=67 // pred_fallthru
        _
    $region68: #{mobilevit_attention.6} parent=5 // pred_fallthru
      _
    %p5387 = scmp.le.s32.totalorder 2, %s18
    // Predicated region
    $region73: #{mobilevit_attention.6} parent=5 // pred_check
      %p5388 = pneg %p5387
    $region74: #{mobilevit_attention.6} parent=5 // pred_check_branch
      %5390 = sbr.rel (%p5388) target = $region76
    $region75: #{mobilevit_attention.6} parent=5 // pred_region
      %s5391 = ssub.s32 %s18, 2
      // Predicated region
      $region77: #{mobilevit_attention.6} parent=75 // pred_check
        %p5392 = pneg %p304
      $region78: #{mobilevit_attention.6} parent=75 // pred_check_branch
        %5394 = sbr.rel (%p5392) target = $region80
      $region79: #{mobilevit_attention.6} parent=75 // pred_region
        %s5395 = smul.u32 4, %s24
        %p5396 = scmp.lt.s32.totalorder %s5395, 7
        %s5397 = scalar_select %p5396, %s5395, 7
        %s5398 = smul.addr %s5397, 8
        %s5399 = smul.addr %s5398, 8
        %s5400 = scalar_lea.vmem %s12, %s5399
      $region80: #{mobilevit_attention.6} parent=75 // pred_fallthru
        _
    $region76: #{mobilevit_attention.6} parent=5 // pred_fallthru
      _
  $region6: #{mobilevit_attention.6} parent=0 // loop_footer
    %s22 = sadd.s32 1, %s18
  $region7: #{mobilevit_attention.6} parent=0 // loop_footer_branch
    %17 = sbr.rel target = $region3
  $region8: #{mobilevit_attention.6} parent=0 // loop_exit
    _

</llo_original>
